<compile_context>
chip_gen: v6e
topology: v6e:2x2x1
jax: 0.10.0
libtpu: 0.0.40
codegen_flags: <defaults>
</compile_context>

<pallas_src>
import jax
import jax.numpy as jnp
from jax.experimental import pallas as pl
from jax.experimental.pallas import tpu as pltpu

BN_EPS = 1e-3


def fused_se_conv_bn_kernel(x_se_ref, w1_ref, b1_ref, x_sp_ref, w2_ref,
                            gamma_ref, beta_ref, o_ref):
    """Grid = (num_k_tiles,) over the Cmid (=3072) reduction axis.

    Per-step block shapes (channel-major):
      x_se : [Cin, 1]      (full, bf16)
      w1   : [tk, Cin]     (K-slice, bf16)
      b1   : [tk, 1]       (K-slice, f32)
      x_sp : [tk, HW]      (K-slice, bf16)
      w2   : [Cout, tk]    (K-slice, bf16)
      gamma/beta : [Cout, 1]  (full, f32)
      o    : [Cout, HW]    (resident f32 accumulator / final output)
    """
    k = pl.program_id(0)

    @pl.when(k == 0)
    def _init():
        o_ref[...] = jnp.zeros_like(o_ref)

    # SE gate for this K-slice of channels: sigmoid(W1[k] @ x_se + b1[k])
    se = jnp.dot(w1_ref[...], x_se_ref[...],
                 preferred_element_type=jnp.float32) + b1_ref[...]       # [tk, 1] f32
    gate = jax.nn.sigmoid(se)                                            # [tk, 1] f32

    # Gate the main activation (lane-broadcast), keep MXU operands in bf16.
    y = (x_sp_ref[...] * gate).astype(jnp.bfloat16)                      # [tk, HW]

    # Partial 1x1 conv (Cmid -> Cout): accumulate W2[:, k] @ y into the
    # resident f32 output block.
    o_ref[...] += jnp.dot(w2_ref[...], y,
                          preferred_element_type=jnp.float32)            # [Cout, HW]

    @pl.when(k == pl.num_programs(0) - 1)
    def _finalize():
        z = o_ref[...]                                                   # [Cout, HW] f32
        hw = z.shape[1]
        inv_hw = jnp.float32(1.0 / hw)
        # One-pass biased (training-mode) batch statistics per channel.
        s1 = jnp.sum(z, axis=1, keepdims=True)                           # [Cout, 1]
        s2 = jnp.sum(z * z, axis=1, keepdims=True)                       # [Cout, 1]
        mean = s1 * inv_hw
        var = s2 * inv_hw - mean * mean
        inv = jax.lax.rsqrt(var + BN_EPS)
        o_ref[...] = (z - mean) * (inv * gamma_ref[...]) + beta_ref[...]


def module_forward(x741, x738, w1, b1, w2, gamma, beta):
    """x741: [1, Cin, 1, 1], x738: [1, Cmid, H, W]  (NCHW, like PyTorch)."""
    _, cin, _, _ = x741.shape
    _, cmid, h, w = x738.shape
    cout = w2.shape[0]
    hw = h * w

    # Channel-major matrices: free reshapes only (no transposes), bf16 MXU inputs.
    x_se = x741.reshape(cin, 1).astype(jnp.bfloat16)        # [Cin, 1]
    w1_m = w1.reshape(cmid, cin).astype(jnp.bfloat16)       # [Cmid, Cin]
    b1_m = b1.reshape(cmid, 1).astype(jnp.float32)          # [Cmid, 1]
    x_sp = x738.reshape(cmid, hw).astype(jnp.bfloat16)      # [Cmid, HW]
    w2_m = w2.reshape(cout, cmid).astype(jnp.bfloat16)      # [Cout, Cmid]
    gamma_m = gamma.reshape(cout, 1).astype(jnp.float32)    # [Cout, 1]
    beta_m = beta.reshape(cout, 1).astype(jnp.float32)      # [Cout, 1]

    # Small K-reduction grid over Cmid to overlap DMA with compute.
    tk = 1024 if cmid % 1024 == 0 else cmid
    nk = cmid // tk

    out = pl.pallas_call(
        fused_se_conv_bn_kernel,
        out_shape=jax.ShapeDtypeStruct((cout, hw), jnp.float32),
        grid_spec=pltpu.PrefetchScalarGridSpec(
            num_scalar_prefetch=0,
            grid=(nk,),
            in_specs=[
                pl.BlockSpec((cin, 1), lambda k: (0, 0)),     # x_se  (full)
                pl.BlockSpec((tk, cin), lambda k: (k, 0)),    # w1    (K-slice)
                pl.BlockSpec((tk, 1), lambda k: (k, 0)),      # b1    (K-slice)
                pl.BlockSpec((tk, hw), lambda k: (k, 0)),     # x_sp  (K-slice)
                pl.BlockSpec((cout, tk), lambda k: (0, k)),   # w2    (K-slice)
                pl.BlockSpec((cout, 1), lambda k: (0, 0)),    # gamma (full)
                pl.BlockSpec((cout, 1), lambda k: (0, 0)),    # beta  (full)
            ],
            out_specs=pl.BlockSpec((cout, hw), lambda k: (0, 0)),  # resident acc
        ),
        compiler_params=pltpu.CompilerParams(
            dimension_semantics=("arbitrary",),               # reduction axis
            vmem_limit_bytes=32 * 1024 * 1024,
        ),
    )(x_se, w1_m, b1_m, x_sp, w2_m, gamma_m, beta_m)

    # [Cout, HW] -> [1, Cout, H, W]: pure reshape, no transpose.
    return out.reshape(1, cout, h, w)


def reference_forward(x741, x738, w1, b1, w2, gamma, beta):
    """Pure-JAX f32 reference of the PyTorch forward (training-mode BN)."""
    cin = x741.shape[1]
    cmid = x738.shape[1]
    cout = w2.shape[0]
    se = jnp.dot(w1.reshape(cmid, cin), x741.reshape(cin)) + b1           # [Cmid]
    gate = jax.nn.sigmoid(se)[None, :, None, None]                         # [1,Cmid,1,1]
    y = gate * x738                                                        # [1,Cmid,H,W]
    z = jnp.einsum('oc,nchw->nohw', w2.reshape(cout, cmid), y)             # [1,Cout,H,W]
    mean = jnp.mean(z, axis=(0, 2, 3), keepdims=True)
    var = jnp.mean((z - mean) ** 2, axis=(0, 2, 3), keepdims=True)
    zhat = (z - mean) * jax.lax.rsqrt(var + BN_EPS)
    return zhat * gamma[None, :, None, None] + beta[None, :, None, None]


if __name__ == "__main__":
    # Shapes from the module: x741=[1,128,1,1], x738=[1,3072,7,7]
    CIN, CMID, COUT, H, W = 128, 3072, 512, 7, 7

    key = jax.random.PRNGKey(0)
    k1, k2, k3, k4, k5, k6, k7 = jax.random.split(key, 7)

    x741 = jax.random.normal(k1, (1, CIN, 1, 1), jnp.float32)
    x738 = jax.random.normal(k2, (1, CMID, H, W), jnp.float32)

    # Deterministic parameter init (matching layer shapes in __init__)
    w1 = jax.random.normal(k3, (CMID, CIN, 1, 1), jnp.float32) * (1.0 / jnp.sqrt(CIN))
    b1 = jax.random.normal(k4, (CMID,), jnp.float32) * 0.1
    w2 = jax.random.normal(k5, (COUT, CMID, 1, 1), jnp.float32) * (1.0 / jnp.sqrt(CMID))
    gamma = 1.0 + 0.1 * jax.random.normal(k6, (COUT,), jnp.float32)
    beta = 0.1 * jax.random.normal(k7, (COUT,), jnp.float32)

    out = module_forward(x741, x738, w1, b1, w2, gamma, beta)
    out = jax.block_until_ready(out)

    ref = reference_forward(x741, x738, w1, b1, w2, gamma, beta)
    assert out.shape == (1, COUT, H, W), out.shape
    # bf16 MXU inputs with f32 accumulation -> slightly looser tolerance vs f32 ref.
    assert jnp.allclose(out, ref, atol=3e-2, rtol=3e-2), "mismatch vs reference"

    print("KERNEL_OK")
</pallas_src>

<mosaic_0001>
module attributes {stable_mosaic.version = 11 : i64} {
  func.func @fused_se_conv_bn_kernel(%arg0: i32, %arg1: memref<128x1xbf16, #tpu.memory_space<vmem>>, %arg2: memref<1024x128xbf16, #tpu.memory_space<vmem>>, %arg3: memref<1024x1xf32, #tpu.memory_space<vmem>>, %arg4: memref<1024x49xbf16, #tpu.memory_space<vmem>>, %arg5: memref<512x1024xbf16, #tpu.memory_space<vmem>>, %arg6: memref<512x1xf32, #tpu.memory_space<vmem>>, %arg7: memref<512x1xf32, #tpu.memory_space<vmem>>, %arg8: memref<512x49xf32, #tpu.memory_space<vmem>>) attributes {dimension_semantics = [#tpu.dimension_semantics<arbitrary>], iteration_bounds = array<i64: 3>, scalar_prefetch = 0 : i64, scratch_operands = 0 : i64, tpu.core_type = #tpu.core_type<tc>, window_params = [{pipeline_mode = #tpu.pipeline_mode<synchronous>, transform_indices = @transform_0, window_bounds = array<i64: 128, 1>}, {transform_indices = @transform_1, window_bounds = array<i64: 1024, 128>}, {transform_indices = @transform_2, window_bounds = array<i64: 1024, 1>}, {transform_indices = @transform_3, window_bounds = array<i64: 1024, 49>}, {transform_indices = @transform_4, window_bounds = array<i64: 512, 1024>}, {pipeline_mode = #tpu.pipeline_mode<synchronous>, transform_indices = @transform_5, window_bounds = array<i64: 512, 1>}, {pipeline_mode = #tpu.pipeline_mode<synchronous>, transform_indices = @transform_6, window_bounds = array<i64: 512, 1>}, {pipeline_mode = #tpu.pipeline_mode<synchronous>, transform_indices = @transform_7, window_bounds = array<i64: 512, 49>}]} {
    %c0_i32 = arith.constant 0 : i32
    %0 = arith.cmpi eq, %arg0, %c0_i32 : i32
    %1 = arith.extui %0 : i1 to i32
    %c0_i32_0 = arith.constant 0 : i32
    %2 = arith.cmpi ne, %1, %c0_i32_0 : i32
    scf.if %2 {
      %cst_17 = arith.constant 0.000000e+00 : f32
      %26 = vector.broadcast %cst_17 : f32 to vector<512x49xf32>
      %c0_18 = arith.constant 0 : index
      %c0_19 = arith.constant 0 : index
      %27 = vector.load %arg8[%c0_18, %c0_19] : memref<512x49xf32, #tpu.memory_space<vmem>>, vector<512x49xf32>
      tpu.vector_store %arg8[%c0_18, %c0_19], %26 {strides = array<i32>} : memref<512x49xf32, #tpu.memory_space<vmem>>, vector<512x49xf32>,
    } else {
    }
    %c0 = arith.constant 0 : index
    %c0_1 = arith.constant 0 : index
    %3 = vector.load %arg2[%c0, %c0_1] : memref<1024x128xbf16, #tpu.memory_space<vmem>>, vector<1024x128xbf16>
    %c0_2 = arith.constant 0 : index
    %c0_3 = arith.constant 0 : index
    %4 = vector.load %arg1[%c0_2, %c0_3] : memref<128x1xbf16, #tpu.memory_space<vmem>>, vector<128x1xbf16>
    %cst = arith.constant dense<0.000000e+00> : vector<1024x1xf32>
    %5 = tpu.matmul %3, %4, %cst {dimension_numbers = #tpu.dot_dimension_numbers<[1], [0], [0], [1], [0, 0, 1, 1], [], []>} : vector<1024x128xbf16>, vector<128x1xbf16>, vector<1024x1xf32> -> vector<1024x1xf32>
    %c0_4 = arith.constant 0 : index
    %c0_5 = arith.constant 0 : index
    %6 = vector.load %arg3[%c0_4, %c0_5] : memref<1024x1xf32, #tpu.memory_space<vmem>>, vector<1024x1xf32>
    %7 = arith.addf %5, %6 : vector<1024x1xf32>
    %8 = arith.negf %7 : vector<1024x1xf32>
    %9 = math.exp %8 : vector<1024x1xf32>
    %cst_6 = arith.constant 1.000000e+00 : f32
    %10 = vector.broadcast %cst_6 : f32 to vector<1024x1xf32>
    %11 = arith.addf %10, %9 : vector<1024x1xf32>
    %12 = arith.divf %10, %11 : vector<1024x1xf32>
    %c0_7 = arith.constant 0 : index
    %c0_8 = arith.constant 0 : index
    %13 = vector.load %arg4[%c0_7, %c0_8] : memref<1024x49xbf16, #tpu.memory_space<vmem>>, vector<1024x49xbf16>
    %14 = arith.extf %13 : vector<1024x49xbf16> to vector<1024x49xf32>
    %15 = vector.broadcast %12 : vector<1024x1xf32> to vector<1024x49xf32>
    %16 = arith.mulf %14, %15 : vector<1024x49xf32>
    %17 = arith.truncf %16 : vector<1024x49xf32> to vector<1024x49xbf16>
    %c0_9 = arith.constant 0 : index
    %c0_10 = arith.constant 0 : index
    %18 = vector.load %arg8[%c0_9, %c0_10] : memref<512x49xf32, #tpu.memory_space<vmem>>, vector<512x49xf32>
    %c0_11 = arith.constant 0 : index
    %c0_12 = arith.constant 0 : index
    %19 = vector.load %arg5[%c0_11, %c0_12] : memref<512x1024xbf16, #tpu.memory_space<vmem>>, vector<512x1024xbf16>
    %cst_13 = arith.constant dense<0.000000e+00> : vector<512x49xf32>
    %20 = tpu.matmul %19, %17, %cst_13 {dimension_numbers = #tpu.dot_dimension_numbers<[1], [0], [0], [1], [0, 0, 1, 1], [], []>} : vector<512x1024xbf16>, vector<1024x49xbf16>, vector<512x49xf32> -> vector<512x49xf32>
    %21 = arith.addf %18, %20 : vector<512x49xf32>
    %c0_14 = arith.constant 0 : index
    %c0_15 = arith.constant 0 : index
    %22 = vector.load %arg8[%c0_14, %c0_15] : memref<512x49xf32, #tpu.memory_space<vmem>>, vector<512x49xf32>
    tpu.vector_store %arg8[%c0_14, %c0_15], %21 {strides = array<i32>} : memref<512x49xf32, #tpu.memory_space<vmem>>, vector<512x49xf32>,
    %c2_i32 = arith.constant 2 : i32
    %23 = arith.cmpi eq, %arg0, %c2_i32 : i32
    %24 = arith.extui %23 : i1 to i32
    %c0_i32_16 = arith.constant 0 : i32
    %25 = arith.cmpi ne, %24, %c0_i32_16 : i32
    scf.if %25 {
      %c0_17 = arith.constant 0 : index
      %c0_18 = arith.constant 0 : index
      %26 = vector.load %arg8[%c0_17, %c0_18] : memref<512x49xf32, #tpu.memory_space<vmem>>, vector<512x49xf32>
      %cst_19 = arith.constant dense<0.000000e+00> : vector<512xf32>
      %27 = vector.multi_reduction <add>, %26, %cst_19 [1] : vector<512x49xf32> to vector<512xf32>
      %28 = vector.shape_cast %27 : vector<512xf32> to vector<512x1xf32>
      %29 = arith.mulf %26, %26 : vector<512x49xf32>
      %cst_20 = arith.constant dense<0.000000e+00> : vector<512xf32>
      %30 = vector.multi_reduction <add>, %29, %cst_20 [1] : vector<512x49xf32> to vector<512xf32>
      %31 = vector.shape_cast %30 : vector<512xf32> to vector<512x1xf32>
      %cst_21 = arith.constant 0.0204081628 : f32
      %32 = vector.broadcast %cst_21 : f32 to vector<512x1xf32>
      %33 = arith.mulf %28, %32 : vector<512x1xf32>
      %cst_22 = arith.constant 0.0204081628 : f32
      %34 = vector.broadcast %cst_22 : f32 to vector<512x1xf32>
      %35 = arith.mulf %31, %34 : vector<512x1xf32>
      %36 = arith.mulf %33, %33 : vector<512x1xf32>
      %37 = arith.subf %35, %36 : vector<512x1xf32>
      %cst_23 = arith.constant 1.000000e-03 : f32
      %38 = vector.broadcast %cst_23 : f32 to vector<512x1xf32>
      %39 = arith.addf %37, %38 : vector<512x1xf32>
      %40 = math.rsqrt %39 : vector<512x1xf32>
      %41 = vector.broadcast %33 : vector<512x1xf32> to vector<512x49xf32>
      %42 = arith.subf %26, %41 : vector<512x49xf32>
      %c0_24 = arith.constant 0 : index
      %c0_25 = arith.constant 0 : index
      %43 = vector.load %arg6[%c0_24, %c0_25] : memref<512x1xf32, #tpu.memory_space<vmem>>, vector<512x1xf32>
      %44 = arith.mulf %40, %43 : vector<512x1xf32>
      %45 = vector.broadcast %44 : vector<512x1xf32> to vector<512x49xf32>
      %46 = arith.mulf %42, %45 : vector<512x49xf32>
      %c0_26 = arith.constant 0 : index
      %c0_27 = arith.constant 0 : index
      %47 = vector.load %arg7[%c0_26, %c0_27] : memref<512x1xf32, #tpu.memory_space<vmem>>, vector<512x1xf32>
      %48 = vector.broadcast %47 : vector<512x1xf32> to vector<512x49xf32>
      %49 = arith.addf %46, %48 : vector<512x49xf32>
      %c0_28 = arith.constant 0 : index
      %c0_29 = arith.constant 0 : index
      %50 = vector.load %arg8[%c0_28, %c0_29] : memref<512x49xf32, #tpu.memory_space<vmem>>, vector<512x49xf32>
      tpu.vector_store %arg8[%c0_28, %c0_29], %49 {strides = array<i32>} : memref<512x49xf32, #tpu.memory_space<vmem>>, vector<512x49xf32>,
    } else {
    }
    return
  }
  func.func @transform_0(%arg0: i32) -> (i32, i32) {
    %c0_i32 = arith.constant 0 : i32
    %c0_i32_0 = arith.constant 0 : i32
    %c0_i32_1 = arith.constant 0 : i32
    return %c0_i32, %c0_i32_0 : i32, i32
  }
  func.func @transform_1(%arg0: i32) -> (i32, i32) {
    %c0_i32 = arith.constant 0 : i32
    %c0_i32_0 = arith.constant 0 : i32
    return %arg0, %c0_i32 : i32, i32
  }
  func.func @transform_2(%arg0: i32) -> (i32, i32) {
    %c0_i32 = arith.constant 0 : i32
    %c0_i32_0 = arith.constant 0 : i32
    return %arg0, %c0_i32 : i32, i32
  }
  func.func @transform_3(%arg0: i32) -> (i32, i32) {
    %c0_i32 = arith.constant 0 : i32
    %c0_i32_0 = arith.constant 0 : i32
    return %arg0, %c0_i32 : i32, i32
  }
  func.func @transform_4(%arg0: i32) -> (i32, i32) {
    %c0_i32 = arith.constant 0 : i32
    %c0_i32_0 = arith.constant 0 : i32
    return %c0_i32, %arg0 : i32, i32
  }
  func.func @transform_5(%arg0: i32) -> (i32, i32) {
    %c0_i32 = arith.constant 0 : i32
    %c0_i32_0 = arith.constant 0 : i32
    %c0_i32_1 = arith.constant 0 : i32
    return %c0_i32, %c0_i32_0 : i32, i32
  }
  func.func @transform_6(%arg0: i32) -> (i32, i32) {
    %c0_i32 = arith.constant 0 : i32
    %c0_i32_0 = arith.constant 0 : i32
    %c0_i32_1 = arith.constant 0 : i32
    return %c0_i32, %c0_i32_0 : i32, i32
  }
  func.func @transform_7(%arg0: i32) -> (i32, i32) {
    %c0_i32 = arith.constant 0 : i32
    %c0_i32_0 = arith.constant 0 : i32
    %c0_i32_1 = arith.constant 0 : i32
    return %c0_i32, %c0_i32_0 : i32, i32
  }
}

</mosaic_0001>

<llo_original>
// kernel: tpu_custom_call.1
$region0: #{tpu_custom_call.1}
  #allocation0 [shape = 'u32[]', space=smem, size = 0x4, offset = 0x4, fixed_abs, tag = 'smem constant byte address 0x4 - core index']
  #allocation1 [shape = 'u32[144,128]{1,0:T(1,128)}', space=vmem, size = 0x12000, scoped, tag = 'internal scratch']
  %s0 = inlined_call_operand.vmem [shape: bf16[128,1], index: 0, kind: input, shape index: {}]
  %s1 = inlined_call_operand.hbm [shape: bf16[3072,128], index: 1, kind: input, shape index: {}]
  %s2 = inlined_call_operand.vmem [shape: f32[3072,1], index: 2, kind: input, shape index: {}]
  %s3 = inlined_call_operand.vmem [shape: bf16[3072,49], index: 3, kind: input, shape index: {}]
  %s4 = inlined_call_operand.vmem [shape: bf16[512,3072], index: 4, kind: input, shape index: {}]
  %s5 = inlined_call_operand.vmem [shape: f32[512,1], index: 5, kind: input, shape index: {}]
  %s6 = inlined_call_operand.vmem [shape: f32[512,1], index: 6, kind: input, shape index: {}]
  %s7 = inlined_call_operand.vmem [shape: f32[512,49], index: 7, kind: output, shape index: {}]
  %s8 = sld [smem:[#allocation0]]
  $region96: #{tpu_custom_call.1} parent=0
    _
  %s10 = ssub.s32 1, %s8
  %s11 = scalar_select 0, %s10, %s8
  $region1: #{tpu_custom_call.1} parent=0
    #allocation2 [shape = 'u8[524288]{0}', space=vmem, size = 0x80000, scoped, tag = 'input window, operand 1']
    #allocation3 [shape = 's32[2]{0}', space=sflag, size = 0x8, scoped, tag = 'scoped memory for tpu_custom_call.1']
    #allocation4 [shape = 'u8[2097152]{0}', space=vmem, size = 0x200000, scoped, tag = 'input window, operand 4']
    %12 = vsyncpa [#allocation3], 0
    %s13 = scalar_lea.sflag [#allocation3], 1
    %14 = vsyncpa %s13, 0
    loop: start=0, step=1, limit=5
    $region2: #{tpu_custom_call.1} parent=1 // loop_pre_header
      _
    $region3: #{tpu_custom_call.1} parent=1 // loop_header
      %s16 = sphi 0, %s20
      %p17 = scmp.ge.s32.totalorder %s16, 5
      %s24 = sphi 0, %s24
      %s26 = sphi 0, %s24
      %s27 = sphi 0, %s26
      %s41 = sphi 0, %s27
      %s47 = sphi 0, %s49
      %s50 = sphi 0, %s47
      %s51 = sphi 0, %s50
      %s67 = sphi 0, %s51
      %s73 = sphi 0, %s75
      %s76 = sphi 0, %s73
      %s77 = sphi 0, %s76
      %s93 = sphi 0, %s77
      %s99 = sphi 0, %s101
      %s102 = sphi 0, %s99
      %s103 = sphi 0, %s102
      %s119 = sphi 0, %s103
      %s125 = sphi 0, %s127
      %s128 = sphi 0, %s125
      %s129 = sphi 0, %s128
      %s145 = sphi 0, %s129
      %s149 = sphi 0, %s149
      %s151 = sphi 0, %s149
      %s152 = sphi 0, %s151
      %s166 = sphi 0, %s152
      %s170 = sphi 0, %s170
      %s172 = sphi 0, %s170
      %s173 = sphi 0, %s172
      %s187 = sphi 0, %s173
      %s191 = sphi 0, %s191
      %s193 = sphi 0, %s191
      %s194 = sphi 0, %s193
      %s208 = sphi 0, %s194
    $region4: #{tpu_custom_call.1} parent=1 // loop_header_branch
      %19 = sbr.rel (%p17) target = $region8
    $region5: #{tpu_custom_call.1} parent=1 // loop_body
      %s21 = ssub.s32 %s16, 1
      %s22 = ssub.s32 %s16, 2
      %s23 = sadd.s32 %s16, 1
      %s25 = sadd.s32 %s24, 1
      %p28 = scmp.eq.s32.totalorder %s16, 2
      %p29 = scmp.ne.s32.totalorder %s24, %s26
      %p30 = scmp.eq.s32.totalorder %s16, 0
      %p31 = por %p29, %p30
      %p32 = scmp.ne.s32.totalorder %s24, %s26
      %p33 = scmp.eq.s32.totalorder %s21, 2
      %p34 = por %p32, %p33
      %p35 = scmp.ne.s32.totalorder %s26, %s27
      %p36 = scmp.eq.s32.totalorder %s21, 0
      %p37 = por %p35, %p36
      %p38 = scmp.ne.s32.totalorder %s26, %s27
      %p39 = scmp.eq.s32.totalorder %s22, 2
      %p40 = por %p38, %p39
      %p42 = scmp.ne.s32.totalorder %s27, %s41
      %p43 = scmp.eq.s32.totalorder %s22, 0
      %p44 = por %p42, %p43
      %s45 = ssub.s32 %s16, %s23
      %p46 = scmp.eq.s32.totalorder %s45, 0
      %s48 = sadd.s32 %s47, 1
      %s49 = scalar_select %p46, %s47, %s48
      %p52 = pneg %p46
      %p53 = scmp.eq.s32.totalorder %s16, 2
      %p54 = por %p52, %p53
      %p55 = scmp.ne.s32.totalorder %s47, %s50
      %p56 = scmp.eq.s32.totalorder %s16, 0
      %p57 = por %p55, %p56
      %p58 = scmp.ne.s32.totalorder %s47, %s50
      %p59 = scmp.eq.s32.totalorder %s21, 2
      %p60 = por %p58, %p59
      %p61 = scmp.ne.s32.totalorder %s50, %s51
      %p62 = scmp.eq.s32.totalorder %s21, 0
      %p63 = por %p61, %p62
      %p64 = scmp.ne.s32.totalorder %s50, %s51
      %p65 = scmp.eq.s32.totalorder %s22, 2
      %p66 = por %p64, %p65
      %p68 = scmp.ne.s32.totalorder %s51, %s67
      %p69 = scmp.eq.s32.totalorder %s22, 0
      %p70 = por %p68, %p69
      %s71 = ssub.s32 %s16, %s23
      %p72 = scmp.eq.s32.totalorder %s71, 0
      %s74 = sadd.s32 %s73, 1
      %s75 = scalar_select %p72, %s73, %s74
      %p78 = pneg %p72
      %p79 = scmp.eq.s32.totalorder %s16, 2
      %p80 = por %p78, %p79
      %p81 = scmp.ne.s32.totalorder %s73, %s76
      %p82 = scmp.eq.s32.totalorder %s16, 0
      %p83 = por %p81, %p82
      %p84 = scmp.ne.s32.totalorder %s73, %s76
      %p85 = scmp.eq.s32.totalorder %s21, 2
      %p86 = por %p84, %p85
      %p87 = scmp.ne.s32.totalorder %s76, %s77
      %p88 = scmp.eq.s32.totalorder %s21, 0
      %p89 = por %p87, %p88
      %p90 = scmp.ne.s32.totalorder %s76, %s77
      %p91 = scmp.eq.s32.totalorder %s22, 2
      %p92 = por %p90, %p91
      %p94 = scmp.ne.s32.totalorder %s77, %s93
      %p95 = scmp.eq.s32.totalorder %s22, 0
      %p96 = por %p94, %p95
      %s97 = ssub.s32 %s16, %s23
      %p98 = scmp.eq.s32.totalorder %s97, 0
      %s100 = sadd.s32 %s99, 1
      %s101 = scalar_select %p98, %s99, %s100
      %p104 = pneg %p98
      %p105 = scmp.eq.s32.totalorder %s16, 2
      %p106 = por %p104, %p105
      %p107 = scmp.ne.s32.totalorder %s99, %s102
      %p108 = scmp.eq.s32.totalorder %s16, 0
      %p109 = por %p107, %p108
      %p110 = scmp.ne.s32.totalorder %s99, %s102
      %p111 = scmp.eq.s32.totalorder %s21, 2
      %p112 = por %p110, %p111
      %p113 = scmp.ne.s32.totalorder %s102, %s103
      %p114 = scmp.eq.s32.totalorder %s21, 0
      %p115 = por %p113, %p114
      %p116 = scmp.ne.s32.totalorder %s102, %s103
      %p117 = scmp.eq.s32.totalorder %s22, 2
      %p118 = por %p116, %p117
      %p120 = scmp.ne.s32.totalorder %s103, %s119
      %p121 = scmp.eq.s32.totalorder %s22, 0
      %p122 = por %p120, %p121
      %s123 = ssub.s32 %s16, %s23
      %p124 = scmp.eq.s32.totalorder %s123, 0
      %s126 = sadd.s32 %s125, 1
      %s127 = scalar_select %p124, %s125, %s126
      %p130 = pneg %p124
      %p131 = scmp.eq.s32.totalorder %s16, 2
      %p132 = por %p130, %p131
      %p133 = scmp.ne.s32.totalorder %s125, %s128
      %p134 = scmp.eq.s32.totalorder %s16, 0
      %p135 = por %p133, %p134
      %p136 = scmp.ne.s32.totalorder %s125, %s128
      %p137 = scmp.eq.s32.totalorder %s21, 2
      %p138 = por %p136, %p137
      %p139 = scmp.ne.s32.totalorder %s128, %s129
      %p140 = scmp.eq.s32.totalorder %s21, 0
      %p141 = por %p139, %p140
      %p142 = scmp.ne.s32.totalorder %s128, %s129
      %p143 = scmp.eq.s32.totalorder %s22, 2
      %p144 = por %p142, %p143
      %p146 = scmp.ne.s32.totalorder %s129, %s145
      %p147 = scmp.eq.s32.totalorder %s22, 0
      %p148 = por %p146, %p147
      %s150 = sadd.s32 %s149, 1
      %p153 = scmp.eq.s32.totalorder %s16, 2
      %p154 = scmp.ne.s32.totalorder %s149, %s151
      %p155 = scmp.eq.s32.totalorder %s16, 0
      %p156 = por %p154, %p155
      %p157 = scmp.ne.s32.totalorder %s149, %s151
      %p158 = scmp.eq.s32.totalorder %s21, 2
      %p159 = por %p157, %p158
      %p160 = scmp.ne.s32.totalorder %s151, %s152
      %p161 = scmp.eq.s32.totalorder %s21, 0
      %p162 = por %p160, %p161
      %p163 = scmp.ne.s32.totalorder %s151, %s152
      %p164 = scmp.eq.s32.totalorder %s22, 2
      %p165 = por %p163, %p164
      %p167 = scmp.ne.s32.totalorder %s152, %s166
      %p168 = scmp.eq.s32.totalorder %s22, 0
      %p169 = por %p167, %p168
      %s171 = sadd.s32 %s170, 1
      %p174 = scmp.eq.s32.totalorder %s16, 2
      %p175 = scmp.ne.s32.totalorder %s170, %s172
      %p176 = scmp.eq.s32.totalorder %s16, 0
      %p177 = por %p175, %p176
      %p178 = scmp.ne.s32.totalorder %s170, %s172
      %p179 = scmp.eq.s32.totalorder %s21, 2
      %p180 = por %p178, %p179
      %p181 = scmp.ne.s32.totalorder %s172, %s173
      %p182 = scmp.eq.s32.totalorder %s21, 0
      %p183 = por %p181, %p182
      %p184 = scmp.ne.s32.totalorder %s172, %s173
      %p185 = scmp.eq.s32.totalorder %s22, 2
      %p186 = por %p184, %p185
      %p188 = scmp.ne.s32.totalorder %s173, %s187
      %p189 = scmp.eq.s32.totalorder %s22, 0
      %p190 = por %p188, %p189
      %s192 = sadd.s32 %s191, 1
      %p195 = scmp.eq.s32.totalorder %s16, 2
      %p196 = scmp.ne.s32.totalorder %s191, %s193
      %p197 = scmp.eq.s32.totalorder %s16, 0
      %p198 = por %p196, %p197
      %p199 = scmp.ne.s32.totalorder %s191, %s193
      %p200 = scmp.eq.s32.totalorder %s21, 2
      %p201 = por %p199, %p200
      %p202 = scmp.ne.s32.totalorder %s193, %s194
      %p203 = scmp.eq.s32.totalorder %s21, 0
      %p204 = por %p202, %p203
      %p205 = scmp.ne.s32.totalorder %s193, %s194
      %p206 = scmp.eq.s32.totalorder %s22, 2
      %p207 = por %p205, %p206
      %p209 = scmp.ne.s32.totalorder %s194, %s208
      %p210 = scmp.eq.s32.totalorder %s22, 0
      %p211 = por %p209, %p210
      %p212 = scmp.le.s32.totalorder 1, %s16
      %p213 = scmp.lt.s32.totalorder %s16, 4
      %p214 = pnand %p212, %p213
      %p215 = pneg %p214
      // Predicated region
      $region9: #{tpu_custom_call.1} parent=5 // pred_check
        _
      $region10: #{tpu_custom_call.1} parent=5 // pred_check_branch
        %217 = sbr.rel (%p214) target = $region12
      $region11: #{tpu_custom_call.1} parent=5 // pred_region
        %s218 = ssub.s32 %s16, 1
        // Predicated region
        $region13: #{tpu_custom_call.1} parent=11 // pred_check
          %p219 = pneg %p37
        $region14: #{tpu_custom_call.1} parent=11 // pred_check_branch
          %221 = sbr.rel (%p219) target = $region16
        $region15: #{tpu_custom_call.1} parent=11 // pred_region
          _
        $region16: #{tpu_custom_call.1} parent=11 // pred_fallthru
          _
        // Predicated region
        $region17: #{tpu_custom_call.1} parent=11 // pred_check
          %p222 = pneg %p162
        $region18: #{tpu_custom_call.1} parent=11 // pred_check_branch
          %224 = sbr.rel (%p222) target = $region20
        $region19: #{tpu_custom_call.1} parent=11 // pred_region
          _
        $region20: #{tpu_custom_call.1} parent=11 // pred_fallthru
          _
        // Predicated region
        $region21: #{tpu_custom_call.1} parent=11 // pred_check
          %p225 = pneg %p183
        $region22: #{tpu_custom_call.1} parent=11 // pred_check_branch
          %227 = sbr.rel (%p225) target = $region24
        $region23: #{tpu_custom_call.1} parent=11 // pred_region
          _
        $region24: #{tpu_custom_call.1} parent=11 // pred_fallthru
          _
      $region12: #{tpu_custom_call.1} parent=5 // pred_fallthru
        _
      %p228 = scmp.lt.s32.totalorder %s16, 3
      // Predicated region
      $region25: #{tpu_custom_call.1} parent=5 // pred_check
        %p229 = pneg %p228
      $region26: #{tpu_custom_call.1} parent=5 // pred_check_branch
        %231 = sbr.rel (%p229) target = $region28
      $region27: #{tpu_custom_call.1} parent=5 // pred_region
        // Predicated region
        $region29: #{tpu_custom_call.1} parent=27 // pred_check
          %p232 = pneg %p57
        $region30: #{tpu_custom_call.1} parent=27 // pred_check_branch
          %234 = sbr.rel (%p232) target = $region32
        $region31: #{tpu_custom_call.1} parent=27 // pred_region
          %s235 = sand.u32 %s47, 1
          %s236 = scalar_lea.sflag [#allocation3], %s235
          %s237 = sand.u32 %s47, 1
          %s238 = smul.addr %s237, 512
          %s239 = scalar_lea.vmem [#allocation2], %s238
          %s240 = smul.u32 128, %s16
          %s242 = ssub.s32 8192, 8192
          %243 = vsyncadd %s236, %s242
          %s244 = smul.addr %s240, 64
          %s245 = scalar_lea.hbm %s1, %s244
          %s246 = sshll.u32 %s239, 4
          %s247 = int_to_ptr.vmem [resolvable:$true] %s246
          %252 = dma.hbm_to_vmem [thread:$0]  %s245, 8192, %s247, %s236, 64, 64, 4
        $region32: #{tpu_custom_call.1} parent=27 // pred_fallthru
          _
        // Predicated region
        $region33: #{tpu_custom_call.1} parent=27 // pred_check
          %p253 = pneg %p83
        $region34: #{tpu_custom_call.1} parent=27 // pred_check_branch
          %255 = sbr.rel (%p253) target = $region36
        $region35: #{tpu_custom_call.1} parent=27 // pred_region
          %s256 = smul.u32 128, %s16
          %p257 = scmp.lt.s32.totalorder %s256, 383
          %s258 = scalar_select %p257, %s256, 383
          %s259 = smul.addr %s258, 8
          %s260 = scalar_lea.vmem %s2, %s259
          %s261 = smul.u32 128, %s16
        $region36: #{tpu_custom_call.1} parent=27 // pred_fallthru
          _
        // Predicated region
        $region37: #{tpu_custom_call.1} parent=27 // pred_check
          %p262 = pneg %p109
        $region38: #{tpu_custom_call.1} parent=27 // pred_check_branch
          %264 = sbr.rel (%p262) target = $region40
        $region39: #{tpu_custom_call.1} parent=27 // pred_region
          %s265 = smul.u32 128, %s16
          %p266 = scmp.lt.s32.totalorder %s265, 383
          %s267 = scalar_select %p266, %s265, 383
          %s268 = smul.addr %s267, 4
          %s269 = scalar_lea.vmem %s3, %s268
          %s270 = smul.u32 128, %s16
        $region40: #{tpu_custom_call.1} parent=27 // pred_fallthru
          _
        // Predicated region
        $region41: #{tpu_custom_call.1} parent=27 // pred_check
          %p271 = pneg %p135
        $region42: #{tpu_custom_call.1} parent=27 // pred_check_branch
          %273 = sbr.rel (%p271) target = $region44
        $region43: #{tpu_custom_call.1} parent=27 // pred_region
          %s274 = sand.u32 %s125, 1
          %s275 = sand.u32 %s125, 1
          %s276 = smul.addr %s275, 2048
          %s277 = scalar_lea.vmem [#allocation4], %s276
          %s278 = smul.u32 8, %s16
          %s279 = smul.addr %s278, 4
          %s280 = scalar_lea.vmem %s4, %s279
          // Predicated region
          $region45: #{tpu_custom_call.1} parent=43 // pred_check
            _
          $region46: #{tpu_custom_call.1} parent=43 // pred_check_branch
            %282 = sbr.rel (0) target = $region48
          $region47: #{tpu_custom_call.1} parent=43 // pred_region
            // Predicated region
            $region49: #{tpu_custom_call.1} parent=47 // pred_check
              _
            $region50: #{tpu_custom_call.1} parent=47 // pred_check_branch
              %284 = sbr.rel (0) target = $region52
            $region51: #{tpu_custom_call.1} parent=47 // pred_region
              loop: start=0, step=1, limit=1
              $region53: #{tpu_custom_call.1} parent=51 // loop_pre_header
                _
              $region54: #{tpu_custom_call.1} parent=51 // loop_header
                %s286 = sphi 0, %s290
                %p287 = scmp.ge.s32.totalorder %s286, 1
                %s291 = sphi %s280, %s280
                %s292 = sphi %s277, %s277
              $region55: #{tpu_custom_call.1} parent=51 // loop_header_branch
                %289 = sbr.rel (%p287) target = $region59
              $region56: #{tpu_custom_call.1} parent=51 // loop_body
                %v293 = vld [vmem:[%s291] sm:$0xff]
                %294 = vst [vmem:[%s292] sm:$0xff] %v293
                %v295 = vld [vmem:[%s291 + $0x8] sm:$0xff]
                %296 = vst [vmem:[%s292 + $0x8] sm:$0xff] %v295
                %v297 = vld [vmem:[%s291 + $0x10] sm:$0xff]
                %298 = vst [vmem:[%s292 + $0x10] sm:$0xff] %v297
                %v299 = vld [vmem:[%s291 + $0x18] sm:$0xff]
                %300 = vst [vmem:[%s292 + $0x18] sm:$0xff] %v299
                %v301 = vld [vmem:[%s291 + $0x60] sm:$0xff]
                %302 = vst [vmem:[%s292 + $0x20] sm:$0xff] %v301
                %v303 = vld [vmem:[%s291 + $0x68] sm:$0xff]
                %304 = vst [vmem:[%s292 + $0x28] sm:$0xff] %v303
                %v305 = vld [vmem:[%s291 + $0x70] sm:$0xff]
                %306 = vst [vmem:[%s292 + $0x30] sm:$0xff] %v305
                %v307 = vld [vmem:[%s291 + $0x78] sm:$0xff]
                %308 = vst [vmem:[%s292 + $0x38] sm:$0xff] %v307
                %v309 = vld [vmem:[%s291 + $0xc0] sm:$0xff]
                %310 = vst [vmem:[%s292 + $0x40] sm:$0xff] %v309
                %v311 = vld [vmem:[%s291 + $0xc8] sm:$0xff]
                %312 = vst [vmem:[%s292 + $0x48] sm:$0xff] %v311
                %v313 = vld [vmem:[%s291 + $0xd0] sm:$0xff]
                %314 = vst [vmem:[%s292 + $0x50] sm:$0xff] %v313
                %v315 = vld [vmem:[%s291 + $0xd8] sm:$0xff]
                %316 = vst [vmem:[%s292 + $0x58] sm:$0xff] %v315
                %v317 = vld [vmem:[%s291 + $0x120] sm:$0xff]
                %318 = vst [vmem:[%s292 + $0x60] sm:$0xff] %v317
                %v319 = vld [vmem:[%s291 + $0x128] sm:$0xff]
                %320 = vst [vmem:[%s292 + $0x68] sm:$0xff] %v319
                %v321 = vld [vmem:[%s291 + $0x130] sm:$0xff]
                %322 = vst [vmem:[%s292 + $0x70] sm:$0xff] %v321
                %v323 = vld [vmem:[%s291 + $0x138] sm:$0xff]
                %324 = vst [vmem:[%s292 + $0x78] sm:$0xff] %v323
                %v325 = vld [vmem:[%s291 + $0x180] sm:$0xff]
                %326 = vst [vmem:[%s292 + $0x80] sm:$0xff] %v325
                %v327 = vld [vmem:[%s291 + $0x188] sm:$0xff]
                %328 = vst [vmem:[%s292 + $0x88] sm:$0xff] %v327
                %v329 = vld [vmem:[%s291 + $0x190] sm:$0xff]
                %330 = vst [vmem:[%s292 + $0x90] sm:$0xff] %v329
                %v331 = vld [vmem:[%s291 + $0x198] sm:$0xff]
                %332 = vst [vmem:[%s292 + $0x98] sm:$0xff] %v331
                %v333 = vld [vmem:[%s291 + $0x1e0] sm:$0xff]
                %334 = vst [vmem:[%s292 + $0xa0] sm:$0xff] %v333
                %v335 = vld [vmem:[%s291 + $0x1e8] sm:$0xff]
                %336 = vst [vmem:[%s292 + $0xa8] sm:$0xff] %v335
                %v337 = vld [vmem:[%s291 + $0x1f0] sm:$0xff]
                %338 = vst [vmem:[%s292 + $0xb0] sm:$0xff] %v337
                %v339 = vld [vmem:[%s291 + $0x1f8] sm:$0xff]
                %340 = vst [vmem:[%s292 + $0xb8] sm:$0xff] %v339
                %v341 = vld [vmem:[%s291 + $0x240] sm:$0xff]
                %342 = vst [vmem:[%s292 + $0xc0] sm:$0xff] %v341
                %v343 = vld [vmem:[%s291 + $0x248] sm:$0xff]
                %344 = vst [vmem:[%s292 + $0xc8] sm:$0xff] %v343
                %v345 = vld [vmem:[%s291 + $0x250] sm:$0xff]
                %346 = vst [vmem:[%s292 + $0xd0] sm:$0xff] %v345
                %v347 = vld [vmem:[%s291 + $0x258] sm:$0xff]
                %348 = vst [vmem:[%s292 + $0xd8] sm:$0xff] %v347
                %v349 = vld [vmem:[%s291 + $0x2a0] sm:$0xff]
                %350 = vst [vmem:[%s292 + $0xe0] sm:$0xff] %v349
                %v351 = vld [vmem:[%s291 + $0x2a8] sm:$0xff]
                %352 = vst [vmem:[%s292 + $0xe8] sm:$0xff] %v351
                %v353 = vld [vmem:[%s291 + $0x2b0] sm:$0xff]
                %354 = vst [vmem:[%s292 + $0xf0] sm:$0xff] %v353
                %v355 = vld [vmem:[%s291 + $0x2b8] sm:$0xff]
                %356 = vst [vmem:[%s292 + $0xf8] sm:$0xff] %v355
                %v357 = vld [vmem:[%s291 + $0x300] sm:$0xff]
                %358 = vst [vmem:[%s292 + $0x100] sm:$0xff] %v357
                %v359 = vld [vmem:[%s291 + $0x308] sm:$0xff]
                %360 = vst [vmem:[%s292 + $0x108] sm:$0xff] %v359
                %v361 = vld [vmem:[%s291 + $0x310] sm:$0xff]
                %362 = vst [vmem:[%s292 + $0x110] sm:$0xff] %v361
                %v363 = vld [vmem:[%s291 + $0x318] sm:$0xff]
                %364 = vst [vmem:[%s292 + $0x118] sm:$0xff] %v363
                %v365 = vld [vmem:[%s291 + $0x360] sm:$0xff]
                %366 = vst [vmem:[%s292 + $0x120] sm:$0xff] %v365
                %v367 = vld [vmem:[%s291 + $0x368] sm:$0xff]
                %368 = vst [vmem:[%s292 + $0x128] sm:$0xff] %v367
                %v369 = vld [vmem:[%s291 + $0x370] sm:$0xff]
                %370 = vst [vmem:[%s292 + $0x130] sm:$0xff] %v369
                %v371 = vld [vmem:[%s291 + $0x378] sm:$0xff]
                %372 = vst [vmem:[%s292 + $0x138] sm:$0xff] %v371
                %v373 = vld [vmem:[%s291 + $0x3c0] sm:$0xff]
                %374 = vst [vmem:[%s292 + $0x140] sm:$0xff] %v373
                %v375 = vld [vmem:[%s291 + $0x3c8] sm:$0xff]
                %376 = vst [vmem:[%s292 + $0x148] sm:$0xff] %v375
                %v377 = vld [vmem:[%s291 + $0x3d0] sm:$0xff]
                %378 = vst [vmem:[%s292 + $0x150] sm:$0xff] %v377
                %v379 = vld [vmem:[%s291 + $0x3d8] sm:$0xff]
                %380 = vst [vmem:[%s292 + $0x158] sm:$0xff] %v379
                %v381 = vld [vmem:[%s291 + $0x420] sm:$0xff]
                %382 = vst [vmem:[%s292 + $0x160] sm:$0xff] %v381
                %v383 = vld [vmem:[%s291 + $0x428] sm:$0xff]
                %384 = vst [vmem:[%s292 + $0x168] sm:$0xff] %v383
                %v385 = vld [vmem:[%s291 + $0x430] sm:$0xff]
                %386 = vst [vmem:[%s292 + $0x170] sm:$0xff] %v385
                %v387 = vld [vmem:[%s291 + $0x438] sm:$0xff]
                %388 = vst [vmem:[%s292 + $0x178] sm:$0xff] %v387
                %v389 = vld [vmem:[%s291 + $0x480] sm:$0xff]
                %390 = vst [vmem:[%s292 + $0x180] sm:$0xff] %v389
                %v391 = vld [vmem:[%s291 + $0x488] sm:$0xff]
                %392 = vst [vmem:[%s292 + $0x188] sm:$0xff] %v391
                %v393 = vld [vmem:[%s291 + $0x490] sm:$0xff]
                %394 = vst [vmem:[%s292 + $0x190] sm:$0xff] %v393
                %v395 = vld [vmem:[%s291 + $0x498] sm:$0xff]
                %396 = vst [vmem:[%s292 + $0x198] sm:$0xff] %v395
                %v397 = vld [vmem:[%s291 + $0x4e0] sm:$0xff]
                %398 = vst [vmem:[%s292 + $0x1a0] sm:$0xff] %v397
                %v399 = vld [vmem:[%s291 + $0x4e8] sm:$0xff]
                %400 = vst [vmem:[%s292 + $0x1a8] sm:$0xff] %v399
                %v401 = vld [vmem:[%s291 + $0x4f0] sm:$0xff]
                %402 = vst [vmem:[%s292 + $0x1b0] sm:$0xff] %v401
                %v403 = vld [vmem:[%s291 + $0x4f8] sm:$0xff]
                %404 = vst [vmem:[%s292 + $0x1b8] sm:$0xff] %v403
                %v405 = vld [vmem:[%s291 + $0x540] sm:$0xff]
                %406 = vst [vmem:[%s292 + $0x1c0] sm:$0xff] %v405
                %v407 = vld [vmem:[%s291 + $0x548] sm:$0xff]
                %408 = vst [vmem:[%s292 + $0x1c8] sm:$0xff] %v407
                %v409 = vld [vmem:[%s291 + $0x550] sm:$0xff]
                %410 = vst [vmem:[%s292 + $0x1d0] sm:$0xff] %v409
                %v411 = vld [vmem:[%s291 + $0x558] sm:$0xff]
                %412 = vst [vmem:[%s292 + $0x1d8] sm:$0xff] %v411
                %v413 = vld [vmem:[%s291 + $0x5a0] sm:$0xff]
                %414 = vst [vmem:[%s292 + $0x1e0] sm:$0xff] %v413
                %v415 = vld [vmem:[%s291 + $0x5a8] sm:$0xff]
                %416 = vst [vmem:[%s292 + $0x1e8] sm:$0xff] %v415
                %v417 = vld [vmem:[%s291 + $0x5b0] sm:$0xff]
                %418 = vst [vmem:[%s292 + $0x1f0] sm:$0xff] %v417
                %v419 = vld [vmem:[%s291 + $0x5b8] sm:$0xff]
                %420 = vst [vmem:[%s292 + $0x1f8] sm:$0xff] %v419
                %v421 = vld [vmem:[%s291 + $0x600] sm:$0xff]
                %422 = vst [vmem:[%s292 + $0x200] sm:$0xff] %v421
                %v423 = vld [vmem:[%s291 + $0x608] sm:$0xff]
                %424 = vst [vmem:[%s292 + $0x208] sm:$0xff] %v423
                %v425 = vld [vmem:[%s291 + $0x610] sm:$0xff]
                %426 = vst [vmem:[%s292 + $0x210] sm:$0xff] %v425
                %v427 = vld [vmem:[%s291 + $0x618] sm:$0xff]
                %428 = vst [vmem:[%s292 + $0x218] sm:$0xff] %v427
                %v429 = vld [vmem:[%s291 + $0x660] sm:$0xff]
                %430 = vst [vmem:[%s292 + $0x220] sm:$0xff] %v429
                %v431 = vld [vmem:[%s291 + $0x668] sm:$0xff]
                %432 = vst [vmem:[%s292 + $0x228] sm:$0xff] %v431
                %v433 = vld [vmem:[%s291 + $0x670] sm:$0xff]
                %434 = vst [vmem:[%s292 + $0x230] sm:$0xff] %v433
                %v435 = vld [vmem:[%s291 + $0x678] sm:$0xff]
                %436 = vst [vmem:[%s292 + $0x238] sm:$0xff] %v435
                %v437 = vld [vmem:[%s291 + $0x6c0] sm:$0xff]
                %438 = vst [vmem:[%s292 + $0x240] sm:$0xff] %v437
                %v439 = vld [vmem:[%s291 + $0x6c8] sm:$0xff]
                %440 = vst [vmem:[%s292 + $0x248] sm:$0xff] %v439
                %v441 = vld [vmem:[%s291 + $0x6d0] sm:$0xff]
                %442 = vst [vmem:[%s292 + $0x250] sm:$0xff] %v441
                %v443 = vld [vmem:[%s291 + $0x6d8] sm:$0xff]
                %444 = vst [vmem:[%s292 + $0x258] sm:$0xff] %v443
                %v445 = vld [vmem:[%s291 + $0x720] sm:$0xff]
                %446 = vst [vmem:[%s292 + $0x260] sm:$0xff] %v445
                %v447 = vld [vmem:[%s291 + $0x728] sm:$0xff]
                %448 = vst [vmem:[%s292 + $0x268] sm:$0xff] %v447
                %v449 = vld [vmem:[%s291 + $0x730] sm:$0xff]
                %450 = vst [vmem:[%s292 + $0x270] sm:$0xff] %v449
                %v451 = vld [vmem:[%s291 + $0x738] sm:$0xff]
                %452 = vst [vmem:[%s292 + $0x278] sm:$0xff] %v451
                %v453 = vld [vmem:[%s291 + $0x780] sm:$0xff]
                %454 = vst [vmem:[%s292 + $0x280] sm:$0xff] %v453
                %v455 = vld [vmem:[%s291 + $0x788] sm:$0xff]
                %456 = vst [vmem:[%s292 + $0x288] sm:$0xff] %v455
                %v457 = vld [vmem:[%s291 + $0x790] sm:$0xff]
                %458 = vst [vmem:[%s292 + $0x290] sm:$0xff] %v457
                %v459 = vld [vmem:[%s291 + $0x798] sm:$0xff]
                %460 = vst [vmem:[%s292 + $0x298] sm:$0xff] %v459
                %v461 = vld [vmem:[%s291 + $0x7e0] sm:$0xff]
                %462 = vst [vmem:[%s292 + $0x2a0] sm:$0xff] %v461
                %v463 = vld [vmem:[%s291 + $0x7e8] sm:$0xff]
                %464 = vst [vmem:[%s292 + $0x2a8] sm:$0xff] %v463
                %v465 = vld [vmem:[%s291 + $0x7f0] sm:$0xff]
                %466 = vst [vmem:[%s292 + $0x2b0] sm:$0xff] %v465
                %v467 = vld [vmem:[%s291 + $0x7f8] sm:$0xff]
                %468 = vst [vmem:[%s292 + $0x2b8] sm:$0xff] %v467
                %v469 = vld [vmem:[%s291 + $0x840] sm:$0xff]
                %470 = vst [vmem:[%s292 + $0x2c0] sm:$0xff] %v469
                %v471 = vld [vmem:[%s291 + $0x848] sm:$0xff]
                %472 = vst [vmem:[%s292 + $0x2c8] sm:$0xff] %v471
                %v473 = vld [vmem:[%s291 + $0x850] sm:$0xff]
                %474 = vst [vmem:[%s292 + $0x2d0] sm:$0xff] %v473
                %v475 = vld [vmem:[%s291 + $0x858] sm:$0xff]
                %476 = vst [vmem:[%s292 + $0x2d8] sm:$0xff] %v475
                %v477 = vld [vmem:[%s291 + $0x8a0] sm:$0xff]
                %478 = vst [vmem:[%s292 + $0x2e0] sm:$0xff] %v477
                %v479 = vld [vmem:[%s291 + $0x8a8] sm:$0xff]
                %480 = vst [vmem:[%s292 + $0x2e8] sm:$0xff] %v479
                %v481 = vld [vmem:[%s291 + $0x8b0] sm:$0xff]
                %482 = vst [vmem:[%s292 + $0x2f0] sm:$0xff] %v481
                %v483 = vld [vmem:[%s291 + $0x8b8] sm:$0xff]
                %484 = vst [vmem:[%s292 + $0x2f8] sm:$0xff] %v483
                %v485 = vld [vmem:[%s291 + $0x900] sm:$0xff]
                %486 = vst [vmem:[%s292 + $0x300] sm:$0xff] %v485
                %v487 = vld [vmem:[%s291 + $0x908] sm:$0xff]
                %488 = vst [vmem:[%s292 + $0x308] sm:$0xff] %v487
                %v489 = vld [vmem:[%s291 + $0x910] sm:$0xff]
                %490 = vst [vmem:[%s292 + $0x310] sm:$0xff] %v489
                %v491 = vld [vmem:[%s291 + $0x918] sm:$0xff]
                %492 = vst [vmem:[%s292 + $0x318] sm:$0xff] %v491
                %v493 = vld [vmem:[%s291 + $0x960] sm:$0xff]
                %494 = vst [vmem:[%s292 + $0x320] sm:$0xff] %v493
                %v495 = vld [vmem:[%s291 + $0x968] sm:$0xff]
                %496 = vst [vmem:[%s292 + $0x328] sm:$0xff] %v495
                %v497 = vld [vmem:[%s291 + $0x970] sm:$0xff]
                %498 = vst [vmem:[%s292 + $0x330] sm:$0xff] %v497
                %v499 = vld [vmem:[%s291 + $0x978] sm:$0xff]
                %500 = vst [vmem:[%s292 + $0x338] sm:$0xff] %v499
                %v501 = vld [vmem:[%s291 + $0x9c0] sm:$0xff]
                %502 = vst [vmem:[%s292 + $0x340] sm:$0xff] %v501
                %v503 = vld [vmem:[%s291 + $0x9c8] sm:$0xff]
                %504 = vst [vmem:[%s292 + $0x348] sm:$0xff] %v503
                %v505 = vld [vmem:[%s291 + $0x9d0] sm:$0xff]
                %506 = vst [vmem:[%s292 + $0x350] sm:$0xff] %v505
                %v507 = vld [vmem:[%s291 + $0x9d8] sm:$0xff]
                %508 = vst [vmem:[%s292 + $0x358] sm:$0xff] %v507
                %v509 = vld [vmem:[%s291 + $0xa20] sm:$0xff]
                %510 = vst [vmem:[%s292 + $0x360] sm:$0xff] %v509
                %v511 = vld [vmem:[%s291 + $0xa28] sm:$0xff]
                %512 = vst [vmem:[%s292 + $0x368] sm:$0xff] %v511
                %v513 = vld [vmem:[%s291 + $0xa30] sm:$0xff]
                %514 = vst [vmem:[%s292 + $0x370] sm:$0xff] %v513
                %v515 = vld [vmem:[%s291 + $0xa38] sm:$0xff]
                %516 = vst [vmem:[%s292 + $0x378] sm:$0xff] %v515
                %v517 = vld [vmem:[%s291 + $0xa80] sm:$0xff]
                %518 = vst [vmem:[%s292 + $0x380] sm:$0xff] %v517
                %v519 = vld [vmem:[%s291 + $0xa88] sm:$0xff]
                %520 = vst [vmem:[%s292 + $0x388] sm:$0xff] %v519
                %v521 = vld [vmem:[%s291 + $0xa90] sm:$0xff]
                %522 = vst [vmem:[%s292 + $0x390] sm:$0xff] %v521
                %v523 = vld [vmem:[%s291 + $0xa98] sm:$0xff]
                %524 = vst [vmem:[%s292 + $0x398] sm:$0xff] %v523
                %v525 = vld [vmem:[%s291 + $0xae0] sm:$0xff]
                %526 = vst [vmem:[%s292 + $0x3a0] sm:$0xff] %v525
                %v527 = vld [vmem:[%s291 + $0xae8] sm:$0xff]
                %528 = vst [vmem:[%s292 + $0x3a8] sm:$0xff] %v527
                %v529 = vld [vmem:[%s291 + $0xaf0] sm:$0xff]
                %530 = vst [vmem:[%s292 + $0x3b0] sm:$0xff] %v529
                %v531 = vld [vmem:[%s291 + $0xaf8] sm:$0xff]
                %532 = vst [vmem:[%s292 + $0x3b8] sm:$0xff] %v531
                %v533 = vld [vmem:[%s291 + $0xb40] sm:$0xff]
                %534 = vst [vmem:[%s292 + $0x3c0] sm:$0xff] %v533
                %v535 = vld [vmem:[%s291 + $0xb48] sm:$0xff]
                %536 = vst [vmem:[%s292 + $0x3c8] sm:$0xff] %v535
                %v537 = vld [vmem:[%s291 + $0xb50] sm:$0xff]
                %538 = vst [vmem:[%s292 + $0x3d0] sm:$0xff] %v537
                %v539 = vld [vmem:[%s291 + $0xb58] sm:$0xff]
                %540 = vst [vmem:[%s292 + $0x3d8] sm:$0xff] %v539
                %v541 = vld [vmem:[%s291 + $0xba0] sm:$0xff]
                %542 = vst [vmem:[%s292 + $0x3e0] sm:$0xff] %v541
                %v543 = vld [vmem:[%s291 + $0xba8] sm:$0xff]
                %544 = vst [vmem:[%s292 + $0x3e8] sm:$0xff] %v543
                %v545 = vld [vmem:[%s291 + $0xbb0] sm:$0xff]
                %546 = vst [vmem:[%s292 + $0x3f0] sm:$0xff] %v545
                %v547 = vld [vmem:[%s291 + $0xbb8] sm:$0xff]
                %548 = vst [vmem:[%s292 + $0x3f8] sm:$0xff] %v547
                %v549 = vld [vmem:[%s291 + $0xc00] sm:$0xff]
                %550 = vst [vmem:[%s292 + $0x400] sm:$0xff] %v549
                %v551 = vld [vmem:[%s291 + $0xc08] sm:$0xff]
                %552 = vst [vmem:[%s292 + $0x408] sm:$0xff] %v551
                %v553 = vld [vmem:[%s291 + $0xc10] sm:$0xff]
                %554 = vst [vmem:[%s292 + $0x410] sm:$0xff] %v553
                %v555 = vld [vmem:[%s291 + $0xc18] sm:$0xff]
                %556 = vst [vmem:[%s292 + $0x418] sm:$0xff] %v555
                %v557 = vld [vmem:[%s291 + $0xc60] sm:$0xff]
                %558 = vst [vmem:[%s292 + $0x420] sm:$0xff] %v557
                %v559 = vld [vmem:[%s291 + $0xc68] sm:$0xff]
                %560 = vst [vmem:[%s292 + $0x428] sm:$0xff] %v559
                %v561 = vld [vmem:[%s291 + $0xc70] sm:$0xff]
                %562 = vst [vmem:[%s292 + $0x430] sm:$0xff] %v561
                %v563 = vld [vmem:[%s291 + $0xc78] sm:$0xff]
                %564 = vst [vmem:[%s292 + $0x438] sm:$0xff] %v563
                %v565 = vld [vmem:[%s291 + $0xcc0] sm:$0xff]
                %566 = vst [vmem:[%s292 + $0x440] sm:$0xff] %v565
                %v567 = vld [vmem:[%s291 + $0xcc8] sm:$0xff]
                %568 = vst [vmem:[%s292 + $0x448] sm:$0xff] %v567
                %v569 = vld [vmem:[%s291 + $0xcd0] sm:$0xff]
                %570 = vst [vmem:[%s292 + $0x450] sm:$0xff] %v569
                %v571 = vld [vmem:[%s291 + $0xcd8] sm:$0xff]
                %572 = vst [vmem:[%s292 + $0x458] sm:$0xff] %v571
                %v573 = vld [vmem:[%s291 + $0xd20] sm:$0xff]
                %574 = vst [vmem:[%s292 + $0x460] sm:$0xff] %v573
                %v575 = vld [vmem:[%s291 + $0xd28] sm:$0xff]
                %576 = vst [vmem:[%s292 + $0x468] sm:$0xff] %v575
                %v577 = vld [vmem:[%s291 + $0xd30] sm:$0xff]
                %578 = vst [vmem:[%s292 + $0x470] sm:$0xff] %v577
                %v579 = vld [vmem:[%s291 + $0xd38] sm:$0xff]
                %580 = vst [vmem:[%s292 + $0x478] sm:$0xff] %v579
                %v581 = vld [vmem:[%s291 + $0xd80] sm:$0xff]
                %582 = vst [vmem:[%s292 + $0x480] sm:$0xff] %v581
                %v583 = vld [vmem:[%s291 + $0xd88] sm:$0xff]
                %584 = vst [vmem:[%s292 + $0x488] sm:$0xff] %v583
                %v585 = vld [vmem:[%s291 + $0xd90] sm:$0xff]
                %586 = vst [vmem:[%s292 + $0x490] sm:$0xff] %v585
                %v587 = vld [vmem:[%s291 + $0xd98] sm:$0xff]
                %588 = vst [vmem:[%s292 + $0x498] sm:$0xff] %v587
                %v589 = vld [vmem:[%s291 + $0xde0] sm:$0xff]
                %590 = vst [vmem:[%s292 + $0x4a0] sm:$0xff] %v589
                %v591 = vld [vmem:[%s291 + $0xde8] sm:$0xff]
                %592 = vst [vmem:[%s292 + $0x4a8] sm:$0xff] %v591
                %v593 = vld [vmem:[%s291 + $0xdf0] sm:$0xff]
                %594 = vst [vmem:[%s292 + $0x4b0] sm:$0xff] %v593
                %v595 = vld [vmem:[%s291 + $0xdf8] sm:$0xff]
                %596 = vst [vmem:[%s292 + $0x4b8] sm:$0xff] %v595
                %v597 = vld [vmem:[%s291 + $0xe40] sm:$0xff]
                %598 = vst [vmem:[%s292 + $0x4c0] sm:$0xff] %v597
                %v599 = vld [vmem:[%s291 + $0xe48] sm:$0xff]
                %600 = vst [vmem:[%s292 + $0x4c8] sm:$0xff] %v599
                %v601 = vld [vmem:[%s291 + $0xe50] sm:$0xff]
                %602 = vst [vmem:[%s292 + $0x4d0] sm:$0xff] %v601
                %v603 = vld [vmem:[%s291 + $0xe58] sm:$0xff]
                %604 = vst [vmem:[%s292 + $0x4d8] sm:$0xff] %v603
                %v605 = vld [vmem:[%s291 + $0xea0] sm:$0xff]
                %606 = vst [vmem:[%s292 + $0x4e0] sm:$0xff] %v605
                %v607 = vld [vmem:[%s291 + $0xea8] sm:$0xff]
                %608 = vst [vmem:[%s292 + $0x4e8] sm:$0xff] %v607
                %v609 = vld [vmem:[%s291 + $0xeb0] sm:$0xff]
                %610 = vst [vmem:[%s292 + $0x4f0] sm:$0xff] %v609
                %v611 = vld [vmem:[%s291 + $0xeb8] sm:$0xff]
                %612 = vst [vmem:[%s292 + $0x4f8] sm:$0xff] %v611
                %v613 = vld [vmem:[%s291 + $0xf00] sm:$0xff]
                %614 = vst [vmem:[%s292 + $0x500] sm:$0xff] %v613
                %v615 = vld [vmem:[%s291 + $0xf08] sm:$0xff]
                %616 = vst [vmem:[%s292 + $0x508] sm:$0xff] %v615
                %v617 = vld [vmem:[%s291 + $0xf10] sm:$0xff]
                %618 = vst [vmem:[%s292 + $0x510] sm:$0xff] %v617
                %v619 = vld [vmem:[%s291 + $0xf18] sm:$0xff]
                %620 = vst [vmem:[%s292 + $0x518] sm:$0xff] %v619
                %v621 = vld [vmem:[%s291 + $0xf60] sm:$0xff]
                %622 = vst [vmem:[%s292 + $0x520] sm:$0xff] %v621
                %v623 = vld [vmem:[%s291 + $0xf68] sm:$0xff]
                %624 = vst [vmem:[%s292 + $0x528] sm:$0xff] %v623
                %v625 = vld [vmem:[%s291 + $0xf70] sm:$0xff]
                %626 = vst [vmem:[%s292 + $0x530] sm:$0xff] %v625
                %v627 = vld [vmem:[%s291 + $0xf78] sm:$0xff]
                %628 = vst [vmem:[%s292 + $0x538] sm:$0xff] %v627
                %v629 = vld [vmem:[%s291 + $0xfc0] sm:$0xff]
                %630 = vst [vmem:[%s292 + $0x540] sm:$0xff] %v629
                %v631 = vld [vmem:[%s291 + $0xfc8] sm:$0xff]
                %632 = vst [vmem:[%s292 + $0x548] sm:$0xff] %v631
                %v633 = vld [vmem:[%s291 + $0xfd0] sm:$0xff]
                %634 = vst [vmem:[%s292 + $0x550] sm:$0xff] %v633
                %v635 = vld [vmem:[%s291 + $0xfd8] sm:$0xff]
                %636 = vst [vmem:[%s292 + $0x558] sm:$0xff] %v635
                %v637 = vld [vmem:[%s291 + $0x1020] sm:$0xff]
                %638 = vst [vmem:[%s292 + $0x560] sm:$0xff] %v637
                %v639 = vld [vmem:[%s291 + $0x1028] sm:$0xff]
                %640 = vst [vmem:[%s292 + $0x568] sm:$0xff] %v639
                %v641 = vld [vmem:[%s291 + $0x1030] sm:$0xff]
                %642 = vst [vmem:[%s292 + $0x570] sm:$0xff] %v641
                %v643 = vld [vmem:[%s291 + $0x1038] sm:$0xff]
                %644 = vst [vmem:[%s292 + $0x578] sm:$0xff] %v643
                %v645 = vld [vmem:[%s291 + $0x1080] sm:$0xff]
                %646 = vst [vmem:[%s292 + $0x580] sm:$0xff] %v645
                %v647 = vld [vmem:[%s291 + $0x1088] sm:$0xff]
                %648 = vst [vmem:[%s292 + $0x588] sm:$0xff] %v647
                %v649 = vld [vmem:[%s291 + $0x1090] sm:$0xff]
                %650 = vst [vmem:[%s292 + $0x590] sm:$0xff] %v649
                %v651 = vld [vmem:[%s291 + $0x1098] sm:$0xff]
                %652 = vst [vmem:[%s292 + $0x598] sm:$0xff] %v651
                %v653 = vld [vmem:[%s291 + $0x10e0] sm:$0xff]
                %654 = vst [vmem:[%s292 + $0x5a0] sm:$0xff] %v653
                %v655 = vld [vmem:[%s291 + $0x10e8] sm:$0xff]
                %656 = vst [vmem:[%s292 + $0x5a8] sm:$0xff] %v655
                %v657 = vld [vmem:[%s291 + $0x10f0] sm:$0xff]
                %658 = vst [vmem:[%s292 + $0x5b0] sm:$0xff] %v657
                %v659 = vld [vmem:[%s291 + $0x10f8] sm:$0xff]
                %660 = vst [vmem:[%s292 + $0x5b8] sm:$0xff] %v659
                %v661 = vld [vmem:[%s291 + $0x1140] sm:$0xff]
                %662 = vst [vmem:[%s292 + $0x5c0] sm:$0xff] %v661
                %v663 = vld [vmem:[%s291 + $0x1148] sm:$0xff]
                %664 = vst [vmem:[%s292 + $0x5c8] sm:$0xff] %v663
                %v665 = vld [vmem:[%s291 + $0x1150] sm:$0xff]
                %666 = vst [vmem:[%s292 + $0x5d0] sm:$0xff] %v665
                %v667 = vld [vmem:[%s291 + $0x1158] sm:$0xff]
                %668 = vst [vmem:[%s292 + $0x5d8] sm:$0xff] %v667
                %v669 = vld [vmem:[%s291 + $0x11a0] sm:$0xff]
                %670 = vst [vmem:[%s292 + $0x5e0] sm:$0xff] %v669
                %v671 = vld [vmem:[%s291 + $0x11a8] sm:$0xff]
                %672 = vst [vmem:[%s292 + $0x5e8] sm:$0xff] %v671
                %v673 = vld [vmem:[%s291 + $0x11b0] sm:$0xff]
                %674 = vst [vmem:[%s292 + $0x5f0] sm:$0xff] %v673
                %v675 = vld [vmem:[%s291 + $0x11b8] sm:$0xff]
                %676 = vst [vmem:[%s292 + $0x5f8] sm:$0xff] %v675
                %v677 = vld [vmem:[%s291 + $0x1200] sm:$0xff]
                %678 = vst [vmem:[%s292 + $0x600] sm:$0xff] %v677
                %v679 = vld [vmem:[%s291 + $0x1208] sm:$0xff]
                %680 = vst [vmem:[%s292 + $0x608] sm:$0xff] %v679
                %v681 = vld [vmem:[%s291 + $0x1210] sm:$0xff]
                %682 = vst [vmem:[%s292 + $0x610] sm:$0xff] %v681
                %v683 = vld [vmem:[%s291 + $0x1218] sm:$0xff]
                %684 = vst [vmem:[%s292 + $0x618] sm:$0xff] %v683
                %v685 = vld [vmem:[%s291 + $0x1260] sm:$0xff]
                %686 = vst [vmem:[%s292 + $0x620] sm:$0xff] %v685
                %v687 = vld [vmem:[%s291 + $0x1268] sm:$0xff]
                %688 = vst [vmem:[%s292 + $0x628] sm:$0xff] %v687
                %v689 = vld [vmem:[%s291 + $0x1270] sm:$0xff]
                %690 = vst [vmem:[%s292 + $0x630] sm:$0xff] %v689
                %v691 = vld [vmem:[%s291 + $0x1278] sm:$0xff]
                %692 = vst [vmem:[%s292 + $0x638] sm:$0xff] %v691
                %v693 = vld [vmem:[%s291 + $0x12c0] sm:$0xff]
                %694 = vst [vmem:[%s292 + $0x640] sm:$0xff] %v693
                %v695 = vld [vmem:[%s291 + $0x12c8] sm:$0xff]
                %696 = vst [vmem:[%s292 + $0x648] sm:$0xff] %v695
                %v697 = vld [vmem:[%s291 + $0x12d0] sm:$0xff]
                %698 = vst [vmem:[%s292 + $0x650] sm:$0xff] %v697
                %v699 = vld [vmem:[%s291 + $0x12d8] sm:$0xff]
                %700 = vst [vmem:[%s292 + $0x658] sm:$0xff] %v699
                %v701 = vld [vmem:[%s291 + $0x1320] sm:$0xff]
                %702 = vst [vmem:[%s292 + $0x660] sm:$0xff] %v701
                %v703 = vld [vmem:[%s291 + $0x1328] sm:$0xff]
                %704 = vst [vmem:[%s292 + $0x668] sm:$0xff] %v703
                %v705 = vld [vmem:[%s291 + $0x1330] sm:$0xff]
                %706 = vst [vmem:[%s292 + $0x670] sm:$0xff] %v705
                %v707 = vld [vmem:[%s291 + $0x1338] sm:$0xff]
                %708 = vst [vmem:[%s292 + $0x678] sm:$0xff] %v707
                %v709 = vld [vmem:[%s291 + $0x1380] sm:$0xff]
                %710 = vst [vmem:[%s292 + $0x680] sm:$0xff] %v709
                %v711 = vld [vmem:[%s291 + $0x1388] sm:$0xff]
                %712 = vst [vmem:[%s292 + $0x688] sm:$0xff] %v711
                %v713 = vld [vmem:[%s291 + $0x1390] sm:$0xff]
                %714 = vst [vmem:[%s292 + $0x690] sm:$0xff] %v713
                %v715 = vld [vmem:[%s291 + $0x1398] sm:$0xff]
                %716 = vst [vmem:[%s292 + $0x698] sm:$0xff] %v715
                %v717 = vld [vmem:[%s291 + $0x13e0] sm:$0xff]
                %718 = vst [vmem:[%s292 + $0x6a0] sm:$0xff] %v717
                %v719 = vld [vmem:[%s291 + $0x13e8] sm:$0xff]
                %720 = vst [vmem:[%s292 + $0x6a8] sm:$0xff] %v719
                %v721 = vld [vmem:[%s291 + $0x13f0] sm:$0xff]
                %722 = vst [vmem:[%s292 + $0x6b0] sm:$0xff] %v721
                %v723 = vld [vmem:[%s291 + $0x13f8] sm:$0xff]
                %724 = vst [vmem:[%s292 + $0x6b8] sm:$0xff] %v723
                %v725 = vld [vmem:[%s291 + $0x1440] sm:$0xff]
                %726 = vst [vmem:[%s292 + $0x6c0] sm:$0xff] %v725
                %v727 = vld [vmem:[%s291 + $0x1448] sm:$0xff]
                %728 = vst [vmem:[%s292 + $0x6c8] sm:$0xff] %v727
                %v729 = vld [vmem:[%s291 + $0x1450] sm:$0xff]
                %730 = vst [vmem:[%s292 + $0x6d0] sm:$0xff] %v729
                %v731 = vld [vmem:[%s291 + $0x1458] sm:$0xff]
                %732 = vst [vmem:[%s292 + $0x6d8] sm:$0xff] %v731
                %v733 = vld [vmem:[%s291 + $0x14a0] sm:$0xff]
                %734 = vst [vmem:[%s292 + $0x6e0] sm:$0xff] %v733
                %v735 = vld [vmem:[%s291 + $0x14a8] sm:$0xff]
                %736 = vst [vmem:[%s292 + $0x6e8] sm:$0xff] %v735
                %v737 = vld [vmem:[%s291 + $0x14b0] sm:$0xff]
                %738 = vst [vmem:[%s292 + $0x6f0] sm:$0xff] %v737
                %v739 = vld [vmem:[%s291 + $0x14b8] sm:$0xff]
                %740 = vst [vmem:[%s292 + $0x6f8] sm:$0xff] %v739
                %v741 = vld [vmem:[%s291 + $0x1500] sm:$0xff]
                %742 = vst [vmem:[%s292 + $0x700] sm:$0xff] %v741
                %v743 = vld [vmem:[%s291 + $0x1508] sm:$0xff]
                %744 = vst [vmem:[%s292 + $0x708] sm:$0xff] %v743
                %v745 = vld [vmem:[%s291 + $0x1510] sm:$0xff]
                %746 = vst [vmem:[%s292 + $0x710] sm:$0xff] %v745
                %v747 = vld [vmem:[%s291 + $0x1518] sm:$0xff]
                %748 = vst [vmem:[%s292 + $0x718] sm:$0xff] %v747
                %v749 = vld [vmem:[%s291 + $0x1560] sm:$0xff]
                %750 = vst [vmem:[%s292 + $0x720] sm:$0xff] %v749
                %v751 = vld [vmem:[%s291 + $0x1568] sm:$0xff]
                %752 = vst [vmem:[%s292 + $0x728] sm:$0xff] %v751
                %v753 = vld [vmem:[%s291 + $0x1570] sm:$0xff]
                %754 = vst [vmem:[%s292 + $0x730] sm:$0xff] %v753
                %v755 = vld [vmem:[%s291 + $0x1578] sm:$0xff]
                %756 = vst [vmem:[%s292 + $0x738] sm:$0xff] %v755
                %v757 = vld [vmem:[%s291 + $0x15c0] sm:$0xff]
                %758 = vst [vmem:[%s292 + $0x740] sm:$0xff] %v757
                %v759 = vld [vmem:[%s291 + $0x15c8] sm:$0xff]
                %760 = vst [vmem:[%s292 + $0x748] sm:$0xff] %v759
                %v761 = vld [vmem:[%s291 + $0x15d0] sm:$0xff]
                %762 = vst [vmem:[%s292 + $0x750] sm:$0xff] %v761
                %v763 = vld [vmem:[%s291 + $0x15d8] sm:$0xff]
                %764 = vst [vmem:[%s292 + $0x758] sm:$0xff] %v763
                %v765 = vld [vmem:[%s291 + $0x1620] sm:$0xff]
                %766 = vst [vmem:[%s292 + $0x760] sm:$0xff] %v765
                %v767 = vld [vmem:[%s291 + $0x1628] sm:$0xff]
                %768 = vst [vmem:[%s292 + $0x768] sm:$0xff] %v767
                %v769 = vld [vmem:[%s291 + $0x1630] sm:$0xff]
                %770 = vst [vmem:[%s292 + $0x770] sm:$0xff] %v769
                %v771 = vld [vmem:[%s291 + $0x1638] sm:$0xff]
                %772 = vst [vmem:[%s292 + $0x778] sm:$0xff] %v771
                %v773 = vld [vmem:[%s291 + $0x1680] sm:$0xff]
                %774 = vst [vmem:[%s292 + $0x780] sm:$0xff] %v773
                %v775 = vld [vmem:[%s291 + $0x1688] sm:$0xff]
                %776 = vst [vmem:[%s292 + $0x788] sm:$0xff] %v775
                %v777 = vld [vmem:[%s291 + $0x1690] sm:$0xff]
                %778 = vst [vmem:[%s292 + $0x790] sm:$0xff] %v777
                %v779 = vld [vmem:[%s291 + $0x1698] sm:$0xff]
                %780 = vst [vmem:[%s292 + $0x798] sm:$0xff] %v779
                %v781 = vld [vmem:[%s291 + $0x16e0] sm:$0xff]
                %782 = vst [vmem:[%s292 + $0x7a0] sm:$0xff] %v781
                %v783 = vld [vmem:[%s291 + $0x16e8] sm:$0xff]
                %784 = vst [vmem:[%s292 + $0x7a8] sm:$0xff] %v783
                %v785 = vld [vmem:[%s291 + $0x16f0] sm:$0xff]
                %786 = vst [vmem:[%s292 + $0x7b0] sm:$0xff] %v785
                %v787 = vld [vmem:[%s291 + $0x16f8] sm:$0xff]
                %788 = vst [vmem:[%s292 + $0x7b8] sm:$0xff] %v787
                %v789 = vld [vmem:[%s291 + $0x1740] sm:$0xff]
                %790 = vst [vmem:[%s292 + $0x7c0] sm:$0xff] %v789
                %v791 = vld [vmem:[%s291 + $0x1748] sm:$0xff]
                %792 = vst [vmem:[%s292 + $0x7c8] sm:$0xff] %v791
                %v793 = vld [vmem:[%s291 + $0x1750] sm:$0xff]
                %794 = vst [vmem:[%s292 + $0x7d0] sm:$0xff] %v793
                %v795 = vld [vmem:[%s291 + $0x1758] sm:$0xff]
                %796 = vst [vmem:[%s292 + $0x7d8] sm:$0xff] %v795
                %v797 = vld [vmem:[%s291 + $0x17a0] sm:$0xff]
                %798 = vst [vmem:[%s292 + $0x7e0] sm:$0xff] %v797
                %v799 = vld [vmem:[%s291 + $0x17a8] sm:$0xff]
                %800 = vst [vmem:[%s292 + $0x7e8] sm:$0xff] %v799
                %v801 = vld [vmem:[%s291 + $0x17b0] sm:$0xff]
                %802 = vst [vmem:[%s292 + $0x7f0] sm:$0xff] %v801
                %v803 = vld [vmem:[%s291 + $0x17b8] sm:$0xff]
                %804 = vst [vmem:[%s292 + $0x7f8] sm:$0xff] %v803
              $region57: #{tpu_custom_call.1} parent=51 // loop_footer
                %s290 = sadd.s32 1, %s286
              $region58: #{tpu_custom_call.1} parent=51 // loop_footer_branch
                %285 = sbr.rel target = $region54
              $region59: #{tpu_custom_call.1} parent=51 // loop_exit
                _
            $region52: #{tpu_custom_call.1} parent=47 // pred_fallthru
              _
            // Predicated region
            $region60: #{tpu_custom_call.1} parent=47 // pred_check
              _
            $region61: #{tpu_custom_call.1} parent=47 // pred_check_branch
              %806 = sbr.rel target = $region63
            $region62: #{tpu_custom_call.1} parent=47 // pred_region
              _
            $region63: #{tpu_custom_call.1} parent=47 // pred_fallthru
              _
          $region48: #{tpu_custom_call.1} parent=43 // pred_fallthru
            _
          %807 = vnop
        $region44: #{tpu_custom_call.1} parent=27 // pred_fallthru
          _
      $region28: #{tpu_custom_call.1} parent=5 // pred_fallthru
        _
      %p808 = scmp.le.s32.totalorder 1, %s16
      %p809 = scmp.lt.s32.totalorder %s16, 4
      %p810 = pnand %p808, %p809
      %p811 = pneg %p810
      // Predicated region
      $region64: #{tpu_custom_call.1} parent=5 // pred_check
        _
      $region65: #{tpu_custom_call.1} parent=5 // pred_check_branch
        %813 = sbr.rel (%p810) target = $region67
      $region66: #{tpu_custom_call.1} parent=5 // pred_region
        %s814 = ssub.s32 %s16, 1
        %s815 = sand.u32 %s50, 1
        %s816 = scalar_lea.sflag [#allocation3], %s815
        %s817 = sand.u32 %s50, 1
        %s818 = smul.addr %s817, 512
        %s819 = scalar_lea.vmem [#allocation2], %s818
        // Predicated region
        $region68: #{tpu_custom_call.1} parent=66 // pred_check
          %p820 = pneg %p63
        $region69: #{tpu_custom_call.1} parent=66 // pred_check_branch
          %822 = sbr.rel (%p820) target = $region71
        $region70: #{tpu_custom_call.1} parent=66 // pred_region
          %823 = dma.done %s816, 8192
        $region71: #{tpu_custom_call.1} parent=66 // pred_fallthru
          _
        %s824 = sand.u32 %s128, 1
        %s825 = sand.u32 %s128, 1
        %s826 = smul.addr %s825, 2048
        %s827 = scalar_lea.vmem [#allocation4], %s826
        // Predicated region
        $region72: #{tpu_custom_call.1} parent=66 // pred_check
          %p828 = pneg %p141
        $region73: #{tpu_custom_call.1} parent=66 // pred_check_branch
          %830 = sbr.rel (%p828) target = $region75
        $region74: #{tpu_custom_call.1} parent=66 // pred_region
          _
        $region75: #{tpu_custom_call.1} parent=66 // pred_fallthru
          _
        %p831 = pneg %p37
        %p832 = pneg %p34
        %s833 = sand.u32 %s50, 1
        %s834 = scalar_lea.sflag [#allocation3], %s833
        %s835 = sand.u32 %s50, 1
        %s836 = smul.addr %s835, 512
        %s837 = scalar_lea.vmem [#allocation2], %s836
        %p838 = pneg %p63
        %p839 = pneg %p60
        %s840 = smul.u32 128, %s21
        %p841 = scmp.lt.s32.totalorder %s840, 383
        %s842 = scalar_select %p841, %s840, 383
        %s843 = smul.addr %s842, 8
        %s844 = scalar_lea.vmem %s2, %s843
        %p845 = pneg %p89
        %p846 = pneg %p86
        %s847 = smul.u32 128, %s21
        %p848 = scmp.lt.s32.totalorder %s847, 383
        %s849 = scalar_select %p848, %s847, 383
        %s850 = smul.addr %s849, 4
        %s851 = scalar_lea.vmem %s3, %s850
        %p852 = pneg %p115
        %p853 = pneg %p112
        %s854 = sand.u32 %s128, 1
        %s855 = sand.u32 %s128, 1
        %s856 = smul.addr %s855, 2048
        %s857 = scalar_lea.vmem [#allocation4], %s856
        %p858 = pneg %p141
        %p859 = pneg %p138
        %p860 = pneg %p162
        %p861 = pneg %p159
        %p862 = pneg %p183
        %p863 = pneg %p180
        %p864 = pneg %p204
        %p865 = pneg %p201
        %s866 = smul.u32 128, %s21
        %s867 = smul.u32 128, %s21
        %p868 = scmp.lt.s32.totalorder %s867, 383
        %s869 = scalar_select %p868, %s867, 383
        %s870 = smul.addr %s869, 8
        %s871 = scalar_lea.vmem %s2, %s870
        %s872 = smul.u32 128, %s21
        %s873 = smul.u32 128, %s21
        %p874 = scmp.lt.s32.totalorder %s873, 383
        %s875 = scalar_select %p874, %s873, 383
        %s876 = smul.addr %s875, 4
        %s877 = scalar_lea.vmem %s3, %s876
        %s878 = smul.u32 128, %s21
        %s879 = smul.u32 8, %s21
        %p881 = scmp.eq.s32.totalorder %s21, 0
        // Predicated region
        $region76: #{tpu_custom_call.1} parent=66 // pred_check
          %p882 = pneg %p881
        $region77: #{tpu_custom_call.1} parent=66 // pred_check_branch
          %884 = sbr.rel (%p882) target = $region79
        $region78: #{tpu_custom_call.1} parent=66 // pred_region
          %vm885 = vcmask 400384
          %886 = vst.msk [vmem:[%s7] sm:$0xff] %vm885, 0.0
          %887 = vst.msk [vmem:[%s7 + $0x8] sm:$0xff] %vm885, 0.0
          %888 = vst.msk [vmem:[%s7 + $0x10] sm:$0xff] %vm885, 0.0
          %889 = vst.msk [vmem:[%s7 + $0x18] sm:$0xff] %vm885, 0.0
          %890 = vst.msk [vmem:[%s7 + $0x20] sm:$0xff] %vm885, 0.0
          %891 = vst.msk [vmem:[%s7 + $0x28] sm:$0xff] %vm885, 0.0
          %892 = vst.msk [vmem:[%s7 + $0x30] sm:$0xff] %vm885, 0.0
          %893 = vst.msk [vmem:[%s7 + $0x38] sm:$0xff] %vm885, 0.0
          %894 = vst.msk [vmem:[%s7 + $0x40] sm:$0xff] %vm885, 0.0
          %895 = vst.msk [vmem:[%s7 + $0x48] sm:$0xff] %vm885, 0.0
          %896 = vst.msk [vmem:[%s7 + $0x50] sm:$0xff] %vm885, 0.0
          %897 = vst.msk [vmem:[%s7 + $0x58] sm:$0xff] %vm885, 0.0
          %898 = vst.msk [vmem:[%s7 + $0x60] sm:$0xff] %vm885, 0.0
          %899 = vst.msk [vmem:[%s7 + $0x68] sm:$0xff] %vm885, 0.0
          %900 = vst.msk [vmem:[%s7 + $0x70] sm:$0xff] %vm885, 0.0
          %901 = vst.msk [vmem:[%s7 + $0x78] sm:$0xff] %vm885, 0.0
          %902 = vst.msk [vmem:[%s7 + $0x80] sm:$0xff] %vm885, 0.0
          %903 = vst.msk [vmem:[%s7 + $0x88] sm:$0xff] %vm885, 0.0
          %904 = vst.msk [vmem:[%s7 + $0x90] sm:$0xff] %vm885, 0.0
          %905 = vst.msk [vmem:[%s7 + $0x98] sm:$0xff] %vm885, 0.0
          %906 = vst.msk [vmem:[%s7 + $0xa0] sm:$0xff] %vm885, 0.0
          %907 = vst.msk [vmem:[%s7 + $0xa8] sm:$0xff] %vm885, 0.0
          %908 = vst.msk [vmem:[%s7 + $0xb0] sm:$0xff] %vm885, 0.0
          %909 = vst.msk [vmem:[%s7 + $0xb8] sm:$0xff] %vm885, 0.0
          %910 = vst.msk [vmem:[%s7 + $0xc0] sm:$0xff] %vm885, 0.0
          %911 = vst.msk [vmem:[%s7 + $0xc8] sm:$0xff] %vm885, 0.0
          %912 = vst.msk [vmem:[%s7 + $0xd0] sm:$0xff] %vm885, 0.0
          %913 = vst.msk [vmem:[%s7 + $0xd8] sm:$0xff] %vm885, 0.0
          %914 = vst.msk [vmem:[%s7 + $0xe0] sm:$0xff] %vm885, 0.0
          %915 = vst.msk [vmem:[%s7 + $0xe8] sm:$0xff] %vm885, 0.0
          %916 = vst.msk [vmem:[%s7 + $0xf0] sm:$0xff] %vm885, 0.0
          %917 = vst.msk [vmem:[%s7 + $0xf8] sm:$0xff] %vm885, 0.0
          %918 = vst.msk [vmem:[%s7 + $0x100] sm:$0xff] %vm885, 0.0
          %919 = vst.msk [vmem:[%s7 + $0x108] sm:$0xff] %vm885, 0.0
          %920 = vst.msk [vmem:[%s7 + $0x110] sm:$0xff] %vm885, 0.0
          %921 = vst.msk [vmem:[%s7 + $0x118] sm:$0xff] %vm885, 0.0
          %922 = vst.msk [vmem:[%s7 + $0x120] sm:$0xff] %vm885, 0.0
          %923 = vst.msk [vmem:[%s7 + $0x128] sm:$0xff] %vm885, 0.0
          %924 = vst.msk [vmem:[%s7 + $0x130] sm:$0xff] %vm885, 0.0
          %925 = vst.msk [vmem:[%s7 + $0x138] sm:$0xff] %vm885, 0.0
          %926 = vst.msk [vmem:[%s7 + $0x140] sm:$0xff] %vm885, 0.0
          %927 = vst.msk [vmem:[%s7 + $0x148] sm:$0xff] %vm885, 0.0
          %928 = vst.msk [vmem:[%s7 + $0x150] sm:$0xff] %vm885, 0.0
          %929 = vst.msk [vmem:[%s7 + $0x158] sm:$0xff] %vm885, 0.0
          %930 = vst.msk [vmem:[%s7 + $0x160] sm:$0xff] %vm885, 0.0
          %931 = vst.msk [vmem:[%s7 + $0x168] sm:$0xff] %vm885, 0.0
          %932 = vst.msk [vmem:[%s7 + $0x170] sm:$0xff] %vm885, 0.0
          %933 = vst.msk [vmem:[%s7 + $0x178] sm:$0xff] %vm885, 0.0
          %934 = vst.msk [vmem:[%s7 + $0x180] sm:$0xff] %vm885, 0.0
          %935 = vst.msk [vmem:[%s7 + $0x188] sm:$0xff] %vm885, 0.0
          %936 = vst.msk [vmem:[%s7 + $0x190] sm:$0xff] %vm885, 0.0
          %937 = vst.msk [vmem:[%s7 + $0x198] sm:$0xff] %vm885, 0.0
          %938 = vst.msk [vmem:[%s7 + $0x1a0] sm:$0xff] %vm885, 0.0
          %939 = vst.msk [vmem:[%s7 + $0x1a8] sm:$0xff] %vm885, 0.0
          %940 = vst.msk [vmem:[%s7 + $0x1b0] sm:$0xff] %vm885, 0.0
          %941 = vst.msk [vmem:[%s7 + $0x1b8] sm:$0xff] %vm885, 0.0
          %942 = vst.msk [vmem:[%s7 + $0x1c0] sm:$0xff] %vm885, 0.0
          %943 = vst.msk [vmem:[%s7 + $0x1c8] sm:$0xff] %vm885, 0.0
          %944 = vst.msk [vmem:[%s7 + $0x1d0] sm:$0xff] %vm885, 0.0
          %945 = vst.msk [vmem:[%s7 + $0x1d8] sm:$0xff] %vm885, 0.0
          %946 = vst.msk [vmem:[%s7 + $0x1e0] sm:$0xff] %vm885, 0.0
          %947 = vst.msk [vmem:[%s7 + $0x1e8] sm:$0xff] %vm885, 0.0
          %948 = vst.msk [vmem:[%s7 + $0x1f0] sm:$0xff] %vm885, 0.0
          %949 = vst.msk [vmem:[%s7 + $0x1f8] sm:$0xff] %vm885, 0.0
        $region79: #{tpu_custom_call.1} parent=66 // pred_fallthru
          _
        %v950 = vld [vmem:[%s819] sm:$0xf]
        %v951 = vld [vmem:[%s819 + $0x4] sm:$0xf]
        %v952 = vld [vmem:[%s819 + $0x8] sm:$0xf]
        %v953 = vld [vmem:[%s819 + $0xc] sm:$0xf]
        %v954 = vld [vmem:[%s819 + $0x10] sm:$0xf]
        %v955 = vld [vmem:[%s819 + $0x14] sm:$0xf]
        %v956 = vld [vmem:[%s819 + $0x18] sm:$0xf]
        %v957 = vld [vmem:[%s819 + $0x1c] sm:$0xf]
        %v958 = vld [vmem:[%s819 + $0x20] sm:$0xf]
        %v959 = vld [vmem:[%s819 + $0x24] sm:$0xf]
        %v960 = vld [vmem:[%s819 + $0x28] sm:$0xf]
        %v961 = vld [vmem:[%s819 + $0x2c] sm:$0xf]
        %v962 = vld [vmem:[%s819 + $0x30] sm:$0xf]
        %v963 = vld [vmem:[%s819 + $0x34] sm:$0xf]
        %v964 = vld [vmem:[%s819 + $0x38] sm:$0xf]
        %v965 = vld [vmem:[%s819 + $0x3c] sm:$0xf]
        %v966 = vld [vmem:[%s819 + $0x40] sm:$0xf]
        %v967 = vld [vmem:[%s819 + $0x44] sm:$0xf]
        %v968 = vld [vmem:[%s819 + $0x48] sm:$0xf]
        %v969 = vld [vmem:[%s819 + $0x4c] sm:$0xf]
        %v970 = vld [vmem:[%s819 + $0x50] sm:$0xf]
        %v971 = vld [vmem:[%s819 + $0x54] sm:$0xf]
        %v972 = vld [vmem:[%s819 + $0x58] sm:$0xf]
        %v973 = vld [vmem:[%s819 + $0x5c] sm:$0xf]
        %v974 = vld [vmem:[%s819 + $0x60] sm:$0xf]
        %v975 = vld [vmem:[%s819 + $0x64] sm:$0xf]
        %v976 = vld [vmem:[%s819 + $0x68] sm:$0xf]
        %v977 = vld [vmem:[%s819 + $0x6c] sm:$0xf]
        %v978 = vld [vmem:[%s819 + $0x70] sm:$0xf]
        %v979 = vld [vmem:[%s819 + $0x74] sm:$0xf]
        %v980 = vld [vmem:[%s819 + $0x78] sm:$0xf]
        %v981 = vld [vmem:[%s819 + $0x7c] sm:$0xf]
        %v982 = vld [vmem:[%s819 + $0x80] sm:$0xf]
        %v983 = vld [vmem:[%s819 + $0x84] sm:$0xf]
        %v984 = vld [vmem:[%s819 + $0x88] sm:$0xf]
        %v985 = vld [vmem:[%s819 + $0x8c] sm:$0xf]
        %v986 = vld [vmem:[%s819 + $0x90] sm:$0xf]
        %v987 = vld [vmem:[%s819 + $0x94] sm:$0xf]
        %v988 = vld [vmem:[%s819 + $0x98] sm:$0xf]
        %v989 = vld [vmem:[%s819 + $0x9c] sm:$0xf]
        %v990 = vld [vmem:[%s819 + $0xa0] sm:$0xf]
        %v991 = vld [vmem:[%s819 + $0xa4] sm:$0xf]
        %v992 = vld [vmem:[%s819 + $0xa8] sm:$0xf]
        %v993 = vld [vmem:[%s819 + $0xac] sm:$0xf]
        %v994 = vld [vmem:[%s819 + $0xb0] sm:$0xf]
        %v995 = vld [vmem:[%s819 + $0xb4] sm:$0xf]
        %v996 = vld [vmem:[%s819 + $0xb8] sm:$0xf]
        %v997 = vld [vmem:[%s819 + $0xbc] sm:$0xf]
        %v998 = vld [vmem:[%s819 + $0xc0] sm:$0xf]
        %v999 = vld [vmem:[%s819 + $0xc4] sm:$0xf]
        %v1000 = vld [vmem:[%s819 + $0xc8] sm:$0xf]
        %v1001 = vld [vmem:[%s819 + $0xcc] sm:$0xf]
        %v1002 = vld [vmem:[%s819 + $0xd0] sm:$0xf]
        %v1003 = vld [vmem:[%s819 + $0xd4] sm:$0xf]
        %v1004 = vld [vmem:[%s819 + $0xd8] sm:$0xf]
        %v1005 = vld [vmem:[%s819 + $0xdc] sm:$0xf]
        %v1006 = vld [vmem:[%s819 + $0xe0] sm:$0xf]
        %v1007 = vld [vmem:[%s819 + $0xe4] sm:$0xf]
        %v1008 = vld [vmem:[%s819 + $0xe8] sm:$0xf]
        %v1009 = vld [vmem:[%s819 + $0xec] sm:$0xf]
        %v1010 = vld [vmem:[%s819 + $0xf0] sm:$0xf]
        %v1011 = vld [vmem:[%s819 + $0xf4] sm:$0xf]
        %v1012 = vld [vmem:[%s819 + $0xf8] sm:$0xf]
        %v1013 = vld [vmem:[%s819 + $0xfc] sm:$0xf]
        %v1014 = vld [vmem:[%s819 + $0x100] sm:$0xf]
        %v1015 = vld [vmem:[%s819 + $0x104] sm:$0xf]
        %v1016 = vld [vmem:[%s819 + $0x108] sm:$0xf]
        %v1017 = vld [vmem:[%s819 + $0x10c] sm:$0xf]
        %v1018 = vld [vmem:[%s819 + $0x110] sm:$0xf]
        %v1019 = vld [vmem:[%s819 + $0x114] sm:$0xf]
        %v1020 = vld [vmem:[%s819 + $0x118] sm:$0xf]
        %v1021 = vld [vmem:[%s819 + $0x11c] sm:$0xf]
        %v1022 = vld [vmem:[%s819 + $0x120] sm:$0xf]
        %v1023 = vld [vmem:[%s819 + $0x124] sm:$0xf]
        %v1024 = vld [vmem:[%s819 + $0x128] sm:$0xf]
        %v1025 = vld [vmem:[%s819 + $0x12c] sm:$0xf]
        %v1026 = vld [vmem:[%s819 + $0x130] sm:$0xf]
        %v1027 = vld [vmem:[%s819 + $0x134] sm:$0xf]
        %v1028 = vld [vmem:[%s819 + $0x138] sm:$0xf]
        %v1029 = vld [vmem:[%s819 + $0x13c] sm:$0xf]
        %v1030 = vld [vmem:[%s819 + $0x140] sm:$0xf]
        %v1031 = vld [vmem:[%s819 + $0x144] sm:$0xf]
        %v1032 = vld [vmem:[%s819 + $0x148] sm:$0xf]
        %v1033 = vld [vmem:[%s819 + $0x14c] sm:$0xf]
        %v1034 = vld [vmem:[%s819 + $0x150] sm:$0xf]
        %v1035 = vld [vmem:[%s819 + $0x154] sm:$0xf]
        %v1036 = vld [vmem:[%s819 + $0x158] sm:$0xf]
        %v1037 = vld [vmem:[%s819 + $0x15c] sm:$0xf]
        %v1038 = vld [vmem:[%s819 + $0x160] sm:$0xf]
        %v1039 = vld [vmem:[%s819 + $0x164] sm:$0xf]
        %v1040 = vld [vmem:[%s819 + $0x168] sm:$0xf]
        %v1041 = vld [vmem:[%s819 + $0x16c] sm:$0xf]
        %v1042 = vld [vmem:[%s819 + $0x170] sm:$0xf]
        %v1043 = vld [vmem:[%s819 + $0x174] sm:$0xf]
        %v1044 = vld [vmem:[%s819 + $0x178] sm:$0xf]
        %v1045 = vld [vmem:[%s819 + $0x17c] sm:$0xf]
        %v1046 = vld [vmem:[%s819 + $0x180] sm:$0xf]
        %v1047 = vld [vmem:[%s819 + $0x184] sm:$0xf]
        %v1048 = vld [vmem:[%s819 + $0x188] sm:$0xf]
        %v1049 = vld [vmem:[%s819 + $0x18c] sm:$0xf]
        %v1050 = vld [vmem:[%s819 + $0x190] sm:$0xf]
        %v1051 = vld [vmem:[%s819 + $0x194] sm:$0xf]
        %v1052 = vld [vmem:[%s819 + $0x198] sm:$0xf]
        %v1053 = vld [vmem:[%s819 + $0x19c] sm:$0xf]
        %v1054 = vld [vmem:[%s819 + $0x1a0] sm:$0xf]
        %v1055 = vld [vmem:[%s819 + $0x1a4] sm:$0xf]
        %v1056 = vld [vmem:[%s819 + $0x1a8] sm:$0xf]
        %v1057 = vld [vmem:[%s819 + $0x1ac] sm:$0xf]
        %v1058 = vld [vmem:[%s819 + $0x1b0] sm:$0xf]
        %v1059 = vld [vmem:[%s819 + $0x1b4] sm:$0xf]
        %v1060 = vld [vmem:[%s819 + $0x1b8] sm:$0xf]
        %v1061 = vld [vmem:[%s819 + $0x1bc] sm:$0xf]
        %v1062 = vld [vmem:[%s819 + $0x1c0] sm:$0xf]
        %v1063 = vld [vmem:[%s819 + $0x1c4] sm:$0xf]
        %v1064 = vld [vmem:[%s819 + $0x1c8] sm:$0xf]
        %v1065 = vld [vmem:[%s819 + $0x1cc] sm:$0xf]
        %v1066 = vld [vmem:[%s819 + $0x1d0] sm:$0xf]
        %v1067 = vld [vmem:[%s819 + $0x1d4] sm:$0xf]
        %v1068 = vld [vmem:[%s819 + $0x1d8] sm:$0xf]
        %v1069 = vld [vmem:[%s819 + $0x1dc] sm:$0xf]
        %v1070 = vld [vmem:[%s819 + $0x1e0] sm:$0xf]
        %v1071 = vld [vmem:[%s819 + $0x1e4] sm:$0xf]
        %v1072 = vld [vmem:[%s819 + $0x1e8] sm:$0xf]
        %v1073 = vld [vmem:[%s819 + $0x1ec] sm:$0xf]
        %v1074 = vld [vmem:[%s819 + $0x1f0] sm:$0xf]
        %v1075 = vld [vmem:[%s819 + $0x1f4] sm:$0xf]
        %v1076 = vld [vmem:[%s819 + $0x1f8] sm:$0xf]
        %v1077 = vld [vmem:[%s819 + $0x1fc] sm:$0xf]
        %v1078 = vld [vmem:[%s0] sm:$0xf]
        %v1079 = vld [vmem:[%s0 + $0x4] sm:$0xf]
        %v1080 = vld [vmem:[%s0 + $0x8] sm:$0xf]
        %v1081 = vld [vmem:[%s0 + $0xc] sm:$0xf]
        %v1082 = vld [vmem:[%s0 + $0x10] sm:$0xf]
        %v1083 = vld [vmem:[%s0 + $0x14] sm:$0xf]
        %v1084 = vld [vmem:[%s0 + $0x18] sm:$0xf]
        %v1085 = vld [vmem:[%s0 + $0x1c] sm:$0xf]
        %v1086 = vld [vmem:[%s0 + $0x20] sm:$0xf]
        %v1087 = vld [vmem:[%s0 + $0x24] sm:$0xf]
        %v1088 = vld [vmem:[%s0 + $0x28] sm:$0xf]
        %v1089 = vld [vmem:[%s0 + $0x2c] sm:$0xf]
        %v1090 = vld [vmem:[%s0 + $0x30] sm:$0xf]
        %v1091 = vld [vmem:[%s0 + $0x34] sm:$0xf]
        %v1092 = vld [vmem:[%s0 + $0x38] sm:$0xf]
        %v1093 = vld [vmem:[%s0 + $0x3c] sm:$0xf]
        %v1094 = vld [vmem:[%s871] sm:$0xff]
        %v1095 = vld [vmem:[%s871 + $0x8] sm:$0xff]
        %v1096 = vld [vmem:[%s871 + $0x10] sm:$0xff]
        %v1097 = vld [vmem:[%s871 + $0x18] sm:$0xff]
        %v1098 = vld [vmem:[%s871 + $0x20] sm:$0xff]
        %v1099 = vld [vmem:[%s871 + $0x28] sm:$0xff]
        %v1100 = vld [vmem:[%s871 + $0x30] sm:$0xff]
        %v1101 = vld [vmem:[%s871 + $0x38] sm:$0xff]
        %v1102 = vld [vmem:[%s871 + $0x40] sm:$0xff]
        %v1103 = vld [vmem:[%s871 + $0x48] sm:$0xff]
        %v1104 = vld [vmem:[%s871 + $0x50] sm:$0xff]
        %v1105 = vld [vmem:[%s871 + $0x58] sm:$0xff]
        %v1106 = vld [vmem:[%s871 + $0x60] sm:$0xff]
        %v1107 = vld [vmem:[%s871 + $0x68] sm:$0xff]
        %v1108 = vld [vmem:[%s871 + $0x70] sm:$0xff]
        %v1109 = vld [vmem:[%s871 + $0x78] sm:$0xff]
        %v1110 = vld [vmem:[%s871 + $0x80] sm:$0xff]
        %v1111 = vld [vmem:[%s871 + $0x88] sm:$0xff]
        %v1112 = vld [vmem:[%s871 + $0x90] sm:$0xff]
        %v1113 = vld [vmem:[%s871 + $0x98] sm:$0xff]
        %v1114 = vld [vmem:[%s871 + $0xa0] sm:$0xff]
        %v1115 = vld [vmem:[%s871 + $0xa8] sm:$0xff]
        %v1116 = vld [vmem:[%s871 + $0xb0] sm:$0xff]
        %v1117 = vld [vmem:[%s871 + $0xb8] sm:$0xff]
        %v1118 = vld [vmem:[%s871 + $0xc0] sm:$0xff]
        %v1119 = vld [vmem:[%s871 + $0xc8] sm:$0xff]
        %v1120 = vld [vmem:[%s871 + $0xd0] sm:$0xff]
        %v1121 = vld [vmem:[%s871 + $0xd8] sm:$0xff]
        %v1122 = vld [vmem:[%s871 + $0xe0] sm:$0xff]
        %v1123 = vld [vmem:[%s871 + $0xe8] sm:$0xff]
        %v1124 = vld [vmem:[%s871 + $0xf0] sm:$0xff]
        %v1125 = vld [vmem:[%s871 + $0xf8] sm:$0xff]
        %v1126 = vld [vmem:[%s871 + $0x100] sm:$0xff]
        %v1127 = vld [vmem:[%s871 + $0x108] sm:$0xff]
        %v1128 = vld [vmem:[%s871 + $0x110] sm:$0xff]
        %v1129 = vld [vmem:[%s871 + $0x118] sm:$0xff]
        %v1130 = vld [vmem:[%s871 + $0x120] sm:$0xff]
        %v1131 = vld [vmem:[%s871 + $0x128] sm:$0xff]
        %v1132 = vld [vmem:[%s871 + $0x130] sm:$0xff]
        %v1133 = vld [vmem:[%s871 + $0x138] sm:$0xff]
        %v1134 = vld [vmem:[%s871 + $0x140] sm:$0xff]
        %v1135 = vld [vmem:[%s871 + $0x148] sm:$0xff]
        %v1136 = vld [vmem:[%s871 + $0x150] sm:$0xff]
        %v1137 = vld [vmem:[%s871 + $0x158] sm:$0xff]
        %v1138 = vld [vmem:[%s871 + $0x160] sm:$0xff]
        %v1139 = vld [vmem:[%s871 + $0x168] sm:$0xff]
        %v1140 = vld [vmem:[%s871 + $0x170] sm:$0xff]
        %v1141 = vld [vmem:[%s871 + $0x178] sm:$0xff]
        %v1142 = vld [vmem:[%s871 + $0x180] sm:$0xff]
        %v1143 = vld [vmem:[%s871 + $0x188] sm:$0xff]
        %v1144 = vld [vmem:[%s871 + $0x190] sm:$0xff]
        %v1145 = vld [vmem:[%s871 + $0x198] sm:$0xff]
        %v1146 = vld [vmem:[%s871 + $0x1a0] sm:$0xff]
        %v1147 = vld [vmem:[%s871 + $0x1a8] sm:$0xff]
        %v1148 = vld [vmem:[%s871 + $0x1b0] sm:$0xff]
        %v1149 = vld [vmem:[%s871 + $0x1b8] sm:$0xff]
        %v1150 = vld [vmem:[%s871 + $0x1c0] sm:$0xff]
        %v1151 = vld [vmem:[%s871 + $0x1c8] sm:$0xff]
        %v1152 = vld [vmem:[%s871 + $0x1d0] sm:$0xff]
        %v1153 = vld [vmem:[%s871 + $0x1d8] sm:$0xff]
        %v1154 = vld [vmem:[%s871 + $0x1e0] sm:$0xff]
        %v1155 = vld [vmem:[%s871 + $0x1e8] sm:$0xff]
        %v1156 = vld [vmem:[%s871 + $0x1f0] sm:$0xff]
        %v1157 = vld [vmem:[%s871 + $0x1f8] sm:$0xff]
        %v1158 = vld [vmem:[%s871 + $0x200] sm:$0xff]
        %v1159 = vld [vmem:[%s871 + $0x208] sm:$0xff]
        %v1160 = vld [vmem:[%s871 + $0x210] sm:$0xff]
        %v1161 = vld [vmem:[%s871 + $0x218] sm:$0xff]
        %v1162 = vld [vmem:[%s871 + $0x220] sm:$0xff]
        %v1163 = vld [vmem:[%s871 + $0x228] sm:$0xff]
        %v1164 = vld [vmem:[%s871 + $0x230] sm:$0xff]
        %v1165 = vld [vmem:[%s871 + $0x238] sm:$0xff]
        %v1166 = vld [vmem:[%s871 + $0x240] sm:$0xff]
        %v1167 = vld [vmem:[%s871 + $0x248] sm:$0xff]
        %v1168 = vld [vmem:[%s871 + $0x250] sm:$0xff]
        %v1169 = vld [vmem:[%s871 + $0x258] sm:$0xff]
        %v1170 = vld [vmem:[%s871 + $0x260] sm:$0xff]
        %v1171 = vld [vmem:[%s871 + $0x268] sm:$0xff]
        %v1172 = vld [vmem:[%s871 + $0x270] sm:$0xff]
        %v1173 = vld [vmem:[%s871 + $0x278] sm:$0xff]
        %v1174 = vld [vmem:[%s871 + $0x280] sm:$0xff]
        %v1175 = vld [vmem:[%s871 + $0x288] sm:$0xff]
        %v1176 = vld [vmem:[%s871 + $0x290] sm:$0xff]
        %v1177 = vld [vmem:[%s871 + $0x298] sm:$0xff]
        %v1178 = vld [vmem:[%s871 + $0x2a0] sm:$0xff]
        %v1179 = vld [vmem:[%s871 + $0x2a8] sm:$0xff]
        %v1180 = vld [vmem:[%s871 + $0x2b0] sm:$0xff]
        %v1181 = vld [vmem:[%s871 + $0x2b8] sm:$0xff]
        %v1182 = vld [vmem:[%s871 + $0x2c0] sm:$0xff]
        %v1183 = vld [vmem:[%s871 + $0x2c8] sm:$0xff]
        %v1184 = vld [vmem:[%s871 + $0x2d0] sm:$0xff]
        %v1185 = vld [vmem:[%s871 + $0x2d8] sm:$0xff]
        %v1186 = vld [vmem:[%s871 + $0x2e0] sm:$0xff]
        %v1187 = vld [vmem:[%s871 + $0x2e8] sm:$0xff]
        %v1188 = vld [vmem:[%s871 + $0x2f0] sm:$0xff]
        %v1189 = vld [vmem:[%s871 + $0x2f8] sm:$0xff]
        %v1190 = vld [vmem:[%s871 + $0x300] sm:$0xff]
        %v1191 = vld [vmem:[%s871 + $0x308] sm:$0xff]
        %v1192 = vld [vmem:[%s871 + $0x310] sm:$0xff]
        %v1193 = vld [vmem:[%s871 + $0x318] sm:$0xff]
        %v1194 = vld [vmem:[%s871 + $0x320] sm:$0xff]
        %v1195 = vld [vmem:[%s871 + $0x328] sm:$0xff]
        %v1196 = vld [vmem:[%s871 + $0x330] sm:$0xff]
        %v1197 = vld [vmem:[%s871 + $0x338] sm:$0xff]
        %v1198 = vld [vmem:[%s871 + $0x340] sm:$0xff]
        %v1199 = vld [vmem:[%s871 + $0x348] sm:$0xff]
        %v1200 = vld [vmem:[%s871 + $0x350] sm:$0xff]
        %v1201 = vld [vmem:[%s871 + $0x358] sm:$0xff]
        %v1202 = vld [vmem:[%s871 + $0x360] sm:$0xff]
        %v1203 = vld [vmem:[%s871 + $0x368] sm:$0xff]
        %v1204 = vld [vmem:[%s871 + $0x370] sm:$0xff]
        %v1205 = vld [vmem:[%s871 + $0x378] sm:$0xff]
        %v1206 = vld [vmem:[%s871 + $0x380] sm:$0xff]
        %v1207 = vld [vmem:[%s871 + $0x388] sm:$0xff]
        %v1208 = vld [vmem:[%s871 + $0x390] sm:$0xff]
        %v1209 = vld [vmem:[%s871 + $0x398] sm:$0xff]
        %v1210 = vld [vmem:[%s871 + $0x3a0] sm:$0xff]
        %v1211 = vld [vmem:[%s871 + $0x3a8] sm:$0xff]
        %v1212 = vld [vmem:[%s871 + $0x3b0] sm:$0xff]
        %v1213 = vld [vmem:[%s871 + $0x3b8] sm:$0xff]
        %v1214 = vld [vmem:[%s871 + $0x3c0] sm:$0xff]
        %v1215 = vld [vmem:[%s871 + $0x3c8] sm:$0xff]
        %v1216 = vld [vmem:[%s871 + $0x3d0] sm:$0xff]
        %v1217 = vld [vmem:[%s871 + $0x3d8] sm:$0xff]
        %v1218 = vld [vmem:[%s871 + $0x3e0] sm:$0xff]
        %v1219 = vld [vmem:[%s871 + $0x3e8] sm:$0xff]
        %v1220 = vld [vmem:[%s871 + $0x3f0] sm:$0xff]
        %v1221 = vld [vmem:[%s871 + $0x3f8] sm:$0xff]
        %v1350 = vunpack.c.l.b16 %v950
        %v1351 = vunpack.c.l.b16 %v951
        %v1352 = vunpack.c.l.b16 %v952
        %v1353 = vunpack.c.l.b16 %v953
        %v1354 = vunpack.c.l.b16 %v954
        %v1355 = vunpack.c.l.b16 %v955
        %v1356 = vunpack.c.l.b16 %v956
        %v1357 = vunpack.c.l.b16 %v957
        %v1358 = vunpack.c.l.b16 %v958
        %v1359 = vunpack.c.l.b16 %v959
        %v1360 = vunpack.c.l.b16 %v960
        %v1361 = vunpack.c.l.b16 %v961
        %v1362 = vunpack.c.l.b16 %v962
        %v1363 = vunpack.c.l.b16 %v963
        %v1364 = vunpack.c.l.b16 %v964
        %v1365 = vunpack.c.l.b16 %v965
        %v1366 = vunpack.c.l.b16 %v966
        %v1367 = vunpack.c.l.b16 %v967
        %v1368 = vunpack.c.l.b16 %v968
        %v1369 = vunpack.c.l.b16 %v969
        %v1370 = vunpack.c.l.b16 %v970
        %v1371 = vunpack.c.l.b16 %v971
        %v1372 = vunpack.c.l.b16 %v972
        %v1373 = vunpack.c.l.b16 %v973
        %v1374 = vunpack.c.l.b16 %v974
        %v1375 = vunpack.c.l.b16 %v975
        %v1376 = vunpack.c.l.b16 %v976
        %v1377 = vunpack.c.l.b16 %v977
        %v1378 = vunpack.c.l.b16 %v978
        %v1379 = vunpack.c.l.b16 %v979
        %v1380 = vunpack.c.l.b16 %v980
        %v1381 = vunpack.c.l.b16 %v981
        %v1382 = vunpack.c.l.b16 %v982
        %v1383 = vunpack.c.l.b16 %v983
        %v1384 = vunpack.c.l.b16 %v984
        %v1385 = vunpack.c.l.b16 %v985
        %v1386 = vunpack.c.l.b16 %v986
        %v1387 = vunpack.c.l.b16 %v987
        %v1388 = vunpack.c.l.b16 %v988
        %v1389 = vunpack.c.l.b16 %v989
        %v1390 = vunpack.c.l.b16 %v990
        %v1391 = vunpack.c.l.b16 %v991
        %v1392 = vunpack.c.l.b16 %v992
        %v1393 = vunpack.c.l.b16 %v993
        %v1394 = vunpack.c.l.b16 %v994
        %v1395 = vunpack.c.l.b16 %v995
        %v1396 = vunpack.c.l.b16 %v996
        %v1397 = vunpack.c.l.b16 %v997
        %v1398 = vunpack.c.l.b16 %v998
        %v1399 = vunpack.c.l.b16 %v999
        %v1400 = vunpack.c.l.b16 %v1000
        %v1401 = vunpack.c.l.b16 %v1001
        %v1402 = vunpack.c.l.b16 %v1002
        %v1403 = vunpack.c.l.b16 %v1003
        %v1404 = vunpack.c.l.b16 %v1004
        %v1405 = vunpack.c.l.b16 %v1005
        %v1406 = vunpack.c.l.b16 %v1006
        %v1407 = vunpack.c.l.b16 %v1007
        %v1408 = vunpack.c.l.b16 %v1008
        %v1409 = vunpack.c.l.b16 %v1009
        %v1410 = vunpack.c.l.b16 %v1010
        %v1411 = vunpack.c.l.b16 %v1011
        %v1412 = vunpack.c.l.b16 %v1012
        %v1413 = vunpack.c.l.b16 %v1013
        %v1414 = vunpack.c.l.b16 %v1014
        %v1415 = vunpack.c.l.b16 %v1015
        %v1416 = vunpack.c.l.b16 %v1016
        %v1417 = vunpack.c.l.b16 %v1017
        %v1418 = vunpack.c.l.b16 %v1018
        %v1419 = vunpack.c.l.b16 %v1019
        %v1420 = vunpack.c.l.b16 %v1020
        %v1421 = vunpack.c.l.b16 %v1021
        %v1422 = vunpack.c.l.b16 %v1022
        %v1423 = vunpack.c.l.b16 %v1023
        %v1424 = vunpack.c.l.b16 %v1024
        %v1425 = vunpack.c.l.b16 %v1025
        %v1426 = vunpack.c.l.b16 %v1026
        %v1427 = vunpack.c.l.b16 %v1027
        %v1428 = vunpack.c.l.b16 %v1028
        %v1429 = vunpack.c.l.b16 %v1029
        %v1430 = vunpack.c.l.b16 %v1030
        %v1431 = vunpack.c.l.b16 %v1031
        %v1432 = vunpack.c.l.b16 %v1032
        %v1433 = vunpack.c.l.b16 %v1033
        %v1434 = vunpack.c.l.b16 %v1034
        %v1435 = vunpack.c.l.b16 %v1035
        %v1436 = vunpack.c.l.b16 %v1036
        %v1437 = vunpack.c.l.b16 %v1037
        %v1438 = vunpack.c.l.b16 %v1038
        %v1439 = vunpack.c.l.b16 %v1039
        %v1440 = vunpack.c.l.b16 %v1040
        %v1441 = vunpack.c.l.b16 %v1041
        %v1442 = vunpack.c.l.b16 %v1042
        %v1443 = vunpack.c.l.b16 %v1043
        %v1444 = vunpack.c.l.b16 %v1044
        %v1445 = vunpack.c.l.b16 %v1045
        %v1446 = vunpack.c.l.b16 %v1046
        %v1447 = vunpack.c.l.b16 %v1047
        %v1448 = vunpack.c.l.b16 %v1048
        %v1449 = vunpack.c.l.b16 %v1049
        %v1450 = vunpack.c.l.b16 %v1050
        %v1451 = vunpack.c.l.b16 %v1051
        %v1452 = vunpack.c.l.b16 %v1052
        %v1453 = vunpack.c.l.b16 %v1053
        %v1454 = vunpack.c.l.b16 %v1054
        %v1455 = vunpack.c.l.b16 %v1055
        %v1456 = vunpack.c.l.b16 %v1056
        %v1457 = vunpack.c.l.b16 %v1057
        %v1458 = vunpack.c.l.b16 %v1058
        %v1459 = vunpack.c.l.b16 %v1059
        %v1460 = vunpack.c.l.b16 %v1060
        %v1461 = vunpack.c.l.b16 %v1061
        %v1462 = vunpack.c.l.b16 %v1062
        %v1463 = vunpack.c.l.b16 %v1063
        %v1464 = vunpack.c.l.b16 %v1064
        %v1465 = vunpack.c.l.b16 %v1065
        %v1466 = vunpack.c.l.b16 %v1066
        %v1467 = vunpack.c.l.b16 %v1067
        %v1468 = vunpack.c.l.b16 %v1068
        %v1469 = vunpack.c.l.b16 %v1069
        %v1470 = vunpack.c.l.b16 %v1070
        %v1471 = vunpack.c.l.b16 %v1071
        %v1472 = vunpack.c.l.b16 %v1072
        %v1473 = vunpack.c.l.b16 %v1073
        %v1474 = vunpack.c.l.b16 %v1074
        %v1475 = vunpack.c.l.b16 %v1075
        %v1476 = vunpack.c.l.b16 %v1076
        %v1477 = vunpack.c.l.b16 %v1077
        %v1478 = vpack.c.b16 %v1351, %v1350
        %v1479 = vpack.c.b16 %v1353, %v1352
        %v1480 = vpack.c.b16 %v1355, %v1354
        %v1481 = vpack.c.b16 %v1357, %v1356
        %v1482 = vpack.c.b16 %v1359, %v1358
        %v1483 = vpack.c.b16 %v1361, %v1360
        %v1484 = vpack.c.b16 %v1363, %v1362
        %v1485 = vpack.c.b16 %v1365, %v1364
        %v1486 = vpack.c.b16 %v1367, %v1366
        %v1487 = vpack.c.b16 %v1369, %v1368
        %v1488 = vpack.c.b16 %v1371, %v1370
        %v1489 = vpack.c.b16 %v1373, %v1372
        %v1490 = vpack.c.b16 %v1375, %v1374
        %v1491 = vpack.c.b16 %v1377, %v1376
        %v1492 = vpack.c.b16 %v1379, %v1378
        %v1493 = vpack.c.b16 %v1381, %v1380
        %v1494 = vpack.c.b16 %v1383, %v1382
        %v1495 = vpack.c.b16 %v1385, %v1384
        %v1496 = vpack.c.b16 %v1387, %v1386
        %v1497 = vpack.c.b16 %v1389, %v1388
        %v1498 = vpack.c.b16 %v1391, %v1390
        %v1499 = vpack.c.b16 %v1393, %v1392
        %v1500 = vpack.c.b16 %v1395, %v1394
        %v1501 = vpack.c.b16 %v1397, %v1396
        %v1502 = vpack.c.b16 %v1399, %v1398
        %v1503 = vpack.c.b16 %v1401, %v1400
        %v1504 = vpack.c.b16 %v1403, %v1402
        %v1505 = vpack.c.b16 %v1405, %v1404
        %v1506 = vpack.c.b16 %v1407, %v1406
        %v1507 = vpack.c.b16 %v1409, %v1408
        %v1508 = vpack.c.b16 %v1411, %v1410
        %v1509 = vpack.c.b16 %v1413, %v1412
        %v1510 = vpack.c.b16 %v1415, %v1414
        %v1511 = vpack.c.b16 %v1417, %v1416
        %v1512 = vpack.c.b16 %v1419, %v1418
        %v1513 = vpack.c.b16 %v1421, %v1420
        %v1514 = vpack.c.b16 %v1423, %v1422
        %v1515 = vpack.c.b16 %v1425, %v1424
        %v1516 = vpack.c.b16 %v1427, %v1426
        %v1517 = vpack.c.b16 %v1429, %v1428
        %v1518 = vpack.c.b16 %v1431, %v1430
        %v1519 = vpack.c.b16 %v1433, %v1432
        %v1520 = vpack.c.b16 %v1435, %v1434
        %v1521 = vpack.c.b16 %v1437, %v1436
        %v1522 = vpack.c.b16 %v1439, %v1438
        %v1523 = vpack.c.b16 %v1441, %v1440
        %v1524 = vpack.c.b16 %v1443, %v1442
        %v1525 = vpack.c.b16 %v1445, %v1444
        %v1526 = vpack.c.b16 %v1447, %v1446
        %v1527 = vpack.c.b16 %v1449, %v1448
        %v1528 = vpack.c.b16 %v1451, %v1450
        %v1529 = vpack.c.b16 %v1453, %v1452
        %v1530 = vpack.c.b16 %v1455, %v1454
        %v1531 = vpack.c.b16 %v1457, %v1456
        %v1532 = vpack.c.b16 %v1459, %v1458
        %v1533 = vpack.c.b16 %v1461, %v1460
        %v1534 = vpack.c.b16 %v1463, %v1462
        %v1535 = vpack.c.b16 %v1465, %v1464
        %v1536 = vpack.c.b16 %v1467, %v1466
        %v1537 = vpack.c.b16 %v1469, %v1468
        %v1538 = vpack.c.b16 %v1471, %v1470
        %v1539 = vpack.c.b16 %v1473, %v1472
        %v1540 = vpack.c.b16 %v1475, %v1474
        %v1541 = vpack.c.b16 %v1477, %v1476
        %v1622 = vunpack.c.l.b16 %v1078
        %v1623 = vunpack.c.l.b16 %v1079
        %v1624 = vunpack.c.l.b16 %v1080
        %v1625 = vunpack.c.l.b16 %v1081
        %v1626 = vunpack.c.l.b16 %v1082
        %v1627 = vunpack.c.l.b16 %v1083
        %v1628 = vunpack.c.l.b16 %v1084
        %v1629 = vunpack.c.l.b16 %v1085
        %v1630 = vunpack.c.l.b16 %v1086
        %v1631 = vunpack.c.l.b16 %v1087
        %v1632 = vunpack.c.l.b16 %v1088
        %v1633 = vunpack.c.l.b16 %v1089
        %v1634 = vunpack.c.l.b16 %v1090
        %v1635 = vunpack.c.l.b16 %v1091
        %v1636 = vunpack.c.l.b16 %v1092
        %v1637 = vunpack.c.l.b16 %v1093
        %v1638 = vpack.c.b16 %v1623, %v1622
        %v1639 = vpack.c.b16 %v1625, %v1624
        %v1640 = vpack.c.b16 %v1627, %v1626
        %v1641 = vpack.c.b16 %v1629, %v1628
        %v1642 = vpack.c.b16 %v1631, %v1630
        %v1643 = vpack.c.b16 %v1633, %v1632
        %v1644 = vpack.c.b16 %v1635, %v1634
        %v1645 = vpack.c.b16 %v1637, %v1636
        %1654 = vmatprep.subr.bf16.mxu0 0
        %1655 = vmatpush1.bf16.msra.mxu0 %v1645
        %1656 = vmatprep.subr.bf16.mxu0 0
        %1657 = vmatpush1.bf16.msra.mxu0 %v1644
        %1658 = vmatprep.subr.bf16.mxu0 0
        %1659 = vmatpush1.bf16.msra.mxu0 %v1643
        %1660 = vmatprep.subr.bf16.mxu0 0
        %1661 = vmatpush1.bf16.msra.mxu0 %v1642
        %1662 = vmatprep.subr.bf16.mxu0 0
        %1663 = vmatpush1.bf16.msra.mxu0 %v1641
        %1664 = vmatprep.subr.bf16.mxu0 0
        %1665 = vmatpush1.bf16.msra.mxu0 %v1640
        %1666 = vmatprep.subr.bf16.mxu0 0
        %1667 = vmatpush1.bf16.msra.mxu0 %v1639
        %1668 = vmatprep.subr.bf16.mxu0 0
        %1669 = vmatpush1.bf16.msra.mxu0 %v1638
        %1670 = vmatprep.subr.bf16.mxu0 0
        %1671 = vmatpush2.bf16.msra.mxu0 0
        %1672 = vmatprep.subr.bf16.mxu0 0
        %1673 = vmatpush2.bf16.msra.mxu0 0
        %1674 = vmatprep.subr.bf16.mxu0 0
        %1675 = vmatpush2.bf16.msra.mxu0 0
        %1676 = vmatprep.subr.bf16.mxu0 0
        %1677 = vmatpush2.bf16.msra.mxu0 0
        %1678 = vmatprep.subr.bf16.mxu0 0
        %1679 = vmatpush2.bf16.msra.mxu0 0
        %1680 = vmatprep.subr.bf16.mxu0 0
        %1681 = vmatpush2.bf16.msra.mxu0 0
        %1682 = vmatprep.subr.bf16.mxu0 0
        %1683 = vmatpush2.bf16.msra.mxu0 0
        %1684 = vmatprep.subr.bf16.mxu0 0
        %1685 = vmatpush2.bf16.msra.mxu0 0
        %1686 = vmatprep.mubr.bf16.mxu0 0
        %1687 = vmatmul.mubr.bf16.gmra.mxu0 %v1478
        %v1688 = vpop.f32.mrf.mxu0
        %v1689 = vadd.f32 %v1094, %v1688
        %v1690 = vpop.f32.mrf.mxu0
        %v1691 = vpop.f32.mrf.mxu0
        %v1692 = vadd.f32 %v1095, %v1691
        %v1693 = vpop.f32.mrf.mxu0
        %1694 = vmatprep.mubr.bf16.mxu0 0
        %1695 = vmatmul.mubr.bf16.gmra.mxu0 %v1479
        %v1696 = vpop.f32.mrf.mxu0
        %v1697 = vadd.f32 %v1096, %v1696
        %v1698 = vpop.f32.mrf.mxu0
        %v1699 = vpop.f32.mrf.mxu0
        %v1700 = vadd.f32 %v1097, %v1699
        %v1701 = vpop.f32.mrf.mxu0
        %1702 = vmatprep.mubr.bf16.mxu0 0
        %1703 = vmatmul.mubr.bf16.gmra.mxu0 %v1480
        %v1704 = vpop.f32.mrf.mxu0
        %v1705 = vadd.f32 %v1098, %v1704
        %v1706 = vpop.f32.mrf.mxu0
        %v1707 = vpop.f32.mrf.mxu0
        %v1708 = vadd.f32 %v1099, %v1707
        %v1709 = vpop.f32.mrf.mxu0
        %1710 = vmatprep.mubr.bf16.mxu0 0
        %1711 = vmatmul.mubr.bf16.gmra.mxu0 %v1481
        %v1712 = vpop.f32.mrf.mxu0
        %v1713 = vadd.f32 %v1100, %v1712
        %v1714 = vpop.f32.mrf.mxu0
        %v1715 = vpop.f32.mrf.mxu0
        %v1716 = vadd.f32 %v1101, %v1715
        %v1717 = vpop.f32.mrf.mxu0
        %1718 = vmatprep.mubr.bf16.mxu0 0
        %1719 = vmatmul.mubr.bf16.gmra.mxu0 %v1482
        %v1720 = vpop.f32.mrf.mxu0
        %v1721 = vadd.f32 %v1102, %v1720
        %v1722 = vpop.f32.mrf.mxu0
        %v1723 = vpop.f32.mrf.mxu0
        %v1724 = vadd.f32 %v1103, %v1723
        %v1725 = vpop.f32.mrf.mxu0
        %1726 = vmatprep.mubr.bf16.mxu0 0
        %1727 = vmatmul.mubr.bf16.gmra.mxu0 %v1483
        %v1728 = vpop.f32.mrf.mxu0
        %v1729 = vadd.f32 %v1104, %v1728
        %v1730 = vpop.f32.mrf.mxu0
        %v1731 = vpop.f32.mrf.mxu0
        %v1732 = vadd.f32 %v1105, %v1731
        %v1733 = vpop.f32.mrf.mxu0
        %1734 = vmatprep.mubr.bf16.mxu0 0
        %1735 = vmatmul.mubr.bf16.gmra.mxu0 %v1484
        %v1736 = vpop.f32.mrf.mxu0
        %v1737 = vadd.f32 %v1106, %v1736
        %v1738 = vpop.f32.mrf.mxu0
        %v1739 = vpop.f32.mrf.mxu0
        %v1740 = vadd.f32 %v1107, %v1739
        %v1741 = vpop.f32.mrf.mxu0
        %1742 = vmatprep.mubr.bf16.mxu0 0
        %1743 = vmatmul.mubr.bf16.gmra.mxu0 %v1485
        %v1744 = vpop.f32.mrf.mxu0
        %v1745 = vadd.f32 %v1108, %v1744
        %v1746 = vpop.f32.mrf.mxu0
        %v1747 = vpop.f32.mrf.mxu0
        %v1748 = vadd.f32 %v1109, %v1747
        %v1749 = vpop.f32.mrf.mxu0
        %1750 = vmatprep.mubr.bf16.mxu0 0
        %1751 = vmatmul.mubr.bf16.gmra.mxu0 %v1486
        %v1752 = vpop.f32.mrf.mxu0
        %v1753 = vadd.f32 %v1110, %v1752
        %v1754 = vpop.f32.mrf.mxu0
        %v1755 = vpop.f32.mrf.mxu0
        %v1756 = vadd.f32 %v1111, %v1755
        %v1757 = vpop.f32.mrf.mxu0
        %1758 = vmatprep.mubr.bf16.mxu0 0
        %1759 = vmatmul.mubr.bf16.gmra.mxu0 %v1487
        %v1760 = vpop.f32.mrf.mxu0
        %v1761 = vadd.f32 %v1112, %v1760
        %v1762 = vpop.f32.mrf.mxu0
        %v1763 = vpop.f32.mrf.mxu0
        %v1764 = vadd.f32 %v1113, %v1763
        %v1765 = vpop.f32.mrf.mxu0
        %1766 = vmatprep.mubr.bf16.mxu0 0
        %1767 = vmatmul.mubr.bf16.gmra.mxu0 %v1488
        %v1768 = vpop.f32.mrf.mxu0
        %v1769 = vadd.f32 %v1114, %v1768
        %v1770 = vpop.f32.mrf.mxu0
        %v1771 = vpop.f32.mrf.mxu0
        %v1772 = vadd.f32 %v1115, %v1771
        %v1773 = vpop.f32.mrf.mxu0
        %1774 = vmatprep.mubr.bf16.mxu0 0
        %1775 = vmatmul.mubr.bf16.gmra.mxu0 %v1489
        %v1776 = vpop.f32.mrf.mxu0
        %v1777 = vadd.f32 %v1116, %v1776
        %v1778 = vpop.f32.mrf.mxu0
        %v1779 = vpop.f32.mrf.mxu0
        %v1780 = vadd.f32 %v1117, %v1779
        %v1781 = vpop.f32.mrf.mxu0
        %1782 = vmatprep.mubr.bf16.mxu0 0
        %1783 = vmatmul.mubr.bf16.gmra.mxu0 %v1490
        %v1784 = vpop.f32.mrf.mxu0
        %v1785 = vadd.f32 %v1118, %v1784
        %v1786 = vpop.f32.mrf.mxu0
        %v1787 = vpop.f32.mrf.mxu0
        %v1788 = vadd.f32 %v1119, %v1787
        %v1789 = vpop.f32.mrf.mxu0
        %1790 = vmatprep.mubr.bf16.mxu0 0
        %1791 = vmatmul.mubr.bf16.gmra.mxu0 %v1491
        %v1792 = vpop.f32.mrf.mxu0
        %v1793 = vadd.f32 %v1120, %v1792
        %v1794 = vpop.f32.mrf.mxu0
        %v1795 = vpop.f32.mrf.mxu0
        %v1796 = vadd.f32 %v1121, %v1795
        %v1797 = vpop.f32.mrf.mxu0
        %1798 = vmatprep.mubr.bf16.mxu0 0
        %1799 = vmatmul.mubr.bf16.gmra.mxu0 %v1492
        %v1800 = vpop.f32.mrf.mxu0
        %v1801 = vadd.f32 %v1122, %v1800
        %v1802 = vpop.f32.mrf.mxu0
        %v1803 = vpop.f32.mrf.mxu0
        %v1804 = vadd.f32 %v1123, %v1803
        %v1805 = vpop.f32.mrf.mxu0
        %1806 = vmatprep.mubr.bf16.mxu0 0
        %1807 = vmatmul.mubr.bf16.gmra.mxu0 %v1493
        %v1808 = vpop.f32.mrf.mxu0
        %v1809 = vadd.f32 %v1124, %v1808
        %v1810 = vpop.f32.mrf.mxu0
        %v1811 = vpop.f32.mrf.mxu0
        %v1812 = vadd.f32 %v1125, %v1811
        %v1813 = vpop.f32.mrf.mxu0
        %1814 = vmatprep.mubr.bf16.mxu0 0
        %1815 = vmatmul.mubr.bf16.gmra.mxu0 %v1494
        %v1816 = vpop.f32.mrf.mxu0
        %v1817 = vadd.f32 %v1126, %v1816
        %v1818 = vpop.f32.mrf.mxu0
        %v1819 = vpop.f32.mrf.mxu0
        %v1820 = vadd.f32 %v1127, %v1819
        %v1821 = vpop.f32.mrf.mxu0
        %1822 = vmatprep.mubr.bf16.mxu0 0
        %1823 = vmatmul.mubr.bf16.gmra.mxu0 %v1495
        %v1824 = vpop.f32.mrf.mxu0
        %v1825 = vadd.f32 %v1128, %v1824
        %v1826 = vpop.f32.mrf.mxu0
        %v1827 = vpop.f32.mrf.mxu0
        %v1828 = vadd.f32 %v1129, %v1827
        %v1829 = vpop.f32.mrf.mxu0
        %1830 = vmatprep.mubr.bf16.mxu0 0
        %1831 = vmatmul.mubr.bf16.gmra.mxu0 %v1496
        %v1832 = vpop.f32.mrf.mxu0
        %v1833 = vadd.f32 %v1130, %v1832
        %v1834 = vpop.f32.mrf.mxu0
        %v1835 = vpop.f32.mrf.mxu0
        %v1836 = vadd.f32 %v1131, %v1835
        %v1837 = vpop.f32.mrf.mxu0
        %1838 = vmatprep.mubr.bf16.mxu0 0
        %1839 = vmatmul.mubr.bf16.gmra.mxu0 %v1497
        %v1840 = vpop.f32.mrf.mxu0
        %v1841 = vadd.f32 %v1132, %v1840
        %v1842 = vpop.f32.mrf.mxu0
        %v1843 = vpop.f32.mrf.mxu0
        %v1844 = vadd.f32 %v1133, %v1843
        %v1845 = vpop.f32.mrf.mxu0
        %1846 = vmatprep.mubr.bf16.mxu0 0
        %1847 = vmatmul.mubr.bf16.gmra.mxu0 %v1498
        %v1848 = vpop.f32.mrf.mxu0
        %v1849 = vadd.f32 %v1134, %v1848
        %v1850 = vpop.f32.mrf.mxu0
        %v1851 = vpop.f32.mrf.mxu0
        %v1852 = vadd.f32 %v1135, %v1851
        %v1853 = vpop.f32.mrf.mxu0
        %1854 = vmatprep.mubr.bf16.mxu0 0
        %1855 = vmatmul.mubr.bf16.gmra.mxu0 %v1499
        %v1856 = vpop.f32.mrf.mxu0
        %v1857 = vadd.f32 %v1136, %v1856
        %v1858 = vpop.f32.mrf.mxu0
        %v1859 = vpop.f32.mrf.mxu0
        %v1860 = vadd.f32 %v1137, %v1859
        %v1861 = vpop.f32.mrf.mxu0
        %1862 = vmatprep.mubr.bf16.mxu0 0
        %1863 = vmatmul.mubr.bf16.gmra.mxu0 %v1500
        %v1864 = vpop.f32.mrf.mxu0
        %v1865 = vadd.f32 %v1138, %v1864
        %v1866 = vpop.f32.mrf.mxu0
        %v1867 = vpop.f32.mrf.mxu0
        %v1868 = vadd.f32 %v1139, %v1867
        %v1869 = vpop.f32.mrf.mxu0
        %1870 = vmatprep.mubr.bf16.mxu0 0
        %1871 = vmatmul.mubr.bf16.gmra.mxu0 %v1501
        %v1872 = vpop.f32.mrf.mxu0
        %v1873 = vadd.f32 %v1140, %v1872
        %v1874 = vpop.f32.mrf.mxu0
        %v1875 = vpop.f32.mrf.mxu0
        %v1876 = vadd.f32 %v1141, %v1875
        %v1877 = vpop.f32.mrf.mxu0
        %1878 = vmatprep.mubr.bf16.mxu0 0
        %1879 = vmatmul.mubr.bf16.gmra.mxu0 %v1502
        %v1880 = vpop.f32.mrf.mxu0
        %v1881 = vadd.f32 %v1142, %v1880
        %v1882 = vpop.f32.mrf.mxu0
        %v1883 = vpop.f32.mrf.mxu0
        %v1884 = vadd.f32 %v1143, %v1883
        %v1885 = vpop.f32.mrf.mxu0
        %1886 = vmatprep.mubr.bf16.mxu0 0
        %1887 = vmatmul.mubr.bf16.gmra.mxu0 %v1503
        %v1888 = vpop.f32.mrf.mxu0
        %v1889 = vadd.f32 %v1144, %v1888
        %v1890 = vpop.f32.mrf.mxu0
        %v1891 = vpop.f32.mrf.mxu0
        %v1892 = vadd.f32 %v1145, %v1891
        %v1893 = vpop.f32.mrf.mxu0
        %1894 = vmatprep.mubr.bf16.mxu0 0
        %1895 = vmatmul.mubr.bf16.gmra.mxu0 %v1504
        %v1896 = vpop.f32.mrf.mxu0
        %v1897 = vadd.f32 %v1146, %v1896
        %v1898 = vpop.f32.mrf.mxu0
        %v1899 = vpop.f32.mrf.mxu0
        %v1900 = vadd.f32 %v1147, %v1899
        %v1901 = vpop.f32.mrf.mxu0
        %1902 = vmatprep.mubr.bf16.mxu0 0
        %1903 = vmatmul.mubr.bf16.gmra.mxu0 %v1505
        %v1904 = vpop.f32.mrf.mxu0
        %v1905 = vadd.f32 %v1148, %v1904
        %v1906 = vpop.f32.mrf.mxu0
        %v1907 = vpop.f32.mrf.mxu0
        %v1908 = vadd.f32 %v1149, %v1907
        %v1909 = vpop.f32.mrf.mxu0
        %1910 = vmatprep.mubr.bf16.mxu0 0
        %1911 = vmatmul.mubr.bf16.gmra.mxu0 %v1506
        %v1912 = vpop.f32.mrf.mxu0
        %v1913 = vadd.f32 %v1150, %v1912
        %v1914 = vpop.f32.mrf.mxu0
        %v1915 = vpop.f32.mrf.mxu0
        %v1916 = vadd.f32 %v1151, %v1915
        %v1917 = vpop.f32.mrf.mxu0
        %1918 = vmatprep.mubr.bf16.mxu0 0
        %1919 = vmatmul.mubr.bf16.gmra.mxu0 %v1507
        %v1920 = vpop.f32.mrf.mxu0
        %v1921 = vadd.f32 %v1152, %v1920
        %v1922 = vpop.f32.mrf.mxu0
        %v1923 = vpop.f32.mrf.mxu0
        %v1924 = vadd.f32 %v1153, %v1923
        %v1925 = vpop.f32.mrf.mxu0
        %1926 = vmatprep.mubr.bf16.mxu0 0
        %1927 = vmatmul.mubr.bf16.gmra.mxu0 %v1508
        %v1928 = vpop.f32.mrf.mxu0
        %v1929 = vadd.f32 %v1154, %v1928
        %v1930 = vpop.f32.mrf.mxu0
        %v1931 = vpop.f32.mrf.mxu0
        %v1932 = vadd.f32 %v1155, %v1931
        %v1933 = vpop.f32.mrf.mxu0
        %1934 = vmatprep.mubr.bf16.mxu0 0
        %1935 = vmatmul.mubr.bf16.gmra.mxu0 %v1509
        %v1936 = vpop.f32.mrf.mxu0
        %v1937 = vadd.f32 %v1156, %v1936
        %v1938 = vpop.f32.mrf.mxu0
        %v1939 = vpop.f32.mrf.mxu0
        %v1940 = vadd.f32 %v1157, %v1939
        %v1941 = vpop.f32.mrf.mxu0
        %1942 = vmatprep.mubr.bf16.mxu0 0
        %1943 = vmatmul.mubr.bf16.gmra.mxu0 %v1510
        %v1944 = vpop.f32.mrf.mxu0
        %v1945 = vadd.f32 %v1158, %v1944
        %v1946 = vpop.f32.mrf.mxu0
        %v1947 = vpop.f32.mrf.mxu0
        %v1948 = vadd.f32 %v1159, %v1947
        %v1949 = vpop.f32.mrf.mxu0
        %1950 = vmatprep.mubr.bf16.mxu0 0
        %1951 = vmatmul.mubr.bf16.gmra.mxu0 %v1511
        %v1952 = vpop.f32.mrf.mxu0
        %v1953 = vadd.f32 %v1160, %v1952
        %v1954 = vpop.f32.mrf.mxu0
        %v1955 = vpop.f32.mrf.mxu0
        %v1956 = vadd.f32 %v1161, %v1955
        %v1957 = vpop.f32.mrf.mxu0
        %1958 = vmatprep.mubr.bf16.mxu0 0
        %1959 = vmatmul.mubr.bf16.gmra.mxu0 %v1512
        %v1960 = vpop.f32.mrf.mxu0
        %v1961 = vadd.f32 %v1162, %v1960
        %v1962 = vpop.f32.mrf.mxu0
        %v1963 = vpop.f32.mrf.mxu0
        %v1964 = vadd.f32 %v1163, %v1963
        %v1965 = vpop.f32.mrf.mxu0
        %1966 = vmatprep.mubr.bf16.mxu0 0
        %1967 = vmatmul.mubr.bf16.gmra.mxu0 %v1513
        %v1968 = vpop.f32.mrf.mxu0
        %v1969 = vadd.f32 %v1164, %v1968
        %v1970 = vpop.f32.mrf.mxu0
        %v1971 = vpop.f32.mrf.mxu0
        %v1972 = vadd.f32 %v1165, %v1971
        %v1973 = vpop.f32.mrf.mxu0
        %1974 = vmatprep.mubr.bf16.mxu0 0
        %1975 = vmatmul.mubr.bf16.gmra.mxu0 %v1514
        %v1976 = vpop.f32.mrf.mxu0
        %v1977 = vadd.f32 %v1166, %v1976
        %v1978 = vpop.f32.mrf.mxu0
        %v1979 = vpop.f32.mrf.mxu0
        %v1980 = vadd.f32 %v1167, %v1979
        %v1981 = vpop.f32.mrf.mxu0
        %1982 = vmatprep.mubr.bf16.mxu0 0
        %1983 = vmatmul.mubr.bf16.gmra.mxu0 %v1515
        %v1984 = vpop.f32.mrf.mxu0
        %v1985 = vadd.f32 %v1168, %v1984
        %v1986 = vpop.f32.mrf.mxu0
        %v1987 = vpop.f32.mrf.mxu0
        %v1988 = vadd.f32 %v1169, %v1987
        %v1989 = vpop.f32.mrf.mxu0
        %1990 = vmatprep.mubr.bf16.mxu0 0
        %1991 = vmatmul.mubr.bf16.gmra.mxu0 %v1516
        %v1992 = vpop.f32.mrf.mxu0
        %v1993 = vadd.f32 %v1170, %v1992
        %v1994 = vpop.f32.mrf.mxu0
        %v1995 = vpop.f32.mrf.mxu0
        %v1996 = vadd.f32 %v1171, %v1995
        %v1997 = vpop.f32.mrf.mxu0
        %1998 = vmatprep.mubr.bf16.mxu0 0
        %1999 = vmatmul.mubr.bf16.gmra.mxu0 %v1517
        %v2000 = vpop.f32.mrf.mxu0
        %v2001 = vadd.f32 %v1172, %v2000
        %v2002 = vpop.f32.mrf.mxu0
        %v2003 = vpop.f32.mrf.mxu0
        %v2004 = vadd.f32 %v1173, %v2003
        %v2005 = vpop.f32.mrf.mxu0
        %2006 = vmatprep.mubr.bf16.mxu0 0
        %2007 = vmatmul.mubr.bf16.gmra.mxu0 %v1518
        %v2008 = vpop.f32.mrf.mxu0
        %v2009 = vadd.f32 %v1174, %v2008
        %v2010 = vpop.f32.mrf.mxu0
        %v2011 = vpop.f32.mrf.mxu0
        %v2012 = vadd.f32 %v1175, %v2011
        %v2013 = vpop.f32.mrf.mxu0
        %2014 = vmatprep.mubr.bf16.mxu0 0
        %2015 = vmatmul.mubr.bf16.gmra.mxu0 %v1519
        %v2016 = vpop.f32.mrf.mxu0
        %v2017 = vadd.f32 %v1176, %v2016
        %v2018 = vpop.f32.mrf.mxu0
        %v2019 = vpop.f32.mrf.mxu0
        %v2020 = vadd.f32 %v1177, %v2019
        %v2021 = vpop.f32.mrf.mxu0
        %2022 = vmatprep.mubr.bf16.mxu0 0
        %2023 = vmatmul.mubr.bf16.gmra.mxu0 %v1520
        %v2024 = vpop.f32.mrf.mxu0
        %v2025 = vadd.f32 %v1178, %v2024
        %v2026 = vpop.f32.mrf.mxu0
        %v2027 = vpop.f32.mrf.mxu0
        %v2028 = vadd.f32 %v1179, %v2027
        %v2029 = vpop.f32.mrf.mxu0
        %2030 = vmatprep.mubr.bf16.mxu0 0
        %2031 = vmatmul.mubr.bf16.gmra.mxu0 %v1521
        %v2032 = vpop.f32.mrf.mxu0
        %v2033 = vadd.f32 %v1180, %v2032
        %v2034 = vpop.f32.mrf.mxu0
        %v2035 = vpop.f32.mrf.mxu0
        %v2036 = vadd.f32 %v1181, %v2035
        %v2037 = vpop.f32.mrf.mxu0
        %2038 = vmatprep.mubr.bf16.mxu0 0
        %2039 = vmatmul.mubr.bf16.gmra.mxu0 %v1522
        %v2040 = vpop.f32.mrf.mxu0
        %v2041 = vadd.f32 %v1182, %v2040
        %v2042 = vpop.f32.mrf.mxu0
        %v2043 = vpop.f32.mrf.mxu0
        %v2044 = vadd.f32 %v1183, %v2043
        %v2045 = vpop.f32.mrf.mxu0
        %2046 = vmatprep.mubr.bf16.mxu0 0
        %2047 = vmatmul.mubr.bf16.gmra.mxu0 %v1523
        %v2048 = vpop.f32.mrf.mxu0
        %v2049 = vadd.f32 %v1184, %v2048
        %v2050 = vpop.f32.mrf.mxu0
        %v2051 = vpop.f32.mrf.mxu0
        %v2052 = vadd.f32 %v1185, %v2051
        %v2053 = vpop.f32.mrf.mxu0
        %2054 = vmatprep.mubr.bf16.mxu0 0
        %2055 = vmatmul.mubr.bf16.gmra.mxu0 %v1524
        %v2056 = vpop.f32.mrf.mxu0
        %v2057 = vadd.f32 %v1186, %v2056
        %v2058 = vpop.f32.mrf.mxu0
        %v2059 = vpop.f32.mrf.mxu0
        %v2060 = vadd.f32 %v1187, %v2059
        %v2061 = vpop.f32.mrf.mxu0
        %2062 = vmatprep.mubr.bf16.mxu0 0
        %2063 = vmatmul.mubr.bf16.gmra.mxu0 %v1525
        %v2064 = vpop.f32.mrf.mxu0
        %v2065 = vadd.f32 %v1188, %v2064
        %v2066 = vpop.f32.mrf.mxu0
        %v2067 = vpop.f32.mrf.mxu0
        %v2068 = vadd.f32 %v1189, %v2067
        %v2069 = vpop.f32.mrf.mxu0
        %2070 = vmatprep.mubr.bf16.mxu0 0
        %2071 = vmatmul.mubr.bf16.gmra.mxu0 %v1526
        %v2072 = vpop.f32.mrf.mxu0
        %v2073 = vadd.f32 %v1190, %v2072
        %v2074 = vpop.f32.mrf.mxu0
        %v2075 = vpop.f32.mrf.mxu0
        %v2076 = vadd.f32 %v1191, %v2075
        %v2077 = vpop.f32.mrf.mxu0
        %2078 = vmatprep.mubr.bf16.mxu0 0
        %2079 = vmatmul.mubr.bf16.gmra.mxu0 %v1527
        %v2080 = vpop.f32.mrf.mxu0
        %v2081 = vadd.f32 %v1192, %v2080
        %v2082 = vpop.f32.mrf.mxu0
        %v2083 = vpop.f32.mrf.mxu0
        %v2084 = vadd.f32 %v1193, %v2083
        %v2085 = vpop.f32.mrf.mxu0
        %2086 = vmatprep.mubr.bf16.mxu0 0
        %2087 = vmatmul.mubr.bf16.gmra.mxu0 %v1528
        %v2088 = vpop.f32.mrf.mxu0
        %v2089 = vadd.f32 %v1194, %v2088
        %v2090 = vpop.f32.mrf.mxu0
        %v2091 = vpop.f32.mrf.mxu0
        %v2092 = vadd.f32 %v1195, %v2091
        %v2093 = vpop.f32.mrf.mxu0
        %2094 = vmatprep.mubr.bf16.mxu0 0
        %2095 = vmatmul.mubr.bf16.gmra.mxu0 %v1529
        %v2096 = vpop.f32.mrf.mxu0
        %v2097 = vadd.f32 %v1196, %v2096
        %v2098 = vpop.f32.mrf.mxu0
        %v2099 = vpop.f32.mrf.mxu0
        %v2100 = vadd.f32 %v1197, %v2099
        %v2101 = vpop.f32.mrf.mxu0
        %2102 = vmatprep.mubr.bf16.mxu0 0
        %2103 = vmatmul.mubr.bf16.gmra.mxu0 %v1530
        %v2104 = vpop.f32.mrf.mxu0
        %v2105 = vadd.f32 %v1198, %v2104
        %v2106 = vpop.f32.mrf.mxu0
        %v2107 = vpop.f32.mrf.mxu0
        %v2108 = vadd.f32 %v1199, %v2107
        %v2109 = vpop.f32.mrf.mxu0
        %2110 = vmatprep.mubr.bf16.mxu0 0
        %2111 = vmatmul.mubr.bf16.gmra.mxu0 %v1531
        %v2112 = vpop.f32.mrf.mxu0
        %v2113 = vadd.f32 %v1200, %v2112
        %v2114 = vpop.f32.mrf.mxu0
        %v2115 = vpop.f32.mrf.mxu0
        %v2116 = vadd.f32 %v1201, %v2115
        %v2117 = vpop.f32.mrf.mxu0
        %2118 = vmatprep.mubr.bf16.mxu0 0
        %2119 = vmatmul.mubr.bf16.gmra.mxu0 %v1532
        %v2120 = vpop.f32.mrf.mxu0
        %v2121 = vadd.f32 %v1202, %v2120
        %v2122 = vpop.f32.mrf.mxu0
        %v2123 = vpop.f32.mrf.mxu0
        %v2124 = vadd.f32 %v1203, %v2123
        %v2125 = vpop.f32.mrf.mxu0
        %2126 = vmatprep.mubr.bf16.mxu0 0
        %2127 = vmatmul.mubr.bf16.gmra.mxu0 %v1533
        %v2128 = vpop.f32.mrf.mxu0
        %v2129 = vadd.f32 %v1204, %v2128
        %v2130 = vpop.f32.mrf.mxu0
        %v2131 = vpop.f32.mrf.mxu0
        %v2132 = vadd.f32 %v1205, %v2131
        %v2133 = vpop.f32.mrf.mxu0
        %2134 = vmatprep.mubr.bf16.mxu0 0
        %2135 = vmatmul.mubr.bf16.gmra.mxu0 %v1534
        %v2136 = vpop.f32.mrf.mxu0
        %v2137 = vadd.f32 %v1206, %v2136
        %v2138 = vpop.f32.mrf.mxu0
        %v2139 = vpop.f32.mrf.mxu0
        %v2140 = vadd.f32 %v1207, %v2139
        %v2141 = vpop.f32.mrf.mxu0
        %2142 = vmatprep.mubr.bf16.mxu0 0
        %2143 = vmatmul.mubr.bf16.gmra.mxu0 %v1535
        %v2144 = vpop.f32.mrf.mxu0
        %v2145 = vadd.f32 %v1208, %v2144
        %v2146 = vpop.f32.mrf.mxu0
        %v2147 = vpop.f32.mrf.mxu0
        %v2148 = vadd.f32 %v1209, %v2147
        %v2149 = vpop.f32.mrf.mxu0
        %2150 = vmatprep.mubr.bf16.mxu0 0
        %2151 = vmatmul.mubr.bf16.gmra.mxu0 %v1536
        %v2152 = vpop.f32.mrf.mxu0
        %v2153 = vadd.f32 %v1210, %v2152
        %v2154 = vpop.f32.mrf.mxu0
        %v2155 = vpop.f32.mrf.mxu0
        %v2156 = vadd.f32 %v1211, %v2155
        %v2157 = vpop.f32.mrf.mxu0
        %2158 = vmatprep.mubr.bf16.mxu0 0
        %2159 = vmatmul.mubr.bf16.gmra.mxu0 %v1537
        %v2160 = vpop.f32.mrf.mxu0
        %v2161 = vadd.f32 %v1212, %v2160
        %v2162 = vpop.f32.mrf.mxu0
        %v2163 = vpop.f32.mrf.mxu0
        %v2164 = vadd.f32 %v1213, %v2163
        %v2165 = vpop.f32.mrf.mxu0
        %2166 = vmatprep.mubr.bf16.mxu0 0
        %2167 = vmatmul.mubr.bf16.gmra.mxu0 %v1538
        %v2168 = vpop.f32.mrf.mxu0
        %v2169 = vadd.f32 %v1214, %v2168
        %v2170 = vpop.f32.mrf.mxu0
        %v2171 = vpop.f32.mrf.mxu0
        %v2172 = vadd.f32 %v1215, %v2171
        %v2173 = vpop.f32.mrf.mxu0
        %2174 = vmatprep.mubr.bf16.mxu0 0
        %2175 = vmatmul.mubr.bf16.gmra.mxu0 %v1539
        %v2176 = vpop.f32.mrf.mxu0
        %v2177 = vadd.f32 %v1216, %v2176
        %v2178 = vpop.f32.mrf.mxu0
        %v2179 = vpop.f32.mrf.mxu0
        %v2180 = vadd.f32 %v1217, %v2179
        %v2181 = vpop.f32.mrf.mxu0
        %2182 = vmatprep.mubr.bf16.mxu0 0
        %2183 = vmatmul.mubr.bf16.gmra.mxu0 %v1540
        %v2184 = vpop.f32.mrf.mxu0
        %v2185 = vadd.f32 %v1218, %v2184
        %v2186 = vpop.f32.mrf.mxu0
        %v2187 = vpop.f32.mrf.mxu0
        %v2188 = vadd.f32 %v1219, %v2187
        %v2189 = vpop.f32.mrf.mxu0
        %2190 = vmatprep.mubr.bf16.mxu0 0
        %2191 = vmatmul.mubr.bf16.gmra.mxu0 %v1541
        %v2192 = vpop.f32.mrf.mxu0
        %v2193 = vadd.f32 %v1220, %v2192
        %v2194 = vpop.f32.mrf.mxu0
        %v2195 = vpop.f32.mrf.mxu0
        %v2196 = vadd.f32 %v1221, %v2195
        %v2197 = vpop.f32.mrf.mxu0
        %2198 = vdwg.mxu0
        %v2199 = vxor.u32 %v1689, 2147483648
        %v2200 = vxor.u32 %v1692, 2147483648
        %v2201 = vxor.u32 %v1697, 2147483648
        %v2202 = vxor.u32 %v1700, 2147483648
        %v2203 = vxor.u32 %v1705, 2147483648
        %v2204 = vxor.u32 %v1708, 2147483648
        %v2205 = vxor.u32 %v1713, 2147483648
        %v2206 = vxor.u32 %v1716, 2147483648
        %v2207 = vxor.u32 %v1721, 2147483648
        %v2208 = vxor.u32 %v1724, 2147483648
        %v2209 = vxor.u32 %v1729, 2147483648
        %v2210 = vxor.u32 %v1732, 2147483648
        %v2211 = vxor.u32 %v1737, 2147483648
        %v2212 = vxor.u32 %v1740, 2147483648
        %v2213 = vxor.u32 %v1745, 2147483648
        %v2214 = vxor.u32 %v1748, 2147483648
        %v2215 = vxor.u32 %v1753, 2147483648
        %v2216 = vxor.u32 %v1756, 2147483648
        %v2217 = vxor.u32 %v1761, 2147483648
        %v2218 = vxor.u32 %v1764, 2147483648
        %v2219 = vxor.u32 %v1769, 2147483648
        %v2220 = vxor.u32 %v1772, 2147483648
        %v2221 = vxor.u32 %v1777, 2147483648
        %v2222 = vxor.u32 %v1780, 2147483648
        %v2223 = vxor.u32 %v1785, 2147483648
        %v2224 = vxor.u32 %v1788, 2147483648
        %v2225 = vxor.u32 %v1793, 2147483648
        %v2226 = vxor.u32 %v1796, 2147483648
        %v2227 = vxor.u32 %v1801, 2147483648
        %v2228 = vxor.u32 %v1804, 2147483648
        %v2229 = vxor.u32 %v1809, 2147483648
        %v2230 = vxor.u32 %v1812, 2147483648
        %v2231 = vxor.u32 %v1817, 2147483648
        %v2232 = vxor.u32 %v1820, 2147483648
        %v2233 = vxor.u32 %v1825, 2147483648
        %v2234 = vxor.u32 %v1828, 2147483648
        %v2235 = vxor.u32 %v1833, 2147483648
        %v2236 = vxor.u32 %v1836, 2147483648
        %v2237 = vxor.u32 %v1841, 2147483648
        %v2238 = vxor.u32 %v1844, 2147483648
        %v2239 = vxor.u32 %v1849, 2147483648
        %v2240 = vxor.u32 %v1852, 2147483648
        %v2241 = vxor.u32 %v1857, 2147483648
        %v2242 = vxor.u32 %v1860, 2147483648
        %v2243 = vxor.u32 %v1865, 2147483648
        %v2244 = vxor.u32 %v1868, 2147483648
        %v2245 = vxor.u32 %v1873, 2147483648
        %v2246 = vxor.u32 %v1876, 2147483648
        %v2247 = vxor.u32 %v1881, 2147483648
        %v2248 = vxor.u32 %v1884, 2147483648
        %v2249 = vxor.u32 %v1889, 2147483648
        %v2250 = vxor.u32 %v1892, 2147483648
        %v2251 = vxor.u32 %v1897, 2147483648
        %v2252 = vxor.u32 %v1900, 2147483648
        %v2253 = vxor.u32 %v1905, 2147483648
        %v2254 = vxor.u32 %v1908, 2147483648
        %v2255 = vxor.u32 %v1913, 2147483648
        %v2256 = vxor.u32 %v1916, 2147483648
        %v2257 = vxor.u32 %v1921, 2147483648
        %v2258 = vxor.u32 %v1924, 2147483648
        %v2259 = vxor.u32 %v1929, 2147483648
        %v2260 = vxor.u32 %v1932, 2147483648
        %v2261 = vxor.u32 %v1937, 2147483648
        %v2262 = vxor.u32 %v1940, 2147483648
        %v2263 = vxor.u32 %v1945, 2147483648
        %v2264 = vxor.u32 %v1948, 2147483648
        %v2265 = vxor.u32 %v1953, 2147483648
        %v2266 = vxor.u32 %v1956, 2147483648
        %v2267 = vxor.u32 %v1961, 2147483648
        %v2268 = vxor.u32 %v1964, 2147483648
        %v2269 = vxor.u32 %v1969, 2147483648
        %v2270 = vxor.u32 %v1972, 2147483648
        %v2271 = vxor.u32 %v1977, 2147483648
        %v2272 = vxor.u32 %v1980, 2147483648
        %v2273 = vxor.u32 %v1985, 2147483648
        %v2274 = vxor.u32 %v1988, 2147483648
        %v2275 = vxor.u32 %v1993, 2147483648
        %v2276 = vxor.u32 %v1996, 2147483648
        %v2277 = vxor.u32 %v2001, 2147483648
        %v2278 = vxor.u32 %v2004, 2147483648
        %v2279 = vxor.u32 %v2009, 2147483648
        %v2280 = vxor.u32 %v2012, 2147483648
        %v2281 = vxor.u32 %v2017, 2147483648
        %v2282 = vxor.u32 %v2020, 2147483648
        %v2283 = vxor.u32 %v2025, 2147483648
        %v2284 = vxor.u32 %v2028, 2147483648
        %v2285 = vxor.u32 %v2033, 2147483648
        %v2286 = vxor.u32 %v2036, 2147483648
        %v2287 = vxor.u32 %v2041, 2147483648
        %v2288 = vxor.u32 %v2044, 2147483648
        %v2289 = vxor.u32 %v2049, 2147483648
        %v2290 = vxor.u32 %v2052, 2147483648
        %v2291 = vxor.u32 %v2057, 2147483648
        %v2292 = vxor.u32 %v2060, 2147483648
        %v2293 = vxor.u32 %v2065, 2147483648
        %v2294 = vxor.u32 %v2068, 2147483648
        %v2295 = vxor.u32 %v2073, 2147483648
        %v2296 = vxor.u32 %v2076, 2147483648
        %v2297 = vxor.u32 %v2081, 2147483648
        %v2298 = vxor.u32 %v2084, 2147483648
        %v2299 = vxor.u32 %v2089, 2147483648
        %v2300 = vxor.u32 %v2092, 2147483648
        %v2301 = vxor.u32 %v2097, 2147483648
        %v2302 = vxor.u32 %v2100, 2147483648
        %v2303 = vxor.u32 %v2105, 2147483648
        %v2304 = vxor.u32 %v2108, 2147483648
        %v2305 = vxor.u32 %v2113, 2147483648
        %v2306 = vxor.u32 %v2116, 2147483648
        %v2307 = vxor.u32 %v2121, 2147483648
        %v2308 = vxor.u32 %v2124, 2147483648
        %v2309 = vxor.u32 %v2129, 2147483648
        %v2310 = vxor.u32 %v2132, 2147483648
        %v2311 = vxor.u32 %v2137, 2147483648
        %v2312 = vxor.u32 %v2140, 2147483648
        %v2313 = vxor.u32 %v2145, 2147483648
        %v2314 = vxor.u32 %v2148, 2147483648
        %v2315 = vxor.u32 %v2153, 2147483648
        %v2316 = vxor.u32 %v2156, 2147483648
        %v2317 = vxor.u32 %v2161, 2147483648
        %v2318 = vxor.u32 %v2164, 2147483648
        %v2319 = vxor.u32 %v2169, 2147483648
        %v2320 = vxor.u32 %v2172, 2147483648
        %v2321 = vxor.u32 %v2177, 2147483648
        %v2322 = vxor.u32 %v2180, 2147483648
        %v2323 = vxor.u32 %v2185, 2147483648
        %v2324 = vxor.u32 %v2188, 2147483648
        %v2325 = vxor.u32 %v2193, 2147483648
        %v2326 = vxor.u32 %v2196, 2147483648
        %v2327 = vmul.f32 %v2199, 1.442695
        %v2328 = vpow.pop %v2327
        %v2329 = vmul.f32 %v2200, 1.442695
        %v2330 = vpow.pop %v2329
        %v2331 = vmul.f32 %v2201, 1.442695
        %v2332 = vpow.pop %v2331
        %v2333 = vmul.f32 %v2202, 1.442695
        %v2334 = vpow.pop %v2333
        %v2335 = vmul.f32 %v2203, 1.442695
        %v2336 = vpow.pop %v2335
        %v2337 = vmul.f32 %v2204, 1.442695
        %v2338 = vpow.pop %v2337
        %v2339 = vmul.f32 %v2205, 1.442695
        %v2340 = vpow.pop %v2339
        %v2341 = vmul.f32 %v2206, 1.442695
        %v2342 = vpow.pop %v2341
        %v2343 = vmul.f32 %v2207, 1.442695
        %v2344 = vpow.pop %v2343
        %v2345 = vmul.f32 %v2208, 1.442695
        %v2346 = vpow.pop %v2345
        %v2347 = vmul.f32 %v2209, 1.442695
        %v2348 = vpow.pop %v2347
        %v2349 = vmul.f32 %v2210, 1.442695
        %v2350 = vpow.pop %v2349
        %v2351 = vmul.f32 %v2211, 1.442695
        %v2352 = vpow.pop %v2351
        %v2353 = vmul.f32 %v2212, 1.442695
        %v2354 = vpow.pop %v2353
        %v2355 = vmul.f32 %v2213, 1.442695
        %v2356 = vpow.pop %v2355
        %v2357 = vmul.f32 %v2214, 1.442695
        %v2358 = vpow.pop %v2357
        %v2359 = vmul.f32 %v2215, 1.442695
        %v2360 = vpow.pop %v2359
        %v2361 = vmul.f32 %v2216, 1.442695
        %v2362 = vpow.pop %v2361
        %v2363 = vmul.f32 %v2217, 1.442695
        %v2364 = vpow.pop %v2363
        %v2365 = vmul.f32 %v2218, 1.442695
        %v2366 = vpow.pop %v2365
        %v2367 = vmul.f32 %v2219, 1.442695
        %v2368 = vpow.pop %v2367
        %v2369 = vmul.f32 %v2220, 1.442695
        %v2370 = vpow.pop %v2369
        %v2371 = vmul.f32 %v2221, 1.442695
        %v2372 = vpow.pop %v2371
        %v2373 = vmul.f32 %v2222, 1.442695
        %v2374 = vpow.pop %v2373
        %v2375 = vmul.f32 %v2223, 1.442695
        %v2376 = vpow.pop %v2375
        %v2377 = vmul.f32 %v2224, 1.442695
        %v2378 = vpow.pop %v2377
        %v2379 = vmul.f32 %v2225, 1.442695
        %v2380 = vpow.pop %v2379
        %v2381 = vmul.f32 %v2226, 1.442695
        %v2382 = vpow.pop %v2381
        %v2383 = vmul.f32 %v2227, 1.442695
        %v2384 = vpow.pop %v2383
        %v2385 = vmul.f32 %v2228, 1.442695
        %v2386 = vpow.pop %v2385
        %v2387 = vmul.f32 %v2229, 1.442695
        %v2388 = vpow.pop %v2387
        %v2389 = vmul.f32 %v2230, 1.442695
        %v2390 = vpow.pop %v2389
        %v2391 = vmul.f32 %v2231, 1.442695
        %v2392 = vpow.pop %v2391
        %v2393 = vmul.f32 %v2232, 1.442695
        %v2394 = vpow.pop %v2393
        %v2395 = vmul.f32 %v2233, 1.442695
        %v2396 = vpow.pop %v2395
        %v2397 = vmul.f32 %v2234, 1.442695
        %v2398 = vpow.pop %v2397
        %v2399 = vmul.f32 %v2235, 1.442695
        %v2400 = vpow.pop %v2399
        %v2401 = vmul.f32 %v2236, 1.442695
        %v2402 = vpow.pop %v2401
        %v2403 = vmul.f32 %v2237, 1.442695
        %v2404 = vpow.pop %v2403
        %v2405 = vmul.f32 %v2238, 1.442695
        %v2406 = vpow.pop %v2405
        %v2407 = vmul.f32 %v2239, 1.442695
        %v2408 = vpow.pop %v2407
        %v2409 = vmul.f32 %v2240, 1.442695
        %v2410 = vpow.pop %v2409
        %v2411 = vmul.f32 %v2241, 1.442695
        %v2412 = vpow.pop %v2411
        %v2413 = vmul.f32 %v2242, 1.442695
        %v2414 = vpow.pop %v2413
        %v2415 = vmul.f32 %v2243, 1.442695
        %v2416 = vpow.pop %v2415
        %v2417 = vmul.f32 %v2244, 1.442695
        %v2418 = vpow.pop %v2417
        %v2419 = vmul.f32 %v2245, 1.442695
        %v2420 = vpow.pop %v2419
        %v2421 = vmul.f32 %v2246, 1.442695
        %v2422 = vpow.pop %v2421
        %v2423 = vmul.f32 %v2247, 1.442695
        %v2424 = vpow.pop %v2423
        %v2425 = vmul.f32 %v2248, 1.442695
        %v2426 = vpow.pop %v2425
        %v2427 = vmul.f32 %v2249, 1.442695
        %v2428 = vpow.pop %v2427
        %v2429 = vmul.f32 %v2250, 1.442695
        %v2430 = vpow.pop %v2429
        %v2431 = vmul.f32 %v2251, 1.442695
        %v2432 = vpow.pop %v2431
        %v2433 = vmul.f32 %v2252, 1.442695
        %v2434 = vpow.pop %v2433
        %v2435 = vmul.f32 %v2253, 1.442695
        %v2436 = vpow.pop %v2435
        %v2437 = vmul.f32 %v2254, 1.442695
        %v2438 = vpow.pop %v2437
        %v2439 = vmul.f32 %v2255, 1.442695
        %v2440 = vpow.pop %v2439
        %v2441 = vmul.f32 %v2256, 1.442695
        %v2442 = vpow.pop %v2441
        %v2443 = vmul.f32 %v2257, 1.442695
        %v2444 = vpow.pop %v2443
        %v2445 = vmul.f32 %v2258, 1.442695
        %v2446 = vpow.pop %v2445
        %v2447 = vmul.f32 %v2259, 1.442695
        %v2448 = vpow.pop %v2447
        %v2449 = vmul.f32 %v2260, 1.442695
        %v2450 = vpow.pop %v2449
        %v2451 = vmul.f32 %v2261, 1.442695
        %v2452 = vpow.pop %v2451
        %v2453 = vmul.f32 %v2262, 1.442695
        %v2454 = vpow.pop %v2453
        %v2455 = vmul.f32 %v2263, 1.442695
        %v2456 = vpow.pop %v2455
        %v2457 = vmul.f32 %v2264, 1.442695
        %v2458 = vpow.pop %v2457
        %v2459 = vmul.f32 %v2265, 1.442695
        %v2460 = vpow.pop %v2459
        %v2461 = vmul.f32 %v2266, 1.442695
        %v2462 = vpow.pop %v2461
        %v2463 = vmul.f32 %v2267, 1.442695
        %v2464 = vpow.pop %v2463
        %v2465 = vmul.f32 %v2268, 1.442695
        %v2466 = vpow.pop %v2465
        %v2467 = vmul.f32 %v2269, 1.442695
        %v2468 = vpow.pop %v2467
        %v2469 = vmul.f32 %v2270, 1.442695
        %v2470 = vpow.pop %v2469
        %v2471 = vmul.f32 %v2271, 1.442695
        %v2472 = vpow.pop %v2471
        %v2473 = vmul.f32 %v2272, 1.442695
        %v2474 = vpow.pop %v2473
        %v2475 = vmul.f32 %v2273, 1.442695
        %v2476 = vpow.pop %v2475
        %v2477 = vmul.f32 %v2274, 1.442695
        %v2478 = vpow.pop %v2477
        %v2479 = vmul.f32 %v2275, 1.442695
        %v2480 = vpow.pop %v2479
        %v2481 = vmul.f32 %v2276, 1.442695
        %v2482 = vpow.pop %v2481
        %v2483 = vmul.f32 %v2277, 1.442695
        %v2484 = vpow.pop %v2483
        %v2485 = vmul.f32 %v2278, 1.442695
        %v2486 = vpow.pop %v2485
        %v2487 = vmul.f32 %v2279, 1.442695
        %v2488 = vpow.pop %v2487
        %v2489 = vmul.f32 %v2280, 1.442695
        %v2490 = vpow.pop %v2489
        %v2491 = vmul.f32 %v2281, 1.442695
        %v2492 = vpow.pop %v2491
        %v2493 = vmul.f32 %v2282, 1.442695
        %v2494 = vpow.pop %v2493
        %v2495 = vmul.f32 %v2283, 1.442695
        %v2496 = vpow.pop %v2495
        %v2497 = vmul.f32 %v2284, 1.442695
        %v2498 = vpow.pop %v2497
        %v2499 = vmul.f32 %v2285, 1.442695
        %v2500 = vpow.pop %v2499
        %v2501 = vmul.f32 %v2286, 1.442695
        %v2502 = vpow.pop %v2501
        %v2503 = vmul.f32 %v2287, 1.442695
        %v2504 = vpow.pop %v2503
        %v2505 = vmul.f32 %v2288, 1.442695
        %v2506 = vpow.pop %v2505
        %v2507 = vmul.f32 %v2289, 1.442695
        %v2508 = vpow.pop %v2507
        %v2509 = vmul.f32 %v2290, 1.442695
        %v2510 = vpow.pop %v2509
        %v2511 = vmul.f32 %v2291, 1.442695
        %v2512 = vpow.pop %v2511
        %v2513 = vmul.f32 %v2292, 1.442695
        %v2514 = vpow.pop %v2513
        %v2515 = vmul.f32 %v2293, 1.442695
        %v2516 = vpow.pop %v2515
        %v2517 = vmul.f32 %v2294, 1.442695
        %v2518 = vpow.pop %v2517
        %v2519 = vmul.f32 %v2295, 1.442695
        %v2520 = vpow.pop %v2519
        %v2521 = vmul.f32 %v2296, 1.442695
        %v2522 = vpow.pop %v2521
        %v2523 = vmul.f32 %v2297, 1.442695
        %v2524 = vpow.pop %v2523
        %v2525 = vmul.f32 %v2298, 1.442695
        %v2526 = vpow.pop %v2525
        %v2527 = vmul.f32 %v2299, 1.442695
        %v2528 = vpow.pop %v2527
        %v2529 = vmul.f32 %v2300, 1.442695
        %v2530 = vpow.pop %v2529
        %v2531 = vmul.f32 %v2301, 1.442695
        %v2532 = vpow.pop %v2531
        %v2533 = vmul.f32 %v2302, 1.442695
        %v2534 = vpow.pop %v2533
        %v2535 = vmul.f32 %v2303, 1.442695
        %v2536 = vpow.pop %v2535
        %v2537 = vmul.f32 %v2304, 1.442695
        %v2538 = vpow.pop %v2537
        %v2539 = vmul.f32 %v2305, 1.442695
        %v2540 = vpow.pop %v2539
        %v2541 = vmul.f32 %v2306, 1.442695
        %v2542 = vpow.pop %v2541
        %v2543 = vmul.f32 %v2307, 1.442695
        %v2544 = vpow.pop %v2543
        %v2545 = vmul.f32 %v2308, 1.442695
        %v2546 = vpow.pop %v2545
        %v2547 = vmul.f32 %v2309, 1.442695
        %v2548 = vpow.pop %v2547
        %v2549 = vmul.f32 %v2310, 1.442695
        %v2550 = vpow.pop %v2549
        %v2551 = vmul.f32 %v2311, 1.442695
        %v2552 = vpow.pop %v2551
        %v2553 = vmul.f32 %v2312, 1.442695
        %v2554 = vpow.pop %v2553
        %v2555 = vmul.f32 %v2313, 1.442695
        %v2556 = vpow.pop %v2555
        %v2557 = vmul.f32 %v2314, 1.442695
        %v2558 = vpow.pop %v2557
        %v2559 = vmul.f32 %v2315, 1.442695
        %v2560 = vpow.pop %v2559
        %v2561 = vmul.f32 %v2316, 1.442695
        %v2562 = vpow.pop %v2561
        %v2563 = vmul.f32 %v2317, 1.442695
        %v2564 = vpow.pop %v2563
        %v2565 = vmul.f32 %v2318, 1.442695
        %v2566 = vpow.pop %v2565
        %v2567 = vmul.f32 %v2319, 1.442695
        %v2568 = vpow.pop %v2567
        %v2569 = vmul.f32 %v2320, 1.442695
        %v2570 = vpow.pop %v2569
        %v2571 = vmul.f32 %v2321, 1.442695
        %v2572 = vpow.pop %v2571
        %v2573 = vmul.f32 %v2322, 1.442695
        %v2574 = vpow.pop %v2573
        %v2575 = vmul.f32 %v2323, 1.442695
        %v2576 = vpow.pop %v2575
        %v2577 = vmul.f32 %v2324, 1.442695
        %v2578 = vpow.pop %v2577
        %v2579 = vmul.f32 %v2325, 1.442695
        %v2580 = vpow.pop %v2579
        %v2581 = vmul.f32 %v2326, 1.442695
        %v2582 = vpow.pop %v2581
        %v2583 = vadd.f32 %v2328, 1.0
        %v2584 = vadd.f32 %v2330, 1.0
        %v2585 = vadd.f32 %v2332, 1.0
        %v2586 = vadd.f32 %v2334, 1.0
        %v2587 = vadd.f32 %v2336, 1.0
        %v2588 = vadd.f32 %v2338, 1.0
        %v2589 = vadd.f32 %v2340, 1.0
        %v2590 = vadd.f32 %v2342, 1.0
        %v2591 = vadd.f32 %v2344, 1.0
        %v2592 = vadd.f32 %v2346, 1.0
        %v2593 = vadd.f32 %v2348, 1.0
        %v2594 = vadd.f32 %v2350, 1.0
        %v2595 = vadd.f32 %v2352, 1.0
        %v2596 = vadd.f32 %v2354, 1.0
        %v2597 = vadd.f32 %v2356, 1.0
        %v2598 = vadd.f32 %v2358, 1.0
        %v2599 = vadd.f32 %v2360, 1.0
        %v2600 = vadd.f32 %v2362, 1.0
        %v2601 = vadd.f32 %v2364, 1.0
        %v2602 = vadd.f32 %v2366, 1.0
        %v2603 = vadd.f32 %v2368, 1.0
        %v2604 = vadd.f32 %v2370, 1.0
        %v2605 = vadd.f32 %v2372, 1.0
        %v2606 = vadd.f32 %v2374, 1.0
        %v2607 = vadd.f32 %v2376, 1.0
        %v2608 = vadd.f32 %v2378, 1.0
        %v2609 = vadd.f32 %v2380, 1.0
        %v2610 = vadd.f32 %v2382, 1.0
        %v2611 = vadd.f32 %v2384, 1.0
        %v2612 = vadd.f32 %v2386, 1.0
        %v2613 = vadd.f32 %v2388, 1.0
        %v2614 = vadd.f32 %v2390, 1.0
        %v2615 = vadd.f32 %v2392, 1.0
        %v2616 = vadd.f32 %v2394, 1.0
        %v2617 = vadd.f32 %v2396, 1.0
        %v2618 = vadd.f32 %v2398, 1.0
        %v2619 = vadd.f32 %v2400, 1.0
        %v2620 = vadd.f32 %v2402, 1.0
        %v2621 = vadd.f32 %v2404, 1.0
        %v2622 = vadd.f32 %v2406, 1.0
        %v2623 = vadd.f32 %v2408, 1.0
        %v2624 = vadd.f32 %v2410, 1.0
        %v2625 = vadd.f32 %v2412, 1.0
        %v2626 = vadd.f32 %v2414, 1.0
        %v2627 = vadd.f32 %v2416, 1.0
        %v2628 = vadd.f32 %v2418, 1.0
        %v2629 = vadd.f32 %v2420, 1.0
        %v2630 = vadd.f32 %v2422, 1.0
        %v2631 = vadd.f32 %v2424, 1.0
        %v2632 = vadd.f32 %v2426, 1.0
        %v2633 = vadd.f32 %v2428, 1.0
        %v2634 = vadd.f32 %v2430, 1.0
        %v2635 = vadd.f32 %v2432, 1.0
        %v2636 = vadd.f32 %v2434, 1.0
        %v2637 = vadd.f32 %v2436, 1.0
        %v2638 = vadd.f32 %v2438, 1.0
        %v2639 = vadd.f32 %v2440, 1.0
        %v2640 = vadd.f32 %v2442, 1.0
        %v2641 = vadd.f32 %v2444, 1.0
        %v2642 = vadd.f32 %v2446, 1.0
        %v2643 = vadd.f32 %v2448, 1.0
        %v2644 = vadd.f32 %v2450, 1.0
        %v2645 = vadd.f32 %v2452, 1.0
        %v2646 = vadd.f32 %v2454, 1.0
        %v2647 = vadd.f32 %v2456, 1.0
        %v2648 = vadd.f32 %v2458, 1.0
        %v2649 = vadd.f32 %v2460, 1.0
        %v2650 = vadd.f32 %v2462, 1.0
        %v2651 = vadd.f32 %v2464, 1.0
        %v2652 = vadd.f32 %v2466, 1.0
        %v2653 = vadd.f32 %v2468, 1.0
        %v2654 = vadd.f32 %v2470, 1.0
        %v2655 = vadd.f32 %v2472, 1.0
        %v2656 = vadd.f32 %v2474, 1.0
        %v2657 = vadd.f32 %v2476, 1.0
        %v2658 = vadd.f32 %v2478, 1.0
        %v2659 = vadd.f32 %v2480, 1.0
        %v2660 = vadd.f32 %v2482, 1.0
        %v2661 = vadd.f32 %v2484, 1.0
        %v2662 = vadd.f32 %v2486, 1.0
        %v2663 = vadd.f32 %v2488, 1.0
        %v2664 = vadd.f32 %v2490, 1.0
        %v2665 = vadd.f32 %v2492, 1.0
        %v2666 = vadd.f32 %v2494, 1.0
        %v2667 = vadd.f32 %v2496, 1.0
        %v2668 = vadd.f32 %v2498, 1.0
        %v2669 = vadd.f32 %v2500, 1.0
        %v2670 = vadd.f32 %v2502, 1.0
        %v2671 = vadd.f32 %v2504, 1.0
        %v2672 = vadd.f32 %v2506, 1.0
        %v2673 = vadd.f32 %v2508, 1.0
        %v2674 = vadd.f32 %v2510, 1.0
        %v2675 = vadd.f32 %v2512, 1.0
        %v2676 = vadd.f32 %v2514, 1.0
        %v2677 = vadd.f32 %v2516, 1.0
        %v2678 = vadd.f32 %v2518, 1.0
        %v2679 = vadd.f32 %v2520, 1.0
        %v2680 = vadd.f32 %v2522, 1.0
        %v2681 = vadd.f32 %v2524, 1.0
        %v2682 = vadd.f32 %v2526, 1.0
        %v2683 = vadd.f32 %v2528, 1.0
        %v2684 = vadd.f32 %v2530, 1.0
        %v2685 = vadd.f32 %v2532, 1.0
        %v2686 = vadd.f32 %v2534, 1.0
        %v2687 = vadd.f32 %v2536, 1.0
        %v2688 = vadd.f32 %v2538, 1.0
        %v2689 = vadd.f32 %v2540, 1.0
        %v2690 = vadd.f32 %v2542, 1.0
        %v2691 = vadd.f32 %v2544, 1.0
        %v2692 = vadd.f32 %v2546, 1.0
        %v2693 = vadd.f32 %v2548, 1.0
        %v2694 = vadd.f32 %v2550, 1.0
        %v2695 = vadd.f32 %v2552, 1.0
        %v2696 = vadd.f32 %v2554, 1.0
        %v2697 = vadd.f32 %v2556, 1.0
        %v2698 = vadd.f32 %v2558, 1.0
        %v2699 = vadd.f32 %v2560, 1.0
        %v2700 = vadd.f32 %v2562, 1.0
        %v2701 = vadd.f32 %v2564, 1.0
        %v2702 = vadd.f32 %v2566, 1.0
        %v2703 = vadd.f32 %v2568, 1.0
        %v2704 = vadd.f32 %v2570, 1.0
        %v2705 = vadd.f32 %v2572, 1.0
        %v2706 = vadd.f32 %v2574, 1.0
        %v2707 = vadd.f32 %v2576, 1.0
        %v2708 = vadd.f32 %v2578, 1.0
        %v2709 = vadd.f32 %v2580, 1.0
        %v2710 = vadd.f32 %v2582, 1.0
        %v2711 = vrcp.pop %v2583
        %v2712 = vmul.f32 1.0, %v2711
        %v2713 = vrcp.pop %v2584
        %v2714 = vmul.f32 1.0, %v2713
        %v2715 = vrcp.pop %v2585
        %v2716 = vmul.f32 1.0, %v2715
        %v2717 = vrcp.pop %v2586
        %v2718 = vmul.f32 1.0, %v2717
        %v2719 = vrcp.pop %v2587
        %v2720 = vmul.f32 1.0, %v2719
        %v2721 = vrcp.pop %v2588
        %v2722 = vmul.f32 1.0, %v2721
        %v2723 = vrcp.pop %v2589
        %v2724 = vmul.f32 1.0, %v2723
        %v2725 = vrcp.pop %v2590
        %v2726 = vmul.f32 1.0, %v2725
        %v2727 = vrcp.pop %v2591
        %v2728 = vmul.f32 1.0, %v2727
        %v2729 = vrcp.pop %v2592
        %v2730 = vmul.f32 1.0, %v2729
        %v2731 = vrcp.pop %v2593
        %v2732 = vmul.f32 1.0, %v2731
        %v2733 = vrcp.pop %v2594
        %v2734 = vmul.f32 1.0, %v2733
        %v2735 = vrcp.pop %v2595
        %v2736 = vmul.f32 1.0, %v2735
        %v2737 = vrcp.pop %v2596
        %v2738 = vmul.f32 1.0, %v2737
        %v2739 = vrcp.pop %v2597
        %v2740 = vmul.f32 1.0, %v2739
        %v2741 = vrcp.pop %v2598
        %v2742 = vmul.f32 1.0, %v2741
        %v2743 = vrcp.pop %v2599
        %v2744 = vmul.f32 1.0, %v2743
        %v2745 = vrcp.pop %v2600
        %v2746 = vmul.f32 1.0, %v2745
        %v2747 = vrcp.pop %v2601
        %v2748 = vmul.f32 1.0, %v2747
        %v2749 = vrcp.pop %v2602
        %v2750 = vmul.f32 1.0, %v2749
        %v2751 = vrcp.pop %v2603
        %v2752 = vmul.f32 1.0, %v2751
        %v2753 = vrcp.pop %v2604
        %v2754 = vmul.f32 1.0, %v2753
        %v2755 = vrcp.pop %v2605
        %v2756 = vmul.f32 1.0, %v2755
        %v2757 = vrcp.pop %v2606
        %v2758 = vmul.f32 1.0, %v2757
        %v2759 = vrcp.pop %v2607
        %v2760 = vmul.f32 1.0, %v2759
        %v2761 = vrcp.pop %v2608
        %v2762 = vmul.f32 1.0, %v2761
        %v2763 = vrcp.pop %v2609
        %v2764 = vmul.f32 1.0, %v2763
        %v2765 = vrcp.pop %v2610
        %v2766 = vmul.f32 1.0, %v2765
        %v2767 = vrcp.pop %v2611
        %v2768 = vmul.f32 1.0, %v2767
        %v2769 = vrcp.pop %v2612
        %v2770 = vmul.f32 1.0, %v2769
        %v2771 = vrcp.pop %v2613
        %v2772 = vmul.f32 1.0, %v2771
        %v2773 = vrcp.pop %v2614
        %v2774 = vmul.f32 1.0, %v2773
        %v2775 = vrcp.pop %v2615
        %v2776 = vmul.f32 1.0, %v2775
        %v2777 = vrcp.pop %v2616
        %v2778 = vmul.f32 1.0, %v2777
        %v2779 = vrcp.pop %v2617
        %v2780 = vmul.f32 1.0, %v2779
        %v2781 = vrcp.pop %v2618
        %v2782 = vmul.f32 1.0, %v2781
        %v2783 = vrcp.pop %v2619
        %v2784 = vmul.f32 1.0, %v2783
        %v2785 = vrcp.pop %v2620
        %v2786 = vmul.f32 1.0, %v2785
        %v2787 = vrcp.pop %v2621
        %v2788 = vmul.f32 1.0, %v2787
        %v2789 = vrcp.pop %v2622
        %v2790 = vmul.f32 1.0, %v2789
        %v2791 = vrcp.pop %v2623
        %v2792 = vmul.f32 1.0, %v2791
        %v2793 = vrcp.pop %v2624
        %v2794 = vmul.f32 1.0, %v2793
        %v2795 = vrcp.pop %v2625
        %v2796 = vmul.f32 1.0, %v2795
        %v2797 = vrcp.pop %v2626
        %v2798 = vmul.f32 1.0, %v2797
        %v2799 = vrcp.pop %v2627
        %v2800 = vmul.f32 1.0, %v2799
        %v2801 = vrcp.pop %v2628
        %v2802 = vmul.f32 1.0, %v2801
        %v2803 = vrcp.pop %v2629
        %v2804 = vmul.f32 1.0, %v2803
        %v2805 = vrcp.pop %v2630
        %v2806 = vmul.f32 1.0, %v2805
        %v2807 = vrcp.pop %v2631
        %v2808 = vmul.f32 1.0, %v2807
        %v2809 = vrcp.pop %v2632
        %v2810 = vmul.f32 1.0, %v2809
        %v2811 = vrcp.pop %v2633
        %v2812 = vmul.f32 1.0, %v2811
        %v2813 = vrcp.pop %v2634
        %v2814 = vmul.f32 1.0, %v2813
        %v2815 = vrcp.pop %v2635
        %v2816 = vmul.f32 1.0, %v2815
        %v2817 = vrcp.pop %v2636
        %v2818 = vmul.f32 1.0, %v2817
        %v2819 = vrcp.pop %v2637
        %v2820 = vmul.f32 1.0, %v2819
        %v2821 = vrcp.pop %v2638
        %v2822 = vmul.f32 1.0, %v2821
        %v2823 = vrcp.pop %v2639
        %v2824 = vmul.f32 1.0, %v2823
        %v2825 = vrcp.pop %v2640
        %v2826 = vmul.f32 1.0, %v2825
        %v2827 = vrcp.pop %v2641
        %v2828 = vmul.f32 1.0, %v2827
        %v2829 = vrcp.pop %v2642
        %v2830 = vmul.f32 1.0, %v2829
        %v2831 = vrcp.pop %v2643
        %v2832 = vmul.f32 1.0, %v2831
        %v2833 = vrcp.pop %v2644
        %v2834 = vmul.f32 1.0, %v2833
        %v2835 = vrcp.pop %v2645
        %v2836 = vmul.f32 1.0, %v2835
        %v2837 = vrcp.pop %v2646
        %v2838 = vmul.f32 1.0, %v2837
        %v2839 = vrcp.pop %v2647
        %v2840 = vmul.f32 1.0, %v2839
        %v2841 = vrcp.pop %v2648
        %v2842 = vmul.f32 1.0, %v2841
        %v2843 = vrcp.pop %v2649
        %v2844 = vmul.f32 1.0, %v2843
        %v2845 = vrcp.pop %v2650
        %v2846 = vmul.f32 1.0, %v2845
        %v2847 = vrcp.pop %v2651
        %v2848 = vmul.f32 1.0, %v2847
        %v2849 = vrcp.pop %v2652
        %v2850 = vmul.f32 1.0, %v2849
        %v2851 = vrcp.pop %v2653
        %v2852 = vmul.f32 1.0, %v2851
        %v2853 = vrcp.pop %v2654
        %v2854 = vmul.f32 1.0, %v2853
        %v2855 = vrcp.pop %v2655
        %v2856 = vmul.f32 1.0, %v2855
        %v2857 = vrcp.pop %v2656
        %v2858 = vmul.f32 1.0, %v2857
        %v2859 = vrcp.pop %v2657
        %v2860 = vmul.f32 1.0, %v2859
        %v2861 = vrcp.pop %v2658
        %v2862 = vmul.f32 1.0, %v2861
        %v2863 = vrcp.pop %v2659
        %v2864 = vmul.f32 1.0, %v2863
        %v2865 = vrcp.pop %v2660
        %v2866 = vmul.f32 1.0, %v2865
        %v2867 = vrcp.pop %v2661
        %v2868 = vmul.f32 1.0, %v2867
        %v2869 = vrcp.pop %v2662
        %v2870 = vmul.f32 1.0, %v2869
        %v2871 = vrcp.pop %v2663
        %v2872 = vmul.f32 1.0, %v2871
        %v2873 = vrcp.pop %v2664
        %v2874 = vmul.f32 1.0, %v2873
        %v2875 = vrcp.pop %v2665
        %v2876 = vmul.f32 1.0, %v2875
        %v2877 = vrcp.pop %v2666
        %v2878 = vmul.f32 1.0, %v2877
        %v2879 = vrcp.pop %v2667
        %v2880 = vmul.f32 1.0, %v2879
        %v2881 = vrcp.pop %v2668
        %v2882 = vmul.f32 1.0, %v2881
        %v2883 = vrcp.pop %v2669
        %v2884 = vmul.f32 1.0, %v2883
        %v2885 = vrcp.pop %v2670
        %v2886 = vmul.f32 1.0, %v2885
        %v2887 = vrcp.pop %v2671
        %v2888 = vmul.f32 1.0, %v2887
        %v2889 = vrcp.pop %v2672
        %v2890 = vmul.f32 1.0, %v2889
        %v2891 = vrcp.pop %v2673
        %v2892 = vmul.f32 1.0, %v2891
        %v2893 = vrcp.pop %v2674
        %v2894 = vmul.f32 1.0, %v2893
        %v2895 = vrcp.pop %v2675
        %v2896 = vmul.f32 1.0, %v2895
        %v2897 = vrcp.pop %v2676
        %v2898 = vmul.f32 1.0, %v2897
        %v2899 = vrcp.pop %v2677
        %v2900 = vmul.f32 1.0, %v2899
        %v2901 = vrcp.pop %v2678
        %v2902 = vmul.f32 1.0, %v2901
        %v2903 = vrcp.pop %v2679
        %v2904 = vmul.f32 1.0, %v2903
        %v2905 = vrcp.pop %v2680
        %v2906 = vmul.f32 1.0, %v2905
        %v2907 = vrcp.pop %v2681
        %v2908 = vmul.f32 1.0, %v2907
        %v2909 = vrcp.pop %v2682
        %v2910 = vmul.f32 1.0, %v2909
        %v2911 = vrcp.pop %v2683
        %v2912 = vmul.f32 1.0, %v2911
        %v2913 = vrcp.pop %v2684
        %v2914 = vmul.f32 1.0, %v2913
        %v2915 = vrcp.pop %v2685
        %v2916 = vmul.f32 1.0, %v2915
        %v2917 = vrcp.pop %v2686
        %v2918 = vmul.f32 1.0, %v2917
        %v2919 = vrcp.pop %v2687
        %v2920 = vmul.f32 1.0, %v2919
        %v2921 = vrcp.pop %v2688
        %v2922 = vmul.f32 1.0, %v2921
        %v2923 = vrcp.pop %v2689
        %v2924 = vmul.f32 1.0, %v2923
        %v2925 = vrcp.pop %v2690
        %v2926 = vmul.f32 1.0, %v2925
        %v2927 = vrcp.pop %v2691
        %v2928 = vmul.f32 1.0, %v2927
        %v2929 = vrcp.pop %v2692
        %v2930 = vmul.f32 1.0, %v2929
        %v2931 = vrcp.pop %v2693
        %v2932 = vmul.f32 1.0, %v2931
        %v2933 = vrcp.pop %v2694
        %v2934 = vmul.f32 1.0, %v2933
        %v2935 = vrcp.pop %v2695
        %v2936 = vmul.f32 1.0, %v2935
        %v2937 = vrcp.pop %v2696
        %v2938 = vmul.f32 1.0, %v2937
        %v2939 = vrcp.pop %v2697
        %v2940 = vmul.f32 1.0, %v2939
        %v2941 = vrcp.pop %v2698
        %v2942 = vmul.f32 1.0, %v2941
        %v2943 = vrcp.pop %v2699
        %v2944 = vmul.f32 1.0, %v2943
        %v2945 = vrcp.pop %v2700
        %v2946 = vmul.f32 1.0, %v2945
        %v2947 = vrcp.pop %v2701
        %v2948 = vmul.f32 1.0, %v2947
        %v2949 = vrcp.pop %v2702
        %v2950 = vmul.f32 1.0, %v2949
        %v2951 = vrcp.pop %v2703
        %v2952 = vmul.f32 1.0, %v2951
        %v2953 = vrcp.pop %v2704
        %v2954 = vmul.f32 1.0, %v2953
        %v2955 = vrcp.pop %v2705
        %v2956 = vmul.f32 1.0, %v2955
        %v2957 = vrcp.pop %v2706
        %v2958 = vmul.f32 1.0, %v2957
        %v2959 = vrcp.pop %v2707
        %v2960 = vmul.f32 1.0, %v2959
        %v2961 = vrcp.pop %v2708
        %v2962 = vmul.f32 1.0, %v2961
        %v2963 = vrcp.pop %v2709
        %v2964 = vmul.f32 1.0, %v2963
        %v2965 = vrcp.pop %v2710
        %v2966 = vmul.f32 1.0, %v2965
        %v2967 = vld [vmem:[%s877] sm:$0xf]
        %v2968 = vld [vmem:[%s877 + $0x4] sm:$0xf]
        %v2969 = vld [vmem:[%s877 + $0x8] sm:$0xf]
        %v2970 = vld [vmem:[%s877 + $0xc] sm:$0xf]
        %v2971 = vld [vmem:[%s877 + $0x10] sm:$0xf]
        %v2972 = vld [vmem:[%s877 + $0x14] sm:$0xf]
        %v2973 = vld [vmem:[%s877 + $0x18] sm:$0xf]
        %v2974 = vld [vmem:[%s877 + $0x1c] sm:$0xf]
        %v2975 = vld [vmem:[%s877 + $0x20] sm:$0xf]
        %v2976 = vld [vmem:[%s877 + $0x24] sm:$0xf]
        %v2977 = vld [vmem:[%s877 + $0x28] sm:$0xf]
        %v2978 = vld [vmem:[%s877 + $0x2c] sm:$0xf]
        %v2979 = vld [vmem:[%s877 + $0x30] sm:$0xf]
        %v2980 = vld [vmem:[%s877 + $0x34] sm:$0xf]
        %v2981 = vld [vmem:[%s877 + $0x38] sm:$0xf]
        %v2982 = vld [vmem:[%s877 + $0x3c] sm:$0xf]
        %v2983 = vld [vmem:[%s877 + $0x40] sm:$0xf]
        %v2984 = vld [vmem:[%s877 + $0x44] sm:$0xf]
        %v2985 = vld [vmem:[%s877 + $0x48] sm:$0xf]
        %v2986 = vld [vmem:[%s877 + $0x4c] sm:$0xf]
        %v2987 = vld [vmem:[%s877 + $0x50] sm:$0xf]
        %v2988 = vld [vmem:[%s877 + $0x54] sm:$0xf]
        %v2989 = vld [vmem:[%s877 + $0x58] sm:$0xf]
        %v2990 = vld [vmem:[%s877 + $0x5c] sm:$0xf]
        %v2991 = vld [vmem:[%s877 + $0x60] sm:$0xf]
        %v2992 = vld [vmem:[%s877 + $0x64] sm:$0xf]
        %v2993 = vld [vmem:[%s877 + $0x68] sm:$0xf]
        %v2994 = vld [vmem:[%s877 + $0x6c] sm:$0xf]
        %v2995 = vld [vmem:[%s877 + $0x70] sm:$0xf]
        %v2996 = vld [vmem:[%s877 + $0x74] sm:$0xf]
        %v2997 = vld [vmem:[%s877 + $0x78] sm:$0xf]
        %v2998 = vld [vmem:[%s877 + $0x7c] sm:$0xf]
        %v2999 = vld [vmem:[%s877 + $0x80] sm:$0xf]
        %v3000 = vld [vmem:[%s877 + $0x84] sm:$0xf]
        %v3001 = vld [vmem:[%s877 + $0x88] sm:$0xf]
        %v3002 = vld [vmem:[%s877 + $0x8c] sm:$0xf]
        %v3003 = vld [vmem:[%s877 + $0x90] sm:$0xf]
        %v3004 = vld [vmem:[%s877 + $0x94] sm:$0xf]
        %v3005 = vld [vmem:[%s877 + $0x98] sm:$0xf]
        %v3006 = vld [vmem:[%s877 + $0x9c] sm:$0xf]
        %v3007 = vld [vmem:[%s877 + $0xa0] sm:$0xf]
        %v3008 = vld [vmem:[%s877 + $0xa4] sm:$0xf]
        %v3009 = vld [vmem:[%s877 + $0xa8] sm:$0xf]
        %v3010 = vld [vmem:[%s877 + $0xac] sm:$0xf]
        %v3011 = vld [vmem:[%s877 + $0xb0] sm:$0xf]
        %v3012 = vld [vmem:[%s877 + $0xb4] sm:$0xf]
        %v3013 = vld [vmem:[%s877 + $0xb8] sm:$0xf]
        %v3014 = vld [vmem:[%s877 + $0xbc] sm:$0xf]
        %v3015 = vld [vmem:[%s877 + $0xc0] sm:$0xf]
        %v3016 = vld [vmem:[%s877 + $0xc4] sm:$0xf]
        %v3017 = vld [vmem:[%s877 + $0xc8] sm:$0xf]
        %v3018 = vld [vmem:[%s877 + $0xcc] sm:$0xf]
        %v3019 = vld [vmem:[%s877 + $0xd0] sm:$0xf]
        %v3020 = vld [vmem:[%s877 + $0xd4] sm:$0xf]
        %v3021 = vld [vmem:[%s877 + $0xd8] sm:$0xf]
        %v3022 = vld [vmem:[%s877 + $0xdc] sm:$0xf]
        %v3023 = vld [vmem:[%s877 + $0xe0] sm:$0xf]
        %v3024 = vld [vmem:[%s877 + $0xe4] sm:$0xf]
        %v3025 = vld [vmem:[%s877 + $0xe8] sm:$0xf]
        %v3026 = vld [vmem:[%s877 + $0xec] sm:$0xf]
        %v3027 = vld [vmem:[%s877 + $0xf0] sm:$0xf]
        %v3028 = vld [vmem:[%s877 + $0xf4] sm:$0xf]
        %v3029 = vld [vmem:[%s877 + $0xf8] sm:$0xf]
        %v3030 = vld [vmem:[%s877 + $0xfc] sm:$0xf]
        %v3031 = vld [vmem:[%s877 + $0x100] sm:$0xf]
        %v3032 = vld [vmem:[%s877 + $0x104] sm:$0xf]
        %v3033 = vld [vmem:[%s877 + $0x108] sm:$0xf]
        %v3034 = vld [vmem:[%s877 + $0x10c] sm:$0xf]
        %v3035 = vld [vmem:[%s877 + $0x110] sm:$0xf]
        %v3036 = vld [vmem:[%s877 + $0x114] sm:$0xf]
        %v3037 = vld [vmem:[%s877 + $0x118] sm:$0xf]
        %v3038 = vld [vmem:[%s877 + $0x11c] sm:$0xf]
        %v3039 = vld [vmem:[%s877 + $0x120] sm:$0xf]
        %v3040 = vld [vmem:[%s877 + $0x124] sm:$0xf]
        %v3041 = vld [vmem:[%s877 + $0x128] sm:$0xf]
        %v3042 = vld [vmem:[%s877 + $0x12c] sm:$0xf]
        %v3043 = vld [vmem:[%s877 + $0x130] sm:$0xf]
        %v3044 = vld [vmem:[%s877 + $0x134] sm:$0xf]
        %v3045 = vld [vmem:[%s877 + $0x138] sm:$0xf]
        %v3046 = vld [vmem:[%s877 + $0x13c] sm:$0xf]
        %v3047 = vld [vmem:[%s877 + $0x140] sm:$0xf]
        %v3048 = vld [vmem:[%s877 + $0x144] sm:$0xf]
        %v3049 = vld [vmem:[%s877 + $0x148] sm:$0xf]
        %v3050 = vld [vmem:[%s877 + $0x14c] sm:$0xf]
        %v3051 = vld [vmem:[%s877 + $0x150] sm:$0xf]
        %v3052 = vld [vmem:[%s877 + $0x154] sm:$0xf]
        %v3053 = vld [vmem:[%s877 + $0x158] sm:$0xf]
        %v3054 = vld [vmem:[%s877 + $0x15c] sm:$0xf]
        %v3055 = vld [vmem:[%s877 + $0x160] sm:$0xf]
        %v3056 = vld [vmem:[%s877 + $0x164] sm:$0xf]
        %v3057 = vld [vmem:[%s877 + $0x168] sm:$0xf]
        %v3058 = vld [vmem:[%s877 + $0x16c] sm:$0xf]
        %v3059 = vld [vmem:[%s877 + $0x170] sm:$0xf]
        %v3060 = vld [vmem:[%s877 + $0x174] sm:$0xf]
        %v3061 = vld [vmem:[%s877 + $0x178] sm:$0xf]
        %v3062 = vld [vmem:[%s877 + $0x17c] sm:$0xf]
        %v3063 = vld [vmem:[%s877 + $0x180] sm:$0xf]
        %v3064 = vld [vmem:[%s877 + $0x184] sm:$0xf]
        %v3065 = vld [vmem:[%s877 + $0x188] sm:$0xf]
        %v3066 = vld [vmem:[%s877 + $0x18c] sm:$0xf]
        %v3067 = vld [vmem:[%s877 + $0x190] sm:$0xf]
        %v3068 = vld [vmem:[%s877 + $0x194] sm:$0xf]
        %v3069 = vld [vmem:[%s877 + $0x198] sm:$0xf]
        %v3070 = vld [vmem:[%s877 + $0x19c] sm:$0xf]
        %v3071 = vld [vmem:[%s877 + $0x1a0] sm:$0xf]
        %v3072 = vld [vmem:[%s877 + $0x1a4] sm:$0xf]
        %v3073 = vld [vmem:[%s877 + $0x1a8] sm:$0xf]
        %v3074 = vld [vmem:[%s877 + $0x1ac] sm:$0xf]
        %v3075 = vld [vmem:[%s877 + $0x1b0] sm:$0xf]
        %v3076 = vld [vmem:[%s877 + $0x1b4] sm:$0xf]
        %v3077 = vld [vmem:[%s877 + $0x1b8] sm:$0xf]
        %v3078 = vld [vmem:[%s877 + $0x1bc] sm:$0xf]
        %v3079 = vld [vmem:[%s877 + $0x1c0] sm:$0xf]
        %v3080 = vld [vmem:[%s877 + $0x1c4] sm:$0xf]
        %v3081 = vld [vmem:[%s877 + $0x1c8] sm:$0xf]
        %v3082 = vld [vmem:[%s877 + $0x1cc] sm:$0xf]
        %v3083 = vld [vmem:[%s877 + $0x1d0] sm:$0xf]
        %v3084 = vld [vmem:[%s877 + $0x1d4] sm:$0xf]
        %v3085 = vld [vmem:[%s877 + $0x1d8] sm:$0xf]
        %v3086 = vld [vmem:[%s877 + $0x1dc] sm:$0xf]
        %v3087 = vld [vmem:[%s877 + $0x1e0] sm:$0xf]
        %v3088 = vld [vmem:[%s877 + $0x1e4] sm:$0xf]
        %v3089 = vld [vmem:[%s877 + $0x1e8] sm:$0xf]
        %v3090 = vld [vmem:[%s877 + $0x1ec] sm:$0xf]
        %v3091 = vld [vmem:[%s877 + $0x1f0] sm:$0xf]
        %v3092 = vld [vmem:[%s877 + $0x1f4] sm:$0xf]
        %v3093 = vld [vmem:[%s877 + $0x1f8] sm:$0xf]
        %v3094 = vld [vmem:[%s877 + $0x1fc] sm:$0xf]
        %v3095 = vunpack.c.l.bf16 %v2967
        %v3096 = vunpack.c.l.bf16 %v2968
        %v3097 = vunpack.c.l.bf16 %v2969
        %v3098 = vunpack.c.l.bf16 %v2970
        %v3099 = vunpack.c.l.bf16 %v2971
        %v3100 = vunpack.c.l.bf16 %v2972
        %v3101 = vunpack.c.l.bf16 %v2973
        %v3102 = vunpack.c.l.bf16 %v2974
        %v3103 = vunpack.c.l.bf16 %v2975
        %v3104 = vunpack.c.l.bf16 %v2976
        %v3105 = vunpack.c.l.bf16 %v2977
        %v3106 = vunpack.c.l.bf16 %v2978
        %v3107 = vunpack.c.l.bf16 %v2979
        %v3108 = vunpack.c.l.bf16 %v2980
        %v3109 = vunpack.c.l.bf16 %v2981
        %v3110 = vunpack.c.l.bf16 %v2982
        %v3111 = vunpack.c.l.bf16 %v2983
        %v3112 = vunpack.c.l.bf16 %v2984
        %v3113 = vunpack.c.l.bf16 %v2985
        %v3114 = vunpack.c.l.bf16 %v2986
        %v3115 = vunpack.c.l.bf16 %v2987
        %v3116 = vunpack.c.l.bf16 %v2988
        %v3117 = vunpack.c.l.bf16 %v2989
        %v3118 = vunpack.c.l.bf16 %v2990
        %v3119 = vunpack.c.l.bf16 %v2991
        %v3120 = vunpack.c.l.bf16 %v2992
        %v3121 = vunpack.c.l.bf16 %v2993
        %v3122 = vunpack.c.l.bf16 %v2994
        %v3123 = vunpack.c.l.bf16 %v2995
        %v3124 = vunpack.c.l.bf16 %v2996
        %v3125 = vunpack.c.l.bf16 %v2997
        %v3126 = vunpack.c.l.bf16 %v2998
        %v3127 = vunpack.c.l.bf16 %v2999
        %v3128 = vunpack.c.l.bf16 %v3000
        %v3129 = vunpack.c.l.bf16 %v3001
        %v3130 = vunpack.c.l.bf16 %v3002
        %v3131 = vunpack.c.l.bf16 %v3003
        %v3132 = vunpack.c.l.bf16 %v3004
        %v3133 = vunpack.c.l.bf16 %v3005
        %v3134 = vunpack.c.l.bf16 %v3006
        %v3135 = vunpack.c.l.bf16 %v3007
        %v3136 = vunpack.c.l.bf16 %v3008
        %v3137 = vunpack.c.l.bf16 %v3009
        %v3138 = vunpack.c.l.bf16 %v3010
        %v3139 = vunpack.c.l.bf16 %v3011
        %v3140 = vunpack.c.l.bf16 %v3012
        %v3141 = vunpack.c.l.bf16 %v3013
        %v3142 = vunpack.c.l.bf16 %v3014
        %v3143 = vunpack.c.l.bf16 %v3015
        %v3144 = vunpack.c.l.bf16 %v3016
        %v3145 = vunpack.c.l.bf16 %v3017
        %v3146 = vunpack.c.l.bf16 %v3018
        %v3147 = vunpack.c.l.bf16 %v3019
        %v3148 = vunpack.c.l.bf16 %v3020
        %v3149 = vunpack.c.l.bf16 %v3021
        %v3150 = vunpack.c.l.bf16 %v3022
        %v3151 = vunpack.c.l.bf16 %v3023
        %v3152 = vunpack.c.l.bf16 %v3024
        %v3153 = vunpack.c.l.bf16 %v3025
        %v3154 = vunpack.c.l.bf16 %v3026
        %v3155 = vunpack.c.l.bf16 %v3027
        %v3156 = vunpack.c.l.bf16 %v3028
        %v3157 = vunpack.c.l.bf16 %v3029
        %v3158 = vunpack.c.l.bf16 %v3030
        %v3159 = vunpack.c.l.bf16 %v3031
        %v3160 = vunpack.c.l.bf16 %v3032
        %v3161 = vunpack.c.l.bf16 %v3033
        %v3162 = vunpack.c.l.bf16 %v3034
        %v3163 = vunpack.c.l.bf16 %v3035
        %v3164 = vunpack.c.l.bf16 %v3036
        %v3165 = vunpack.c.l.bf16 %v3037
        %v3166 = vunpack.c.l.bf16 %v3038
        %v3167 = vunpack.c.l.bf16 %v3039
        %v3168 = vunpack.c.l.bf16 %v3040
        %v3169 = vunpack.c.l.bf16 %v3041
        %v3170 = vunpack.c.l.bf16 %v3042
        %v3171 = vunpack.c.l.bf16 %v3043
        %v3172 = vunpack.c.l.bf16 %v3044
        %v3173 = vunpack.c.l.bf16 %v3045
        %v3174 = vunpack.c.l.bf16 %v3046
        %v3175 = vunpack.c.l.bf16 %v3047
        %v3176 = vunpack.c.l.bf16 %v3048
        %v3177 = vunpack.c.l.bf16 %v3049
        %v3178 = vunpack.c.l.bf16 %v3050
        %v3179 = vunpack.c.l.bf16 %v3051
        %v3180 = vunpack.c.l.bf16 %v3052
        %v3181 = vunpack.c.l.bf16 %v3053
        %v3182 = vunpack.c.l.bf16 %v3054
        %v3183 = vunpack.c.l.bf16 %v3055
        %v3184 = vunpack.c.l.bf16 %v3056
        %v3185 = vunpack.c.l.bf16 %v3057
        %v3186 = vunpack.c.l.bf16 %v3058
        %v3187 = vunpack.c.l.bf16 %v3059
        %v3188 = vunpack.c.l.bf16 %v3060
        %v3189 = vunpack.c.l.bf16 %v3061
        %v3190 = vunpack.c.l.bf16 %v3062
        %v3191 = vunpack.c.l.bf16 %v3063
        %v3192 = vunpack.c.l.bf16 %v3064
        %v3193 = vunpack.c.l.bf16 %v3065
        %v3194 = vunpack.c.l.bf16 %v3066
        %v3195 = vunpack.c.l.bf16 %v3067
        %v3196 = vunpack.c.l.bf16 %v3068
        %v3197 = vunpack.c.l.bf16 %v3069
        %v3198 = vunpack.c.l.bf16 %v3070
        %v3199 = vunpack.c.l.bf16 %v3071
        %v3200 = vunpack.c.l.bf16 %v3072
        %v3201 = vunpack.c.l.bf16 %v3073
        %v3202 = vunpack.c.l.bf16 %v3074
        %v3203 = vunpack.c.l.bf16 %v3075
        %v3204 = vunpack.c.l.bf16 %v3076
        %v3205 = vunpack.c.l.bf16 %v3077
        %v3206 = vunpack.c.l.bf16 %v3078
        %v3207 = vunpack.c.l.bf16 %v3079
        %v3208 = vunpack.c.l.bf16 %v3080
        %v3209 = vunpack.c.l.bf16 %v3081
        %v3210 = vunpack.c.l.bf16 %v3082
        %v3211 = vunpack.c.l.bf16 %v3083
        %v3212 = vunpack.c.l.bf16 %v3084
        %v3213 = vunpack.c.l.bf16 %v3085
        %v3214 = vunpack.c.l.bf16 %v3086
        %v3215 = vunpack.c.l.bf16 %v3087
        %v3216 = vunpack.c.l.bf16 %v3088
        %v3217 = vunpack.c.l.bf16 %v3089
        %v3218 = vunpack.c.l.bf16 %v3090
        %v3219 = vunpack.c.l.bf16 %v3091
        %v3220 = vunpack.c.l.bf16 %v3092
        %v3221 = vunpack.c.l.bf16 %v3093
        %v3222 = vunpack.c.l.bf16 %v3094
        %3224 = vset.pattern.permute.xlu0 0
        %3225 = vperm.xlu0 %3224, %v2712
        %v3226 = vpop.permute.xlu0 %3225
        %3229 = vset.pattern.permute.xlu0 0
        %3230 = vperm.xlu0 %3229, %v2714
        %v3231 = vpop.permute.xlu0 %3230
        %3234 = vset.pattern.permute.xlu0 0
        %3235 = vperm.xlu0 %3234, %v2716
        %v3236 = vpop.permute.xlu0 %3235
        %3239 = vset.pattern.permute.xlu0 0
        %3240 = vperm.xlu0 %3239, %v2718
        %v3241 = vpop.permute.xlu0 %3240
        %3244 = vset.pattern.permute.xlu0 0
        %3245 = vperm.xlu0 %3244, %v2720
        %v3246 = vpop.permute.xlu0 %3245
        %3249 = vset.pattern.permute.xlu0 0
        %3250 = vperm.xlu0 %3249, %v2722
        %v3251 = vpop.permute.xlu0 %3250
        %3254 = vset.pattern.permute.xlu0 0
        %3255 = vperm.xlu0 %3254, %v2724
        %v3256 = vpop.permute.xlu0 %3255
        %3259 = vset.pattern.permute.xlu0 0
        %3260 = vperm.xlu0 %3259, %v2726
        %v3261 = vpop.permute.xlu0 %3260
        %3264 = vset.pattern.permute.xlu0 0
        %3265 = vperm.xlu0 %3264, %v2728
        %v3266 = vpop.permute.xlu0 %3265
        %3269 = vset.pattern.permute.xlu0 0
        %3270 = vperm.xlu0 %3269, %v2730
        %v3271 = vpop.permute.xlu0 %3270
        %3274 = vset.pattern.permute.xlu0 0
        %3275 = vperm.xlu0 %3274, %v2732
        %v3276 = vpop.permute.xlu0 %3275
        %3279 = vset.pattern.permute.xlu0 0
        %3280 = vperm.xlu0 %3279, %v2734
        %v3281 = vpop.permute.xlu0 %3280
        %3284 = vset.pattern.permute.xlu0 0
        %3285 = vperm.xlu0 %3284, %v2736
        %v3286 = vpop.permute.xlu0 %3285
        %3289 = vset.pattern.permute.xlu0 0
        %3290 = vperm.xlu0 %3289, %v2738
        %v3291 = vpop.permute.xlu0 %3290
        %3294 = vset.pattern.permute.xlu0 0
        %3295 = vperm.xlu0 %3294, %v2740
        %v3296 = vpop.permute.xlu0 %3295
        %3299 = vset.pattern.permute.xlu0 0
        %3300 = vperm.xlu0 %3299, %v2742
        %v3301 = vpop.permute.xlu0 %3300
        %3304 = vset.pattern.permute.xlu0 0
        %3305 = vperm.xlu0 %3304, %v2744
        %v3306 = vpop.permute.xlu0 %3305
        %3309 = vset.pattern.permute.xlu0 0
        %3310 = vperm.xlu0 %3309, %v2746
        %v3311 = vpop.permute.xlu0 %3310
        %3314 = vset.pattern.permute.xlu0 0
        %3315 = vperm.xlu0 %3314, %v2748
        %v3316 = vpop.permute.xlu0 %3315
        %3319 = vset.pattern.permute.xlu0 0
        %3320 = vperm.xlu0 %3319, %v2750
        %v3321 = vpop.permute.xlu0 %3320
        %3324 = vset.pattern.permute.xlu0 0
        %3325 = vperm.xlu0 %3324, %v2752
        %v3326 = vpop.permute.xlu0 %3325
        %3329 = vset.pattern.permute.xlu0 0
        %3330 = vperm.xlu0 %3329, %v2754
        %v3331 = vpop.permute.xlu0 %3330
        %3334 = vset.pattern.permute.xlu0 0
        %3335 = vperm.xlu0 %3334, %v2756
        %v3336 = vpop.permute.xlu0 %3335
        %3339 = vset.pattern.permute.xlu0 0
        %3340 = vperm.xlu0 %3339, %v2758
        %v3341 = vpop.permute.xlu0 %3340
        %3344 = vset.pattern.permute.xlu0 0
        %3345 = vperm.xlu0 %3344, %v2760
        %v3346 = vpop.permute.xlu0 %3345
        %3349 = vset.pattern.permute.xlu0 0
        %3350 = vperm.xlu0 %3349, %v2762
        %v3351 = vpop.permute.xlu0 %3350
        %3354 = vset.pattern.permute.xlu0 0
        %3355 = vperm.xlu0 %3354, %v2764
        %v3356 = vpop.permute.xlu0 %3355
        %3359 = vset.pattern.permute.xlu0 0
        %3360 = vperm.xlu0 %3359, %v2766
        %v3361 = vpop.permute.xlu0 %3360
        %3364 = vset.pattern.permute.xlu0 0
        %3365 = vperm.xlu0 %3364, %v2768
        %v3366 = vpop.permute.xlu0 %3365
        %3369 = vset.pattern.permute.xlu0 0
        %3370 = vperm.xlu0 %3369, %v2770
        %v3371 = vpop.permute.xlu0 %3370
        %3374 = vset.pattern.permute.xlu0 0
        %3375 = vperm.xlu0 %3374, %v2772
        %v3376 = vpop.permute.xlu0 %3375
        %3379 = vset.pattern.permute.xlu0 0
        %3380 = vperm.xlu0 %3379, %v2774
        %v3381 = vpop.permute.xlu0 %3380
        %3384 = vset.pattern.permute.xlu0 0
        %3385 = vperm.xlu0 %3384, %v2776
        %v3386 = vpop.permute.xlu0 %3385
        %3389 = vset.pattern.permute.xlu0 0
        %3390 = vperm.xlu0 %3389, %v2778
        %v3391 = vpop.permute.xlu0 %3390
        %3394 = vset.pattern.permute.xlu0 0
        %3395 = vperm.xlu0 %3394, %v2780
        %v3396 = vpop.permute.xlu0 %3395
        %3399 = vset.pattern.permute.xlu0 0
        %3400 = vperm.xlu0 %3399, %v2782
        %v3401 = vpop.permute.xlu0 %3400
        %3404 = vset.pattern.permute.xlu0 0
        %3405 = vperm.xlu0 %3404, %v2784
        %v3406 = vpop.permute.xlu0 %3405
        %3409 = vset.pattern.permute.xlu0 0
        %3410 = vperm.xlu0 %3409, %v2786
        %v3411 = vpop.permute.xlu0 %3410
        %3414 = vset.pattern.permute.xlu0 0
        %3415 = vperm.xlu0 %3414, %v2788
        %v3416 = vpop.permute.xlu0 %3415
        %3419 = vset.pattern.permute.xlu0 0
        %3420 = vperm.xlu0 %3419, %v2790
        %v3421 = vpop.permute.xlu0 %3420
        %3424 = vset.pattern.permute.xlu0 0
        %3425 = vperm.xlu0 %3424, %v2792
        %v3426 = vpop.permute.xlu0 %3425
        %3429 = vset.pattern.permute.xlu0 0
        %3430 = vperm.xlu0 %3429, %v2794
        %v3431 = vpop.permute.xlu0 %3430
        %3434 = vset.pattern.permute.xlu0 0
        %3435 = vperm.xlu0 %3434, %v2796
        %v3436 = vpop.permute.xlu0 %3435
        %3439 = vset.pattern.permute.xlu0 0
        %3440 = vperm.xlu0 %3439, %v2798
        %v3441 = vpop.permute.xlu0 %3440
        %3444 = vset.pattern.permute.xlu0 0
        %3445 = vperm.xlu0 %3444, %v2800
        %v3446 = vpop.permute.xlu0 %3445
        %3449 = vset.pattern.permute.xlu0 0
        %3450 = vperm.xlu0 %3449, %v2802
        %v3451 = vpop.permute.xlu0 %3450
        %3454 = vset.pattern.permute.xlu0 0
        %3455 = vperm.xlu0 %3454, %v2804
        %v3456 = vpop.permute.xlu0 %3455
        %3459 = vset.pattern.permute.xlu0 0
        %3460 = vperm.xlu0 %3459, %v2806
        %v3461 = vpop.permute.xlu0 %3460
        %3464 = vset.pattern.permute.xlu0 0
        %3465 = vperm.xlu0 %3464, %v2808
        %v3466 = vpop.permute.xlu0 %3465
        %3469 = vset.pattern.permute.xlu0 0
        %3470 = vperm.xlu0 %3469, %v2810
        %v3471 = vpop.permute.xlu0 %3470
        %3474 = vset.pattern.permute.xlu0 0
        %3475 = vperm.xlu0 %3474, %v2812
        %v3476 = vpop.permute.xlu0 %3475
        %3479 = vset.pattern.permute.xlu0 0
        %3480 = vperm.xlu0 %3479, %v2814
        %v3481 = vpop.permute.xlu0 %3480
        %3484 = vset.pattern.permute.xlu0 0
        %3485 = vperm.xlu0 %3484, %v2816
        %v3486 = vpop.permute.xlu0 %3485
        %3489 = vset.pattern.permute.xlu0 0
        %3490 = vperm.xlu0 %3489, %v2818
        %v3491 = vpop.permute.xlu0 %3490
        %3494 = vset.pattern.permute.xlu0 0
        %3495 = vperm.xlu0 %3494, %v2820
        %v3496 = vpop.permute.xlu0 %3495
        %3499 = vset.pattern.permute.xlu0 0
        %3500 = vperm.xlu0 %3499, %v2822
        %v3501 = vpop.permute.xlu0 %3500
        %3504 = vset.pattern.permute.xlu0 0
        %3505 = vperm.xlu0 %3504, %v2824
        %v3506 = vpop.permute.xlu0 %3505
        %3509 = vset.pattern.permute.xlu0 0
        %3510 = vperm.xlu0 %3509, %v2826
        %v3511 = vpop.permute.xlu0 %3510
        %3514 = vset.pattern.permute.xlu0 0
        %3515 = vperm.xlu0 %3514, %v2828
        %v3516 = vpop.permute.xlu0 %3515
        %3519 = vset.pattern.permute.xlu0 0
        %3520 = vperm.xlu0 %3519, %v2830
        %v3521 = vpop.permute.xlu0 %3520
        %3524 = vset.pattern.permute.xlu0 0
        %3525 = vperm.xlu0 %3524, %v2832
        %v3526 = vpop.permute.xlu0 %3525
        %3529 = vset.pattern.permute.xlu0 0
        %3530 = vperm.xlu0 %3529, %v2834
        %v3531 = vpop.permute.xlu0 %3530
        %3534 = vset.pattern.permute.xlu0 0
        %3535 = vperm.xlu0 %3534, %v2836
        %v3536 = vpop.permute.xlu0 %3535
        %3539 = vset.pattern.permute.xlu0 0
        %3540 = vperm.xlu0 %3539, %v2838
        %v3541 = vpop.permute.xlu0 %3540
        %3544 = vset.pattern.permute.xlu0 0
        %3545 = vperm.xlu0 %3544, %v2840
        %v3546 = vpop.permute.xlu0 %3545
        %3549 = vset.pattern.permute.xlu0 0
        %3550 = vperm.xlu0 %3549, %v2842
        %v3551 = vpop.permute.xlu0 %3550
        %3554 = vset.pattern.permute.xlu0 0
        %3555 = vperm.xlu0 %3554, %v2844
        %v3556 = vpop.permute.xlu0 %3555
        %3559 = vset.pattern.permute.xlu0 0
        %3560 = vperm.xlu0 %3559, %v2846
        %v3561 = vpop.permute.xlu0 %3560
        %3564 = vset.pattern.permute.xlu0 0
        %3565 = vperm.xlu0 %3564, %v2848
        %v3566 = vpop.permute.xlu0 %3565
        %3569 = vset.pattern.permute.xlu0 0
        %3570 = vperm.xlu0 %3569, %v2850
        %v3571 = vpop.permute.xlu0 %3570
        %3574 = vset.pattern.permute.xlu0 0
        %3575 = vperm.xlu0 %3574, %v2852
        %v3576 = vpop.permute.xlu0 %3575
        %3579 = vset.pattern.permute.xlu0 0
        %3580 = vperm.xlu0 %3579, %v2854
        %v3581 = vpop.permute.xlu0 %3580
        %3584 = vset.pattern.permute.xlu0 0
        %3585 = vperm.xlu0 %3584, %v2856
        %v3586 = vpop.permute.xlu0 %3585
        %3589 = vset.pattern.permute.xlu0 0
        %3590 = vperm.xlu0 %3589, %v2858
        %v3591 = vpop.permute.xlu0 %3590
        %3594 = vset.pattern.permute.xlu0 0
        %3595 = vperm.xlu0 %3594, %v2860
        %v3596 = vpop.permute.xlu0 %3595
        %3599 = vset.pattern.permute.xlu0 0
        %3600 = vperm.xlu0 %3599, %v2862
        %v3601 = vpop.permute.xlu0 %3600
        %3604 = vset.pattern.permute.xlu0 0
        %3605 = vperm.xlu0 %3604, %v2864
        %v3606 = vpop.permute.xlu0 %3605
        %3609 = vset.pattern.permute.xlu0 0
        %3610 = vperm.xlu0 %3609, %v2866
        %v3611 = vpop.permute.xlu0 %3610
        %3614 = vset.pattern.permute.xlu0 0
        %3615 = vperm.xlu0 %3614, %v2868
        %v3616 = vpop.permute.xlu0 %3615
        %3619 = vset.pattern.permute.xlu0 0
        %3620 = vperm.xlu0 %3619, %v2870
        %v3621 = vpop.permute.xlu0 %3620
        %3624 = vset.pattern.permute.xlu0 0
        %3625 = vperm.xlu0 %3624, %v2872
        %v3626 = vpop.permute.xlu0 %3625
        %3629 = vset.pattern.permute.xlu0 0
        %3630 = vperm.xlu0 %3629, %v2874
        %v3631 = vpop.permute.xlu0 %3630
        %3634 = vset.pattern.permute.xlu0 0
        %3635 = vperm.xlu0 %3634, %v2876
        %v3636 = vpop.permute.xlu0 %3635
        %3639 = vset.pattern.permute.xlu0 0
        %3640 = vperm.xlu0 %3639, %v2878
        %v3641 = vpop.permute.xlu0 %3640
        %3644 = vset.pattern.permute.xlu0 0
        %3645 = vperm.xlu0 %3644, %v2880
        %v3646 = vpop.permute.xlu0 %3645
        %3649 = vset.pattern.permute.xlu0 0
        %3650 = vperm.xlu0 %3649, %v2882
        %v3651 = vpop.permute.xlu0 %3650
        %3654 = vset.pattern.permute.xlu0 0
        %3655 = vperm.xlu0 %3654, %v2884
        %v3656 = vpop.permute.xlu0 %3655
        %3659 = vset.pattern.permute.xlu0 0
        %3660 = vperm.xlu0 %3659, %v2886
        %v3661 = vpop.permute.xlu0 %3660
        %3664 = vset.pattern.permute.xlu0 0
        %3665 = vperm.xlu0 %3664, %v2888
        %v3666 = vpop.permute.xlu0 %3665
        %3669 = vset.pattern.permute.xlu0 0
        %3670 = vperm.xlu0 %3669, %v2890
        %v3671 = vpop.permute.xlu0 %3670
        %3674 = vset.pattern.permute.xlu0 0
        %3675 = vperm.xlu0 %3674, %v2892
        %v3676 = vpop.permute.xlu0 %3675
        %3679 = vset.pattern.permute.xlu0 0
        %3680 = vperm.xlu0 %3679, %v2894
        %v3681 = vpop.permute.xlu0 %3680
        %3684 = vset.pattern.permute.xlu0 0
        %3685 = vperm.xlu0 %3684, %v2896
        %v3686 = vpop.permute.xlu0 %3685
        %3689 = vset.pattern.permute.xlu0 0
        %3690 = vperm.xlu0 %3689, %v2898
        %v3691 = vpop.permute.xlu0 %3690
        %3694 = vset.pattern.permute.xlu0 0
        %3695 = vperm.xlu0 %3694, %v2900
        %v3696 = vpop.permute.xlu0 %3695
        %3699 = vset.pattern.permute.xlu0 0
        %3700 = vperm.xlu0 %3699, %v2902
        %v3701 = vpop.permute.xlu0 %3700
        %3704 = vset.pattern.permute.xlu0 0
        %3705 = vperm.xlu0 %3704, %v2904
        %v3706 = vpop.permute.xlu0 %3705
        %3709 = vset.pattern.permute.xlu0 0
        %3710 = vperm.xlu0 %3709, %v2906
        %v3711 = vpop.permute.xlu0 %3710
        %3714 = vset.pattern.permute.xlu0 0
        %3715 = vperm.xlu0 %3714, %v2908
        %v3716 = vpop.permute.xlu0 %3715
        %3719 = vset.pattern.permute.xlu0 0
        %3720 = vperm.xlu0 %3719, %v2910
        %v3721 = vpop.permute.xlu0 %3720
        %3724 = vset.pattern.permute.xlu0 0
        %3725 = vperm.xlu0 %3724, %v2912
        %v3726 = vpop.permute.xlu0 %3725
        %3729 = vset.pattern.permute.xlu0 0
        %3730 = vperm.xlu0 %3729, %v2914
        %v3731 = vpop.permute.xlu0 %3730
        %3734 = vset.pattern.permute.xlu0 0
        %3735 = vperm.xlu0 %3734, %v2916
        %v3736 = vpop.permute.xlu0 %3735
        %3739 = vset.pattern.permute.xlu0 0
        %3740 = vperm.xlu0 %3739, %v2918
        %v3741 = vpop.permute.xlu0 %3740
        %3744 = vset.pattern.permute.xlu0 0
        %3745 = vperm.xlu0 %3744, %v2920
        %v3746 = vpop.permute.xlu0 %3745
        %3749 = vset.pattern.permute.xlu0 0
        %3750 = vperm.xlu0 %3749, %v2922
        %v3751 = vpop.permute.xlu0 %3750
        %3754 = vset.pattern.permute.xlu0 0
        %3755 = vperm.xlu0 %3754, %v2924
        %v3756 = vpop.permute.xlu0 %3755
        %3759 = vset.pattern.permute.xlu0 0
        %3760 = vperm.xlu0 %3759, %v2926
        %v3761 = vpop.permute.xlu0 %3760
        %3764 = vset.pattern.permute.xlu0 0
        %3765 = vperm.xlu0 %3764, %v2928
        %v3766 = vpop.permute.xlu0 %3765
        %3769 = vset.pattern.permute.xlu0 0
        %3770 = vperm.xlu0 %3769, %v2930
        %v3771 = vpop.permute.xlu0 %3770
        %3774 = vset.pattern.permute.xlu0 0
        %3775 = vperm.xlu0 %3774, %v2932
        %v3776 = vpop.permute.xlu0 %3775
        %3779 = vset.pattern.permute.xlu0 0
        %3780 = vperm.xlu0 %3779, %v2934
        %v3781 = vpop.permute.xlu0 %3780
        %3784 = vset.pattern.permute.xlu0 0
        %3785 = vperm.xlu0 %3784, %v2936
        %v3786 = vpop.permute.xlu0 %3785
        %3789 = vset.pattern.permute.xlu0 0
        %3790 = vperm.xlu0 %3789, %v2938
        %v3791 = vpop.permute.xlu0 %3790
        %3794 = vset.pattern.permute.xlu0 0
        %3795 = vperm.xlu0 %3794, %v2940
        %v3796 = vpop.permute.xlu0 %3795
        %3799 = vset.pattern.permute.xlu0 0
        %3800 = vperm.xlu0 %3799, %v2942
        %v3801 = vpop.permute.xlu0 %3800
        %3804 = vset.pattern.permute.xlu0 0
        %3805 = vperm.xlu0 %3804, %v2944
        %v3806 = vpop.permute.xlu0 %3805
        %3809 = vset.pattern.permute.xlu0 0
        %3810 = vperm.xlu0 %3809, %v2946
        %v3811 = vpop.permute.xlu0 %3810
        %3814 = vset.pattern.permute.xlu0 0
        %3815 = vperm.xlu0 %3814, %v2948
        %v3816 = vpop.permute.xlu0 %3815
        %3819 = vset.pattern.permute.xlu0 0
        %3820 = vperm.xlu0 %3819, %v2950
        %v3821 = vpop.permute.xlu0 %3820
        %3824 = vset.pattern.permute.xlu0 0
        %3825 = vperm.xlu0 %3824, %v2952
        %v3826 = vpop.permute.xlu0 %3825
        %3829 = vset.pattern.permute.xlu0 0
        %3830 = vperm.xlu0 %3829, %v2954
        %v3831 = vpop.permute.xlu0 %3830
        %3834 = vset.pattern.permute.xlu0 0
        %3835 = vperm.xlu0 %3834, %v2956
        %v3836 = vpop.permute.xlu0 %3835
        %3839 = vset.pattern.permute.xlu0 0
        %3840 = vperm.xlu0 %3839, %v2958
        %v3841 = vpop.permute.xlu0 %3840
        %3844 = vset.pattern.permute.xlu0 0
        %3845 = vperm.xlu0 %3844, %v2960
        %v3846 = vpop.permute.xlu0 %3845
        %3849 = vset.pattern.permute.xlu0 0
        %3850 = vperm.xlu0 %3849, %v2962
        %v3851 = vpop.permute.xlu0 %3850
        %3854 = vset.pattern.permute.xlu0 0
        %3855 = vperm.xlu0 %3854, %v2964
        %v3856 = vpop.permute.xlu0 %3855
        %3859 = vset.pattern.permute.xlu0 0
        %3860 = vperm.xlu0 %3859, %v2966
        %v3861 = vpop.permute.xlu0 %3860
        %v3863 = vmul.f32 %v3095, %v3226
        %v3864 = vmul.f32 %v3096, %v3231
        %v3865 = vmul.f32 %v3097, %v3236
        %v3866 = vmul.f32 %v3098, %v3241
        %v3867 = vmul.f32 %v3099, %v3246
        %v3868 = vmul.f32 %v3100, %v3251
        %v3869 = vmul.f32 %v3101, %v3256
        %v3870 = vmul.f32 %v3102, %v3261
        %v3871 = vmul.f32 %v3103, %v3266
        %v3872 = vmul.f32 %v3104, %v3271
        %v3873 = vmul.f32 %v3105, %v3276
        %v3874 = vmul.f32 %v3106, %v3281
        %v3875 = vmul.f32 %v3107, %v3286
        %v3876 = vmul.f32 %v3108, %v3291
        %v3877 = vmul.f32 %v3109, %v3296
        %v3878 = vmul.f32 %v3110, %v3301
        %v3879 = vmul.f32 %v3111, %v3306
        %v3880 = vmul.f32 %v3112, %v3311
        %v3881 = vmul.f32 %v3113, %v3316
        %v3882 = vmul.f32 %v3114, %v3321
        %v3883 = vmul.f32 %v3115, %v3326
        %v3884 = vmul.f32 %v3116, %v3331
        %v3885 = vmul.f32 %v3117, %v3336
        %v3886 = vmul.f32 %v3118, %v3341
        %v3887 = vmul.f32 %v3119, %v3346
        %v3888 = vmul.f32 %v3120, %v3351
        %v3889 = vmul.f32 %v3121, %v3356
        %v3890 = vmul.f32 %v3122, %v3361
        %v3891 = vmul.f32 %v3123, %v3366
        %v3892 = vmul.f32 %v3124, %v3371
        %v3893 = vmul.f32 %v3125, %v3376
        %v3894 = vmul.f32 %v3126, %v3381
        %v3895 = vmul.f32 %v3127, %v3386
        %v3896 = vmul.f32 %v3128, %v3391
        %v3897 = vmul.f32 %v3129, %v3396
        %v3898 = vmul.f32 %v3130, %v3401
        %v3899 = vmul.f32 %v3131, %v3406
        %v3900 = vmul.f32 %v3132, %v3411
        %v3901 = vmul.f32 %v3133, %v3416
        %v3902 = vmul.f32 %v3134, %v3421
        %v3903 = vmul.f32 %v3135, %v3426
        %v3904 = vmul.f32 %v3136, %v3431
        %v3905 = vmul.f32 %v3137, %v3436
        %v3906 = vmul.f32 %v3138, %v3441
        %v3907 = vmul.f32 %v3139, %v3446
        %v3908 = vmul.f32 %v3140, %v3451
        %v3909 = vmul.f32 %v3141, %v3456
        %v3910 = vmul.f32 %v3142, %v3461
        %v3911 = vmul.f32 %v3143, %v3466
        %v3912 = vmul.f32 %v3144, %v3471
        %v3913 = vmul.f32 %v3145, %v3476
        %v3914 = vmul.f32 %v3146, %v3481
        %v3915 = vmul.f32 %v3147, %v3486
        %v3916 = vmul.f32 %v3148, %v3491
        %v3917 = vmul.f32 %v3149, %v3496
        %v3918 = vmul.f32 %v3150, %v3501
        %v3919 = vmul.f32 %v3151, %v3506
        %v3920 = vmul.f32 %v3152, %v3511
        %v3921 = vmul.f32 %v3153, %v3516
        %v3922 = vmul.f32 %v3154, %v3521
        %v3923 = vmul.f32 %v3155, %v3526
        %v3924 = vmul.f32 %v3156, %v3531
        %v3925 = vmul.f32 %v3157, %v3536
        %v3926 = vmul.f32 %v3158, %v3541
        %v3927 = vmul.f32 %v3159, %v3546
        %v3928 = vmul.f32 %v3160, %v3551
        %v3929 = vmul.f32 %v3161, %v3556
        %v3930 = vmul.f32 %v3162, %v3561
        %v3931 = vmul.f32 %v3163, %v3566
        %v3932 = vmul.f32 %v3164, %v3571
        %v3933 = vmul.f32 %v3165, %v3576
        %v3934 = vmul.f32 %v3166, %v3581
        %v3935 = vmul.f32 %v3167, %v3586
        %v3936 = vmul.f32 %v3168, %v3591
        %v3937 = vmul.f32 %v3169, %v3596
        %v3938 = vmul.f32 %v3170, %v3601
        %v3939 = vmul.f32 %v3171, %v3606
        %v3940 = vmul.f32 %v3172, %v3611
        %v3941 = vmul.f32 %v3173, %v3616
        %v3942 = vmul.f32 %v3174, %v3621
        %v3943 = vmul.f32 %v3175, %v3626
        %v3944 = vmul.f32 %v3176, %v3631
        %v3945 = vmul.f32 %v3177, %v3636
        %v3946 = vmul.f32 %v3178, %v3641
        %v3947 = vmul.f32 %v3179, %v3646
        %v3948 = vmul.f32 %v3180, %v3651
        %v3949 = vmul.f32 %v3181, %v3656
        %v3950 = vmul.f32 %v3182, %v3661
        %v3951 = vmul.f32 %v3183, %v3666
        %v3952 = vmul.f32 %v3184, %v3671
        %v3953 = vmul.f32 %v3185, %v3676
        %v3954 = vmul.f32 %v3186, %v3681
        %v3955 = vmul.f32 %v3187, %v3686
        %v3956 = vmul.f32 %v3188, %v3691
        %v3957 = vmul.f32 %v3189, %v3696
        %v3958 = vmul.f32 %v3190, %v3701
        %v3959 = vmul.f32 %v3191, %v3706
        %v3960 = vmul.f32 %v3192, %v3711
        %v3961 = vmul.f32 %v3193, %v3716
        %v3962 = vmul.f32 %v3194, %v3721
        %v3963 = vmul.f32 %v3195, %v3726
        %v3964 = vmul.f32 %v3196, %v3731
        %v3965 = vmul.f32 %v3197, %v3736
        %v3966 = vmul.f32 %v3198, %v3741
        %v3967 = vmul.f32 %v3199, %v3746
        %v3968 = vmul.f32 %v3200, %v3751
        %v3969 = vmul.f32 %v3201, %v3756
        %v3970 = vmul.f32 %v3202, %v3761
        %v3971 = vmul.f32 %v3203, %v3766
        %v3972 = vmul.f32 %v3204, %v3771
        %v3973 = vmul.f32 %v3205, %v3776
        %v3974 = vmul.f32 %v3206, %v3781
        %v3975 = vmul.f32 %v3207, %v3786
        %v3976 = vmul.f32 %v3208, %v3791
        %v3977 = vmul.f32 %v3209, %v3796
        %v3978 = vmul.f32 %v3210, %v3801
        %v3979 = vmul.f32 %v3211, %v3806
        %v3980 = vmul.f32 %v3212, %v3811
        %v3981 = vmul.f32 %v3213, %v3816
        %v3982 = vmul.f32 %v3214, %v3821
        %v3983 = vmul.f32 %v3215, %v3826
        %v3984 = vmul.f32 %v3216, %v3831
        %v3985 = vmul.f32 %v3217, %v3836
        %v3986 = vmul.f32 %v3218, %v3841
        %v3987 = vmul.f32 %v3219, %v3846
        %v3988 = vmul.f32 %v3220, %v3851
        %v3989 = vmul.f32 %v3221, %v3856
        %v3990 = vmul.f32 %v3222, %v3861
        %v3991 = vpack.c.bf16 %v3864, %v3863
        %v3992 = vpack.c.bf16 %v3866, %v3865
        %v3993 = vpack.c.bf16 %v3868, %v3867
        %v3994 = vpack.c.bf16 %v3870, %v3869
        %v3995 = vpack.c.bf16 %v3872, %v3871
        %v3996 = vpack.c.bf16 %v3874, %v3873
        %v3997 = vpack.c.bf16 %v3876, %v3875
        %v3998 = vpack.c.bf16 %v3878, %v3877
        %v3999 = vpack.c.bf16 %v3880, %v3879
        %v4000 = vpack.c.bf16 %v3882, %v3881
        %v4001 = vpack.c.bf16 %v3884, %v3883
        %v4002 = vpack.c.bf16 %v3886, %v3885
        %v4003 = vpack.c.bf16 %v3888, %v3887
        %v4004 = vpack.c.bf16 %v3890, %v3889
        %v4005 = vpack.c.bf16 %v3892, %v3891
        %v4006 = vpack.c.bf16 %v3894, %v3893
        %v4007 = vpack.c.bf16 %v3896, %v3895
        %v4008 = vpack.c.bf16 %v3898, %v3897
        %v4009 = vpack.c.bf16 %v3900, %v3899
        %v4010 = vpack.c.bf16 %v3902, %v3901
        %v4011 = vpack.c.bf16 %v3904, %v3903
        %v4012 = vpack.c.bf16 %v3906, %v3905
        %v4013 = vpack.c.bf16 %v3908, %v3907
        %v4014 = vpack.c.bf16 %v3910, %v3909
        %v4015 = vpack.c.bf16 %v3912, %v3911
        %v4016 = vpack.c.bf16 %v3914, %v3913
        %v4017 = vpack.c.bf16 %v3916, %v3915
        %v4018 = vpack.c.bf16 %v3918, %v3917
        %v4019 = vpack.c.bf16 %v3920, %v3919
        %v4020 = vpack.c.bf16 %v3922, %v3921
        %v4021 = vpack.c.bf16 %v3924, %v3923
        %v4022 = vpack.c.bf16 %v3926, %v3925
        %v4023 = vpack.c.bf16 %v3928, %v3927
        %v4024 = vpack.c.bf16 %v3930, %v3929
        %v4025 = vpack.c.bf16 %v3932, %v3931
        %v4026 = vpack.c.bf16 %v3934, %v3933
        %v4027 = vpack.c.bf16 %v3936, %v3935
        %v4028 = vpack.c.bf16 %v3938, %v3937
        %v4029 = vpack.c.bf16 %v3940, %v3939
        %v4030 = vpack.c.bf16 %v3942, %v3941
        %v4031 = vpack.c.bf16 %v3944, %v3943
        %v4032 = vpack.c.bf16 %v3946, %v3945
        %v4033 = vpack.c.bf16 %v3948, %v3947
        %v4034 = vpack.c.bf16 %v3950, %v3949
        %v4035 = vpack.c.bf16 %v3952, %v3951
        %v4036 = vpack.c.bf16 %v3954, %v3953
        %v4037 = vpack.c.bf16 %v3956, %v3955
        %v4038 = vpack.c.bf16 %v3958, %v3957
        %v4039 = vpack.c.bf16 %v3960, %v3959
        %v4040 = vpack.c.bf16 %v3962, %v3961
        %v4041 = vpack.c.bf16 %v3964, %v3963
        %v4042 = vpack.c.bf16 %v3966, %v3965
        %v4043 = vpack.c.bf16 %v3968, %v3967
        %v4044 = vpack.c.bf16 %v3970, %v3969
        %v4045 = vpack.c.bf16 %v3972, %v3971
        %v4046 = vpack.c.bf16 %v3974, %v3973
        %v4047 = vpack.c.bf16 %v3976, %v3975
        %v4048 = vpack.c.bf16 %v3978, %v3977
        %v4049 = vpack.c.bf16 %v3980, %v3979
        %v4050 = vpack.c.bf16 %v3982, %v3981
        %v4051 = vpack.c.bf16 %v3984, %v3983
        %v4052 = vpack.c.bf16 %v3986, %v3985
        %v4053 = vpack.c.bf16 %v3988, %v3987
        %v4054 = vpack.c.bf16 %v3990, %v3989
        %v4055 = vld [vmem:[%s7] sm:$0xff]
        %v4056 = vld [vmem:[%s7 + $0x8] sm:$0xff]
        %v4057 = vld [vmem:[%s7 + $0x10] sm:$0xff]
        %v4058 = vld [vmem:[%s7 + $0x18] sm:$0xff]
        %v4059 = vld [vmem:[%s7 + $0x20] sm:$0xff]
        %v4060 = vld [vmem:[%s7 + $0x28] sm:$0xff]
        %v4061 = vld [vmem:[%s7 + $0x30] sm:$0xff]
        %v4062 = vld [vmem:[%s7 + $0x38] sm:$0xff]
        %v4063 = vld [vmem:[%s7 + $0x40] sm:$0xff]
        %v4064 = vld [vmem:[%s7 + $0x48] sm:$0xff]
        %v4065 = vld [vmem:[%s7 + $0x50] sm:$0xff]
        %v4066 = vld [vmem:[%s7 + $0x58] sm:$0xff]
        %v4067 = vld [vmem:[%s7 + $0x60] sm:$0xff]
        %v4068 = vld [vmem:[%s7 + $0x68] sm:$0xff]
        %v4069 = vld [vmem:[%s7 + $0x70] sm:$0xff]
        %v4070 = vld [vmem:[%s7 + $0x78] sm:$0xff]
        %v4071 = vld [vmem:[%s7 + $0x80] sm:$0xff]
        %v4072 = vld [vmem:[%s7 + $0x88] sm:$0xff]
        %v4073 = vld [vmem:[%s7 + $0x90] sm:$0xff]
        %v4074 = vld [vmem:[%s7 + $0x98] sm:$0xff]
        %v4075 = vld [vmem:[%s7 + $0xa0] sm:$0xff]
        %v4076 = vld [vmem:[%s7 + $0xa8] sm:$0xff]
        %v4077 = vld [vmem:[%s7 + $0xb0] sm:$0xff]
        %v4078 = vld [vmem:[%s7 + $0xb8] sm:$0xff]
        %v4079 = vld [vmem:[%s7 + $0xc0] sm:$0xff]
        %v4080 = vld [vmem:[%s7 + $0xc8] sm:$0xff]
        %v4081 = vld [vmem:[%s7 + $0xd0] sm:$0xff]
        %v4082 = vld [vmem:[%s7 + $0xd8] sm:$0xff]
        %v4083 = vld [vmem:[%s7 + $0xe0] sm:$0xff]
        %v4084 = vld [vmem:[%s7 + $0xe8] sm:$0xff]
        %v4085 = vld [vmem:[%s7 + $0xf0] sm:$0xff]
        %v4086 = vld [vmem:[%s7 + $0xf8] sm:$0xff]
        %v4087 = vld [vmem:[%s7 + $0x100] sm:$0xff]
        %v4088 = vld [vmem:[%s7 + $0x108] sm:$0xff]
        %v4089 = vld [vmem:[%s7 + $0x110] sm:$0xff]
        %v4090 = vld [vmem:[%s7 + $0x118] sm:$0xff]
        %v4091 = vld [vmem:[%s7 + $0x120] sm:$0xff]
        %v4092 = vld [vmem:[%s7 + $0x128] sm:$0xff]
        %v4093 = vld [vmem:[%s7 + $0x130] sm:$0xff]
        %v4094 = vld [vmem:[%s7 + $0x138] sm:$0xff]
        %v4095 = vld [vmem:[%s7 + $0x140] sm:$0xff]
        %v4096 = vld [vmem:[%s7 + $0x148] sm:$0xff]
        %v4097 = vld [vmem:[%s7 + $0x150] sm:$0xff]
        %v4098 = vld [vmem:[%s7 + $0x158] sm:$0xff]
        %v4099 = vld [vmem:[%s7 + $0x160] sm:$0xff]
        %v4100 = vld [vmem:[%s7 + $0x168] sm:$0xff]
        %v4101 = vld [vmem:[%s7 + $0x170] sm:$0xff]
        %v4102 = vld [vmem:[%s7 + $0x178] sm:$0xff]
        %v4103 = vld [vmem:[%s7 + $0x180] sm:$0xff]
        %v4104 = vld [vmem:[%s7 + $0x188] sm:$0xff]
        %v4105 = vld [vmem:[%s7 + $0x190] sm:$0xff]
        %v4106 = vld [vmem:[%s7 + $0x198] sm:$0xff]
        %v4107 = vld [vmem:[%s7 + $0x1a0] sm:$0xff]
        %v4108 = vld [vmem:[%s7 + $0x1a8] sm:$0xff]
        %v4109 = vld [vmem:[%s7 + $0x1b0] sm:$0xff]
        %v4110 = vld [vmem:[%s7 + $0x1b8] sm:$0xff]
        %v4111 = vld [vmem:[%s7 + $0x1c0] sm:$0xff]
        %v4112 = vld [vmem:[%s7 + $0x1c8] sm:$0xff]
        %v4113 = vld [vmem:[%s7 + $0x1d0] sm:$0xff]
        %v4114 = vld [vmem:[%s7 + $0x1d8] sm:$0xff]
        %v4115 = vld [vmem:[%s7 + $0x1e0] sm:$0xff]
        %v4116 = vld [vmem:[%s7 + $0x1e8] sm:$0xff]
        %v4117 = vld [vmem:[%s7 + $0x1f0] sm:$0xff]
        %v4118 = vld [vmem:[%s7 + $0x1f8] sm:$0xff]
        %v4119 = vld [vmem:[%s827] sm:$0xff]
        %v4120 = vld [vmem:[%s827 + $0x8] sm:$0xff]
        %v4121 = vld [vmem:[%s827 + $0x10] sm:$0xff]
        %v4122 = vld [vmem:[%s827 + $0x18] sm:$0xff]
        %v4123 = vld [vmem:[%s827 + $0x20] sm:$0xff]
        %v4124 = vld [vmem:[%s827 + $0x28] sm:$0xff]
        %v4125 = vld [vmem:[%s827 + $0x30] sm:$0xff]
        %v4126 = vld [vmem:[%s827 + $0x38] sm:$0xff]
        %v4127 = vld [vmem:[%s827 + $0x40] sm:$0xff]
        %v4128 = vld [vmem:[%s827 + $0x48] sm:$0xff]
        %v4129 = vld [vmem:[%s827 + $0x50] sm:$0xff]
        %v4130 = vld [vmem:[%s827 + $0x58] sm:$0xff]
        %v4131 = vld [vmem:[%s827 + $0x60] sm:$0xff]
        %v4132 = vld [vmem:[%s827 + $0x68] sm:$0xff]
        %v4133 = vld [vmem:[%s827 + $0x70] sm:$0xff]
        %v4134 = vld [vmem:[%s827 + $0x78] sm:$0xff]
        %v4135 = vld [vmem:[%s827 + $0x80] sm:$0xff]
        %v4136 = vld [vmem:[%s827 + $0x88] sm:$0xff]
        %v4137 = vld [vmem:[%s827 + $0x90] sm:$0xff]
        %v4138 = vld [vmem:[%s827 + $0x98] sm:$0xff]
        %v4139 = vld [vmem:[%s827 + $0xa0] sm:$0xff]
        %v4140 = vld [vmem:[%s827 + $0xa8] sm:$0xff]
        %v4141 = vld [vmem:[%s827 + $0xb0] sm:$0xff]
        %v4142 = vld [vmem:[%s827 + $0xb8] sm:$0xff]
        %v4143 = vld [vmem:[%s827 + $0xc0] sm:$0xff]
        %v4144 = vld [vmem:[%s827 + $0xc8] sm:$0xff]
        %v4145 = vld [vmem:[%s827 + $0xd0] sm:$0xff]
        %v4146 = vld [vmem:[%s827 + $0xd8] sm:$0xff]
        %v4147 = vld [vmem:[%s827 + $0xe0] sm:$0xff]
        %v4148 = vld [vmem:[%s827 + $0xe8] sm:$0xff]
        %v4149 = vld [vmem:[%s827 + $0xf0] sm:$0xff]
        %v4150 = vld [vmem:[%s827 + $0xf8] sm:$0xff]
        %v4151 = vld [vmem:[%s827 + $0x100] sm:$0xff]
        %v4152 = vld [vmem:[%s827 + $0x108] sm:$0xff]
        %v4153 = vld [vmem:[%s827 + $0x110] sm:$0xff]
        %v4154 = vld [vmem:[%s827 + $0x118] sm:$0xff]
        %v4155 = vld [vmem:[%s827 + $0x120] sm:$0xff]
        %v4156 = vld [vmem:[%s827 + $0x128] sm:$0xff]
        %v4157 = vld [vmem:[%s827 + $0x130] sm:$0xff]
        %v4158 = vld [vmem:[%s827 + $0x138] sm:$0xff]
        %v4159 = vld [vmem:[%s827 + $0x140] sm:$0xff]
        %v4160 = vld [vmem:[%s827 + $0x148] sm:$0xff]
        %v4161 = vld [vmem:[%s827 + $0x150] sm:$0xff]
        %v4162 = vld [vmem:[%s827 + $0x158] sm:$0xff]
        %v4163 = vld [vmem:[%s827 + $0x160] sm:$0xff]
        %v4164 = vld [vmem:[%s827 + $0x168] sm:$0xff]
        %v4165 = vld [vmem:[%s827 + $0x170] sm:$0xff]
        %v4166 = vld [vmem:[%s827 + $0x178] sm:$0xff]
        %v4167 = vld [vmem:[%s827 + $0x180] sm:$0xff]
        %v4168 = vld [vmem:[%s827 + $0x188] sm:$0xff]
        %v4169 = vld [vmem:[%s827 + $0x190] sm:$0xff]
        %v4170 = vld [vmem:[%s827 + $0x198] sm:$0xff]
        %v4171 = vld [vmem:[%s827 + $0x1a0] sm:$0xff]
        %v4172 = vld [vmem:[%s827 + $0x1a8] sm:$0xff]
        %v4173 = vld [vmem:[%s827 + $0x1b0] sm:$0xff]
        %v4174 = vld [vmem:[%s827 + $0x1b8] sm:$0xff]
        %v4175 = vld [vmem:[%s827 + $0x1c0] sm:$0xff]
        %v4176 = vld [vmem:[%s827 + $0x1c8] sm:$0xff]
        %v4177 = vld [vmem:[%s827 + $0x1d0] sm:$0xff]
        %v4178 = vld [vmem:[%s827 + $0x1d8] sm:$0xff]
        %v4179 = vld [vmem:[%s827 + $0x1e0] sm:$0xff]
        %v4180 = vld [vmem:[%s827 + $0x1e8] sm:$0xff]
        %v4181 = vld [vmem:[%s827 + $0x1f0] sm:$0xff]
        %v4182 = vld [vmem:[%s827 + $0x1f8] sm:$0xff]
        %v4183 = vld [vmem:[%s827 + $0x200] sm:$0xff]
        %v4184 = vld [vmem:[%s827 + $0x208] sm:$0xff]
        %v4185 = vld [vmem:[%s827 + $0x210] sm:$0xff]
        %v4186 = vld [vmem:[%s827 + $0x218] sm:$0xff]
        %v4187 = vld [vmem:[%s827 + $0x220] sm:$0xff]
        %v4188 = vld [vmem:[%s827 + $0x228] sm:$0xff]
        %v4189 = vld [vmem:[%s827 + $0x230] sm:$0xff]
        %v4190 = vld [vmem:[%s827 + $0x238] sm:$0xff]
        %v4191 = vld [vmem:[%s827 + $0x240] sm:$0xff]
        %v4192 = vld [vmem:[%s827 + $0x248] sm:$0xff]
        %v4193 = vld [vmem:[%s827 + $0x250] sm:$0xff]
        %v4194 = vld [vmem:[%s827 + $0x258] sm:$0xff]
        %v4195 = vld [vmem:[%s827 + $0x260] sm:$0xff]
        %v4196 = vld [vmem:[%s827 + $0x268] sm:$0xff]
        %v4197 = vld [vmem:[%s827 + $0x270] sm:$0xff]
        %v4198 = vld [vmem:[%s827 + $0x278] sm:$0xff]
        %v4199 = vld [vmem:[%s827 + $0x280] sm:$0xff]
        %v4200 = vld [vmem:[%s827 + $0x288] sm:$0xff]
        %v4201 = vld [vmem:[%s827 + $0x290] sm:$0xff]
        %v4202 = vld [vmem:[%s827 + $0x298] sm:$0xff]
        %v4203 = vld [vmem:[%s827 + $0x2a0] sm:$0xff]
        %v4204 = vld [vmem:[%s827 + $0x2a8] sm:$0xff]
        %v4205 = vld [vmem:[%s827 + $0x2b0] sm:$0xff]
        %v4206 = vld [vmem:[%s827 + $0x2b8] sm:$0xff]
        %v4207 = vld [vmem:[%s827 + $0x2c0] sm:$0xff]
        %v4208 = vld [vmem:[%s827 + $0x2c8] sm:$0xff]
        %v4209 = vld [vmem:[%s827 + $0x2d0] sm:$0xff]
        %v4210 = vld [vmem:[%s827 + $0x2d8] sm:$0xff]
        %v4211 = vld [vmem:[%s827 + $0x2e0] sm:$0xff]
        %v4212 = vld [vmem:[%s827 + $0x2e8] sm:$0xff]
        %v4213 = vld [vmem:[%s827 + $0x2f0] sm:$0xff]
        %v4214 = vld [vmem:[%s827 + $0x2f8] sm:$0xff]
        %v4215 = vld [vmem:[%s827 + $0x300] sm:$0xff]
        %v4216 = vld [vmem:[%s827 + $0x308] sm:$0xff]
        %v4217 = vld [vmem:[%s827 + $0x310] sm:$0xff]
        %v4218 = vld [vmem:[%s827 + $0x318] sm:$0xff]
        %v4219 = vld [vmem:[%s827 + $0x320] sm:$0xff]
        %v4220 = vld [vmem:[%s827 + $0x328] sm:$0xff]
        %v4221 = vld [vmem:[%s827 + $0x330] sm:$0xff]
        %v4222 = vld [vmem:[%s827 + $0x338] sm:$0xff]
        %v4223 = vld [vmem:[%s827 + $0x340] sm:$0xff]
        %v4224 = vld [vmem:[%s827 + $0x348] sm:$0xff]
        %v4225 = vld [vmem:[%s827 + $0x350] sm:$0xff]
        %v4226 = vld [vmem:[%s827 + $0x358] sm:$0xff]
        %v4227 = vld [vmem:[%s827 + $0x360] sm:$0xff]
        %v4228 = vld [vmem:[%s827 + $0x368] sm:$0xff]
        %v4229 = vld [vmem:[%s827 + $0x370] sm:$0xff]
        %v4230 = vld [vmem:[%s827 + $0x378] sm:$0xff]
        %v4231 = vld [vmem:[%s827 + $0x380] sm:$0xff]
        %v4232 = vld [vmem:[%s827 + $0x388] sm:$0xff]
        %v4233 = vld [vmem:[%s827 + $0x390] sm:$0xff]
        %v4234 = vld [vmem:[%s827 + $0x398] sm:$0xff]
        %v4235 = vld [vmem:[%s827 + $0x3a0] sm:$0xff]
        %v4236 = vld [vmem:[%s827 + $0x3a8] sm:$0xff]
        %v4237 = vld [vmem:[%s827 + $0x3b0] sm:$0xff]
        %v4238 = vld [vmem:[%s827 + $0x3b8] sm:$0xff]
        %v4239 = vld [vmem:[%s827 + $0x3c0] sm:$0xff]
        %v4240 = vld [vmem:[%s827 + $0x3c8] sm:$0xff]
        %v4241 = vld [vmem:[%s827 + $0x3d0] sm:$0xff]
        %v4242 = vld [vmem:[%s827 + $0x3d8] sm:$0xff]
        %v4243 = vld [vmem:[%s827 + $0x3e0] sm:$0xff]
        %v4244 = vld [vmem:[%s827 + $0x3e8] sm:$0xff]
        %v4245 = vld [vmem:[%s827 + $0x3f0] sm:$0xff]
        %v4246 = vld [vmem:[%s827 + $0x3f8] sm:$0xff]
        %v4247 = vld [vmem:[%s827 + $0x400] sm:$0xff]
        %v4248 = vld [vmem:[%s827 + $0x408] sm:$0xff]
        %v4249 = vld [vmem:[%s827 + $0x410] sm:$0xff]
        %v4250 = vld [vmem:[%s827 + $0x418] sm:$0xff]
        %v4251 = vld [vmem:[%s827 + $0x420] sm:$0xff]
        %v4252 = vld [vmem:[%s827 + $0x428] sm:$0xff]
        %v4253 = vld [vmem:[%s827 + $0x430] sm:$0xff]
        %v4254 = vld [vmem:[%s827 + $0x438] sm:$0xff]
        %v4255 = vld [vmem:[%s827 + $0x440] sm:$0xff]
        %v4256 = vld [vmem:[%s827 + $0x448] sm:$0xff]
        %v4257 = vld [vmem:[%s827 + $0x450] sm:$0xff]
        %v4258 = vld [vmem:[%s827 + $0x458] sm:$0xff]
        %v4259 = vld [vmem:[%s827 + $0x460] sm:$0xff]
        %v4260 = vld [vmem:[%s827 + $0x468] sm:$0xff]
        %v4261 = vld [vmem:[%s827 + $0x470] sm:$0xff]
        %v4262 = vld [vmem:[%s827 + $0x478] sm:$0xff]
        %v4263 = vld [vmem:[%s827 + $0x480] sm:$0xff]
        %v4264 = vld [vmem:[%s827 + $0x488] sm:$0xff]
        %v4265 = vld [vmem:[%s827 + $0x490] sm:$0xff]
        %v4266 = vld [vmem:[%s827 + $0x498] sm:$0xff]
        %v4267 = vld [vmem:[%s827 + $0x4a0] sm:$0xff]
        %v4268 = vld [vmem:[%s827 + $0x4a8] sm:$0xff]
        %v4269 = vld [vmem:[%s827 + $0x4b0] sm:$0xff]
        %v4270 = vld [vmem:[%s827 + $0x4b8] sm:$0xff]
        %v4271 = vld [vmem:[%s827 + $0x4c0] sm:$0xff]
        %v4272 = vld [vmem:[%s827 + $0x4c8] sm:$0xff]
        %v4273 = vld [vmem:[%s827 + $0x4d0] sm:$0xff]
        %v4274 = vld [vmem:[%s827 + $0x4d8] sm:$0xff]
        %v4275 = vld [vmem:[%s827 + $0x4e0] sm:$0xff]
        %v4276 = vld [vmem:[%s827 + $0x4e8] sm:$0xff]
        %v4277 = vld [vmem:[%s827 + $0x4f0] sm:$0xff]
        %v4278 = vld [vmem:[%s827 + $0x4f8] sm:$0xff]
        %v4279 = vld [vmem:[%s827 + $0x500] sm:$0xff]
        %v4280 = vld [vmem:[%s827 + $0x508] sm:$0xff]
        %v4281 = vld [vmem:[%s827 + $0x510] sm:$0xff]
        %v4282 = vld [vmem:[%s827 + $0x518] sm:$0xff]
        %v4283 = vld [vmem:[%s827 + $0x520] sm:$0xff]
        %v4284 = vld [vmem:[%s827 + $0x528] sm:$0xff]
        %v4285 = vld [vmem:[%s827 + $0x530] sm:$0xff]
        %v4286 = vld [vmem:[%s827 + $0x538] sm:$0xff]
        %v4287 = vld [vmem:[%s827 + $0x540] sm:$0xff]
        %v4288 = vld [vmem:[%s827 + $0x548] sm:$0xff]
        %v4289 = vld [vmem:[%s827 + $0x550] sm:$0xff]
        %v4290 = vld [vmem:[%s827 + $0x558] sm:$0xff]
        %v4291 = vld [vmem:[%s827 + $0x560] sm:$0xff]
        %v4292 = vld [vmem:[%s827 + $0x568] sm:$0xff]
        %v4293 = vld [vmem:[%s827 + $0x570] sm:$0xff]
        %v4294 = vld [vmem:[%s827 + $0x578] sm:$0xff]
        %v4295 = vld [vmem:[%s827 + $0x580] sm:$0xff]
        %v4296 = vld [vmem:[%s827 + $0x588] sm:$0xff]
        %v4297 = vld [vmem:[%s827 + $0x590] sm:$0xff]
        %v4298 = vld [vmem:[%s827 + $0x598] sm:$0xff]
        %v4299 = vld [vmem:[%s827 + $0x5a0] sm:$0xff]
        %v4300 = vld [vmem:[%s827 + $0x5a8] sm:$0xff]
        %v4301 = vld [vmem:[%s827 + $0x5b0] sm:$0xff]
        %v4302 = vld [vmem:[%s827 + $0x5b8] sm:$0xff]
        %v4303 = vld [vmem:[%s827 + $0x5c0] sm:$0xff]
        %v4304 = vld [vmem:[%s827 + $0x5c8] sm:$0xff]
        %v4305 = vld [vmem:[%s827 + $0x5d0] sm:$0xff]
        %v4306 = vld [vmem:[%s827 + $0x5d8] sm:$0xff]
        %v4307 = vld [vmem:[%s827 + $0x5e0] sm:$0xff]
        %v4308 = vld [vmem:[%s827 + $0x5e8] sm:$0xff]
        %v4309 = vld [vmem:[%s827 + $0x5f0] sm:$0xff]
        %v4310 = vld [vmem:[%s827 + $0x5f8] sm:$0xff]
        %v4311 = vld [vmem:[%s827 + $0x600] sm:$0xff]
        %v4312 = vld [vmem:[%s827 + $0x608] sm:$0xff]
        %v4313 = vld [vmem:[%s827 + $0x610] sm:$0xff]
        %v4314 = vld [vmem:[%s827 + $0x618] sm:$0xff]
        %v4315 = vld [vmem:[%s827 + $0x620] sm:$0xff]
        %v4316 = vld [vmem:[%s827 + $0x628] sm:$0xff]
        %v4317 = vld [vmem:[%s827 + $0x630] sm:$0xff]
        %v4318 = vld [vmem:[%s827 + $0x638] sm:$0xff]
        %v4319 = vld [vmem:[%s827 + $0x640] sm:$0xff]
        %v4320 = vld [vmem:[%s827 + $0x648] sm:$0xff]
        %v4321 = vld [vmem:[%s827 + $0x650] sm:$0xff]
        %v4322 = vld [vmem:[%s827 + $0x658] sm:$0xff]
        %v4323 = vld [vmem:[%s827 + $0x660] sm:$0xff]
        %v4324 = vld [vmem:[%s827 + $0x668] sm:$0xff]
        %v4325 = vld [vmem:[%s827 + $0x670] sm:$0xff]
        %v4326 = vld [vmem:[%s827 + $0x678] sm:$0xff]
        %v4327 = vld [vmem:[%s827 + $0x680] sm:$0xff]
        %v4328 = vld [vmem:[%s827 + $0x688] sm:$0xff]
        %v4329 = vld [vmem:[%s827 + $0x690] sm:$0xff]
        %v4330 = vld [vmem:[%s827 + $0x698] sm:$0xff]
        %v4331 = vld [vmem:[%s827 + $0x6a0] sm:$0xff]
        %v4332 = vld [vmem:[%s827 + $0x6a8] sm:$0xff]
        %v4333 = vld [vmem:[%s827 + $0x6b0] sm:$0xff]
        %v4334 = vld [vmem:[%s827 + $0x6b8] sm:$0xff]
        %v4335 = vld [vmem:[%s827 + $0x6c0] sm:$0xff]
        %v4336 = vld [vmem:[%s827 + $0x6c8] sm:$0xff]
        %v4337 = vld [vmem:[%s827 + $0x6d0] sm:$0xff]
        %v4338 = vld [vmem:[%s827 + $0x6d8] sm:$0xff]
        %v4339 = vld [vmem:[%s827 + $0x6e0] sm:$0xff]
        %v4340 = vld [vmem:[%s827 + $0x6e8] sm:$0xff]
        %v4341 = vld [vmem:[%s827 + $0x6f0] sm:$0xff]
        %v4342 = vld [vmem:[%s827 + $0x6f8] sm:$0xff]
        %v4343 = vld [vmem:[%s827 + $0x700] sm:$0xff]
        %v4344 = vld [vmem:[%s827 + $0x708] sm:$0xff]
        %v4345 = vld [vmem:[%s827 + $0x710] sm:$0xff]
        %v4346 = vld [vmem:[%s827 + $0x718] sm:$0xff]
        %v4347 = vld [vmem:[%s827 + $0x720] sm:$0xff]
        %v4348 = vld [vmem:[%s827 + $0x728] sm:$0xff]
        %v4349 = vld [vmem:[%s827 + $0x730] sm:$0xff]
        %v4350 = vld [vmem:[%s827 + $0x738] sm:$0xff]
        %v4351 = vld [vmem:[%s827 + $0x740] sm:$0xff]
        %v4352 = vld [vmem:[%s827 + $0x748] sm:$0xff]
        %v4353 = vld [vmem:[%s827 + $0x750] sm:$0xff]
        %v4354 = vld [vmem:[%s827 + $0x758] sm:$0xff]
        %v4355 = vld [vmem:[%s827 + $0x760] sm:$0xff]
        %v4356 = vld [vmem:[%s827 + $0x768] sm:$0xff]
        %v4357 = vld [vmem:[%s827 + $0x770] sm:$0xff]
        %v4358 = vld [vmem:[%s827 + $0x778] sm:$0xff]
        %v4359 = vld [vmem:[%s827 + $0x780] sm:$0xff]
        %v4360 = vld [vmem:[%s827 + $0x788] sm:$0xff]
        %v4361 = vld [vmem:[%s827 + $0x790] sm:$0xff]
        %v4362 = vld [vmem:[%s827 + $0x798] sm:$0xff]
        %v4363 = vld [vmem:[%s827 + $0x7a0] sm:$0xff]
        %v4364 = vld [vmem:[%s827 + $0x7a8] sm:$0xff]
        %v4365 = vld [vmem:[%s827 + $0x7b0] sm:$0xff]
        %v4366 = vld [vmem:[%s827 + $0x7b8] sm:$0xff]
        %v4367 = vld [vmem:[%s827 + $0x7c0] sm:$0xff]
        %v4368 = vld [vmem:[%s827 + $0x7c8] sm:$0xff]
        %v4369 = vld [vmem:[%s827 + $0x7d0] sm:$0xff]
        %v4370 = vld [vmem:[%s827 + $0x7d8] sm:$0xff]
        %v4371 = vld [vmem:[%s827 + $0x7e0] sm:$0xff]
        %v4372 = vld [vmem:[%s827 + $0x7e8] sm:$0xff]
        %v4373 = vld [vmem:[%s827 + $0x7f0] sm:$0xff]
        %v4374 = vld [vmem:[%s827 + $0x7f8] sm:$0xff]
        %v4631 = vunpack.c.l.b16 %v4119
        %v4632 = vunpack.c.h.b16 %v4119
        %v4633 = vunpack.c.l.b16 %v4120
        %v4634 = vunpack.c.h.b16 %v4120
        %v4635 = vunpack.c.l.b16 %v4121
        %v4636 = vunpack.c.h.b16 %v4121
        %v4637 = vunpack.c.l.b16 %v4122
        %v4638 = vunpack.c.h.b16 %v4122
        %v4639 = vunpack.c.l.b16 %v4123
        %v4640 = vunpack.c.h.b16 %v4123
        %v4641 = vunpack.c.l.b16 %v4124
        %v4642 = vunpack.c.h.b16 %v4124
        %v4643 = vunpack.c.l.b16 %v4125
        %v4644 = vunpack.c.h.b16 %v4125
        %v4645 = vunpack.c.l.b16 %v4126
        %v4646 = vunpack.c.h.b16 %v4126
        %v4647 = vunpack.c.l.b16 %v4127
        %v4648 = vunpack.c.h.b16 %v4127
        %v4649 = vunpack.c.l.b16 %v4128
        %v4650 = vunpack.c.h.b16 %v4128
        %v4651 = vunpack.c.l.b16 %v4129
        %v4652 = vunpack.c.h.b16 %v4129
        %v4653 = vunpack.c.l.b16 %v4130
        %v4654 = vunpack.c.h.b16 %v4130
        %v4655 = vunpack.c.l.b16 %v4131
        %v4656 = vunpack.c.h.b16 %v4131
        %v4657 = vunpack.c.l.b16 %v4132
        %v4658 = vunpack.c.h.b16 %v4132
        %v4659 = vunpack.c.l.b16 %v4133
        %v4660 = vunpack.c.h.b16 %v4133
        %v4661 = vunpack.c.l.b16 %v4134
        %v4662 = vunpack.c.h.b16 %v4134
        %v4663 = vunpack.c.l.b16 %v4135
        %v4664 = vunpack.c.h.b16 %v4135
        %v4665 = vunpack.c.l.b16 %v4136
        %v4666 = vunpack.c.h.b16 %v4136
        %v4667 = vunpack.c.l.b16 %v4137
        %v4668 = vunpack.c.h.b16 %v4137
        %v4669 = vunpack.c.l.b16 %v4138
        %v4670 = vunpack.c.h.b16 %v4138
        %v4671 = vunpack.c.l.b16 %v4139
        %v4672 = vunpack.c.h.b16 %v4139
        %v4673 = vunpack.c.l.b16 %v4140
        %v4674 = vunpack.c.h.b16 %v4140
        %v4675 = vunpack.c.l.b16 %v4141
        %v4676 = vunpack.c.h.b16 %v4141
        %v4677 = vunpack.c.l.b16 %v4142
        %v4678 = vunpack.c.h.b16 %v4142
        %v4679 = vunpack.c.l.b16 %v4143
        %v4680 = vunpack.c.h.b16 %v4143
        %v4681 = vunpack.c.l.b16 %v4144
        %v4682 = vunpack.c.h.b16 %v4144
        %v4683 = vunpack.c.l.b16 %v4145
        %v4684 = vunpack.c.h.b16 %v4145
        %v4685 = vunpack.c.l.b16 %v4146
        %v4686 = vunpack.c.h.b16 %v4146
        %v4687 = vunpack.c.l.b16 %v4147
        %v4688 = vunpack.c.h.b16 %v4147
        %v4689 = vunpack.c.l.b16 %v4148
        %v4690 = vunpack.c.h.b16 %v4148
        %v4691 = vunpack.c.l.b16 %v4149
        %v4692 = vunpack.c.h.b16 %v4149
        %v4693 = vunpack.c.l.b16 %v4150
        %v4694 = vunpack.c.h.b16 %v4150
        %v4695 = vunpack.c.l.b16 %v4151
        %v4696 = vunpack.c.h.b16 %v4151
        %v4697 = vunpack.c.l.b16 %v4152
        %v4698 = vunpack.c.h.b16 %v4152
        %v4699 = vunpack.c.l.b16 %v4153
        %v4700 = vunpack.c.h.b16 %v4153
        %v4701 = vunpack.c.l.b16 %v4154
        %v4702 = vunpack.c.h.b16 %v4154
        %v4703 = vunpack.c.l.b16 %v4155
        %v4704 = vunpack.c.h.b16 %v4155
        %v4705 = vunpack.c.l.b16 %v4156
        %v4706 = vunpack.c.h.b16 %v4156
        %v4707 = vunpack.c.l.b16 %v4157
        %v4708 = vunpack.c.h.b16 %v4157
        %v4709 = vunpack.c.l.b16 %v4158
        %v4710 = vunpack.c.h.b16 %v4158
        %v4711 = vunpack.c.l.b16 %v4159
        %v4712 = vunpack.c.h.b16 %v4159
        %v4713 = vunpack.c.l.b16 %v4160
        %v4714 = vunpack.c.h.b16 %v4160
        %v4715 = vunpack.c.l.b16 %v4161
        %v4716 = vunpack.c.h.b16 %v4161
        %v4717 = vunpack.c.l.b16 %v4162
        %v4718 = vunpack.c.h.b16 %v4162
        %v4719 = vunpack.c.l.b16 %v4163
        %v4720 = vunpack.c.h.b16 %v4163
        %v4721 = vunpack.c.l.b16 %v4164
        %v4722 = vunpack.c.h.b16 %v4164
        %v4723 = vunpack.c.l.b16 %v4165
        %v4724 = vunpack.c.h.b16 %v4165
        %v4725 = vunpack.c.l.b16 %v4166
        %v4726 = vunpack.c.h.b16 %v4166
        %v4727 = vunpack.c.l.b16 %v4167
        %v4728 = vunpack.c.h.b16 %v4167
        %v4729 = vunpack.c.l.b16 %v4168
        %v4730 = vunpack.c.h.b16 %v4168
        %v4731 = vunpack.c.l.b16 %v4169
        %v4732 = vunpack.c.h.b16 %v4169
        %v4733 = vunpack.c.l.b16 %v4170
        %v4734 = vunpack.c.h.b16 %v4170
        %v4735 = vunpack.c.l.b16 %v4171
        %v4736 = vunpack.c.h.b16 %v4171
        %v4737 = vunpack.c.l.b16 %v4172
        %v4738 = vunpack.c.h.b16 %v4172
        %v4739 = vunpack.c.l.b16 %v4173
        %v4740 = vunpack.c.h.b16 %v4173
        %v4741 = vunpack.c.l.b16 %v4174
        %v4742 = vunpack.c.h.b16 %v4174
        %v4743 = vunpack.c.l.b16 %v4175
        %v4744 = vunpack.c.h.b16 %v4175
        %v4745 = vunpack.c.l.b16 %v4176
        %v4746 = vunpack.c.h.b16 %v4176
        %v4747 = vunpack.c.l.b16 %v4177
        %v4748 = vunpack.c.h.b16 %v4177
        %v4749 = vunpack.c.l.b16 %v4178
        %v4750 = vunpack.c.h.b16 %v4178
        %v4751 = vunpack.c.l.b16 %v4179
        %v4752 = vunpack.c.h.b16 %v4179
        %v4753 = vunpack.c.l.b16 %v4180
        %v4754 = vunpack.c.h.b16 %v4180
        %v4755 = vunpack.c.l.b16 %v4181
        %v4756 = vunpack.c.h.b16 %v4181
        %v4757 = vunpack.c.l.b16 %v4182
        %v4758 = vunpack.c.h.b16 %v4182
        %v4759 = vunpack.c.l.b16 %v4183
        %v4760 = vunpack.c.h.b16 %v4183
        %v4761 = vunpack.c.l.b16 %v4184
        %v4762 = vunpack.c.h.b16 %v4184
        %v4763 = vunpack.c.l.b16 %v4185
        %v4764 = vunpack.c.h.b16 %v4185
        %v4765 = vunpack.c.l.b16 %v4186
        %v4766 = vunpack.c.h.b16 %v4186
        %v4767 = vunpack.c.l.b16 %v4187
        %v4768 = vunpack.c.h.b16 %v4187
        %v4769 = vunpack.c.l.b16 %v4188
        %v4770 = vunpack.c.h.b16 %v4188
        %v4771 = vunpack.c.l.b16 %v4189
        %v4772 = vunpack.c.h.b16 %v4189
        %v4773 = vunpack.c.l.b16 %v4190
        %v4774 = vunpack.c.h.b16 %v4190
        %v4775 = vunpack.c.l.b16 %v4191
        %v4776 = vunpack.c.h.b16 %v4191
        %v4777 = vunpack.c.l.b16 %v4192
        %v4778 = vunpack.c.h.b16 %v4192
        %v4779 = vunpack.c.l.b16 %v4193
        %v4780 = vunpack.c.h.b16 %v4193
        %v4781 = vunpack.c.l.b16 %v4194
        %v4782 = vunpack.c.h.b16 %v4194
        %v4783 = vunpack.c.l.b16 %v4195
        %v4784 = vunpack.c.h.b16 %v4195
        %v4785 = vunpack.c.l.b16 %v4196
        %v4786 = vunpack.c.h.b16 %v4196
        %v4787 = vunpack.c.l.b16 %v4197
        %v4788 = vunpack.c.h.b16 %v4197
        %v4789 = vunpack.c.l.b16 %v4198
        %v4790 = vunpack.c.h.b16 %v4198
        %v4791 = vunpack.c.l.b16 %v4199
        %v4792 = vunpack.c.h.b16 %v4199
        %v4793 = vunpack.c.l.b16 %v4200
        %v4794 = vunpack.c.h.b16 %v4200
        %v4795 = vunpack.c.l.b16 %v4201
        %v4796 = vunpack.c.h.b16 %v4201
        %v4797 = vunpack.c.l.b16 %v4202
        %v4798 = vunpack.c.h.b16 %v4202
        %v4799 = vunpack.c.l.b16 %v4203
        %v4800 = vunpack.c.h.b16 %v4203
        %v4801 = vunpack.c.l.b16 %v4204
        %v4802 = vunpack.c.h.b16 %v4204
        %v4803 = vunpack.c.l.b16 %v4205
        %v4804 = vunpack.c.h.b16 %v4205
        %v4805 = vunpack.c.l.b16 %v4206
        %v4806 = vunpack.c.h.b16 %v4206
        %v4807 = vunpack.c.l.b16 %v4207
        %v4808 = vunpack.c.h.b16 %v4207
        %v4809 = vunpack.c.l.b16 %v4208
        %v4810 = vunpack.c.h.b16 %v4208
        %v4811 = vunpack.c.l.b16 %v4209
        %v4812 = vunpack.c.h.b16 %v4209
        %v4813 = vunpack.c.l.b16 %v4210
        %v4814 = vunpack.c.h.b16 %v4210
        %v4815 = vunpack.c.l.b16 %v4211
        %v4816 = vunpack.c.h.b16 %v4211
        %v4817 = vunpack.c.l.b16 %v4212
        %v4818 = vunpack.c.h.b16 %v4212
        %v4819 = vunpack.c.l.b16 %v4213
        %v4820 = vunpack.c.h.b16 %v4213
        %v4821 = vunpack.c.l.b16 %v4214
        %v4822 = vunpack.c.h.b16 %v4214
        %v4823 = vunpack.c.l.b16 %v4215
        %v4824 = vunpack.c.h.b16 %v4215
        %v4825 = vunpack.c.l.b16 %v4216
        %v4826 = vunpack.c.h.b16 %v4216
        %v4827 = vunpack.c.l.b16 %v4217
        %v4828 = vunpack.c.h.b16 %v4217
        %v4829 = vunpack.c.l.b16 %v4218
        %v4830 = vunpack.c.h.b16 %v4218
        %v4831 = vunpack.c.l.b16 %v4219
        %v4832 = vunpack.c.h.b16 %v4219
        %v4833 = vunpack.c.l.b16 %v4220
        %v4834 = vunpack.c.h.b16 %v4220
        %v4835 = vunpack.c.l.b16 %v4221
        %v4836 = vunpack.c.h.b16 %v4221
        %v4837 = vunpack.c.l.b16 %v4222
        %v4838 = vunpack.c.h.b16 %v4222
        %v4839 = vunpack.c.l.b16 %v4223
        %v4840 = vunpack.c.h.b16 %v4223
        %v4841 = vunpack.c.l.b16 %v4224
        %v4842 = vunpack.c.h.b16 %v4224
        %v4843 = vunpack.c.l.b16 %v4225
        %v4844 = vunpack.c.h.b16 %v4225
        %v4845 = vunpack.c.l.b16 %v4226
        %v4846 = vunpack.c.h.b16 %v4226
        %v4847 = vunpack.c.l.b16 %v4227
        %v4848 = vunpack.c.h.b16 %v4227
        %v4849 = vunpack.c.l.b16 %v4228
        %v4850 = vunpack.c.h.b16 %v4228
        %v4851 = vunpack.c.l.b16 %v4229
        %v4852 = vunpack.c.h.b16 %v4229
        %v4853 = vunpack.c.l.b16 %v4230
        %v4854 = vunpack.c.h.b16 %v4230
        %v4855 = vunpack.c.l.b16 %v4231
        %v4856 = vunpack.c.h.b16 %v4231
        %v4857 = vunpack.c.l.b16 %v4232
        %v4858 = vunpack.c.h.b16 %v4232
        %v4859 = vunpack.c.l.b16 %v4233
        %v4860 = vunpack.c.h.b16 %v4233
        %v4861 = vunpack.c.l.b16 %v4234
        %v4862 = vunpack.c.h.b16 %v4234
        %v4863 = vunpack.c.l.b16 %v4235
        %v4864 = vunpack.c.h.b16 %v4235
        %v4865 = vunpack.c.l.b16 %v4236
        %v4866 = vunpack.c.h.b16 %v4236
        %v4867 = vunpack.c.l.b16 %v4237
        %v4868 = vunpack.c.h.b16 %v4237
        %v4869 = vunpack.c.l.b16 %v4238
        %v4870 = vunpack.c.h.b16 %v4238
        %v4871 = vunpack.c.l.b16 %v4239
        %v4872 = vunpack.c.h.b16 %v4239
        %v4873 = vunpack.c.l.b16 %v4240
        %v4874 = vunpack.c.h.b16 %v4240
        %v4875 = vunpack.c.l.b16 %v4241
        %v4876 = vunpack.c.h.b16 %v4241
        %v4877 = vunpack.c.l.b16 %v4242
        %v4878 = vunpack.c.h.b16 %v4242
        %v4879 = vunpack.c.l.b16 %v4243
        %v4880 = vunpack.c.h.b16 %v4243
        %v4881 = vunpack.c.l.b16 %v4244
        %v4882 = vunpack.c.h.b16 %v4244
        %v4883 = vunpack.c.l.b16 %v4245
        %v4884 = vunpack.c.h.b16 %v4245
        %v4885 = vunpack.c.l.b16 %v4246
        %v4886 = vunpack.c.h.b16 %v4246
        %v4887 = vunpack.c.l.b16 %v4247
        %v4888 = vunpack.c.h.b16 %v4247
        %v4889 = vunpack.c.l.b16 %v4248
        %v4890 = vunpack.c.h.b16 %v4248
        %v4891 = vunpack.c.l.b16 %v4249
        %v4892 = vunpack.c.h.b16 %v4249
        %v4893 = vunpack.c.l.b16 %v4250
        %v4894 = vunpack.c.h.b16 %v4250
        %v4895 = vunpack.c.l.b16 %v4251
        %v4896 = vunpack.c.h.b16 %v4251
        %v4897 = vunpack.c.l.b16 %v4252
        %v4898 = vunpack.c.h.b16 %v4252
        %v4899 = vunpack.c.l.b16 %v4253
        %v4900 = vunpack.c.h.b16 %v4253
        %v4901 = vunpack.c.l.b16 %v4254
        %v4902 = vunpack.c.h.b16 %v4254
        %v4903 = vunpack.c.l.b16 %v4255
        %v4904 = vunpack.c.h.b16 %v4255
        %v4905 = vunpack.c.l.b16 %v4256
        %v4906 = vunpack.c.h.b16 %v4256
        %v4907 = vunpack.c.l.b16 %v4257
        %v4908 = vunpack.c.h.b16 %v4257
        %v4909 = vunpack.c.l.b16 %v4258
        %v4910 = vunpack.c.h.b16 %v4258
        %v4911 = vunpack.c.l.b16 %v4259
        %v4912 = vunpack.c.h.b16 %v4259
        %v4913 = vunpack.c.l.b16 %v4260
        %v4914 = vunpack.c.h.b16 %v4260
        %v4915 = vunpack.c.l.b16 %v4261
        %v4916 = vunpack.c.h.b16 %v4261
        %v4917 = vunpack.c.l.b16 %v4262
        %v4918 = vunpack.c.h.b16 %v4262
        %v4919 = vunpack.c.l.b16 %v4263
        %v4920 = vunpack.c.h.b16 %v4263
        %v4921 = vunpack.c.l.b16 %v4264
        %v4922 = vunpack.c.h.b16 %v4264
        %v4923 = vunpack.c.l.b16 %v4265
        %v4924 = vunpack.c.h.b16 %v4265
        %v4925 = vunpack.c.l.b16 %v4266
        %v4926 = vunpack.c.h.b16 %v4266
        %v4927 = vunpack.c.l.b16 %v4267
        %v4928 = vunpack.c.h.b16 %v4267
        %v4929 = vunpack.c.l.b16 %v4268
        %v4930 = vunpack.c.h.b16 %v4268
        %v4931 = vunpack.c.l.b16 %v4269
        %v4932 = vunpack.c.h.b16 %v4269
        %v4933 = vunpack.c.l.b16 %v4270
        %v4934 = vunpack.c.h.b16 %v4270
        %v4935 = vunpack.c.l.b16 %v4271
        %v4936 = vunpack.c.h.b16 %v4271
        %v4937 = vunpack.c.l.b16 %v4272
        %v4938 = vunpack.c.h.b16 %v4272
        %v4939 = vunpack.c.l.b16 %v4273
        %v4940 = vunpack.c.h.b16 %v4273
        %v4941 = vunpack.c.l.b16 %v4274
        %v4942 = vunpack.c.h.b16 %v4274
        %v4943 = vunpack.c.l.b16 %v4275
        %v4944 = vunpack.c.h.b16 %v4275
        %v4945 = vunpack.c.l.b16 %v4276
        %v4946 = vunpack.c.h.b16 %v4276
        %v4947 = vunpack.c.l.b16 %v4277
        %v4948 = vunpack.c.h.b16 %v4277
        %v4949 = vunpack.c.l.b16 %v4278
        %v4950 = vunpack.c.h.b16 %v4278
        %v4951 = vunpack.c.l.b16 %v4279
        %v4952 = vunpack.c.h.b16 %v4279
        %v4953 = vunpack.c.l.b16 %v4280
        %v4954 = vunpack.c.h.b16 %v4280
        %v4955 = vunpack.c.l.b16 %v4281
        %v4956 = vunpack.c.h.b16 %v4281
        %v4957 = vunpack.c.l.b16 %v4282
        %v4958 = vunpack.c.h.b16 %v4282
        %v4959 = vunpack.c.l.b16 %v4283
        %v4960 = vunpack.c.h.b16 %v4283
        %v4961 = vunpack.c.l.b16 %v4284
        %v4962 = vunpack.c.h.b16 %v4284
        %v4963 = vunpack.c.l.b16 %v4285
        %v4964 = vunpack.c.h.b16 %v4285
        %v4965 = vunpack.c.l.b16 %v4286
        %v4966 = vunpack.c.h.b16 %v4286
        %v4967 = vunpack.c.l.b16 %v4287
        %v4968 = vunpack.c.h.b16 %v4287
        %v4969 = vunpack.c.l.b16 %v4288
        %v4970 = vunpack.c.h.b16 %v4288
        %v4971 = vunpack.c.l.b16 %v4289
        %v4972 = vunpack.c.h.b16 %v4289
        %v4973 = vunpack.c.l.b16 %v4290
        %v4974 = vunpack.c.h.b16 %v4290
        %v4975 = vunpack.c.l.b16 %v4291
        %v4976 = vunpack.c.h.b16 %v4291
        %v4977 = vunpack.c.l.b16 %v4292
        %v4978 = vunpack.c.h.b16 %v4292
        %v4979 = vunpack.c.l.b16 %v4293
        %v4980 = vunpack.c.h.b16 %v4293
        %v4981 = vunpack.c.l.b16 %v4294
        %v4982 = vunpack.c.h.b16 %v4294
        %v4983 = vunpack.c.l.b16 %v4295
        %v4984 = vunpack.c.h.b16 %v4295
        %v4985 = vunpack.c.l.b16 %v4296
        %v4986 = vunpack.c.h.b16 %v4296
        %v4987 = vunpack.c.l.b16 %v4297
        %v4988 = vunpack.c.h.b16 %v4297
        %v4989 = vunpack.c.l.b16 %v4298
        %v4990 = vunpack.c.h.b16 %v4298
        %v4991 = vunpack.c.l.b16 %v4299
        %v4992 = vunpack.c.h.b16 %v4299
        %v4993 = vunpack.c.l.b16 %v4300
        %v4994 = vunpack.c.h.b16 %v4300
        %v4995 = vunpack.c.l.b16 %v4301
        %v4996 = vunpack.c.h.b16 %v4301
        %v4997 = vunpack.c.l.b16 %v4302
        %v4998 = vunpack.c.h.b16 %v4302
        %v4999 = vunpack.c.l.b16 %v4303
        %v5000 = vunpack.c.h.b16 %v4303
        %v5001 = vunpack.c.l.b16 %v4304
        %v5002 = vunpack.c.h.b16 %v4304
        %v5003 = vunpack.c.l.b16 %v4305
        %v5004 = vunpack.c.h.b16 %v4305
        %v5005 = vunpack.c.l.b16 %v4306
        %v5006 = vunpack.c.h.b16 %v4306
        %v5007 = vunpack.c.l.b16 %v4307
        %v5008 = vunpack.c.h.b16 %v4307
        %v5009 = vunpack.c.l.b16 %v4308
        %v5010 = vunpack.c.h.b16 %v4308
        %v5011 = vunpack.c.l.b16 %v4309
        %v5012 = vunpack.c.h.b16 %v4309
        %v5013 = vunpack.c.l.b16 %v4310
        %v5014 = vunpack.c.h.b16 %v4310
        %v5015 = vunpack.c.l.b16 %v4311
        %v5016 = vunpack.c.h.b16 %v4311
        %v5017 = vunpack.c.l.b16 %v4312
        %v5018 = vunpack.c.h.b16 %v4312
        %v5019 = vunpack.c.l.b16 %v4313
        %v5020 = vunpack.c.h.b16 %v4313
        %v5021 = vunpack.c.l.b16 %v4314
        %v5022 = vunpack.c.h.b16 %v4314
        %v5023 = vunpack.c.l.b16 %v4315
        %v5024 = vunpack.c.h.b16 %v4315
        %v5025 = vunpack.c.l.b16 %v4316
        %v5026 = vunpack.c.h.b16 %v4316
        %v5027 = vunpack.c.l.b16 %v4317
        %v5028 = vunpack.c.h.b16 %v4317
        %v5029 = vunpack.c.l.b16 %v4318
        %v5030 = vunpack.c.h.b16 %v4318
        %v5031 = vunpack.c.l.b16 %v4319
        %v5032 = vunpack.c.h.b16 %v4319
        %v5033 = vunpack.c.l.b16 %v4320
        %v5034 = vunpack.c.h.b16 %v4320
        %v5035 = vunpack.c.l.b16 %v4321
        %v5036 = vunpack.c.h.b16 %v4321
        %v5037 = vunpack.c.l.b16 %v4322
        %v5038 = vunpack.c.h.b16 %v4322
        %v5039 = vunpack.c.l.b16 %v4323
        %v5040 = vunpack.c.h.b16 %v4323
        %v5041 = vunpack.c.l.b16 %v4324
        %v5042 = vunpack.c.h.b16 %v4324
        %v5043 = vunpack.c.l.b16 %v4325
        %v5044 = vunpack.c.h.b16 %v4325
        %v5045 = vunpack.c.l.b16 %v4326
        %v5046 = vunpack.c.h.b16 %v4326
        %v5047 = vunpack.c.l.b16 %v4327
        %v5048 = vunpack.c.h.b16 %v4327
        %v5049 = vunpack.c.l.b16 %v4328
        %v5050 = vunpack.c.h.b16 %v4328
        %v5051 = vunpack.c.l.b16 %v4329
        %v5052 = vunpack.c.h.b16 %v4329
        %v5053 = vunpack.c.l.b16 %v4330
        %v5054 = vunpack.c.h.b16 %v4330
        %v5055 = vunpack.c.l.b16 %v4331
        %v5056 = vunpack.c.h.b16 %v4331
        %v5057 = vunpack.c.l.b16 %v4332
        %v5058 = vunpack.c.h.b16 %v4332
        %v5059 = vunpack.c.l.b16 %v4333
        %v5060 = vunpack.c.h.b16 %v4333
        %v5061 = vunpack.c.l.b16 %v4334
        %v5062 = vunpack.c.h.b16 %v4334
        %v5063 = vunpack.c.l.b16 %v4335
        %v5064 = vunpack.c.h.b16 %v4335
        %v5065 = vunpack.c.l.b16 %v4336
        %v5066 = vunpack.c.h.b16 %v4336
        %v5067 = vunpack.c.l.b16 %v4337
        %v5068 = vunpack.c.h.b16 %v4337
        %v5069 = vunpack.c.l.b16 %v4338
        %v5070 = vunpack.c.h.b16 %v4338
        %v5071 = vunpack.c.l.b16 %v4339
        %v5072 = vunpack.c.h.b16 %v4339
        %v5073 = vunpack.c.l.b16 %v4340
        %v5074 = vunpack.c.h.b16 %v4340
        %v5075 = vunpack.c.l.b16 %v4341
        %v5076 = vunpack.c.h.b16 %v4341
        %v5077 = vunpack.c.l.b16 %v4342
        %v5078 = vunpack.c.h.b16 %v4342
        %v5079 = vunpack.c.l.b16 %v4343
        %v5080 = vunpack.c.h.b16 %v4343
        %v5081 = vunpack.c.l.b16 %v4344
        %v5082 = vunpack.c.h.b16 %v4344
        %v5083 = vunpack.c.l.b16 %v4345
        %v5084 = vunpack.c.h.b16 %v4345
        %v5085 = vunpack.c.l.b16 %v4346
        %v5086 = vunpack.c.h.b16 %v4346
        %v5087 = vunpack.c.l.b16 %v4347
        %v5088 = vunpack.c.h.b16 %v4347
        %v5089 = vunpack.c.l.b16 %v4348
        %v5090 = vunpack.c.h.b16 %v4348
        %v5091 = vunpack.c.l.b16 %v4349
        %v5092 = vunpack.c.h.b16 %v4349
        %v5093 = vunpack.c.l.b16 %v4350
        %v5094 = vunpack.c.h.b16 %v4350
        %v5095 = vunpack.c.l.b16 %v4351
        %v5096 = vunpack.c.h.b16 %v4351
        %v5097 = vunpack.c.l.b16 %v4352
        %v5098 = vunpack.c.h.b16 %v4352
        %v5099 = vunpack.c.l.b16 %v4353
        %v5100 = vunpack.c.h.b16 %v4353
        %v5101 = vunpack.c.l.b16 %v4354
        %v5102 = vunpack.c.h.b16 %v4354
        %v5103 = vunpack.c.l.b16 %v4355
        %v5104 = vunpack.c.h.b16 %v4355
        %v5105 = vunpack.c.l.b16 %v4356
        %v5106 = vunpack.c.h.b16 %v4356
        %v5107 = vunpack.c.l.b16 %v4357
        %v5108 = vunpack.c.h.b16 %v4357
        %v5109 = vunpack.c.l.b16 %v4358
        %v5110 = vunpack.c.h.b16 %v4358
        %v5111 = vunpack.c.l.b16 %v4359
        %v5112 = vunpack.c.h.b16 %v4359
        %v5113 = vunpack.c.l.b16 %v4360
        %v5114 = vunpack.c.h.b16 %v4360
        %v5115 = vunpack.c.l.b16 %v4361
        %v5116 = vunpack.c.h.b16 %v4361
        %v5117 = vunpack.c.l.b16 %v4362
        %v5118 = vunpack.c.h.b16 %v4362
        %v5119 = vunpack.c.l.b16 %v4363
        %v5120 = vunpack.c.h.b16 %v4363
        %v5121 = vunpack.c.l.b16 %v4364
        %v5122 = vunpack.c.h.b16 %v4364
        %v5123 = vunpack.c.l.b16 %v4365
        %v5124 = vunpack.c.h.b16 %v4365
        %v5125 = vunpack.c.l.b16 %v4366
        %v5126 = vunpack.c.h.b16 %v4366
        %v5127 = vunpack.c.l.b16 %v4367
        %v5128 = vunpack.c.h.b16 %v4367
        %v5129 = vunpack.c.l.b16 %v4368
        %v5130 = vunpack.c.h.b16 %v4368
        %v5131 = vunpack.c.l.b16 %v4369
        %v5132 = vunpack.c.h.b16 %v4369
        %v5133 = vunpack.c.l.b16 %v4370
        %v5134 = vunpack.c.h.b16 %v4370
        %v5135 = vunpack.c.l.b16 %v4371
        %v5136 = vunpack.c.h.b16 %v4371
        %v5137 = vunpack.c.l.b16 %v4372
        %v5138 = vunpack.c.h.b16 %v4372
        %v5139 = vunpack.c.l.b16 %v4373
        %v5140 = vunpack.c.h.b16 %v4373
        %v5141 = vunpack.c.l.b16 %v4374
        %v5142 = vunpack.c.h.b16 %v4374
        %v5143 = vpack.c.b16 %v4639, %v4631
        %v5144 = vpack.c.b16 %v4640, %v4632
        %v5145 = vpack.c.b16 %v4641, %v4633
        %v5146 = vpack.c.b16 %v4642, %v4634
        %v5147 = vpack.c.b16 %v4643, %v4635
        %v5148 = vpack.c.b16 %v4644, %v4636
        %v5149 = vpack.c.b16 %v4645, %v4637
        %v5150 = vpack.c.b16 %v4646, %v4638
        %v5151 = vpack.c.b16 %v4655, %v4647
        %v5152 = vpack.c.b16 %v4656, %v4648
        %v5153 = vpack.c.b16 %v4657, %v4649
        %v5154 = vpack.c.b16 %v4658, %v4650
        %v5155 = vpack.c.b16 %v4659, %v4651
        %v5156 = vpack.c.b16 %v4660, %v4652
        %v5157 = vpack.c.b16 %v4661, %v4653
        %v5158 = vpack.c.b16 %v4662, %v4654
        %v5159 = vpack.c.b16 %v4671, %v4663
        %v5160 = vpack.c.b16 %v4672, %v4664
        %v5161 = vpack.c.b16 %v4673, %v4665
        %v5162 = vpack.c.b16 %v4674, %v4666
        %v5163 = vpack.c.b16 %v4675, %v4667
        %v5164 = vpack.c.b16 %v4676, %v4668
        %v5165 = vpack.c.b16 %v4677, %v4669
        %v5166 = vpack.c.b16 %v4678, %v4670
        %v5167 = vpack.c.b16 %v4687, %v4679
        %v5168 = vpack.c.b16 %v4688, %v4680
        %v5169 = vpack.c.b16 %v4689, %v4681
        %v5170 = vpack.c.b16 %v4690, %v4682
        %v5171 = vpack.c.b16 %v4691, %v4683
        %v5172 = vpack.c.b16 %v4692, %v4684
        %v5173 = vpack.c.b16 %v4693, %v4685
        %v5174 = vpack.c.b16 %v4694, %v4686
        %v5175 = vpack.c.b16 %v4703, %v4695
        %v5176 = vpack.c.b16 %v4704, %v4696
        %v5177 = vpack.c.b16 %v4705, %v4697
        %v5178 = vpack.c.b16 %v4706, %v4698
        %v5179 = vpack.c.b16 %v4707, %v4699
        %v5180 = vpack.c.b16 %v4708, %v4700
        %v5181 = vpack.c.b16 %v4709, %v4701
        %v5182 = vpack.c.b16 %v4710, %v4702
        %v5183 = vpack.c.b16 %v4719, %v4711
        %v5184 = vpack.c.b16 %v4720, %v4712
        %v5185 = vpack.c.b16 %v4721, %v4713
        %v5186 = vpack.c.b16 %v4722, %v4714
        %v5187 = vpack.c.b16 %v4723, %v4715
        %v5188 = vpack.c.b16 %v4724, %v4716
        %v5189 = vpack.c.b16 %v4725, %v4717
        %v5190 = vpack.c.b16 %v4726, %v4718
        %v5191 = vpack.c.b16 %v4735, %v4727
        %v5192 = vpack.c.b16 %v4736, %v4728
        %v5193 = vpack.c.b16 %v4737, %v4729
        %v5194 = vpack.c.b16 %v4738, %v4730
        %v5195 = vpack.c.b16 %v4739, %v4731
        %v5196 = vpack.c.b16 %v4740, %v4732
        %v5197 = vpack.c.b16 %v4741, %v4733
        %v5198 = vpack.c.b16 %v4742, %v4734
        %v5199 = vpack.c.b16 %v4751, %v4743
        %v5200 = vpack.c.b16 %v4752, %v4744
        %v5201 = vpack.c.b16 %v4753, %v4745
        %v5202 = vpack.c.b16 %v4754, %v4746
        %v5203 = vpack.c.b16 %v4755, %v4747
        %v5204 = vpack.c.b16 %v4756, %v4748
        %v5205 = vpack.c.b16 %v4757, %v4749
        %v5206 = vpack.c.b16 %v4758, %v4750
        %v5207 = vpack.c.b16 %v4767, %v4759
        %v5208 = vpack.c.b16 %v4768, %v4760
        %v5209 = vpack.c.b16 %v4769, %v4761
        %v5210 = vpack.c.b16 %v4770, %v4762
        %v5211 = vpack.c.b16 %v4771, %v4763
        %v5212 = vpack.c.b16 %v4772, %v4764
        %v5213 = vpack.c.b16 %v4773, %v4765
        %v5214 = vpack.c.b16 %v4774, %v4766
        %v5215 = vpack.c.b16 %v4783, %v4775
        %v5216 = vpack.c.b16 %v4784, %v4776
        %v5217 = vpack.c.b16 %v4785, %v4777
        %v5218 = vpack.c.b16 %v4786, %v4778
        %v5219 = vpack.c.b16 %v4787, %v4779
        %v5220 = vpack.c.b16 %v4788, %v4780
        %v5221 = vpack.c.b16 %v4789, %v4781
        %v5222 = vpack.c.b16 %v4790, %v4782
        %v5223 = vpack.c.b16 %v4799, %v4791
        %v5224 = vpack.c.b16 %v4800, %v4792
        %v5225 = vpack.c.b16 %v4801, %v4793
        %v5226 = vpack.c.b16 %v4802, %v4794
        %v5227 = vpack.c.b16 %v4803, %v4795
        %v5228 = vpack.c.b16 %v4804, %v4796
        %v5229 = vpack.c.b16 %v4805, %v4797
        %v5230 = vpack.c.b16 %v4806, %v4798
        %v5231 = vpack.c.b16 %v4815, %v4807
        %v5232 = vpack.c.b16 %v4816, %v4808
        %v5233 = vpack.c.b16 %v4817, %v4809
        %v5234 = vpack.c.b16 %v4818, %v4810
        %v5235 = vpack.c.b16 %v4819, %v4811
        %v5236 = vpack.c.b16 %v4820, %v4812
        %v5237 = vpack.c.b16 %v4821, %v4813
        %v5238 = vpack.c.b16 %v4822, %v4814
        %v5239 = vpack.c.b16 %v4831, %v4823
        %v5240 = vpack.c.b16 %v4832, %v4824
        %v5241 = vpack.c.b16 %v4833, %v4825
        %v5242 = vpack.c.b16 %v4834, %v4826
        %v5243 = vpack.c.b16 %v4835, %v4827
        %v5244 = vpack.c.b16 %v4836, %v4828
        %v5245 = vpack.c.b16 %v4837, %v4829
        %v5246 = vpack.c.b16 %v4838, %v4830
        %v5247 = vpack.c.b16 %v4847, %v4839
        %v5248 = vpack.c.b16 %v4848, %v4840
        %v5249 = vpack.c.b16 %v4849, %v4841
        %v5250 = vpack.c.b16 %v4850, %v4842
        %v5251 = vpack.c.b16 %v4851, %v4843
        %v5252 = vpack.c.b16 %v4852, %v4844
        %v5253 = vpack.c.b16 %v4853, %v4845
        %v5254 = vpack.c.b16 %v4854, %v4846
        %v5255 = vpack.c.b16 %v4863, %v4855
        %v5256 = vpack.c.b16 %v4864, %v4856
        %v5257 = vpack.c.b16 %v4865, %v4857
        %v5258 = vpack.c.b16 %v4866, %v4858
        %v5259 = vpack.c.b16 %v4867, %v4859
        %v5260 = vpack.c.b16 %v4868, %v4860
        %v5261 = vpack.c.b16 %v4869, %v4861
        %v5262 = vpack.c.b16 %v4870, %v4862
        %v5263 = vpack.c.b16 %v4879, %v4871
        %v5264 = vpack.c.b16 %v4880, %v4872
        %v5265 = vpack.c.b16 %v4881, %v4873
        %v5266 = vpack.c.b16 %v4882, %v4874
        %v5267 = vpack.c.b16 %v4883, %v4875
        %v5268 = vpack.c.b16 %v4884, %v4876
        %v5269 = vpack.c.b16 %v4885, %v4877
        %v5270 = vpack.c.b16 %v4886, %v4878
        %v5271 = vpack.c.b16 %v4895, %v4887
        %v5272 = vpack.c.b16 %v4896, %v4888
        %v5273 = vpack.c.b16 %v4897, %v4889
        %v5274 = vpack.c.b16 %v4898, %v4890
        %v5275 = vpack.c.b16 %v4899, %v4891
        %v5276 = vpack.c.b16 %v4900, %v4892
        %v5277 = vpack.c.b16 %v4901, %v4893
        %v5278 = vpack.c.b16 %v4902, %v4894
        %v5279 = vpack.c.b16 %v4911, %v4903
        %v5280 = vpack.c.b16 %v4912, %v4904
        %v5281 = vpack.c.b16 %v4913, %v4905
        %v5282 = vpack.c.b16 %v4914, %v4906
        %v5283 = vpack.c.b16 %v4915, %v4907
        %v5284 = vpack.c.b16 %v4916, %v4908
        %v5285 = vpack.c.b16 %v4917, %v4909
        %v5286 = vpack.c.b16 %v4918, %v4910
        %v5287 = vpack.c.b16 %v4927, %v4919
        %v5288 = vpack.c.b16 %v4928, %v4920
        %v5289 = vpack.c.b16 %v4929, %v4921
        %v5290 = vpack.c.b16 %v4930, %v4922
        %v5291 = vpack.c.b16 %v4931, %v4923
        %v5292 = vpack.c.b16 %v4932, %v4924
        %v5293 = vpack.c.b16 %v4933, %v4925
        %v5294 = vpack.c.b16 %v4934, %v4926
        %v5295 = vpack.c.b16 %v4943, %v4935
        %v5296 = vpack.c.b16 %v4944, %v4936
        %v5297 = vpack.c.b16 %v4945, %v4937
        %v5298 = vpack.c.b16 %v4946, %v4938
        %v5299 = vpack.c.b16 %v4947, %v4939
        %v5300 = vpack.c.b16 %v4948, %v4940
        %v5301 = vpack.c.b16 %v4949, %v4941
        %v5302 = vpack.c.b16 %v4950, %v4942
        %v5303 = vpack.c.b16 %v4959, %v4951
        %v5304 = vpack.c.b16 %v4960, %v4952
        %v5305 = vpack.c.b16 %v4961, %v4953
        %v5306 = vpack.c.b16 %v4962, %v4954
        %v5307 = vpack.c.b16 %v4963, %v4955
        %v5308 = vpack.c.b16 %v4964, %v4956
        %v5309 = vpack.c.b16 %v4965, %v4957
        %v5310 = vpack.c.b16 %v4966, %v4958
        %v5311 = vpack.c.b16 %v4975, %v4967
        %v5312 = vpack.c.b16 %v4976, %v4968
        %v5313 = vpack.c.b16 %v4977, %v4969
        %v5314 = vpack.c.b16 %v4978, %v4970
        %v5315 = vpack.c.b16 %v4979, %v4971
        %v5316 = vpack.c.b16 %v4980, %v4972
        %v5317 = vpack.c.b16 %v4981, %v4973
        %v5318 = vpack.c.b16 %v4982, %v4974
        %v5319 = vpack.c.b16 %v4991, %v4983
        %v5320 = vpack.c.b16 %v4992, %v4984
        %v5321 = vpack.c.b16 %v4993, %v4985
        %v5322 = vpack.c.b16 %v4994, %v4986
        %v5323 = vpack.c.b16 %v4995, %v4987
        %v5324 = vpack.c.b16 %v4996, %v4988
        %v5325 = vpack.c.b16 %v4997, %v4989
        %v5326 = vpack.c.b16 %v4998, %v4990
        %v5327 = vpack.c.b16 %v5007, %v4999
        %v5328 = vpack.c.b16 %v5008, %v5000
        %v5329 = vpack.c.b16 %v5009, %v5001
        %v5330 = vpack.c.b16 %v5010, %v5002
        %v5331 = vpack.c.b16 %v5011, %v5003
        %v5332 = vpack.c.b16 %v5012, %v5004
        %v5333 = vpack.c.b16 %v5013, %v5005
        %v5334 = vpack.c.b16 %v5014, %v5006
        %v5335 = vpack.c.b16 %v5023, %v5015
        %v5336 = vpack.c.b16 %v5024, %v5016
        %v5337 = vpack.c.b16 %v5025, %v5017
        %v5338 = vpack.c.b16 %v5026, %v5018
        %v5339 = vpack.c.b16 %v5027, %v5019
        %v5340 = vpack.c.b16 %v5028, %v5020
        %v5341 = vpack.c.b16 %v5029, %v5021
        %v5342 = vpack.c.b16 %v5030, %v5022
        %v5343 = vpack.c.b16 %v5039, %v5031
        %v5344 = vpack.c.b16 %v5040, %v5032
        %v5345 = vpack.c.b16 %v5041, %v5033
        %v5346 = vpack.c.b16 %v5042, %v5034
        %v5347 = vpack.c.b16 %v5043, %v5035
        %v5348 = vpack.c.b16 %v5044, %v5036
        %v5349 = vpack.c.b16 %v5045, %v5037
        %v5350 = vpack.c.b16 %v5046, %v5038
        %v5351 = vpack.c.b16 %v5055, %v5047
        %v5352 = vpack.c.b16 %v5056, %v5048
        %v5353 = vpack.c.b16 %v5057, %v5049
        %v5354 = vpack.c.b16 %v5058, %v5050
        %v5355 = vpack.c.b16 %v5059, %v5051
        %v5356 = vpack.c.b16 %v5060, %v5052
        %v5357 = vpack.c.b16 %v5061, %v5053
        %v5358 = vpack.c.b16 %v5062, %v5054
        %v5359 = vpack.c.b16 %v5071, %v5063
        %v5360 = vpack.c.b16 %v5072, %v5064
        %v5361 = vpack.c.b16 %v5073, %v5065
        %v5362 = vpack.c.b16 %v5074, %v5066
        %v5363 = vpack.c.b16 %v5075, %v5067
        %v5364 = vpack.c.b16 %v5076, %v5068
        %v5365 = vpack.c.b16 %v5077, %v5069
        %v5366 = vpack.c.b16 %v5078, %v5070
        %v5367 = vpack.c.b16 %v5087, %v5079
        %v5368 = vpack.c.b16 %v5088, %v5080
        %v5369 = vpack.c.b16 %v5089, %v5081
        %v5370 = vpack.c.b16 %v5090, %v5082
        %v5371 = vpack.c.b16 %v5091, %v5083
        %v5372 = vpack.c.b16 %v5092, %v5084
        %v5373 = vpack.c.b16 %v5093, %v5085
        %v5374 = vpack.c.b16 %v5094, %v5086
        %v5375 = vpack.c.b16 %v5103, %v5095
        %v5376 = vpack.c.b16 %v5104, %v5096
        %v5377 = vpack.c.b16 %v5105, %v5097
        %v5378 = vpack.c.b16 %v5106, %v5098
        %v5379 = vpack.c.b16 %v5107, %v5099
        %v5380 = vpack.c.b16 %v5108, %v5100
        %v5381 = vpack.c.b16 %v5109, %v5101
        %v5382 = vpack.c.b16 %v5110, %v5102
        %v5383 = vpack.c.b16 %v5119, %v5111
        %v5384 = vpack.c.b16 %v5120, %v5112
        %v5385 = vpack.c.b16 %v5121, %v5113
        %v5386 = vpack.c.b16 %v5122, %v5114
        %v5387 = vpack.c.b16 %v5123, %v5115
        %v5388 = vpack.c.b16 %v5124, %v5116
        %v5389 = vpack.c.b16 %v5125, %v5117
        %v5390 = vpack.c.b16 %v5126, %v5118
        %v5391 = vpack.c.b16 %v5135, %v5127
        %v5392 = vpack.c.b16 %v5136, %v5128
        %v5393 = vpack.c.b16 %v5137, %v5129
        %v5394 = vpack.c.b16 %v5138, %v5130
        %v5395 = vpack.c.b16 %v5139, %v5131
        %v5396 = vpack.c.b16 %v5140, %v5132
        %v5397 = vpack.c.b16 %v5141, %v5133
        %v5398 = vpack.c.b16 %v5142, %v5134
        %5655 = vmatprep.subr.bf16.mxu0 0
        %5656 = vmatpush1.bf16.msra.mxu0 %v3998
        %5657 = vmatprep.subr.bf16.mxu0 0
        %5658 = vmatpush1.bf16.msra.mxu0 %v3997
        %5659 = vmatprep.subr.bf16.mxu0 0
        %5660 = vmatpush1.bf16.msra.mxu0 %v3996
        %5661 = vmatprep.subr.bf16.mxu0 0
        %5662 = vmatpush1.bf16.msra.mxu0 %v3995
        %5663 = vmatprep.subr.bf16.mxu0 0
        %5664 = vmatpush1.bf16.msra.mxu0 %v3994
        %5665 = vmatprep.subr.bf16.mxu0 0
        %5666 = vmatpush1.bf16.msra.mxu0 %v3993
        %5667 = vmatprep.subr.bf16.mxu0 0
        %5668 = vmatpush1.bf16.msra.mxu0 %v3992
        %5669 = vmatprep.subr.bf16.mxu0 0
        %5670 = vmatpush1.bf16.msra.mxu0 %v3991
        %5671 = vmatprep.subr.bf16.mxu0 0
        %5672 = vmatpush2.bf16.msra.mxu0 %v4006
        %5673 = vmatprep.subr.bf16.mxu0 0
        %5674 = vmatpush2.bf16.msra.mxu0 %v4005
        %5675 = vmatprep.subr.bf16.mxu0 0
        %5676 = vmatpush2.bf16.msra.mxu0 %v4004
        %5677 = vmatprep.subr.bf16.mxu0 0
        %5678 = vmatpush2.bf16.msra.mxu0 %v4003
        %5679 = vmatprep.subr.bf16.mxu0 0
        %5680 = vmatpush2.bf16.msra.mxu0 %v4002
        %5681 = vmatprep.subr.bf16.mxu0 0
        %5682 = vmatpush2.bf16.msra.mxu0 %v4001
        %5683 = vmatprep.subr.bf16.mxu0 0
        %5684 = vmatpush2.bf16.msra.mxu0 %v4000
        %5685 = vmatprep.subr.bf16.mxu0 0
        %5686 = vmatpush2.bf16.msra.mxu0 %v3999
        %5687 = vmatprep.mubr.bf16.mxu0 %v5144
        %5688 = vmatmul.mubr.bf16.gmra.mxu0 %v5143
        %v5689 = vpop.f32.mrf.mxu0
        %v5690 = vadd.f32 0.0, %v5689
        %v5691 = vpop.f32.mrf.mxu0
        %v5692 = vpop.f32.mrf.mxu0
        %v5693 = vadd.f32 0.0, %v5692
        %v5694 = vpop.f32.mrf.mxu0
        %5695 = vmatprep.mubr.bf16.mxu0 %v5152
        %5696 = vmatmul.mubr.bf16.gmra.mxu0 %v5151
        %v5697 = vpop.f32.mrf.mxu0
        %v5698 = vadd.f32 0.0, %v5697
        %v5699 = vpop.f32.mrf.mxu0
        %v5700 = vpop.f32.mrf.mxu0
        %v5701 = vadd.f32 0.0, %v5700
        %v5702 = vpop.f32.mrf.mxu0
        %5703 = vmatprep.mubr.bf16.mxu0 %v5160
        %5704 = vmatmul.mubr.bf16.gmra.mxu0 %v5159
        %v5705 = vpop.f32.mrf.mxu0
        %v5706 = vadd.f32 0.0, %v5705
        %v5707 = vpop.f32.mrf.mxu0
        %v5708 = vpop.f32.mrf.mxu0
        %v5709 = vadd.f32 0.0, %v5708
        %v5710 = vpop.f32.mrf.mxu0
        %5711 = vmatprep.mubr.bf16.mxu0 %v5168
        %5712 = vmatmul.mubr.bf16.gmra.mxu0 %v5167
        %v5713 = vpop.f32.mrf.mxu0
        %v5714 = vadd.f32 0.0, %v5713
        %v5715 = vpop.f32.mrf.mxu0
        %v5716 = vpop.f32.mrf.mxu0
        %v5717 = vadd.f32 0.0, %v5716
        %v5718 = vpop.f32.mrf.mxu0
        %5719 = vmatprep.mubr.bf16.mxu0 %v5176
        %5720 = vmatmul.mubr.bf16.gmra.mxu0 %v5175
        %v5721 = vpop.f32.mrf.mxu0
        %v5722 = vadd.f32 0.0, %v5721
        %v5723 = vpop.f32.mrf.mxu0
        %v5724 = vpop.f32.mrf.mxu0
        %v5725 = vadd.f32 0.0, %v5724
        %v5726 = vpop.f32.mrf.mxu0
        %5727 = vmatprep.mubr.bf16.mxu0 %v5184
        %5728 = vmatmul.mubr.bf16.gmra.mxu0 %v5183
        %v5729 = vpop.f32.mrf.mxu0
        %v5730 = vadd.f32 0.0, %v5729
        %v5731 = vpop.f32.mrf.mxu0
        %v5732 = vpop.f32.mrf.mxu0
        %v5733 = vadd.f32 0.0, %v5732
        %v5734 = vpop.f32.mrf.mxu0
        %5735 = vmatprep.mubr.bf16.mxu0 %v5192
        %5736 = vmatmul.mubr.bf16.gmra.mxu0 %v5191
        %v5737 = vpop.f32.mrf.mxu0
        %v5738 = vadd.f32 0.0, %v5737
        %v5739 = vpop.f32.mrf.mxu0
        %v5740 = vpop.f32.mrf.mxu0
        %v5741 = vadd.f32 0.0, %v5740
        %v5742 = vpop.f32.mrf.mxu0
        %5743 = vmatprep.mubr.bf16.mxu0 %v5200
        %5744 = vmatmul.mubr.bf16.gmra.mxu0 %v5199
        %v5745 = vpop.f32.mrf.mxu0
        %v5746 = vadd.f32 0.0, %v5745
        %v5747 = vpop.f32.mrf.mxu0
        %v5748 = vpop.f32.mrf.mxu0
        %v5749 = vadd.f32 0.0, %v5748
        %v5750 = vpop.f32.mrf.mxu0
        %5751 = vmatprep.mubr.bf16.mxu0 %v5208
        %5752 = vmatmul.mubr.bf16.gmra.mxu0 %v5207
        %v5753 = vpop.f32.mrf.mxu0
        %v5754 = vadd.f32 0.0, %v5753
        %v5755 = vpop.f32.mrf.mxu0
        %v5756 = vpop.f32.mrf.mxu0
        %v5757 = vadd.f32 0.0, %v5756
        %v5758 = vpop.f32.mrf.mxu0
        %5759 = vmatprep.mubr.bf16.mxu0 %v5216
        %5760 = vmatmul.mubr.bf16.gmra.mxu0 %v5215
        %v5761 = vpop.f32.mrf.mxu0
        %v5762 = vadd.f32 0.0, %v5761
        %v5763 = vpop.f32.mrf.mxu0
        %v5764 = vpop.f32.mrf.mxu0
        %v5765 = vadd.f32 0.0, %v5764
        %v5766 = vpop.f32.mrf.mxu0
        %5767 = vmatprep.mubr.bf16.mxu0 %v5224
        %5768 = vmatmul.mubr.bf16.gmra.mxu0 %v5223
        %v5769 = vpop.f32.mrf.mxu0
        %v5770 = vadd.f32 0.0, %v5769
        %v5771 = vpop.f32.mrf.mxu0
        %v5772 = vpop.f32.mrf.mxu0
        %v5773 = vadd.f32 0.0, %v5772
        %v5774 = vpop.f32.mrf.mxu0
        %5775 = vmatprep.mubr.bf16.mxu0 %v5232
        %5776 = vmatmul.mubr.bf16.gmra.mxu0 %v5231
        %v5777 = vpop.f32.mrf.mxu0
        %v5778 = vadd.f32 0.0, %v5777
        %v5779 = vpop.f32.mrf.mxu0
        %v5780 = vpop.f32.mrf.mxu0
        %v5781 = vadd.f32 0.0, %v5780
        %v5782 = vpop.f32.mrf.mxu0
        %5783 = vmatprep.mubr.bf16.mxu0 %v5240
        %5784 = vmatmul.mubr.bf16.gmra.mxu0 %v5239
        %v5785 = vpop.f32.mrf.mxu0
        %v5786 = vadd.f32 0.0, %v5785
        %v5787 = vpop.f32.mrf.mxu0
        %v5788 = vpop.f32.mrf.mxu0
        %v5789 = vadd.f32 0.0, %v5788
        %v5790 = vpop.f32.mrf.mxu0
        %5791 = vmatprep.mubr.bf16.mxu0 %v5248
        %5792 = vmatmul.mubr.bf16.gmra.mxu0 %v5247
        %v5793 = vpop.f32.mrf.mxu0
        %v5794 = vadd.f32 0.0, %v5793
        %v5795 = vpop.f32.mrf.mxu0
        %v5796 = vpop.f32.mrf.mxu0
        %v5797 = vadd.f32 0.0, %v5796
        %v5798 = vpop.f32.mrf.mxu0
        %5799 = vmatprep.mubr.bf16.mxu0 %v5256
        %5800 = vmatmul.mubr.bf16.gmra.mxu0 %v5255
        %v5801 = vpop.f32.mrf.mxu0
        %v5802 = vadd.f32 0.0, %v5801
        %v5803 = vpop.f32.mrf.mxu0
        %v5804 = vpop.f32.mrf.mxu0
        %v5805 = vadd.f32 0.0, %v5804
        %v5806 = vpop.f32.mrf.mxu0
        %5807 = vmatprep.mubr.bf16.mxu0 %v5264
        %5808 = vmatmul.mubr.bf16.gmra.mxu0 %v5263
        %v5809 = vpop.f32.mrf.mxu0
        %v5810 = vadd.f32 0.0, %v5809
        %v5811 = vpop.f32.mrf.mxu0
        %v5812 = vpop.f32.mrf.mxu0
        %v5813 = vadd.f32 0.0, %v5812
        %v5814 = vpop.f32.mrf.mxu0
        %5815 = vmatprep.mubr.bf16.mxu0 %v5272
        %5816 = vmatmul.mubr.bf16.gmra.mxu0 %v5271
        %v5817 = vpop.f32.mrf.mxu0
        %v5818 = vadd.f32 0.0, %v5817
        %v5819 = vpop.f32.mrf.mxu0
        %v5820 = vpop.f32.mrf.mxu0
        %v5821 = vadd.f32 0.0, %v5820
        %v5822 = vpop.f32.mrf.mxu0
        %5823 = vmatprep.mubr.bf16.mxu0 %v5280
        %5824 = vmatmul.mubr.bf16.gmra.mxu0 %v5279
        %v5825 = vpop.f32.mrf.mxu0
        %v5826 = vadd.f32 0.0, %v5825
        %v5827 = vpop.f32.mrf.mxu0
        %v5828 = vpop.f32.mrf.mxu0
        %v5829 = vadd.f32 0.0, %v5828
        %v5830 = vpop.f32.mrf.mxu0
        %5831 = vmatprep.mubr.bf16.mxu0 %v5288
        %5832 = vmatmul.mubr.bf16.gmra.mxu0 %v5287
        %v5833 = vpop.f32.mrf.mxu0
        %v5834 = vadd.f32 0.0, %v5833
        %v5835 = vpop.f32.mrf.mxu0
        %v5836 = vpop.f32.mrf.mxu0
        %v5837 = vadd.f32 0.0, %v5836
        %v5838 = vpop.f32.mrf.mxu0
        %5839 = vmatprep.mubr.bf16.mxu0 %v5296
        %5840 = vmatmul.mubr.bf16.gmra.mxu0 %v5295
        %v5841 = vpop.f32.mrf.mxu0
        %v5842 = vadd.f32 0.0, %v5841
        %v5843 = vpop.f32.mrf.mxu0
        %v5844 = vpop.f32.mrf.mxu0
        %v5845 = vadd.f32 0.0, %v5844
        %v5846 = vpop.f32.mrf.mxu0
        %5847 = vmatprep.mubr.bf16.mxu0 %v5304
        %5848 = vmatmul.mubr.bf16.gmra.mxu0 %v5303
        %v5849 = vpop.f32.mrf.mxu0
        %v5850 = vadd.f32 0.0, %v5849
        %v5851 = vpop.f32.mrf.mxu0
        %v5852 = vpop.f32.mrf.mxu0
        %v5853 = vadd.f32 0.0, %v5852
        %v5854 = vpop.f32.mrf.mxu0
        %5855 = vmatprep.mubr.bf16.mxu0 %v5312
        %5856 = vmatmul.mubr.bf16.gmra.mxu0 %v5311
        %v5857 = vpop.f32.mrf.mxu0
        %v5858 = vadd.f32 0.0, %v5857
        %v5859 = vpop.f32.mrf.mxu0
        %v5860 = vpop.f32.mrf.mxu0
        %v5861 = vadd.f32 0.0, %v5860
        %v5862 = vpop.f32.mrf.mxu0
        %5863 = vmatprep.mubr.bf16.mxu0 %v5320
        %5864 = vmatmul.mubr.bf16.gmra.mxu0 %v5319
        %v5865 = vpop.f32.mrf.mxu0
        %v5866 = vadd.f32 0.0, %v5865
        %v5867 = vpop.f32.mrf.mxu0
        %v5868 = vpop.f32.mrf.mxu0
        %v5869 = vadd.f32 0.0, %v5868
        %v5870 = vpop.f32.mrf.mxu0
        %5871 = vmatprep.mubr.bf16.mxu0 %v5328
        %5872 = vmatmul.mubr.bf16.gmra.mxu0 %v5327
        %v5873 = vpop.f32.mrf.mxu0
        %v5874 = vadd.f32 0.0, %v5873
        %v5875 = vpop.f32.mrf.mxu0
        %v5876 = vpop.f32.mrf.mxu0
        %v5877 = vadd.f32 0.0, %v5876
        %v5878 = vpop.f32.mrf.mxu0
        %5879 = vmatprep.mubr.bf16.mxu0 %v5336
        %5880 = vmatmul.mubr.bf16.gmra.mxu0 %v5335
        %v5881 = vpop.f32.mrf.mxu0
        %v5882 = vadd.f32 0.0, %v5881
        %v5883 = vpop.f32.mrf.mxu0
        %v5884 = vpop.f32.mrf.mxu0
        %v5885 = vadd.f32 0.0, %v5884
        %v5886 = vpop.f32.mrf.mxu0
        %5887 = vmatprep.mubr.bf16.mxu0 %v5344
        %5888 = vmatmul.mubr.bf16.gmra.mxu0 %v5343
        %v5889 = vpop.f32.mrf.mxu0
        %v5890 = vadd.f32 0.0, %v5889
        %v5891 = vpop.f32.mrf.mxu0
        %v5892 = vpop.f32.mrf.mxu0
        %v5893 = vadd.f32 0.0, %v5892
        %v5894 = vpop.f32.mrf.mxu0
        %5895 = vmatprep.mubr.bf16.mxu0 %v5352
        %5896 = vmatmul.mubr.bf16.gmra.mxu0 %v5351
        %v5897 = vpop.f32.mrf.mxu0
        %v5898 = vadd.f32 0.0, %v5897
        %v5899 = vpop.f32.mrf.mxu0
        %v5900 = vpop.f32.mrf.mxu0
        %v5901 = vadd.f32 0.0, %v5900
        %v5902 = vpop.f32.mrf.mxu0
        %5903 = vmatprep.mubr.bf16.mxu0 %v5360
        %5904 = vmatmul.mubr.bf16.gmra.mxu0 %v5359
        %v5905 = vpop.f32.mrf.mxu0
        %v5906 = vadd.f32 0.0, %v5905
        %v5907 = vpop.f32.mrf.mxu0
        %v5908 = vpop.f32.mrf.mxu0
        %v5909 = vadd.f32 0.0, %v5908
        %v5910 = vpop.f32.mrf.mxu0
        %5911 = vmatprep.mubr.bf16.mxu0 %v5368
        %5912 = vmatmul.mubr.bf16.gmra.mxu0 %v5367
        %v5913 = vpop.f32.mrf.mxu0
        %v5914 = vadd.f32 0.0, %v5913
        %v5915 = vpop.f32.mrf.mxu0
        %v5916 = vpop.f32.mrf.mxu0
        %v5917 = vadd.f32 0.0, %v5916
        %v5918 = vpop.f32.mrf.mxu0
        %5919 = vmatprep.mubr.bf16.mxu0 %v5376
        %5920 = vmatmul.mubr.bf16.gmra.mxu0 %v5375
        %v5921 = vpop.f32.mrf.mxu0
        %v5922 = vadd.f32 0.0, %v5921
        %v5923 = vpop.f32.mrf.mxu0
        %v5924 = vpop.f32.mrf.mxu0
        %v5925 = vadd.f32 0.0, %v5924
        %v5926 = vpop.f32.mrf.mxu0
        %5927 = vmatprep.mubr.bf16.mxu0 %v5384
        %5928 = vmatmul.mubr.bf16.gmra.mxu0 %v5383
        %v5929 = vpop.f32.mrf.mxu0
        %v5930 = vadd.f32 0.0, %v5929
        %v5931 = vpop.f32.mrf.mxu0
        %v5932 = vpop.f32.mrf.mxu0
        %v5933 = vadd.f32 0.0, %v5932
        %v5934 = vpop.f32.mrf.mxu0
        %5935 = vmatprep.mubr.bf16.mxu0 %v5392
        %5936 = vmatmul.mubr.bf16.gmra.mxu0 %v5391
        %v5937 = vpop.f32.mrf.mxu0
        %v5938 = vadd.f32 0.0, %v5937
        %v5939 = vpop.f32.mrf.mxu0
        %v5940 = vpop.f32.mrf.mxu0
        %v5941 = vadd.f32 0.0, %v5940
        %v5942 = vpop.f32.mrf.mxu0
        %5943 = vdwg.mxu0
        %5944 = vmatprep.subr.bf16.mxu0 0
        %5945 = vmatpush1.bf16.msra.mxu0 %v4014
        %5946 = vmatprep.subr.bf16.mxu0 0
        %5947 = vmatpush1.bf16.msra.mxu0 %v4013
        %5948 = vmatprep.subr.bf16.mxu0 0
        %5949 = vmatpush1.bf16.msra.mxu0 %v4012
        %5950 = vmatprep.subr.bf16.mxu0 0
        %5951 = vmatpush1.bf16.msra.mxu0 %v4011
        %5952 = vmatprep.subr.bf16.mxu0 0
        %5953 = vmatpush1.bf16.msra.mxu0 %v4010
        %5954 = vmatprep.subr.bf16.mxu0 0
        %5955 = vmatpush1.bf16.msra.mxu0 %v4009
        %5956 = vmatprep.subr.bf16.mxu0 0
        %5957 = vmatpush1.bf16.msra.mxu0 %v4008
        %5958 = vmatprep.subr.bf16.mxu0 0
        %5959 = vmatpush1.bf16.msra.mxu0 %v4007
        %5960 = vmatprep.subr.bf16.mxu0 0
        %5961 = vmatpush2.bf16.msra.mxu0 %v4022
        %5962 = vmatprep.subr.bf16.mxu0 0
        %5963 = vmatpush2.bf16.msra.mxu0 %v4021
        %5964 = vmatprep.subr.bf16.mxu0 0
        %5965 = vmatpush2.bf16.msra.mxu0 %v4020
        %5966 = vmatprep.subr.bf16.mxu0 0
        %5967 = vmatpush2.bf16.msra.mxu0 %v4019
        %5968 = vmatprep.subr.bf16.mxu0 0
        %5969 = vmatpush2.bf16.msra.mxu0 %v4018
        %5970 = vmatprep.subr.bf16.mxu0 0
        %5971 = vmatpush2.bf16.msra.mxu0 %v4017
        %5972 = vmatprep.subr.bf16.mxu0 0
        %5973 = vmatpush2.bf16.msra.mxu0 %v4016
        %5974 = vmatprep.subr.bf16.mxu0 0
        %5975 = vmatpush2.bf16.msra.mxu0 %v4015
        %5976 = vmatprep.mubr.bf16.mxu0 %v5146
        %5977 = vmatmul.mubr.bf16.gmra.mxu0 %v5145
        %v5978 = vpop.f32.mrf.mxu0
        %v5979 = vadd.f32 %v5690, %v5978
        %v5980 = vpop.f32.mrf.mxu0
        %v5981 = vpop.f32.mrf.mxu0
        %v5982 = vadd.f32 %v5693, %v5981
        %v5983 = vpop.f32.mrf.mxu0
        %5984 = vmatprep.mubr.bf16.mxu0 %v5154
        %5985 = vmatmul.mubr.bf16.gmra.mxu0 %v5153
        %v5986 = vpop.f32.mrf.mxu0
        %v5987 = vadd.f32 %v5698, %v5986
        %v5988 = vpop.f32.mrf.mxu0
        %v5989 = vpop.f32.mrf.mxu0
        %v5990 = vadd.f32 %v5701, %v5989
        %v5991 = vpop.f32.mrf.mxu0
        %5992 = vmatprep.mubr.bf16.mxu0 %v5162
        %5993 = vmatmul.mubr.bf16.gmra.mxu0 %v5161
        %v5994 = vpop.f32.mrf.mxu0
        %v5995 = vadd.f32 %v5706, %v5994
        %v5996 = vpop.f32.mrf.mxu0
        %v5997 = vpop.f32.mrf.mxu0
        %v5998 = vadd.f32 %v5709, %v5997
        %v5999 = vpop.f32.mrf.mxu0
        %6000 = vmatprep.mubr.bf16.mxu0 %v5170
        %6001 = vmatmul.mubr.bf16.gmra.mxu0 %v5169
        %v6002 = vpop.f32.mrf.mxu0
        %v6003 = vadd.f32 %v5714, %v6002
        %v6004 = vpop.f32.mrf.mxu0
        %v6005 = vpop.f32.mrf.mxu0
        %v6006 = vadd.f32 %v5717, %v6005
        %v6007 = vpop.f32.mrf.mxu0
        %6008 = vmatprep.mubr.bf16.mxu0 %v5178
        %6009 = vmatmul.mubr.bf16.gmra.mxu0 %v5177
        %v6010 = vpop.f32.mrf.mxu0
        %v6011 = vadd.f32 %v5722, %v6010
        %v6012 = vpop.f32.mrf.mxu0
        %v6013 = vpop.f32.mrf.mxu0
        %v6014 = vadd.f32 %v5725, %v6013
        %v6015 = vpop.f32.mrf.mxu0
        %6016 = vmatprep.mubr.bf16.mxu0 %v5186
        %6017 = vmatmul.mubr.bf16.gmra.mxu0 %v5185
        %v6018 = vpop.f32.mrf.mxu0
        %v6019 = vadd.f32 %v5730, %v6018
        %v6020 = vpop.f32.mrf.mxu0
        %v6021 = vpop.f32.mrf.mxu0
        %v6022 = vadd.f32 %v5733, %v6021
        %v6023 = vpop.f32.mrf.mxu0
        %6024 = vmatprep.mubr.bf16.mxu0 %v5194
        %6025 = vmatmul.mubr.bf16.gmra.mxu0 %v5193
        %v6026 = vpop.f32.mrf.mxu0
        %v6027 = vadd.f32 %v5738, %v6026
        %v6028 = vpop.f32.mrf.mxu0
        %v6029 = vpop.f32.mrf.mxu0
        %v6030 = vadd.f32 %v5741, %v6029
        %v6031 = vpop.f32.mrf.mxu0
        %6032 = vmatprep.mubr.bf16.mxu0 %v5202
        %6033 = vmatmul.mubr.bf16.gmra.mxu0 %v5201
        %v6034 = vpop.f32.mrf.mxu0
        %v6035 = vadd.f32 %v5746, %v6034
        %v6036 = vpop.f32.mrf.mxu0
        %v6037 = vpop.f32.mrf.mxu0
        %v6038 = vadd.f32 %v5749, %v6037
        %v6039 = vpop.f32.mrf.mxu0
        %6040 = vmatprep.mubr.bf16.mxu0 %v5210
        %6041 = vmatmul.mubr.bf16.gmra.mxu0 %v5209
        %v6042 = vpop.f32.mrf.mxu0
        %v6043 = vadd.f32 %v5754, %v6042
        %v6044 = vpop.f32.mrf.mxu0
        %v6045 = vpop.f32.mrf.mxu0
        %v6046 = vadd.f32 %v5757, %v6045
        %v6047 = vpop.f32.mrf.mxu0
        %6048 = vmatprep.mubr.bf16.mxu0 %v5218
        %6049 = vmatmul.mubr.bf16.gmra.mxu0 %v5217
        %v6050 = vpop.f32.mrf.mxu0
        %v6051 = vadd.f32 %v5762, %v6050
        %v6052 = vpop.f32.mrf.mxu0
        %v6053 = vpop.f32.mrf.mxu0
        %v6054 = vadd.f32 %v5765, %v6053
        %v6055 = vpop.f32.mrf.mxu0
        %6056 = vmatprep.mubr.bf16.mxu0 %v5226
        %6057 = vmatmul.mubr.bf16.gmra.mxu0 %v5225
        %v6058 = vpop.f32.mrf.mxu0
        %v6059 = vadd.f32 %v5770, %v6058
        %v6060 = vpop.f32.mrf.mxu0
        %v6061 = vpop.f32.mrf.mxu0
        %v6062 = vadd.f32 %v5773, %v6061
        %v6063 = vpop.f32.mrf.mxu0
        %6064 = vmatprep.mubr.bf16.mxu0 %v5234
        %6065 = vmatmul.mubr.bf16.gmra.mxu0 %v5233
        %v6066 = vpop.f32.mrf.mxu0
        %v6067 = vadd.f32 %v5778, %v6066
        %v6068 = vpop.f32.mrf.mxu0
        %v6069 = vpop.f32.mrf.mxu0
        %v6070 = vadd.f32 %v5781, %v6069
        %v6071 = vpop.f32.mrf.mxu0
        %6072 = vmatprep.mubr.bf16.mxu0 %v5242
        %6073 = vmatmul.mubr.bf16.gmra.mxu0 %v5241
        %v6074 = vpop.f32.mrf.mxu0
        %v6075 = vadd.f32 %v5786, %v6074
        %v6076 = vpop.f32.mrf.mxu0
        %v6077 = vpop.f32.mrf.mxu0
        %v6078 = vadd.f32 %v5789, %v6077
        %v6079 = vpop.f32.mrf.mxu0
        %6080 = vmatprep.mubr.bf16.mxu0 %v5250
        %6081 = vmatmul.mubr.bf16.gmra.mxu0 %v5249
        %v6082 = vpop.f32.mrf.mxu0
        %v6083 = vadd.f32 %v5794, %v6082
        %v6084 = vpop.f32.mrf.mxu0
        %v6085 = vpop.f32.mrf.mxu0
        %v6086 = vadd.f32 %v5797, %v6085
        %v6087 = vpop.f32.mrf.mxu0
        %6088 = vmatprep.mubr.bf16.mxu0 %v5258
        %6089 = vmatmul.mubr.bf16.gmra.mxu0 %v5257
        %v6090 = vpop.f32.mrf.mxu0
        %v6091 = vadd.f32 %v5802, %v6090
        %v6092 = vpop.f32.mrf.mxu0
        %v6093 = vpop.f32.mrf.mxu0
        %v6094 = vadd.f32 %v5805, %v6093
        %v6095 = vpop.f32.mrf.mxu0
        %6096 = vmatprep.mubr.bf16.mxu0 %v5266
        %6097 = vmatmul.mubr.bf16.gmra.mxu0 %v5265
        %v6098 = vpop.f32.mrf.mxu0
        %v6099 = vadd.f32 %v5810, %v6098
        %v6100 = vpop.f32.mrf.mxu0
        %v6101 = vpop.f32.mrf.mxu0
        %v6102 = vadd.f32 %v5813, %v6101
        %v6103 = vpop.f32.mrf.mxu0
        %6104 = vmatprep.mubr.bf16.mxu0 %v5274
        %6105 = vmatmul.mubr.bf16.gmra.mxu0 %v5273
        %v6106 = vpop.f32.mrf.mxu0
        %v6107 = vadd.f32 %v5818, %v6106
        %v6108 = vpop.f32.mrf.mxu0
        %v6109 = vpop.f32.mrf.mxu0
        %v6110 = vadd.f32 %v5821, %v6109
        %v6111 = vpop.f32.mrf.mxu0
        %6112 = vmatprep.mubr.bf16.mxu0 %v5282
        %6113 = vmatmul.mubr.bf16.gmra.mxu0 %v5281
        %v6114 = vpop.f32.mrf.mxu0
        %v6115 = vadd.f32 %v5826, %v6114
        %v6116 = vpop.f32.mrf.mxu0
        %v6117 = vpop.f32.mrf.mxu0
        %v6118 = vadd.f32 %v5829, %v6117
        %v6119 = vpop.f32.mrf.mxu0
        %6120 = vmatprep.mubr.bf16.mxu0 %v5290
        %6121 = vmatmul.mubr.bf16.gmra.mxu0 %v5289
        %v6122 = vpop.f32.mrf.mxu0
        %v6123 = vadd.f32 %v5834, %v6122
        %v6124 = vpop.f32.mrf.mxu0
        %v6125 = vpop.f32.mrf.mxu0
        %v6126 = vadd.f32 %v5837, %v6125
        %v6127 = vpop.f32.mrf.mxu0
        %6128 = vmatprep.mubr.bf16.mxu0 %v5298
        %6129 = vmatmul.mubr.bf16.gmra.mxu0 %v5297
        %v6130 = vpop.f32.mrf.mxu0
        %v6131 = vadd.f32 %v5842, %v6130
        %v6132 = vpop.f32.mrf.mxu0
        %v6133 = vpop.f32.mrf.mxu0
        %v6134 = vadd.f32 %v5845, %v6133
        %v6135 = vpop.f32.mrf.mxu0
        %6136 = vmatprep.mubr.bf16.mxu0 %v5306
        %6137 = vmatmul.mubr.bf16.gmra.mxu0 %v5305
        %v6138 = vpop.f32.mrf.mxu0
        %v6139 = vadd.f32 %v5850, %v6138
        %v6140 = vpop.f32.mrf.mxu0
        %v6141 = vpop.f32.mrf.mxu0
        %v6142 = vadd.f32 %v5853, %v6141
        %v6143 = vpop.f32.mrf.mxu0
        %6144 = vmatprep.mubr.bf16.mxu0 %v5314
        %6145 = vmatmul.mubr.bf16.gmra.mxu0 %v5313
        %v6146 = vpop.f32.mrf.mxu0
        %v6147 = vadd.f32 %v5858, %v6146
        %v6148 = vpop.f32.mrf.mxu0
        %v6149 = vpop.f32.mrf.mxu0
        %v6150 = vadd.f32 %v5861, %v6149
        %v6151 = vpop.f32.mrf.mxu0
        %6152 = vmatprep.mubr.bf16.mxu0 %v5322
        %6153 = vmatmul.mubr.bf16.gmra.mxu0 %v5321
        %v6154 = vpop.f32.mrf.mxu0
        %v6155 = vadd.f32 %v5866, %v6154
        %v6156 = vpop.f32.mrf.mxu0
        %v6157 = vpop.f32.mrf.mxu0
        %v6158 = vadd.f32 %v5869, %v6157
        %v6159 = vpop.f32.mrf.mxu0
        %6160 = vmatprep.mubr.bf16.mxu0 %v5330
        %6161 = vmatmul.mubr.bf16.gmra.mxu0 %v5329
        %v6162 = vpop.f32.mrf.mxu0
        %v6163 = vadd.f32 %v5874, %v6162
        %v6164 = vpop.f32.mrf.mxu0
        %v6165 = vpop.f32.mrf.mxu0
        %v6166 = vadd.f32 %v5877, %v6165
        %v6167 = vpop.f32.mrf.mxu0
        %6168 = vmatprep.mubr.bf16.mxu0 %v5338
        %6169 = vmatmul.mubr.bf16.gmra.mxu0 %v5337
        %v6170 = vpop.f32.mrf.mxu0
        %v6171 = vadd.f32 %v5882, %v6170
        %v6172 = vpop.f32.mrf.mxu0
        %v6173 = vpop.f32.mrf.mxu0
        %v6174 = vadd.f32 %v5885, %v6173
        %v6175 = vpop.f32.mrf.mxu0
        %6176 = vmatprep.mubr.bf16.mxu0 %v5346
        %6177 = vmatmul.mubr.bf16.gmra.mxu0 %v5345
        %v6178 = vpop.f32.mrf.mxu0
        %v6179 = vadd.f32 %v5890, %v6178
        %v6180 = vpop.f32.mrf.mxu0
        %v6181 = vpop.f32.mrf.mxu0
        %v6182 = vadd.f32 %v5893, %v6181
        %v6183 = vpop.f32.mrf.mxu0
        %6184 = vmatprep.mubr.bf16.mxu0 %v5354
        %6185 = vmatmul.mubr.bf16.gmra.mxu0 %v5353
        %v6186 = vpop.f32.mrf.mxu0
        %v6187 = vadd.f32 %v5898, %v6186
        %v6188 = vpop.f32.mrf.mxu0
        %v6189 = vpop.f32.mrf.mxu0
        %v6190 = vadd.f32 %v5901, %v6189
        %v6191 = vpop.f32.mrf.mxu0
        %6192 = vmatprep.mubr.bf16.mxu0 %v5362
        %6193 = vmatmul.mubr.bf16.gmra.mxu0 %v5361
        %v6194 = vpop.f32.mrf.mxu0
        %v6195 = vadd.f32 %v5906, %v6194
        %v6196 = vpop.f32.mrf.mxu0
        %v6197 = vpop.f32.mrf.mxu0
        %v6198 = vadd.f32 %v5909, %v6197
        %v6199 = vpop.f32.mrf.mxu0
        %6200 = vmatprep.mubr.bf16.mxu0 %v5370
        %6201 = vmatmul.mubr.bf16.gmra.mxu0 %v5369
        %v6202 = vpop.f32.mrf.mxu0
        %v6203 = vadd.f32 %v5914, %v6202
        %v6204 = vpop.f32.mrf.mxu0
        %v6205 = vpop.f32.mrf.mxu0
        %v6206 = vadd.f32 %v5917, %v6205
        %v6207 = vpop.f32.mrf.mxu0
        %6208 = vmatprep.mubr.bf16.mxu0 %v5378
        %6209 = vmatmul.mubr.bf16.gmra.mxu0 %v5377
        %v6210 = vpop.f32.mrf.mxu0
        %v6211 = vadd.f32 %v5922, %v6210
        %v6212 = vpop.f32.mrf.mxu0
        %v6213 = vpop.f32.mrf.mxu0
        %v6214 = vadd.f32 %v5925, %v6213
        %v6215 = vpop.f32.mrf.mxu0
        %6216 = vmatprep.mubr.bf16.mxu0 %v5386
        %6217 = vmatmul.mubr.bf16.gmra.mxu0 %v5385
        %v6218 = vpop.f32.mrf.mxu0
        %v6219 = vadd.f32 %v5930, %v6218
        %v6220 = vpop.f32.mrf.mxu0
        %v6221 = vpop.f32.mrf.mxu0
        %v6222 = vadd.f32 %v5933, %v6221
        %v6223 = vpop.f32.mrf.mxu0
        %6224 = vmatprep.mubr.bf16.mxu0 %v5394
        %6225 = vmatmul.mubr.bf16.gmra.mxu0 %v5393
        %v6226 = vpop.f32.mrf.mxu0
        %v6227 = vadd.f32 %v5938, %v6226
        %v6228 = vpop.f32.mrf.mxu0
        %v6229 = vpop.f32.mrf.mxu0
        %v6230 = vadd.f32 %v5941, %v6229
        %v6231 = vpop.f32.mrf.mxu0
        %6232 = vdwg.mxu0
        %6233 = vmatprep.subr.bf16.mxu0 0
        %6234 = vmatpush1.bf16.msra.mxu0 %v4030
        %6235 = vmatprep.subr.bf16.mxu0 0
        %6236 = vmatpush1.bf16.msra.mxu0 %v4029
        %6237 = vmatprep.subr.bf16.mxu0 0
        %6238 = vmatpush1.bf16.msra.mxu0 %v4028
        %6239 = vmatprep.subr.bf16.mxu0 0
        %6240 = vmatpush1.bf16.msra.mxu0 %v4027
        %6241 = vmatprep.subr.bf16.mxu0 0
        %6242 = vmatpush1.bf16.msra.mxu0 %v4026
        %6243 = vmatprep.subr.bf16.mxu0 0
        %6244 = vmatpush1.bf16.msra.mxu0 %v4025
        %6245 = vmatprep.subr.bf16.mxu0 0
        %6246 = vmatpush1.bf16.msra.mxu0 %v4024
        %6247 = vmatprep.subr.bf16.mxu0 0
        %6248 = vmatpush1.bf16.msra.mxu0 %v4023
        %6249 = vmatprep.subr.bf16.mxu0 0
        %6250 = vmatpush2.bf16.msra.mxu0 %v4038
        %6251 = vmatprep.subr.bf16.mxu0 0
        %6252 = vmatpush2.bf16.msra.mxu0 %v4037
        %6253 = vmatprep.subr.bf16.mxu0 0
        %6254 = vmatpush2.bf16.msra.mxu0 %v4036
        %6255 = vmatprep.subr.bf16.mxu0 0
        %6256 = vmatpush2.bf16.msra.mxu0 %v4035
        %6257 = vmatprep.subr.bf16.mxu0 0
        %6258 = vmatpush2.bf16.msra.mxu0 %v4034
        %6259 = vmatprep.subr.bf16.mxu0 0
        %6260 = vmatpush2.bf16.msra.mxu0 %v4033
        %6261 = vmatprep.subr.bf16.mxu0 0
        %6262 = vmatpush2.bf16.msra.mxu0 %v4032
        %6263 = vmatprep.subr.bf16.mxu0 0
        %6264 = vmatpush2.bf16.msra.mxu0 %v4031
        %6265 = vmatprep.mubr.bf16.mxu0 %v5148
        %6266 = vmatmul.mubr.bf16.gmra.mxu0 %v5147
        %v6267 = vpop.f32.mrf.mxu0
        %v6268 = vadd.f32 %v5979, %v6267
        %v6269 = vpop.f32.mrf.mxu0
        %v6270 = vpop.f32.mrf.mxu0
        %v6271 = vadd.f32 %v5982, %v6270
        %v6272 = vpop.f32.mrf.mxu0
        %6273 = vmatprep.mubr.bf16.mxu0 %v5156
        %6274 = vmatmul.mubr.bf16.gmra.mxu0 %v5155
        %v6275 = vpop.f32.mrf.mxu0
        %v6276 = vadd.f32 %v5987, %v6275
        %v6277 = vpop.f32.mrf.mxu0
        %v6278 = vpop.f32.mrf.mxu0
        %v6279 = vadd.f32 %v5990, %v6278
        %v6280 = vpop.f32.mrf.mxu0
        %6281 = vmatprep.mubr.bf16.mxu0 %v5164
        %6282 = vmatmul.mubr.bf16.gmra.mxu0 %v5163
        %v6283 = vpop.f32.mrf.mxu0
        %v6284 = vadd.f32 %v5995, %v6283
        %v6285 = vpop.f32.mrf.mxu0
        %v6286 = vpop.f32.mrf.mxu0
        %v6287 = vadd.f32 %v5998, %v6286
        %v6288 = vpop.f32.mrf.mxu0
        %6289 = vmatprep.mubr.bf16.mxu0 %v5172
        %6290 = vmatmul.mubr.bf16.gmra.mxu0 %v5171
        %v6291 = vpop.f32.mrf.mxu0
        %v6292 = vadd.f32 %v6003, %v6291
        %v6293 = vpop.f32.mrf.mxu0
        %v6294 = vpop.f32.mrf.mxu0
        %v6295 = vadd.f32 %v6006, %v6294
        %v6296 = vpop.f32.mrf.mxu0
        %6297 = vmatprep.mubr.bf16.mxu0 %v5180
        %6298 = vmatmul.mubr.bf16.gmra.mxu0 %v5179
        %v6299 = vpop.f32.mrf.mxu0
        %v6300 = vadd.f32 %v6011, %v6299
        %v6301 = vpop.f32.mrf.mxu0
        %v6302 = vpop.f32.mrf.mxu0
        %v6303 = vadd.f32 %v6014, %v6302
        %v6304 = vpop.f32.mrf.mxu0
        %6305 = vmatprep.mubr.bf16.mxu0 %v5188
        %6306 = vmatmul.mubr.bf16.gmra.mxu0 %v5187
        %v6307 = vpop.f32.mrf.mxu0
        %v6308 = vadd.f32 %v6019, %v6307
        %v6309 = vpop.f32.mrf.mxu0
        %v6310 = vpop.f32.mrf.mxu0
        %v6311 = vadd.f32 %v6022, %v6310
        %v6312 = vpop.f32.mrf.mxu0
        %6313 = vmatprep.mubr.bf16.mxu0 %v5196
        %6314 = vmatmul.mubr.bf16.gmra.mxu0 %v5195
        %v6315 = vpop.f32.mrf.mxu0
        %v6316 = vadd.f32 %v6027, %v6315
        %v6317 = vpop.f32.mrf.mxu0
        %v6318 = vpop.f32.mrf.mxu0
        %v6319 = vadd.f32 %v6030, %v6318
        %v6320 = vpop.f32.mrf.mxu0
        %6321 = vmatprep.mubr.bf16.mxu0 %v5204
        %6322 = vmatmul.mubr.bf16.gmra.mxu0 %v5203
        %v6323 = vpop.f32.mrf.mxu0
        %v6324 = vadd.f32 %v6035, %v6323
        %v6325 = vpop.f32.mrf.mxu0
        %v6326 = vpop.f32.mrf.mxu0
        %v6327 = vadd.f32 %v6038, %v6326
        %v6328 = vpop.f32.mrf.mxu0
        %6329 = vmatprep.mubr.bf16.mxu0 %v5212
        %6330 = vmatmul.mubr.bf16.gmra.mxu0 %v5211
        %v6331 = vpop.f32.mrf.mxu0
        %v6332 = vadd.f32 %v6043, %v6331
        %v6333 = vpop.f32.mrf.mxu0
        %v6334 = vpop.f32.mrf.mxu0
        %v6335 = vadd.f32 %v6046, %v6334
        %v6336 = vpop.f32.mrf.mxu0
        %6337 = vmatprep.mubr.bf16.mxu0 %v5220
        %6338 = vmatmul.mubr.bf16.gmra.mxu0 %v5219
        %v6339 = vpop.f32.mrf.mxu0
        %v6340 = vadd.f32 %v6051, %v6339
        %v6341 = vpop.f32.mrf.mxu0
        %v6342 = vpop.f32.mrf.mxu0
        %v6343 = vadd.f32 %v6054, %v6342
        %v6344 = vpop.f32.mrf.mxu0
        %6345 = vmatprep.mubr.bf16.mxu0 %v5228
        %6346 = vmatmul.mubr.bf16.gmra.mxu0 %v5227
        %v6347 = vpop.f32.mrf.mxu0
        %v6348 = vadd.f32 %v6059, %v6347
        %v6349 = vpop.f32.mrf.mxu0
        %v6350 = vpop.f32.mrf.mxu0
        %v6351 = vadd.f32 %v6062, %v6350
        %v6352 = vpop.f32.mrf.mxu0
        %6353 = vmatprep.mubr.bf16.mxu0 %v5236
        %6354 = vmatmul.mubr.bf16.gmra.mxu0 %v5235
        %v6355 = vpop.f32.mrf.mxu0
        %v6356 = vadd.f32 %v6067, %v6355
        %v6357 = vpop.f32.mrf.mxu0
        %v6358 = vpop.f32.mrf.mxu0
        %v6359 = vadd.f32 %v6070, %v6358
        %v6360 = vpop.f32.mrf.mxu0
        %6361 = vmatprep.mubr.bf16.mxu0 %v5244
        %6362 = vmatmul.mubr.bf16.gmra.mxu0 %v5243
        %v6363 = vpop.f32.mrf.mxu0
        %v6364 = vadd.f32 %v6075, %v6363
        %v6365 = vpop.f32.mrf.mxu0
        %v6366 = vpop.f32.mrf.mxu0
        %v6367 = vadd.f32 %v6078, %v6366
        %v6368 = vpop.f32.mrf.mxu0
        %6369 = vmatprep.mubr.bf16.mxu0 %v5252
        %6370 = vmatmul.mubr.bf16.gmra.mxu0 %v5251
        %v6371 = vpop.f32.mrf.mxu0
        %v6372 = vadd.f32 %v6083, %v6371
        %v6373 = vpop.f32.mrf.mxu0
        %v6374 = vpop.f32.mrf.mxu0
        %v6375 = vadd.f32 %v6086, %v6374
        %v6376 = vpop.f32.mrf.mxu0
        %6377 = vmatprep.mubr.bf16.mxu0 %v5260
        %6378 = vmatmul.mubr.bf16.gmra.mxu0 %v5259
        %v6379 = vpop.f32.mrf.mxu0
        %v6380 = vadd.f32 %v6091, %v6379
        %v6381 = vpop.f32.mrf.mxu0
        %v6382 = vpop.f32.mrf.mxu0
        %v6383 = vadd.f32 %v6094, %v6382
        %v6384 = vpop.f32.mrf.mxu0
        %6385 = vmatprep.mubr.bf16.mxu0 %v5268
        %6386 = vmatmul.mubr.bf16.gmra.mxu0 %v5267
        %v6387 = vpop.f32.mrf.mxu0
        %v6388 = vadd.f32 %v6099, %v6387
        %v6389 = vpop.f32.mrf.mxu0
        %v6390 = vpop.f32.mrf.mxu0
        %v6391 = vadd.f32 %v6102, %v6390
        %v6392 = vpop.f32.mrf.mxu0
        %6393 = vmatprep.mubr.bf16.mxu0 %v5276
        %6394 = vmatmul.mubr.bf16.gmra.mxu0 %v5275
        %v6395 = vpop.f32.mrf.mxu0
        %v6396 = vadd.f32 %v6107, %v6395
        %v6397 = vpop.f32.mrf.mxu0
        %v6398 = vpop.f32.mrf.mxu0
        %v6399 = vadd.f32 %v6110, %v6398
        %v6400 = vpop.f32.mrf.mxu0
        %6401 = vmatprep.mubr.bf16.mxu0 %v5284
        %6402 = vmatmul.mubr.bf16.gmra.mxu0 %v5283
        %v6403 = vpop.f32.mrf.mxu0
        %v6404 = vadd.f32 %v6115, %v6403
        %v6405 = vpop.f32.mrf.mxu0
        %v6406 = vpop.f32.mrf.mxu0
        %v6407 = vadd.f32 %v6118, %v6406
        %v6408 = vpop.f32.mrf.mxu0
        %6409 = vmatprep.mubr.bf16.mxu0 %v5292
        %6410 = vmatmul.mubr.bf16.gmra.mxu0 %v5291
        %v6411 = vpop.f32.mrf.mxu0
        %v6412 = vadd.f32 %v6123, %v6411
        %v6413 = vpop.f32.mrf.mxu0
        %v6414 = vpop.f32.mrf.mxu0
        %v6415 = vadd.f32 %v6126, %v6414
        %v6416 = vpop.f32.mrf.mxu0
        %6417 = vmatprep.mubr.bf16.mxu0 %v5300
        %6418 = vmatmul.mubr.bf16.gmra.mxu0 %v5299
        %v6419 = vpop.f32.mrf.mxu0
        %v6420 = vadd.f32 %v6131, %v6419
        %v6421 = vpop.f32.mrf.mxu0
        %v6422 = vpop.f32.mrf.mxu0
        %v6423 = vadd.f32 %v6134, %v6422
        %v6424 = vpop.f32.mrf.mxu0
        %6425 = vmatprep.mubr.bf16.mxu0 %v5308
        %6426 = vmatmul.mubr.bf16.gmra.mxu0 %v5307
        %v6427 = vpop.f32.mrf.mxu0
        %v6428 = vadd.f32 %v6139, %v6427
        %v6429 = vpop.f32.mrf.mxu0
        %v6430 = vpop.f32.mrf.mxu0
        %v6431 = vadd.f32 %v6142, %v6430
        %v6432 = vpop.f32.mrf.mxu0
        %6433 = vmatprep.mubr.bf16.mxu0 %v5316
        %6434 = vmatmul.mubr.bf16.gmra.mxu0 %v5315
        %v6435 = vpop.f32.mrf.mxu0
        %v6436 = vadd.f32 %v6147, %v6435
        %v6437 = vpop.f32.mrf.mxu0
        %v6438 = vpop.f32.mrf.mxu0
        %v6439 = vadd.f32 %v6150, %v6438
        %v6440 = vpop.f32.mrf.mxu0
        %6441 = vmatprep.mubr.bf16.mxu0 %v5324
        %6442 = vmatmul.mubr.bf16.gmra.mxu0 %v5323
        %v6443 = vpop.f32.mrf.mxu0
        %v6444 = vadd.f32 %v6155, %v6443
        %v6445 = vpop.f32.mrf.mxu0
        %v6446 = vpop.f32.mrf.mxu0
        %v6447 = vadd.f32 %v6158, %v6446
        %v6448 = vpop.f32.mrf.mxu0
        %6449 = vmatprep.mubr.bf16.mxu0 %v5332
        %6450 = vmatmul.mubr.bf16.gmra.mxu0 %v5331
        %v6451 = vpop.f32.mrf.mxu0
        %v6452 = vadd.f32 %v6163, %v6451
        %v6453 = vpop.f32.mrf.mxu0
        %v6454 = vpop.f32.mrf.mxu0
        %v6455 = vadd.f32 %v6166, %v6454
        %v6456 = vpop.f32.mrf.mxu0
        %6457 = vmatprep.mubr.bf16.mxu0 %v5340
        %6458 = vmatmul.mubr.bf16.gmra.mxu0 %v5339
        %v6459 = vpop.f32.mrf.mxu0
        %v6460 = vadd.f32 %v6171, %v6459
        %v6461 = vpop.f32.mrf.mxu0
        %v6462 = vpop.f32.mrf.mxu0
        %v6463 = vadd.f32 %v6174, %v6462
        %v6464 = vpop.f32.mrf.mxu0
        %6465 = vmatprep.mubr.bf16.mxu0 %v5348
        %6466 = vmatmul.mubr.bf16.gmra.mxu0 %v5347
        %v6467 = vpop.f32.mrf.mxu0
        %v6468 = vadd.f32 %v6179, %v6467
        %v6469 = vpop.f32.mrf.mxu0
        %v6470 = vpop.f32.mrf.mxu0
        %v6471 = vadd.f32 %v6182, %v6470
        %v6472 = vpop.f32.mrf.mxu0
        %6473 = vmatprep.mubr.bf16.mxu0 %v5356
        %6474 = vmatmul.mubr.bf16.gmra.mxu0 %v5355
        %v6475 = vpop.f32.mrf.mxu0
        %v6476 = vadd.f32 %v6187, %v6475
        %v6477 = vpop.f32.mrf.mxu0
        %v6478 = vpop.f32.mrf.mxu0
        %v6479 = vadd.f32 %v6190, %v6478
        %v6480 = vpop.f32.mrf.mxu0
        %6481 = vmatprep.mubr.bf16.mxu0 %v5364
        %6482 = vmatmul.mubr.bf16.gmra.mxu0 %v5363
        %v6483 = vpop.f32.mrf.mxu0
        %v6484 = vadd.f32 %v6195, %v6483
        %v6485 = vpop.f32.mrf.mxu0
        %v6486 = vpop.f32.mrf.mxu0
        %v6487 = vadd.f32 %v6198, %v6486
        %v6488 = vpop.f32.mrf.mxu0
        %6489 = vmatprep.mubr.bf16.mxu0 %v5372
        %6490 = vmatmul.mubr.bf16.gmra.mxu0 %v5371
        %v6491 = vpop.f32.mrf.mxu0
        %v6492 = vadd.f32 %v6203, %v6491
        %v6493 = vpop.f32.mrf.mxu0
        %v6494 = vpop.f32.mrf.mxu0
        %v6495 = vadd.f32 %v6206, %v6494
        %v6496 = vpop.f32.mrf.mxu0
        %6497 = vmatprep.mubr.bf16.mxu0 %v5380
        %6498 = vmatmul.mubr.bf16.gmra.mxu0 %v5379
        %v6499 = vpop.f32.mrf.mxu0
        %v6500 = vadd.f32 %v6211, %v6499
        %v6501 = vpop.f32.mrf.mxu0
        %v6502 = vpop.f32.mrf.mxu0
        %v6503 = vadd.f32 %v6214, %v6502
        %v6504 = vpop.f32.mrf.mxu0
        %6505 = vmatprep.mubr.bf16.mxu0 %v5388
        %6506 = vmatmul.mubr.bf16.gmra.mxu0 %v5387
        %v6507 = vpop.f32.mrf.mxu0
        %v6508 = vadd.f32 %v6219, %v6507
        %v6509 = vpop.f32.mrf.mxu0
        %v6510 = vpop.f32.mrf.mxu0
        %v6511 = vadd.f32 %v6222, %v6510
        %v6512 = vpop.f32.mrf.mxu0
        %6513 = vmatprep.mubr.bf16.mxu0 %v5396
        %6514 = vmatmul.mubr.bf16.gmra.mxu0 %v5395
        %v6515 = vpop.f32.mrf.mxu0
        %v6516 = vadd.f32 %v6227, %v6515
        %v6517 = vpop.f32.mrf.mxu0
        %v6518 = vpop.f32.mrf.mxu0
        %v6519 = vadd.f32 %v6230, %v6518
        %v6520 = vpop.f32.mrf.mxu0
        %6521 = vdwg.mxu0
        %6522 = vmatprep.subr.bf16.mxu0 0
        %6523 = vmatpush1.bf16.msra.mxu0 %v4046
        %6524 = vmatprep.subr.bf16.mxu0 0
        %6525 = vmatpush1.bf16.msra.mxu0 %v4045
        %6526 = vmatprep.subr.bf16.mxu0 0
        %6527 = vmatpush1.bf16.msra.mxu0 %v4044
        %6528 = vmatprep.subr.bf16.mxu0 0
        %6529 = vmatpush1.bf16.msra.mxu0 %v4043
        %6530 = vmatprep.subr.bf16.mxu0 0
        %6531 = vmatpush1.bf16.msra.mxu0 %v4042
        %6532 = vmatprep.subr.bf16.mxu0 0
        %6533 = vmatpush1.bf16.msra.mxu0 %v4041
        %6534 = vmatprep.subr.bf16.mxu0 0
        %6535 = vmatpush1.bf16.msra.mxu0 %v4040
        %6536 = vmatprep.subr.bf16.mxu0 0
        %6537 = vmatpush1.bf16.msra.mxu0 %v4039
        %6538 = vmatprep.subr.bf16.mxu0 0
        %6539 = vmatpush2.bf16.msra.mxu0 %v4054
        %6540 = vmatprep.subr.bf16.mxu0 0
        %6541 = vmatpush2.bf16.msra.mxu0 %v4053
        %6542 = vmatprep.subr.bf16.mxu0 0
        %6543 = vmatpush2.bf16.msra.mxu0 %v4052
        %6544 = vmatprep.subr.bf16.mxu0 0
        %6545 = vmatpush2.bf16.msra.mxu0 %v4051
        %6546 = vmatprep.subr.bf16.mxu0 0
        %6547 = vmatpush2.bf16.msra.mxu0 %v4050
        %6548 = vmatprep.subr.bf16.mxu0 0
        %6549 = vmatpush2.bf16.msra.mxu0 %v4049
        %6550 = vmatprep.subr.bf16.mxu0 0
        %6551 = vmatpush2.bf16.msra.mxu0 %v4048
        %6552 = vmatprep.subr.bf16.mxu0 0
        %6553 = vmatpush2.bf16.msra.mxu0 %v4047
        %6554 = vmatprep.mubr.bf16.mxu0 %v5150
        %6555 = vmatmul.mubr.bf16.gmra.mxu0 %v5149
        %v6556 = vpop.f32.mrf.mxu0
        %v6557 = vadd.f32 %v6268, %v6556
        %v6558 = vpop.f32.mrf.mxu0
        %v6559 = vpop.f32.mrf.mxu0
        %v6560 = vadd.f32 %v6271, %v6559
        %v6561 = vpop.f32.mrf.mxu0
        %6562 = vmatprep.mubr.bf16.mxu0 %v5158
        %6563 = vmatmul.mubr.bf16.gmra.mxu0 %v5157
        %v6564 = vpop.f32.mrf.mxu0
        %v6565 = vadd.f32 %v6276, %v6564
        %v6566 = vpop.f32.mrf.mxu0
        %v6567 = vpop.f32.mrf.mxu0
        %v6568 = vadd.f32 %v6279, %v6567
        %v6569 = vpop.f32.mrf.mxu0
        %6570 = vmatprep.mubr.bf16.mxu0 %v5166
        %6571 = vmatmul.mubr.bf16.gmra.mxu0 %v5165
        %v6572 = vpop.f32.mrf.mxu0
        %v6573 = vadd.f32 %v6284, %v6572
        %v6574 = vpop.f32.mrf.mxu0
        %v6575 = vpop.f32.mrf.mxu0
        %v6576 = vadd.f32 %v6287, %v6575
        %v6577 = vpop.f32.mrf.mxu0
        %6578 = vmatprep.mubr.bf16.mxu0 %v5174
        %6579 = vmatmul.mubr.bf16.gmra.mxu0 %v5173
        %v6580 = vpop.f32.mrf.mxu0
        %v6581 = vadd.f32 %v6292, %v6580
        %v6582 = vpop.f32.mrf.mxu0
        %v6583 = vpop.f32.mrf.mxu0
        %v6584 = vadd.f32 %v6295, %v6583
        %v6585 = vpop.f32.mrf.mxu0
        %6586 = vmatprep.mubr.bf16.mxu0 %v5182
        %6587 = vmatmul.mubr.bf16.gmra.mxu0 %v5181
        %v6588 = vpop.f32.mrf.mxu0
        %v6589 = vadd.f32 %v6300, %v6588
        %v6590 = vpop.f32.mrf.mxu0
        %v6591 = vpop.f32.mrf.mxu0
        %v6592 = vadd.f32 %v6303, %v6591
        %v6593 = vpop.f32.mrf.mxu0
        %6594 = vmatprep.mubr.bf16.mxu0 %v5190
        %6595 = vmatmul.mubr.bf16.gmra.mxu0 %v5189
        %v6596 = vpop.f32.mrf.mxu0
        %v6597 = vadd.f32 %v6308, %v6596
        %v6598 = vpop.f32.mrf.mxu0
        %v6599 = vpop.f32.mrf.mxu0
        %v6600 = vadd.f32 %v6311, %v6599
        %v6601 = vpop.f32.mrf.mxu0
        %6602 = vmatprep.mubr.bf16.mxu0 %v5198
        %6603 = vmatmul.mubr.bf16.gmra.mxu0 %v5197
        %v6604 = vpop.f32.mrf.mxu0
        %v6605 = vadd.f32 %v6316, %v6604
        %v6606 = vpop.f32.mrf.mxu0
        %v6607 = vpop.f32.mrf.mxu0
        %v6608 = vadd.f32 %v6319, %v6607
        %v6609 = vpop.f32.mrf.mxu0
        %6610 = vmatprep.mubr.bf16.mxu0 %v5206
        %6611 = vmatmul.mubr.bf16.gmra.mxu0 %v5205
        %v6612 = vpop.f32.mrf.mxu0
        %v6613 = vadd.f32 %v6324, %v6612
        %v6614 = vpop.f32.mrf.mxu0
        %v6615 = vpop.f32.mrf.mxu0
        %v6616 = vadd.f32 %v6327, %v6615
        %v6617 = vpop.f32.mrf.mxu0
        %6618 = vmatprep.mubr.bf16.mxu0 %v5214
        %6619 = vmatmul.mubr.bf16.gmra.mxu0 %v5213
        %v6620 = vpop.f32.mrf.mxu0
        %v6621 = vadd.f32 %v6332, %v6620
        %v6622 = vpop.f32.mrf.mxu0
        %v6623 = vpop.f32.mrf.mxu0
        %v6624 = vadd.f32 %v6335, %v6623
        %v6625 = vpop.f32.mrf.mxu0
        %6626 = vmatprep.mubr.bf16.mxu0 %v5222
        %6627 = vmatmul.mubr.bf16.gmra.mxu0 %v5221
        %v6628 = vpop.f32.mrf.mxu0
        %v6629 = vadd.f32 %v6340, %v6628
        %v6630 = vpop.f32.mrf.mxu0
        %v6631 = vpop.f32.mrf.mxu0
        %v6632 = vadd.f32 %v6343, %v6631
        %v6633 = vpop.f32.mrf.mxu0
        %6634 = vmatprep.mubr.bf16.mxu0 %v5230
        %6635 = vmatmul.mubr.bf16.gmra.mxu0 %v5229
        %v6636 = vpop.f32.mrf.mxu0
        %v6637 = vadd.f32 %v6348, %v6636
        %v6638 = vpop.f32.mrf.mxu0
        %v6639 = vpop.f32.mrf.mxu0
        %v6640 = vadd.f32 %v6351, %v6639
        %v6641 = vpop.f32.mrf.mxu0
        %6642 = vmatprep.mubr.bf16.mxu0 %v5238
        %6643 = vmatmul.mubr.bf16.gmra.mxu0 %v5237
        %v6644 = vpop.f32.mrf.mxu0
        %v6645 = vadd.f32 %v6356, %v6644
        %v6646 = vpop.f32.mrf.mxu0
        %v6647 = vpop.f32.mrf.mxu0
        %v6648 = vadd.f32 %v6359, %v6647
        %v6649 = vpop.f32.mrf.mxu0
        %6650 = vmatprep.mubr.bf16.mxu0 %v5246
        %6651 = vmatmul.mubr.bf16.gmra.mxu0 %v5245
        %v6652 = vpop.f32.mrf.mxu0
        %v6653 = vadd.f32 %v6364, %v6652
        %v6654 = vpop.f32.mrf.mxu0
        %v6655 = vpop.f32.mrf.mxu0
        %v6656 = vadd.f32 %v6367, %v6655
        %v6657 = vpop.f32.mrf.mxu0
        %6658 = vmatprep.mubr.bf16.mxu0 %v5254
        %6659 = vmatmul.mubr.bf16.gmra.mxu0 %v5253
        %v6660 = vpop.f32.mrf.mxu0
        %v6661 = vadd.f32 %v6372, %v6660
        %v6662 = vpop.f32.mrf.mxu0
        %v6663 = vpop.f32.mrf.mxu0
        %v6664 = vadd.f32 %v6375, %v6663
        %v6665 = vpop.f32.mrf.mxu0
        %6666 = vmatprep.mubr.bf16.mxu0 %v5262
        %6667 = vmatmul.mubr.bf16.gmra.mxu0 %v5261
        %v6668 = vpop.f32.mrf.mxu0
        %v6669 = vadd.f32 %v6380, %v6668
        %v6670 = vpop.f32.mrf.mxu0
        %v6671 = vpop.f32.mrf.mxu0
        %v6672 = vadd.f32 %v6383, %v6671
        %v6673 = vpop.f32.mrf.mxu0
        %6674 = vmatprep.mubr.bf16.mxu0 %v5270
        %6675 = vmatmul.mubr.bf16.gmra.mxu0 %v5269
        %v6676 = vpop.f32.mrf.mxu0
        %v6677 = vadd.f32 %v6388, %v6676
        %v6678 = vpop.f32.mrf.mxu0
        %v6679 = vpop.f32.mrf.mxu0
        %v6680 = vadd.f32 %v6391, %v6679
        %v6681 = vpop.f32.mrf.mxu0
        %6682 = vmatprep.mubr.bf16.mxu0 %v5278
        %6683 = vmatmul.mubr.bf16.gmra.mxu0 %v5277
        %v6684 = vpop.f32.mrf.mxu0
        %v6685 = vadd.f32 %v6396, %v6684
        %v6686 = vpop.f32.mrf.mxu0
        %v6687 = vpop.f32.mrf.mxu0
        %v6688 = vadd.f32 %v6399, %v6687
        %v6689 = vpop.f32.mrf.mxu0
        %6690 = vmatprep.mubr.bf16.mxu0 %v5286
        %6691 = vmatmul.mubr.bf16.gmra.mxu0 %v5285
        %v6692 = vpop.f32.mrf.mxu0
        %v6693 = vadd.f32 %v6404, %v6692
        %v6694 = vpop.f32.mrf.mxu0
        %v6695 = vpop.f32.mrf.mxu0
        %v6696 = vadd.f32 %v6407, %v6695
        %v6697 = vpop.f32.mrf.mxu0
        %6698 = vmatprep.mubr.bf16.mxu0 %v5294
        %6699 = vmatmul.mubr.bf16.gmra.mxu0 %v5293
        %v6700 = vpop.f32.mrf.mxu0
        %v6701 = vadd.f32 %v6412, %v6700
        %v6702 = vpop.f32.mrf.mxu0
        %v6703 = vpop.f32.mrf.mxu0
        %v6704 = vadd.f32 %v6415, %v6703
        %v6705 = vpop.f32.mrf.mxu0
        %6706 = vmatprep.mubr.bf16.mxu0 %v5302
        %6707 = vmatmul.mubr.bf16.gmra.mxu0 %v5301
        %v6708 = vpop.f32.mrf.mxu0
        %v6709 = vadd.f32 %v6420, %v6708
        %v6710 = vpop.f32.mrf.mxu0
        %v6711 = vpop.f32.mrf.mxu0
        %v6712 = vadd.f32 %v6423, %v6711
        %v6713 = vpop.f32.mrf.mxu0
        %6714 = vmatprep.mubr.bf16.mxu0 %v5310
        %6715 = vmatmul.mubr.bf16.gmra.mxu0 %v5309
        %v6716 = vpop.f32.mrf.mxu0
        %v6717 = vadd.f32 %v6428, %v6716
        %v6718 = vpop.f32.mrf.mxu0
        %v6719 = vpop.f32.mrf.mxu0
        %v6720 = vadd.f32 %v6431, %v6719
        %v6721 = vpop.f32.mrf.mxu0
        %6722 = vmatprep.mubr.bf16.mxu0 %v5318
        %6723 = vmatmul.mubr.bf16.gmra.mxu0 %v5317
        %v6724 = vpop.f32.mrf.mxu0
        %v6725 = vadd.f32 %v6436, %v6724
        %v6726 = vpop.f32.mrf.mxu0
        %v6727 = vpop.f32.mrf.mxu0
        %v6728 = vadd.f32 %v6439, %v6727
        %v6729 = vpop.f32.mrf.mxu0
        %6730 = vmatprep.mubr.bf16.mxu0 %v5326
        %6731 = vmatmul.mubr.bf16.gmra.mxu0 %v5325
        %v6732 = vpop.f32.mrf.mxu0
        %v6733 = vadd.f32 %v6444, %v6732
        %v6734 = vpop.f32.mrf.mxu0
        %v6735 = vpop.f32.mrf.mxu0
        %v6736 = vadd.f32 %v6447, %v6735
        %v6737 = vpop.f32.mrf.mxu0
        %6738 = vmatprep.mubr.bf16.mxu0 %v5334
        %6739 = vmatmul.mubr.bf16.gmra.mxu0 %v5333
        %v6740 = vpop.f32.mrf.mxu0
        %v6741 = vadd.f32 %v6452, %v6740
        %v6742 = vpop.f32.mrf.mxu0
        %v6743 = vpop.f32.mrf.mxu0
        %v6744 = vadd.f32 %v6455, %v6743
        %v6745 = vpop.f32.mrf.mxu0
        %6746 = vmatprep.mubr.bf16.mxu0 %v5342
        %6747 = vmatmul.mubr.bf16.gmra.mxu0 %v5341
        %v6748 = vpop.f32.mrf.mxu0
        %v6749 = vadd.f32 %v6460, %v6748
        %v6750 = vpop.f32.mrf.mxu0
        %v6751 = vpop.f32.mrf.mxu0
        %v6752 = vadd.f32 %v6463, %v6751
        %v6753 = vpop.f32.mrf.mxu0
        %6754 = vmatprep.mubr.bf16.mxu0 %v5350
        %6755 = vmatmul.mubr.bf16.gmra.mxu0 %v5349
        %v6756 = vpop.f32.mrf.mxu0
        %v6757 = vadd.f32 %v6468, %v6756
        %v6758 = vpop.f32.mrf.mxu0
        %v6759 = vpop.f32.mrf.mxu0
        %v6760 = vadd.f32 %v6471, %v6759
        %v6761 = vpop.f32.mrf.mxu0
        %6762 = vmatprep.mubr.bf16.mxu0 %v5358
        %6763 = vmatmul.mubr.bf16.gmra.mxu0 %v5357
        %v6764 = vpop.f32.mrf.mxu0
        %v6765 = vadd.f32 %v6476, %v6764
        %v6766 = vpop.f32.mrf.mxu0
        %v6767 = vpop.f32.mrf.mxu0
        %v6768 = vadd.f32 %v6479, %v6767
        %v6769 = vpop.f32.mrf.mxu0
        %6770 = vmatprep.mubr.bf16.mxu0 %v5366
        %6771 = vmatmul.mubr.bf16.gmra.mxu0 %v5365
        %v6772 = vpop.f32.mrf.mxu0
        %v6773 = vadd.f32 %v6484, %v6772
        %v6774 = vpop.f32.mrf.mxu0
        %v6775 = vpop.f32.mrf.mxu0
        %v6776 = vadd.f32 %v6487, %v6775
        %v6777 = vpop.f32.mrf.mxu0
        %6778 = vmatprep.mubr.bf16.mxu0 %v5374
        %6779 = vmatmul.mubr.bf16.gmra.mxu0 %v5373
        %v6780 = vpop.f32.mrf.mxu0
        %v6781 = vadd.f32 %v6492, %v6780
        %v6782 = vpop.f32.mrf.mxu0
        %v6783 = vpop.f32.mrf.mxu0
        %v6784 = vadd.f32 %v6495, %v6783
        %v6785 = vpop.f32.mrf.mxu0
        %6786 = vmatprep.mubr.bf16.mxu0 %v5382
        %6787 = vmatmul.mubr.bf16.gmra.mxu0 %v5381
        %v6788 = vpop.f32.mrf.mxu0
        %v6789 = vadd.f32 %v6500, %v6788
        %v6790 = vpop.f32.mrf.mxu0
        %v6791 = vpop.f32.mrf.mxu0
        %v6792 = vadd.f32 %v6503, %v6791
        %v6793 = vpop.f32.mrf.mxu0
        %6794 = vmatprep.mubr.bf16.mxu0 %v5390
        %6795 = vmatmul.mubr.bf16.gmra.mxu0 %v5389
        %v6796 = vpop.f32.mrf.mxu0
        %v6797 = vadd.f32 %v6508, %v6796
        %v6798 = vpop.f32.mrf.mxu0
        %v6799 = vpop.f32.mrf.mxu0
        %v6800 = vadd.f32 %v6511, %v6799
        %v6801 = vpop.f32.mrf.mxu0
        %6802 = vmatprep.mubr.bf16.mxu0 %v5398
        %6803 = vmatmul.mubr.bf16.gmra.mxu0 %v5397
        %v6804 = vpop.f32.mrf.mxu0
        %v6805 = vadd.f32 %v6516, %v6804
        %v6806 = vpop.f32.mrf.mxu0
        %v6807 = vpop.f32.mrf.mxu0
        %v6808 = vadd.f32 %v6519, %v6807
        %v6809 = vpop.f32.mrf.mxu0
        %6810 = vdwg.mxu0
        %v6811 = vadd.f32 %v4055, %v6557
        %v6812 = vadd.f32 %v4056, %v6560
        %v6813 = vadd.f32 %v4057, %v6565
        %v6814 = vadd.f32 %v4058, %v6568
        %v6815 = vadd.f32 %v4059, %v6573
        %v6816 = vadd.f32 %v4060, %v6576
        %v6817 = vadd.f32 %v4061, %v6581
        %v6818 = vadd.f32 %v4062, %v6584
        %v6819 = vadd.f32 %v4063, %v6589
        %v6820 = vadd.f32 %v4064, %v6592
        %v6821 = vadd.f32 %v4065, %v6597
        %v6822 = vadd.f32 %v4066, %v6600
        %v6823 = vadd.f32 %v4067, %v6605
        %v6824 = vadd.f32 %v4068, %v6608
        %v6825 = vadd.f32 %v4069, %v6613
        %v6826 = vadd.f32 %v4070, %v6616
        %v6827 = vadd.f32 %v4071, %v6621
        %v6828 = vadd.f32 %v4072, %v6624
        %v6829 = vadd.f32 %v4073, %v6629
        %v6830 = vadd.f32 %v4074, %v6632
        %v6831 = vadd.f32 %v4075, %v6637
        %v6832 = vadd.f32 %v4076, %v6640
        %v6833 = vadd.f32 %v4077, %v6645
        %v6834 = vadd.f32 %v4078, %v6648
        %v6835 = vadd.f32 %v4079, %v6653
        %v6836 = vadd.f32 %v4080, %v6656
        %v6837 = vadd.f32 %v4081, %v6661
        %v6838 = vadd.f32 %v4082, %v6664
        %v6839 = vadd.f32 %v4083, %v6669
        %v6840 = vadd.f32 %v4084, %v6672
        %v6841 = vadd.f32 %v4085, %v6677
        %v6842 = vadd.f32 %v4086, %v6680
        %v6843 = vadd.f32 %v4087, %v6685
        %v6844 = vadd.f32 %v4088, %v6688
        %v6845 = vadd.f32 %v4089, %v6693
        %v6846 = vadd.f32 %v4090, %v6696
        %v6847 = vadd.f32 %v4091, %v6701
        %v6848 = vadd.f32 %v4092, %v6704
        %v6849 = vadd.f32 %v4093, %v6709
        %v6850 = vadd.f32 %v4094, %v6712
        %v6851 = vadd.f32 %v4095, %v6717
        %v6852 = vadd.f32 %v4096, %v6720
        %v6853 = vadd.f32 %v4097, %v6725
        %v6854 = vadd.f32 %v4098, %v6728
        %v6855 = vadd.f32 %v4099, %v6733
        %v6856 = vadd.f32 %v4100, %v6736
        %v6857 = vadd.f32 %v4101, %v6741
        %v6858 = vadd.f32 %v4102, %v6744
        %v6859 = vadd.f32 %v4103, %v6749
        %v6860 = vadd.f32 %v4104, %v6752
        %v6861 = vadd.f32 %v4105, %v6757
        %v6862 = vadd.f32 %v4106, %v6760
        %v6863 = vadd.f32 %v4107, %v6765
        %v6864 = vadd.f32 %v4108, %v6768
        %v6865 = vadd.f32 %v4109, %v6773
        %v6866 = vadd.f32 %v4110, %v6776
        %v6867 = vadd.f32 %v4111, %v6781
        %v6868 = vadd.f32 %v4112, %v6784
        %v6869 = vadd.f32 %v4113, %v6789
        %v6870 = vadd.f32 %v4114, %v6792
        %v6871 = vadd.f32 %v4115, %v6797
        %v6872 = vadd.f32 %v4116, %v6800
        %v6873 = vadd.f32 %v4117, %v6805
        %v6874 = vadd.f32 %v4118, %v6808
        %vm6875 = vcmask 400384
        %6876 = vst.msk [vmem:[%s7] sm:$0xff] %vm6875, %v6811
        %6877 = vst.msk [vmem:[%s7 + $0x8] sm:$0xff] %vm6875, %v6812
        %6878 = vst.msk [vmem:[%s7 + $0x10] sm:$0xff] %vm6875, %v6813
        %6879 = vst.msk [vmem:[%s7 + $0x18] sm:$0xff] %vm6875, %v6814
        %6880 = vst.msk [vmem:[%s7 + $0x20] sm:$0xff] %vm6875, %v6815
        %6881 = vst.msk [vmem:[%s7 + $0x28] sm:$0xff] %vm6875, %v6816
        %6882 = vst.msk [vmem:[%s7 + $0x30] sm:$0xff] %vm6875, %v6817
        %6883 = vst.msk [vmem:[%s7 + $0x38] sm:$0xff] %vm6875, %v6818
        %6884 = vst.msk [vmem:[%s7 + $0x40] sm:$0xff] %vm6875, %v6819
        %6885 = vst.msk [vmem:[%s7 + $0x48] sm:$0xff] %vm6875, %v6820
        %6886 = vst.msk [vmem:[%s7 + $0x50] sm:$0xff] %vm6875, %v6821
        %6887 = vst.msk [vmem:[%s7 + $0x58] sm:$0xff] %vm6875, %v6822
        %6888 = vst.msk [vmem:[%s7 + $0x60] sm:$0xff] %vm6875, %v6823
        %6889 = vst.msk [vmem:[%s7 + $0x68] sm:$0xff] %vm6875, %v6824
        %6890 = vst.msk [vmem:[%s7 + $0x70] sm:$0xff] %vm6875, %v6825
        %6891 = vst.msk [vmem:[%s7 + $0x78] sm:$0xff] %vm6875, %v6826
        %6892 = vst.msk [vmem:[%s7 + $0x80] sm:$0xff] %vm6875, %v6827
        %6893 = vst.msk [vmem:[%s7 + $0x88] sm:$0xff] %vm6875, %v6828
        %6894 = vst.msk [vmem:[%s7 + $0x90] sm:$0xff] %vm6875, %v6829
        %6895 = vst.msk [vmem:[%s7 + $0x98] sm:$0xff] %vm6875, %v6830
        %6896 = vst.msk [vmem:[%s7 + $0xa0] sm:$0xff] %vm6875, %v6831
        %6897 = vst.msk [vmem:[%s7 + $0xa8] sm:$0xff] %vm6875, %v6832
        %6898 = vst.msk [vmem:[%s7 + $0xb0] sm:$0xff] %vm6875, %v6833
        %6899 = vst.msk [vmem:[%s7 + $0xb8] sm:$0xff] %vm6875, %v6834
        %6900 = vst.msk [vmem:[%s7 + $0xc0] sm:$0xff] %vm6875, %v6835
        %6901 = vst.msk [vmem:[%s7 + $0xc8] sm:$0xff] %vm6875, %v6836
        %6902 = vst.msk [vmem:[%s7 + $0xd0] sm:$0xff] %vm6875, %v6837
        %6903 = vst.msk [vmem:[%s7 + $0xd8] sm:$0xff] %vm6875, %v6838
        %6904 = vst.msk [vmem:[%s7 + $0xe0] sm:$0xff] %vm6875, %v6839
        %6905 = vst.msk [vmem:[%s7 + $0xe8] sm:$0xff] %vm6875, %v6840
        %6906 = vst.msk [vmem:[%s7 + $0xf0] sm:$0xff] %vm6875, %v6841
        %6907 = vst.msk [vmem:[%s7 + $0xf8] sm:$0xff] %vm6875, %v6842
        %6908 = vst.msk [vmem:[%s7 + $0x100] sm:$0xff] %vm6875, %v6843
        %6909 = vst.msk [vmem:[%s7 + $0x108] sm:$0xff] %vm6875, %v6844
        %6910 = vst.msk [vmem:[%s7 + $0x110] sm:$0xff] %vm6875, %v6845
        %6911 = vst.msk [vmem:[%s7 + $0x118] sm:$0xff] %vm6875, %v6846
        %6912 = vst.msk [vmem:[%s7 + $0x120] sm:$0xff] %vm6875, %v6847
        %6913 = vst.msk [vmem:[%s7 + $0x128] sm:$0xff] %vm6875, %v6848
        %6914 = vst.msk [vmem:[%s7 + $0x130] sm:$0xff] %vm6875, %v6849
        %6915 = vst.msk [vmem:[%s7 + $0x138] sm:$0xff] %vm6875, %v6850
        %6916 = vst.msk [vmem:[%s7 + $0x140] sm:$0xff] %vm6875, %v6851
        %6917 = vst.msk [vmem:[%s7 + $0x148] sm:$0xff] %vm6875, %v6852
        %6918 = vst.msk [vmem:[%s7 + $0x150] sm:$0xff] %vm6875, %v6853
        %6919 = vst.msk [vmem:[%s7 + $0x158] sm:$0xff] %vm6875, %v6854
        %6920 = vst.msk [vmem:[%s7 + $0x160] sm:$0xff] %vm6875, %v6855
        %6921 = vst.msk [vmem:[%s7 + $0x168] sm:$0xff] %vm6875, %v6856
        %6922 = vst.msk [vmem:[%s7 + $0x170] sm:$0xff] %vm6875, %v6857
        %6923 = vst.msk [vmem:[%s7 + $0x178] sm:$0xff] %vm6875, %v6858
        %6924 = vst.msk [vmem:[%s7 + $0x180] sm:$0xff] %vm6875, %v6859
        %6925 = vst.msk [vmem:[%s7 + $0x188] sm:$0xff] %vm6875, %v6860
        %6926 = vst.msk [vmem:[%s7 + $0x190] sm:$0xff] %vm6875, %v6861
        %6927 = vst.msk [vmem:[%s7 + $0x198] sm:$0xff] %vm6875, %v6862
        %6928 = vst.msk [vmem:[%s7 + $0x1a0] sm:$0xff] %vm6875, %v6863
        %6929 = vst.msk [vmem:[%s7 + $0x1a8] sm:$0xff] %vm6875, %v6864
        %6930 = vst.msk [vmem:[%s7 + $0x1b0] sm:$0xff] %vm6875, %v6865
        %6931 = vst.msk [vmem:[%s7 + $0x1b8] sm:$0xff] %vm6875, %v6866
        %6932 = vst.msk [vmem:[%s7 + $0x1c0] sm:$0xff] %vm6875, %v6867
        %6933 = vst.msk [vmem:[%s7 + $0x1c8] sm:$0xff] %vm6875, %v6868
        %6934 = vst.msk [vmem:[%s7 + $0x1d0] sm:$0xff] %vm6875, %v6869
        %6935 = vst.msk [vmem:[%s7 + $0x1d8] sm:$0xff] %vm6875, %v6870
        %6936 = vst.msk [vmem:[%s7 + $0x1e0] sm:$0xff] %vm6875, %v6871
        %6937 = vst.msk [vmem:[%s7 + $0x1e8] sm:$0xff] %vm6875, %v6872
        %6938 = vst.msk [vmem:[%s7 + $0x1f0] sm:$0xff] %vm6875, %v6873
        %6939 = vst.msk [vmem:[%s7 + $0x1f8] sm:$0xff] %vm6875, %v6874
        %p6940 = scmp.eq.s32.totalorder %s21, 2
        // Predicated region
        $region80: #{tpu_custom_call.1} parent=66 // pred_check
          %p6941 = pneg %p6940
        $region81: #{tpu_custom_call.1} parent=66 // pred_check_branch
          %6943 = sbr.rel (%p6941) target = $region83
        $region82: #{tpu_custom_call.1} parent=66 // pred_region
          %v6944 = vld [vmem:[%s7] sm:$0xff]
          %v6945 = vld [vmem:[%s7 + $0x8] sm:$0xff]
          %v6946 = vld [vmem:[%s7 + $0x10] sm:$0xff]
          %v6947 = vld [vmem:[%s7 + $0x18] sm:$0xff]
          %v6948 = vld [vmem:[%s7 + $0x20] sm:$0xff]
          %v6949 = vld [vmem:[%s7 + $0x28] sm:$0xff]
          %v6950 = vld [vmem:[%s7 + $0x30] sm:$0xff]
          %v6951 = vld [vmem:[%s7 + $0x38] sm:$0xff]
          %v6952 = vld [vmem:[%s7 + $0x40] sm:$0xff]
          %v6953 = vld [vmem:[%s7 + $0x48] sm:$0xff]
          %v6954 = vld [vmem:[%s7 + $0x50] sm:$0xff]
          %v6955 = vld [vmem:[%s7 + $0x58] sm:$0xff]
          %v6956 = vld [vmem:[%s7 + $0x60] sm:$0xff]
          %v6957 = vld [vmem:[%s7 + $0x68] sm:$0xff]
          %v6958 = vld [vmem:[%s7 + $0x70] sm:$0xff]
          %v6959 = vld [vmem:[%s7 + $0x78] sm:$0xff]
          %v6960 = vld [vmem:[%s7 + $0x80] sm:$0xff]
          %v6961 = vld [vmem:[%s7 + $0x88] sm:$0xff]
          %v6962 = vld [vmem:[%s7 + $0x90] sm:$0xff]
          %v6963 = vld [vmem:[%s7 + $0x98] sm:$0xff]
          %v6964 = vld [vmem:[%s7 + $0xa0] sm:$0xff]
          %v6965 = vld [vmem:[%s7 + $0xa8] sm:$0xff]
          %v6966 = vld [vmem:[%s7 + $0xb0] sm:$0xff]
          %v6967 = vld [vmem:[%s7 + $0xb8] sm:$0xff]
          %v6968 = vld [vmem:[%s7 + $0xc0] sm:$0xff]
          %v6969 = vld [vmem:[%s7 + $0xc8] sm:$0xff]
          %v6970 = vld [vmem:[%s7 + $0xd0] sm:$0xff]
          %v6971 = vld [vmem:[%s7 + $0xd8] sm:$0xff]
          %v6972 = vld [vmem:[%s7 + $0xe0] sm:$0xff]
          %v6973 = vld [vmem:[%s7 + $0xe8] sm:$0xff]
          %v6974 = vld [vmem:[%s7 + $0xf0] sm:$0xff]
          %v6975 = vld [vmem:[%s7 + $0xf8] sm:$0xff]
          %v6976 = vld [vmem:[%s7 + $0x100] sm:$0xff]
          %v6977 = vld [vmem:[%s7 + $0x108] sm:$0xff]
          %v6978 = vld [vmem:[%s7 + $0x110] sm:$0xff]
          %v6979 = vld [vmem:[%s7 + $0x118] sm:$0xff]
          %v6980 = vld [vmem:[%s7 + $0x120] sm:$0xff]
          %v6981 = vld [vmem:[%s7 + $0x128] sm:$0xff]
          %v6982 = vld [vmem:[%s7 + $0x130] sm:$0xff]
          %v6983 = vld [vmem:[%s7 + $0x138] sm:$0xff]
          %v6984 = vld [vmem:[%s7 + $0x140] sm:$0xff]
          %v6985 = vld [vmem:[%s7 + $0x148] sm:$0xff]
          %v6986 = vld [vmem:[%s7 + $0x150] sm:$0xff]
          %v6987 = vld [vmem:[%s7 + $0x158] sm:$0xff]
          %v6988 = vld [vmem:[%s7 + $0x160] sm:$0xff]
          %v6989 = vld [vmem:[%s7 + $0x168] sm:$0xff]
          %v6990 = vld [vmem:[%s7 + $0x170] sm:$0xff]
          %v6991 = vld [vmem:[%s7 + $0x178] sm:$0xff]
          %v6992 = vld [vmem:[%s7 + $0x180] sm:$0xff]
          %v6993 = vld [vmem:[%s7 + $0x188] sm:$0xff]
          %v6994 = vld [vmem:[%s7 + $0x190] sm:$0xff]
          %v6995 = vld [vmem:[%s7 + $0x198] sm:$0xff]
          %v6996 = vld [vmem:[%s7 + $0x1a0] sm:$0xff]
          %v6997 = vld [vmem:[%s7 + $0x1a8] sm:$0xff]
          %v6998 = vld [vmem:[%s7 + $0x1b0] sm:$0xff]
          %v6999 = vld [vmem:[%s7 + $0x1b8] sm:$0xff]
          %v7000 = vld [vmem:[%s7 + $0x1c0] sm:$0xff]
          %v7001 = vld [vmem:[%s7 + $0x1c8] sm:$0xff]
          %v7002 = vld [vmem:[%s7 + $0x1d0] sm:$0xff]
          %v7003 = vld [vmem:[%s7 + $0x1d8] sm:$0xff]
          %v7004 = vld [vmem:[%s7 + $0x1e0] sm:$0xff]
          %v7005 = vld [vmem:[%s7 + $0x1e8] sm:$0xff]
          %v7006 = vld [vmem:[%s7 + $0x1f0] sm:$0xff]
          %v7007 = vld [vmem:[%s7 + $0x1f8] sm:$0xff]
          %v7008 = vsel %vm6875, %v6944, 0.0
          %7009 = vadd.xlane.f32.xlu0 %v7008
          %v7010 = vpop.xlane.xlu0 %7009
          %v7011 = vsel %vm6875, %v6945, 0.0
          %7012 = vadd.xlane.f32.xlu0 %v7011
          %v7013 = vpop.xlane.xlu0 %7012
          %v7014 = vsel %vm6875, %v6946, 0.0
          %7015 = vadd.xlane.f32.xlu0 %v7014
          %v7016 = vpop.xlane.xlu0 %7015
          %v7017 = vsel %vm6875, %v6947, 0.0
          %7018 = vadd.xlane.f32.xlu0 %v7017
          %v7019 = vpop.xlane.xlu0 %7018
          %v7020 = vsel %vm6875, %v6948, 0.0
          %7021 = vadd.xlane.f32.xlu0 %v7020
          %v7022 = vpop.xlane.xlu0 %7021
          %v7023 = vsel %vm6875, %v6949, 0.0
          %7024 = vadd.xlane.f32.xlu0 %v7023
          %v7025 = vpop.xlane.xlu0 %7024
          %v7026 = vsel %vm6875, %v6950, 0.0
          %7027 = vadd.xlane.f32.xlu0 %v7026
          %v7028 = vpop.xlane.xlu0 %7027
          %v7029 = vsel %vm6875, %v6951, 0.0
          %7030 = vadd.xlane.f32.xlu0 %v7029
          %v7031 = vpop.xlane.xlu0 %7030
          %v7032 = vsel %vm6875, %v6952, 0.0
          %7033 = vadd.xlane.f32.xlu0 %v7032
          %v7034 = vpop.xlane.xlu0 %7033
          %v7035 = vsel %vm6875, %v6953, 0.0
          %7036 = vadd.xlane.f32.xlu0 %v7035
          %v7037 = vpop.xlane.xlu0 %7036
          %v7038 = vsel %vm6875, %v6954, 0.0
          %7039 = vadd.xlane.f32.xlu0 %v7038
          %v7040 = vpop.xlane.xlu0 %7039
          %v7041 = vsel %vm6875, %v6955, 0.0
          %7042 = vadd.xlane.f32.xlu0 %v7041
          %v7043 = vpop.xlane.xlu0 %7042
          %v7044 = vsel %vm6875, %v6956, 0.0
          %7045 = vadd.xlane.f32.xlu0 %v7044
          %v7046 = vpop.xlane.xlu0 %7045
          %v7047 = vsel %vm6875, %v6957, 0.0
          %7048 = vadd.xlane.f32.xlu0 %v7047
          %v7049 = vpop.xlane.xlu0 %7048
          %v7050 = vsel %vm6875, %v6958, 0.0
          %7051 = vadd.xlane.f32.xlu0 %v7050
          %v7052 = vpop.xlane.xlu0 %7051
          %v7053 = vsel %vm6875, %v6959, 0.0
          %7054 = vadd.xlane.f32.xlu0 %v7053
          %v7055 = vpop.xlane.xlu0 %7054
          %v7056 = vsel %vm6875, %v6960, 0.0
          %7057 = vadd.xlane.f32.xlu0 %v7056
          %v7058 = vpop.xlane.xlu0 %7057
          %v7059 = vsel %vm6875, %v6961, 0.0
          %7060 = vadd.xlane.f32.xlu0 %v7059
          %v7061 = vpop.xlane.xlu0 %7060
          %v7062 = vsel %vm6875, %v6962, 0.0
          %7063 = vadd.xlane.f32.xlu0 %v7062
          %v7064 = vpop.xlane.xlu0 %7063
          %v7065 = vsel %vm6875, %v6963, 0.0
          %7066 = vadd.xlane.f32.xlu0 %v7065
          %v7067 = vpop.xlane.xlu0 %7066
          %v7068 = vsel %vm6875, %v6964, 0.0
          %7069 = vadd.xlane.f32.xlu0 %v7068
          %v7070 = vpop.xlane.xlu0 %7069
          %v7071 = vsel %vm6875, %v6965, 0.0
          %7072 = vadd.xlane.f32.xlu0 %v7071
          %v7073 = vpop.xlane.xlu0 %7072
          %v7074 = vsel %vm6875, %v6966, 0.0
          %7075 = vadd.xlane.f32.xlu0 %v7074
          %v7076 = vpop.xlane.xlu0 %7075
          %v7077 = vsel %vm6875, %v6967, 0.0
          %7078 = vadd.xlane.f32.xlu0 %v7077
          %v7079 = vpop.xlane.xlu0 %7078
          %v7080 = vsel %vm6875, %v6968, 0.0
          %7081 = vadd.xlane.f32.xlu0 %v7080
          %v7082 = vpop.xlane.xlu0 %7081
          %v7083 = vsel %vm6875, %v6969, 0.0
          %7084 = vadd.xlane.f32.xlu0 %v7083
          %v7085 = vpop.xlane.xlu0 %7084
          %v7086 = vsel %vm6875, %v6970, 0.0
          %7087 = vadd.xlane.f32.xlu0 %v7086
          %v7088 = vpop.xlane.xlu0 %7087
          %v7089 = vsel %vm6875, %v6971, 0.0
          %7090 = vadd.xlane.f32.xlu0 %v7089
          %v7091 = vpop.xlane.xlu0 %7090
          %v7092 = vsel %vm6875, %v6972, 0.0
          %7093 = vadd.xlane.f32.xlu0 %v7092
          %v7094 = vpop.xlane.xlu0 %7093
          %v7095 = vsel %vm6875, %v6973, 0.0
          %7096 = vadd.xlane.f32.xlu0 %v7095
          %v7097 = vpop.xlane.xlu0 %7096
          %v7098 = vsel %vm6875, %v6974, 0.0
          %7099 = vadd.xlane.f32.xlu0 %v7098
          %v7100 = vpop.xlane.xlu0 %7099
          %v7101 = vsel %vm6875, %v6975, 0.0
          %7102 = vadd.xlane.f32.xlu0 %v7101
          %v7103 = vpop.xlane.xlu0 %7102
          %v7104 = vsel %vm6875, %v6976, 0.0
          %7105 = vadd.xlane.f32.xlu0 %v7104
          %v7106 = vpop.xlane.xlu0 %7105
          %v7107 = vsel %vm6875, %v6977, 0.0
          %7108 = vadd.xlane.f32.xlu0 %v7107
          %v7109 = vpop.xlane.xlu0 %7108
          %v7110 = vsel %vm6875, %v6978, 0.0
          %7111 = vadd.xlane.f32.xlu0 %v7110
          %v7112 = vpop.xlane.xlu0 %7111
          %v7113 = vsel %vm6875, %v6979, 0.0
          %7114 = vadd.xlane.f32.xlu0 %v7113
          %v7115 = vpop.xlane.xlu0 %7114
          %v7116 = vsel %vm6875, %v6980, 0.0
          %7117 = vadd.xlane.f32.xlu0 %v7116
          %v7118 = vpop.xlane.xlu0 %7117
          %v7119 = vsel %vm6875, %v6981, 0.0
          %7120 = vadd.xlane.f32.xlu0 %v7119
          %v7121 = vpop.xlane.xlu0 %7120
          %v7122 = vsel %vm6875, %v6982, 0.0
          %7123 = vadd.xlane.f32.xlu0 %v7122
          %v7124 = vpop.xlane.xlu0 %7123
          %v7125 = vsel %vm6875, %v6983, 0.0
          %7126 = vadd.xlane.f32.xlu0 %v7125
          %v7127 = vpop.xlane.xlu0 %7126
          %v7128 = vsel %vm6875, %v6984, 0.0
          %7129 = vadd.xlane.f32.xlu0 %v7128
          %v7130 = vpop.xlane.xlu0 %7129
          %v7131 = vsel %vm6875, %v6985, 0.0
          %7132 = vadd.xlane.f32.xlu0 %v7131
          %v7133 = vpop.xlane.xlu0 %7132
          %v7134 = vsel %vm6875, %v6986, 0.0
          %7135 = vadd.xlane.f32.xlu0 %v7134
          %v7136 = vpop.xlane.xlu0 %7135
          %v7137 = vsel %vm6875, %v6987, 0.0
          %7138 = vadd.xlane.f32.xlu0 %v7137
          %v7139 = vpop.xlane.xlu0 %7138
          %v7140 = vsel %vm6875, %v6988, 0.0
          %7141 = vadd.xlane.f32.xlu0 %v7140
          %v7142 = vpop.xlane.xlu0 %7141
          %v7143 = vsel %vm6875, %v6989, 0.0
          %7144 = vadd.xlane.f32.xlu0 %v7143
          %v7145 = vpop.xlane.xlu0 %7144
          %v7146 = vsel %vm6875, %v6990, 0.0
          %7147 = vadd.xlane.f32.xlu0 %v7146
          %v7148 = vpop.xlane.xlu0 %7147
          %v7149 = vsel %vm6875, %v6991, 0.0
          %7150 = vadd.xlane.f32.xlu0 %v7149
          %v7151 = vpop.xlane.xlu0 %7150
          %v7152 = vsel %vm6875, %v6992, 0.0
          %7153 = vadd.xlane.f32.xlu0 %v7152
          %v7154 = vpop.xlane.xlu0 %7153
          %v7155 = vsel %vm6875, %v6993, 0.0
          %7156 = vadd.xlane.f32.xlu0 %v7155
          %v7157 = vpop.xlane.xlu0 %7156
          %v7158 = vsel %vm6875, %v6994, 0.0
          %7159 = vadd.xlane.f32.xlu0 %v7158
          %v7160 = vpop.xlane.xlu0 %7159
          %v7161 = vsel %vm6875, %v6995, 0.0
          %7162 = vadd.xlane.f32.xlu0 %v7161
          %v7163 = vpop.xlane.xlu0 %7162
          %v7164 = vsel %vm6875, %v6996, 0.0
          %7165 = vadd.xlane.f32.xlu0 %v7164
          %v7166 = vpop.xlane.xlu0 %7165
          %v7167 = vsel %vm6875, %v6997, 0.0
          %7168 = vadd.xlane.f32.xlu0 %v7167
          %v7169 = vpop.xlane.xlu0 %7168
          %v7170 = vsel %vm6875, %v6998, 0.0
          %7171 = vadd.xlane.f32.xlu0 %v7170
          %v7172 = vpop.xlane.xlu0 %7171
          %v7173 = vsel %vm6875, %v6999, 0.0
          %7174 = vadd.xlane.f32.xlu0 %v7173
          %v7175 = vpop.xlane.xlu0 %7174
          %v7176 = vsel %vm6875, %v7000, 0.0
          %7177 = vadd.xlane.f32.xlu0 %v7176
          %v7178 = vpop.xlane.xlu0 %7177
          %v7179 = vsel %vm6875, %v7001, 0.0
          %7180 = vadd.xlane.f32.xlu0 %v7179
          %v7181 = vpop.xlane.xlu0 %7180
          %v7182 = vsel %vm6875, %v7002, 0.0
          %7183 = vadd.xlane.f32.xlu0 %v7182
          %v7184 = vpop.xlane.xlu0 %7183
          %v7185 = vsel %vm6875, %v7003, 0.0
          %7186 = vadd.xlane.f32.xlu0 %v7185
          %v7187 = vpop.xlane.xlu0 %7186
          %v7188 = vsel %vm6875, %v7004, 0.0
          %7189 = vadd.xlane.f32.xlu0 %v7188
          %v7190 = vpop.xlane.xlu0 %7189
          %v7191 = vsel %vm6875, %v7005, 0.0
          %7192 = vadd.xlane.f32.xlu0 %v7191
          %v7193 = vpop.xlane.xlu0 %7192
          %v7194 = vsel %vm6875, %v7006, 0.0
          %7195 = vadd.xlane.f32.xlu0 %v7194
          %v7196 = vpop.xlane.xlu0 %7195
          %v7197 = vsel %vm6875, %v7007, 0.0
          %7198 = vadd.xlane.f32.xlu0 %v7197
          %v7199 = vpop.xlane.xlu0 %7198
          %v7200 = vmul.f32 %v6944, %v6944
          %v7201 = vmul.f32 %v6945, %v6945
          %v7202 = vmul.f32 %v6946, %v6946
          %v7203 = vmul.f32 %v6947, %v6947
          %v7204 = vmul.f32 %v6948, %v6948
          %v7205 = vmul.f32 %v6949, %v6949
          %v7206 = vmul.f32 %v6950, %v6950
          %v7207 = vmul.f32 %v6951, %v6951
          %v7208 = vmul.f32 %v6952, %v6952
          %v7209 = vmul.f32 %v6953, %v6953
          %v7210 = vmul.f32 %v6954, %v6954
          %v7211 = vmul.f32 %v6955, %v6955
          %v7212 = vmul.f32 %v6956, %v6956
          %v7213 = vmul.f32 %v6957, %v6957
          %v7214 = vmul.f32 %v6958, %v6958
          %v7215 = vmul.f32 %v6959, %v6959
          %v7216 = vmul.f32 %v6960, %v6960
          %v7217 = vmul.f32 %v6961, %v6961
          %v7218 = vmul.f32 %v6962, %v6962
          %v7219 = vmul.f32 %v6963, %v6963
          %v7220 = vmul.f32 %v6964, %v6964
          %v7221 = vmul.f32 %v6965, %v6965
          %v7222 = vmul.f32 %v6966, %v6966
          %v7223 = vmul.f32 %v6967, %v6967
          %v7224 = vmul.f32 %v6968, %v6968
          %v7225 = vmul.f32 %v6969, %v6969
          %v7226 = vmul.f32 %v6970, %v6970
          %v7227 = vmul.f32 %v6971, %v6971
          %v7228 = vmul.f32 %v6972, %v6972
          %v7229 = vmul.f32 %v6973, %v6973
          %v7230 = vmul.f32 %v6974, %v6974
          %v7231 = vmul.f32 %v6975, %v6975
          %v7232 = vmul.f32 %v6976, %v6976
          %v7233 = vmul.f32 %v6977, %v6977
          %v7234 = vmul.f32 %v6978, %v6978
          %v7235 = vmul.f32 %v6979, %v6979
          %v7236 = vmul.f32 %v6980, %v6980
          %v7237 = vmul.f32 %v6981, %v6981
          %v7238 = vmul.f32 %v6982, %v6982
          %v7239 = vmul.f32 %v6983, %v6983
          %v7240 = vmul.f32 %v6984, %v6984
          %v7241 = vmul.f32 %v6985, %v6985
          %v7242 = vmul.f32 %v6986, %v6986
          %v7243 = vmul.f32 %v6987, %v6987
          %v7244 = vmul.f32 %v6988, %v6988
          %v7245 = vmul.f32 %v6989, %v6989
          %v7246 = vmul.f32 %v6990, %v6990
          %v7247 = vmul.f32 %v6991, %v6991
          %v7248 = vmul.f32 %v6992, %v6992
          %v7249 = vmul.f32 %v6993, %v6993
          %v7250 = vmul.f32 %v6994, %v6994
          %v7251 = vmul.f32 %v6995, %v6995
          %v7252 = vmul.f32 %v6996, %v6996
          %v7253 = vmul.f32 %v6997, %v6997
          %v7254 = vmul.f32 %v6998, %v6998
          %v7255 = vmul.f32 %v6999, %v6999
          %v7256 = vmul.f32 %v7000, %v7000
          %v7257 = vmul.f32 %v7001, %v7001
          %v7258 = vmul.f32 %v7002, %v7002
          %v7259 = vmul.f32 %v7003, %v7003
          %v7260 = vmul.f32 %v7004, %v7004
          %v7261 = vmul.f32 %v7005, %v7005
          %v7262 = vmul.f32 %v7006, %v7006
          %v7263 = vmul.f32 %v7007, %v7007
          %v7264 = vsel %vm6875, %v7200, 0.0
          %7265 = vadd.xlane.f32.xlu0 %v7264
          %v7266 = vpop.xlane.xlu0 %7265
          %v7267 = vsel %vm6875, %v7201, 0.0
          %7268 = vadd.xlane.f32.xlu0 %v7267
          %v7269 = vpop.xlane.xlu0 %7268
          %v7270 = vsel %vm6875, %v7202, 0.0
          %7271 = vadd.xlane.f32.xlu0 %v7270
          %v7272 = vpop.xlane.xlu0 %7271
          %v7273 = vsel %vm6875, %v7203, 0.0
          %7274 = vadd.xlane.f32.xlu0 %v7273
          %v7275 = vpop.xlane.xlu0 %7274
          %v7276 = vsel %vm6875, %v7204, 0.0
          %7277 = vadd.xlane.f32.xlu0 %v7276
          %v7278 = vpop.xlane.xlu0 %7277
          %v7279 = vsel %vm6875, %v7205, 0.0
          %7280 = vadd.xlane.f32.xlu0 %v7279
          %v7281 = vpop.xlane.xlu0 %7280
          %v7282 = vsel %vm6875, %v7206, 0.0
          %7283 = vadd.xlane.f32.xlu0 %v7282
          %v7284 = vpop.xlane.xlu0 %7283
          %v7285 = vsel %vm6875, %v7207, 0.0
          %7286 = vadd.xlane.f32.xlu0 %v7285
          %v7287 = vpop.xlane.xlu0 %7286
          %v7288 = vsel %vm6875, %v7208, 0.0
          %7289 = vadd.xlane.f32.xlu0 %v7288
          %v7290 = vpop.xlane.xlu0 %7289
          %v7291 = vsel %vm6875, %v7209, 0.0
          %7292 = vadd.xlane.f32.xlu0 %v7291
          %v7293 = vpop.xlane.xlu0 %7292
          %v7294 = vsel %vm6875, %v7210, 0.0
          %7295 = vadd.xlane.f32.xlu0 %v7294
          %v7296 = vpop.xlane.xlu0 %7295
          %v7297 = vsel %vm6875, %v7211, 0.0
          %7298 = vadd.xlane.f32.xlu0 %v7297
          %v7299 = vpop.xlane.xlu0 %7298
          %v7300 = vsel %vm6875, %v7212, 0.0
          %7301 = vadd.xlane.f32.xlu0 %v7300
          %v7302 = vpop.xlane.xlu0 %7301
          %v7303 = vsel %vm6875, %v7213, 0.0
          %7304 = vadd.xlane.f32.xlu0 %v7303
          %v7305 = vpop.xlane.xlu0 %7304
          %v7306 = vsel %vm6875, %v7214, 0.0
          %7307 = vadd.xlane.f32.xlu0 %v7306
          %v7308 = vpop.xlane.xlu0 %7307
          %v7309 = vsel %vm6875, %v7215, 0.0
          %7310 = vadd.xlane.f32.xlu0 %v7309
          %v7311 = vpop.xlane.xlu0 %7310
          %v7312 = vsel %vm6875, %v7216, 0.0
          %7313 = vadd.xlane.f32.xlu0 %v7312
          %v7314 = vpop.xlane.xlu0 %7313
          %v7315 = vsel %vm6875, %v7217, 0.0
          %7316 = vadd.xlane.f32.xlu0 %v7315
          %v7317 = vpop.xlane.xlu0 %7316
          %v7318 = vsel %vm6875, %v7218, 0.0
          %7319 = vadd.xlane.f32.xlu0 %v7318
          %v7320 = vpop.xlane.xlu0 %7319
          %v7321 = vsel %vm6875, %v7219, 0.0
          %7322 = vadd.xlane.f32.xlu0 %v7321
          %v7323 = vpop.xlane.xlu0 %7322
          %v7324 = vsel %vm6875, %v7220, 0.0
          %7325 = vadd.xlane.f32.xlu0 %v7324
          %v7326 = vpop.xlane.xlu0 %7325
          %v7327 = vsel %vm6875, %v7221, 0.0
          %7328 = vadd.xlane.f32.xlu0 %v7327
          %v7329 = vpop.xlane.xlu0 %7328
          %v7330 = vsel %vm6875, %v7222, 0.0
          %7331 = vadd.xlane.f32.xlu0 %v7330
          %v7332 = vpop.xlane.xlu0 %7331
          %v7333 = vsel %vm6875, %v7223, 0.0
          %7334 = vadd.xlane.f32.xlu0 %v7333
          %v7335 = vpop.xlane.xlu0 %7334
          %v7336 = vsel %vm6875, %v7224, 0.0
          %7337 = vadd.xlane.f32.xlu0 %v7336
          %v7338 = vpop.xlane.xlu0 %7337
          %v7339 = vsel %vm6875, %v7225, 0.0
          %7340 = vadd.xlane.f32.xlu0 %v7339
          %v7341 = vpop.xlane.xlu0 %7340
          %v7342 = vsel %vm6875, %v7226, 0.0
          %7343 = vadd.xlane.f32.xlu0 %v7342
          %v7344 = vpop.xlane.xlu0 %7343
          %v7345 = vsel %vm6875, %v7227, 0.0
          %7346 = vadd.xlane.f32.xlu0 %v7345
          %v7347 = vpop.xlane.xlu0 %7346
          %v7348 = vsel %vm6875, %v7228, 0.0
          %7349 = vadd.xlane.f32.xlu0 %v7348
          %v7350 = vpop.xlane.xlu0 %7349
          %v7351 = vsel %vm6875, %v7229, 0.0
          %7352 = vadd.xlane.f32.xlu0 %v7351
          %v7353 = vpop.xlane.xlu0 %7352
          %v7354 = vsel %vm6875, %v7230, 0.0
          %7355 = vadd.xlane.f32.xlu0 %v7354
          %v7356 = vpop.xlane.xlu0 %7355
          %v7357 = vsel %vm6875, %v7231, 0.0
          %7358 = vadd.xlane.f32.xlu0 %v7357
          %v7359 = vpop.xlane.xlu0 %7358
          %v7360 = vsel %vm6875, %v7232, 0.0
          %7361 = vadd.xlane.f32.xlu0 %v7360
          %v7362 = vpop.xlane.xlu0 %7361
          %v7363 = vsel %vm6875, %v7233, 0.0
          %7364 = vadd.xlane.f32.xlu0 %v7363
          %v7365 = vpop.xlane.xlu0 %7364
          %v7366 = vsel %vm6875, %v7234, 0.0
          %7367 = vadd.xlane.f32.xlu0 %v7366
          %v7368 = vpop.xlane.xlu0 %7367
          %v7369 = vsel %vm6875, %v7235, 0.0
          %7370 = vadd.xlane.f32.xlu0 %v7369
          %v7371 = vpop.xlane.xlu0 %7370
          %v7372 = vsel %vm6875, %v7236, 0.0
          %7373 = vadd.xlane.f32.xlu0 %v7372
          %v7374 = vpop.xlane.xlu0 %7373
          %v7375 = vsel %vm6875, %v7237, 0.0
          %7376 = vadd.xlane.f32.xlu0 %v7375
          %v7377 = vpop.xlane.xlu0 %7376
          %v7378 = vsel %vm6875, %v7238, 0.0
          %7379 = vadd.xlane.f32.xlu0 %v7378
          %v7380 = vpop.xlane.xlu0 %7379
          %v7381 = vsel %vm6875, %v7239, 0.0
          %7382 = vadd.xlane.f32.xlu0 %v7381
          %v7383 = vpop.xlane.xlu0 %7382
          %v7384 = vsel %vm6875, %v7240, 0.0
          %7385 = vadd.xlane.f32.xlu0 %v7384
          %v7386 = vpop.xlane.xlu0 %7385
          %v7387 = vsel %vm6875, %v7241, 0.0
          %7388 = vadd.xlane.f32.xlu0 %v7387
          %v7389 = vpop.xlane.xlu0 %7388
          %v7390 = vsel %vm6875, %v7242, 0.0
          %7391 = vadd.xlane.f32.xlu0 %v7390
          %v7392 = vpop.xlane.xlu0 %7391
          %v7393 = vsel %vm6875, %v7243, 0.0
          %7394 = vadd.xlane.f32.xlu0 %v7393
          %v7395 = vpop.xlane.xlu0 %7394
          %v7396 = vsel %vm6875, %v7244, 0.0
          %7397 = vadd.xlane.f32.xlu0 %v7396
          %v7398 = vpop.xlane.xlu0 %7397
          %v7399 = vsel %vm6875, %v7245, 0.0
          %7400 = vadd.xlane.f32.xlu0 %v7399
          %v7401 = vpop.xlane.xlu0 %7400
          %v7402 = vsel %vm6875, %v7246, 0.0
          %7403 = vadd.xlane.f32.xlu0 %v7402
          %v7404 = vpop.xlane.xlu0 %7403
          %v7405 = vsel %vm6875, %v7247, 0.0
          %7406 = vadd.xlane.f32.xlu0 %v7405
          %v7407 = vpop.xlane.xlu0 %7406
          %v7408 = vsel %vm6875, %v7248, 0.0
          %7409 = vadd.xlane.f32.xlu0 %v7408
          %v7410 = vpop.xlane.xlu0 %7409
          %v7411 = vsel %vm6875, %v7249, 0.0
          %7412 = vadd.xlane.f32.xlu0 %v7411
          %v7413 = vpop.xlane.xlu0 %7412
          %v7414 = vsel %vm6875, %v7250, 0.0
          %7415 = vadd.xlane.f32.xlu0 %v7414
          %v7416 = vpop.xlane.xlu0 %7415
          %v7417 = vsel %vm6875, %v7251, 0.0
          %7418 = vadd.xlane.f32.xlu0 %v7417
          %v7419 = vpop.xlane.xlu0 %7418
          %v7420 = vsel %vm6875, %v7252, 0.0
          %7421 = vadd.xlane.f32.xlu0 %v7420
          %v7422 = vpop.xlane.xlu0 %7421
          %v7423 = vsel %vm6875, %v7253, 0.0
          %7424 = vadd.xlane.f32.xlu0 %v7423
          %v7425 = vpop.xlane.xlu0 %7424
          %v7426 = vsel %vm6875, %v7254, 0.0
          %7427 = vadd.xlane.f32.xlu0 %v7426
          %v7428 = vpop.xlane.xlu0 %7427
          %v7429 = vsel %vm6875, %v7255, 0.0
          %7430 = vadd.xlane.f32.xlu0 %v7429
          %v7431 = vpop.xlane.xlu0 %7430
          %v7432 = vsel %vm6875, %v7256, 0.0
          %7433 = vadd.xlane.f32.xlu0 %v7432
          %v7434 = vpop.xlane.xlu0 %7433
          %v7435 = vsel %vm6875, %v7257, 0.0
          %7436 = vadd.xlane.f32.xlu0 %v7435
          %v7437 = vpop.xlane.xlu0 %7436
          %v7438 = vsel %vm6875, %v7258, 0.0
          %7439 = vadd.xlane.f32.xlu0 %v7438
          %v7440 = vpop.xlane.xlu0 %7439
          %v7441 = vsel %vm6875, %v7259, 0.0
          %7442 = vadd.xlane.f32.xlu0 %v7441
          %v7443 = vpop.xlane.xlu0 %7442
          %v7444 = vsel %vm6875, %v7260, 0.0
          %7445 = vadd.xlane.f32.xlu0 %v7444
          %v7446 = vpop.xlane.xlu0 %7445
          %v7447 = vsel %vm6875, %v7261, 0.0
          %7448 = vadd.xlane.f32.xlu0 %v7447
          %v7449 = vpop.xlane.xlu0 %7448
          %v7450 = vsel %vm6875, %v7262, 0.0
          %7451 = vadd.xlane.f32.xlu0 %v7450
          %v7452 = vpop.xlane.xlu0 %7451
          %v7453 = vsel %vm6875, %v7263, 0.0
          %7454 = vadd.xlane.f32.xlu0 %v7453
          %v7455 = vpop.xlane.xlu0 %7454
          %v7456 = vmul.f32 %v7010, 0.020408163
          %v7457 = vmul.f32 %v7013, 0.020408163
          %v7458 = vmul.f32 %v7016, 0.020408163
          %v7459 = vmul.f32 %v7019, 0.020408163
          %v7460 = vmul.f32 %v7022, 0.020408163
          %v7461 = vmul.f32 %v7025, 0.020408163
          %v7462 = vmul.f32 %v7028, 0.020408163
          %v7463 = vmul.f32 %v7031, 0.020408163
          %v7464 = vmul.f32 %v7034, 0.020408163
          %v7465 = vmul.f32 %v7037, 0.020408163
          %v7466 = vmul.f32 %v7040, 0.020408163
          %v7467 = vmul.f32 %v7043, 0.020408163
          %v7468 = vmul.f32 %v7046, 0.020408163
          %v7469 = vmul.f32 %v7049, 0.020408163
          %v7470 = vmul.f32 %v7052, 0.020408163
          %v7471 = vmul.f32 %v7055, 0.020408163
          %v7472 = vmul.f32 %v7058, 0.020408163
          %v7473 = vmul.f32 %v7061, 0.020408163
          %v7474 = vmul.f32 %v7064, 0.020408163
          %v7475 = vmul.f32 %v7067, 0.020408163
          %v7476 = vmul.f32 %v7070, 0.020408163
          %v7477 = vmul.f32 %v7073, 0.020408163
          %v7478 = vmul.f32 %v7076, 0.020408163
          %v7479 = vmul.f32 %v7079, 0.020408163
          %v7480 = vmul.f32 %v7082, 0.020408163
          %v7481 = vmul.f32 %v7085, 0.020408163
          %v7482 = vmul.f32 %v7088, 0.020408163
          %v7483 = vmul.f32 %v7091, 0.020408163
          %v7484 = vmul.f32 %v7094, 0.020408163
          %v7485 = vmul.f32 %v7097, 0.020408163
          %v7486 = vmul.f32 %v7100, 0.020408163
          %v7487 = vmul.f32 %v7103, 0.020408163
          %v7488 = vmul.f32 %v7106, 0.020408163
          %v7489 = vmul.f32 %v7109, 0.020408163
          %v7490 = vmul.f32 %v7112, 0.020408163
          %v7491 = vmul.f32 %v7115, 0.020408163
          %v7492 = vmul.f32 %v7118, 0.020408163
          %v7493 = vmul.f32 %v7121, 0.020408163
          %v7494 = vmul.f32 %v7124, 0.020408163
          %v7495 = vmul.f32 %v7127, 0.020408163
          %v7496 = vmul.f32 %v7130, 0.020408163
          %v7497 = vmul.f32 %v7133, 0.020408163
          %v7498 = vmul.f32 %v7136, 0.020408163
          %v7499 = vmul.f32 %v7139, 0.020408163
          %v7500 = vmul.f32 %v7142, 0.020408163
          %v7501 = vmul.f32 %v7145, 0.020408163
          %v7502 = vmul.f32 %v7148, 0.020408163
          %v7503 = vmul.f32 %v7151, 0.020408163
          %v7504 = vmul.f32 %v7154, 0.020408163
          %v7505 = vmul.f32 %v7157, 0.020408163
          %v7506 = vmul.f32 %v7160, 0.020408163
          %v7507 = vmul.f32 %v7163, 0.020408163
          %v7508 = vmul.f32 %v7166, 0.020408163
          %v7509 = vmul.f32 %v7169, 0.020408163
          %v7510 = vmul.f32 %v7172, 0.020408163
          %v7511 = vmul.f32 %v7175, 0.020408163
          %v7512 = vmul.f32 %v7178, 0.020408163
          %v7513 = vmul.f32 %v7181, 0.020408163
          %v7514 = vmul.f32 %v7184, 0.020408163
          %v7515 = vmul.f32 %v7187, 0.020408163
          %v7516 = vmul.f32 %v7190, 0.020408163
          %v7517 = vmul.f32 %v7193, 0.020408163
          %v7518 = vmul.f32 %v7196, 0.020408163
          %v7519 = vmul.f32 %v7199, 0.020408163
          %v7520 = vmul.f32 %v7266, 0.020408163
          %v7521 = vmul.f32 %v7269, 0.020408163
          %v7522 = vmul.f32 %v7272, 0.020408163
          %v7523 = vmul.f32 %v7275, 0.020408163
          %v7524 = vmul.f32 %v7278, 0.020408163
          %v7525 = vmul.f32 %v7281, 0.020408163
          %v7526 = vmul.f32 %v7284, 0.020408163
          %v7527 = vmul.f32 %v7287, 0.020408163
          %v7528 = vmul.f32 %v7290, 0.020408163
          %v7529 = vmul.f32 %v7293, 0.020408163
          %v7530 = vmul.f32 %v7296, 0.020408163
          %v7531 = vmul.f32 %v7299, 0.020408163
          %v7532 = vmul.f32 %v7302, 0.020408163
          %v7533 = vmul.f32 %v7305, 0.020408163
          %v7534 = vmul.f32 %v7308, 0.020408163
          %v7535 = vmul.f32 %v7311, 0.020408163
          %v7536 = vmul.f32 %v7314, 0.020408163
          %v7537 = vmul.f32 %v7317, 0.020408163
          %v7538 = vmul.f32 %v7320, 0.020408163
          %v7539 = vmul.f32 %v7323, 0.020408163
          %v7540 = vmul.f32 %v7326, 0.020408163
          %v7541 = vmul.f32 %v7329, 0.020408163
          %v7542 = vmul.f32 %v7332, 0.020408163
          %v7543 = vmul.f32 %v7335, 0.020408163
          %v7544 = vmul.f32 %v7338, 0.020408163
          %v7545 = vmul.f32 %v7341, 0.020408163
          %v7546 = vmul.f32 %v7344, 0.020408163
          %v7547 = vmul.f32 %v7347, 0.020408163
          %v7548 = vmul.f32 %v7350, 0.020408163
          %v7549 = vmul.f32 %v7353, 0.020408163
          %v7550 = vmul.f32 %v7356, 0.020408163
          %v7551 = vmul.f32 %v7359, 0.020408163
          %v7552 = vmul.f32 %v7362, 0.020408163
          %v7553 = vmul.f32 %v7365, 0.020408163
          %v7554 = vmul.f32 %v7368, 0.020408163
          %v7555 = vmul.f32 %v7371, 0.020408163
          %v7556 = vmul.f32 %v7374, 0.020408163
          %v7557 = vmul.f32 %v7377, 0.020408163
          %v7558 = vmul.f32 %v7380, 0.020408163
          %v7559 = vmul.f32 %v7383, 0.020408163
          %v7560 = vmul.f32 %v7386, 0.020408163
          %v7561 = vmul.f32 %v7389, 0.020408163
          %v7562 = vmul.f32 %v7392, 0.020408163
          %v7563 = vmul.f32 %v7395, 0.020408163
          %v7564 = vmul.f32 %v7398, 0.020408163
          %v7565 = vmul.f32 %v7401, 0.020408163
          %v7566 = vmul.f32 %v7404, 0.020408163
          %v7567 = vmul.f32 %v7407, 0.020408163
          %v7568 = vmul.f32 %v7410, 0.020408163
          %v7569 = vmul.f32 %v7413, 0.020408163
          %v7570 = vmul.f32 %v7416, 0.020408163
          %v7571 = vmul.f32 %v7419, 0.020408163
          %v7572 = vmul.f32 %v7422, 0.020408163
          %v7573 = vmul.f32 %v7425, 0.020408163
          %v7574 = vmul.f32 %v7428, 0.020408163
          %v7575 = vmul.f32 %v7431, 0.020408163
          %v7576 = vmul.f32 %v7434, 0.020408163
          %v7577 = vmul.f32 %v7437, 0.020408163
          %v7578 = vmul.f32 %v7440, 0.020408163
          %v7579 = vmul.f32 %v7443, 0.020408163
          %v7580 = vmul.f32 %v7446, 0.020408163
          %v7581 = vmul.f32 %v7449, 0.020408163
          %v7582 = vmul.f32 %v7452, 0.020408163
          %v7583 = vmul.f32 %v7455, 0.020408163
          %v7584 = vmul.f32 %v7456, %v7456
          %v7585 = vmul.f32 %v7457, %v7457
          %v7586 = vmul.f32 %v7458, %v7458
          %v7587 = vmul.f32 %v7459, %v7459
          %v7588 = vmul.f32 %v7460, %v7460
          %v7589 = vmul.f32 %v7461, %v7461
          %v7590 = vmul.f32 %v7462, %v7462
          %v7591 = vmul.f32 %v7463, %v7463
          %v7592 = vmul.f32 %v7464, %v7464
          %v7593 = vmul.f32 %v7465, %v7465
          %v7594 = vmul.f32 %v7466, %v7466
          %v7595 = vmul.f32 %v7467, %v7467
          %v7596 = vmul.f32 %v7468, %v7468
          %v7597 = vmul.f32 %v7469, %v7469
          %v7598 = vmul.f32 %v7470, %v7470
          %v7599 = vmul.f32 %v7471, %v7471
          %v7600 = vmul.f32 %v7472, %v7472
          %v7601 = vmul.f32 %v7473, %v7473
          %v7602 = vmul.f32 %v7474, %v7474
          %v7603 = vmul.f32 %v7475, %v7475
          %v7604 = vmul.f32 %v7476, %v7476
          %v7605 = vmul.f32 %v7477, %v7477
          %v7606 = vmul.f32 %v7478, %v7478
          %v7607 = vmul.f32 %v7479, %v7479
          %v7608 = vmul.f32 %v7480, %v7480
          %v7609 = vmul.f32 %v7481, %v7481
          %v7610 = vmul.f32 %v7482, %v7482
          %v7611 = vmul.f32 %v7483, %v7483
          %v7612 = vmul.f32 %v7484, %v7484
          %v7613 = vmul.f32 %v7485, %v7485
          %v7614 = vmul.f32 %v7486, %v7486
          %v7615 = vmul.f32 %v7487, %v7487
          %v7616 = vmul.f32 %v7488, %v7488
          %v7617 = vmul.f32 %v7489, %v7489
          %v7618 = vmul.f32 %v7490, %v7490
          %v7619 = vmul.f32 %v7491, %v7491
          %v7620 = vmul.f32 %v7492, %v7492
          %v7621 = vmul.f32 %v7493, %v7493
          %v7622 = vmul.f32 %v7494, %v7494
          %v7623 = vmul.f32 %v7495, %v7495
          %v7624 = vmul.f32 %v7496, %v7496
          %v7625 = vmul.f32 %v7497, %v7497
          %v7626 = vmul.f32 %v7498, %v7498
          %v7627 = vmul.f32 %v7499, %v7499
          %v7628 = vmul.f32 %v7500, %v7500
          %v7629 = vmul.f32 %v7501, %v7501
          %v7630 = vmul.f32 %v7502, %v7502
          %v7631 = vmul.f32 %v7503, %v7503
          %v7632 = vmul.f32 %v7504, %v7504
          %v7633 = vmul.f32 %v7505, %v7505
          %v7634 = vmul.f32 %v7506, %v7506
          %v7635 = vmul.f32 %v7507, %v7507
          %v7636 = vmul.f32 %v7508, %v7508
          %v7637 = vmul.f32 %v7509, %v7509
          %v7638 = vmul.f32 %v7510, %v7510
          %v7639 = vmul.f32 %v7511, %v7511
          %v7640 = vmul.f32 %v7512, %v7512
          %v7641 = vmul.f32 %v7513, %v7513
          %v7642 = vmul.f32 %v7514, %v7514
          %v7643 = vmul.f32 %v7515, %v7515
          %v7644 = vmul.f32 %v7516, %v7516
          %v7645 = vmul.f32 %v7517, %v7517
          %v7646 = vmul.f32 %v7518, %v7518
          %v7647 = vmul.f32 %v7519, %v7519
          %v7648 = vsub.f32 %v7520, %v7584
          %v7649 = vsub.f32 %v7521, %v7585
          %v7650 = vsub.f32 %v7522, %v7586
          %v7651 = vsub.f32 %v7523, %v7587
          %v7652 = vsub.f32 %v7524, %v7588
          %v7653 = vsub.f32 %v7525, %v7589
          %v7654 = vsub.f32 %v7526, %v7590
          %v7655 = vsub.f32 %v7527, %v7591
          %v7656 = vsub.f32 %v7528, %v7592
          %v7657 = vsub.f32 %v7529, %v7593
          %v7658 = vsub.f32 %v7530, %v7594
          %v7659 = vsub.f32 %v7531, %v7595
          %v7660 = vsub.f32 %v7532, %v7596
          %v7661 = vsub.f32 %v7533, %v7597
          %v7662 = vsub.f32 %v7534, %v7598
          %v7663 = vsub.f32 %v7535, %v7599
          %v7664 = vsub.f32 %v7536, %v7600
          %v7665 = vsub.f32 %v7537, %v7601
          %v7666 = vsub.f32 %v7538, %v7602
          %v7667 = vsub.f32 %v7539, %v7603
          %v7668 = vsub.f32 %v7540, %v7604
          %v7669 = vsub.f32 %v7541, %v7605
          %v7670 = vsub.f32 %v7542, %v7606
          %v7671 = vsub.f32 %v7543, %v7607
          %v7672 = vsub.f32 %v7544, %v7608
          %v7673 = vsub.f32 %v7545, %v7609
          %v7674 = vsub.f32 %v7546, %v7610
          %v7675 = vsub.f32 %v7547, %v7611
          %v7676 = vsub.f32 %v7548, %v7612
          %v7677 = vsub.f32 %v7549, %v7613
          %v7678 = vsub.f32 %v7550, %v7614
          %v7679 = vsub.f32 %v7551, %v7615
          %v7680 = vsub.f32 %v7552, %v7616
          %v7681 = vsub.f32 %v7553, %v7617
          %v7682 = vsub.f32 %v7554, %v7618
          %v7683 = vsub.f32 %v7555, %v7619
          %v7684 = vsub.f32 %v7556, %v7620
          %v7685 = vsub.f32 %v7557, %v7621
          %v7686 = vsub.f32 %v7558, %v7622
          %v7687 = vsub.f32 %v7559, %v7623
          %v7688 = vsub.f32 %v7560, %v7624
          %v7689 = vsub.f32 %v7561, %v7625
          %v7690 = vsub.f32 %v7562, %v7626
          %v7691 = vsub.f32 %v7563, %v7627
          %v7692 = vsub.f32 %v7564, %v7628
          %v7693 = vsub.f32 %v7565, %v7629
          %v7694 = vsub.f32 %v7566, %v7630
          %v7695 = vsub.f32 %v7567, %v7631
          %v7696 = vsub.f32 %v7568, %v7632
          %v7697 = vsub.f32 %v7569, %v7633
          %v7698 = vsub.f32 %v7570, %v7634
          %v7699 = vsub.f32 %v7571, %v7635
          %v7700 = vsub.f32 %v7572, %v7636
          %v7701 = vsub.f32 %v7573, %v7637
          %v7702 = vsub.f32 %v7574, %v7638
          %v7703 = vsub.f32 %v7575, %v7639
          %v7704 = vsub.f32 %v7576, %v7640
          %v7705 = vsub.f32 %v7577, %v7641
          %v7706 = vsub.f32 %v7578, %v7642
          %v7707 = vsub.f32 %v7579, %v7643
          %v7708 = vsub.f32 %v7580, %v7644
          %v7709 = vsub.f32 %v7581, %v7645
          %v7710 = vsub.f32 %v7582, %v7646
          %v7711 = vsub.f32 %v7583, %v7647
          %v7712 = vadd.f32 %v7648, 0.001
          %v7713 = vadd.f32 %v7649, 0.001
          %v7714 = vadd.f32 %v7650, 0.001
          %v7715 = vadd.f32 %v7651, 0.001
          %v7716 = vadd.f32 %v7652, 0.001
          %v7717 = vadd.f32 %v7653, 0.001
          %v7718 = vadd.f32 %v7654, 0.001
          %v7719 = vadd.f32 %v7655, 0.001
          %v7720 = vadd.f32 %v7656, 0.001
          %v7721 = vadd.f32 %v7657, 0.001
          %v7722 = vadd.f32 %v7658, 0.001
          %v7723 = vadd.f32 %v7659, 0.001
          %v7724 = vadd.f32 %v7660, 0.001
          %v7725 = vadd.f32 %v7661, 0.001
          %v7726 = vadd.f32 %v7662, 0.001
          %v7727 = vadd.f32 %v7663, 0.001
          %v7728 = vadd.f32 %v7664, 0.001
          %v7729 = vadd.f32 %v7665, 0.001
          %v7730 = vadd.f32 %v7666, 0.001
          %v7731 = vadd.f32 %v7667, 0.001
          %v7732 = vadd.f32 %v7668, 0.001
          %v7733 = vadd.f32 %v7669, 0.001
          %v7734 = vadd.f32 %v7670, 0.001
          %v7735 = vadd.f32 %v7671, 0.001
          %v7736 = vadd.f32 %v7672, 0.001
          %v7737 = vadd.f32 %v7673, 0.001
          %v7738 = vadd.f32 %v7674, 0.001
          %v7739 = vadd.f32 %v7675, 0.001
          %v7740 = vadd.f32 %v7676, 0.001
          %v7741 = vadd.f32 %v7677, 0.001
          %v7742 = vadd.f32 %v7678, 0.001
          %v7743 = vadd.f32 %v7679, 0.001
          %v7744 = vadd.f32 %v7680, 0.001
          %v7745 = vadd.f32 %v7681, 0.001
          %v7746 = vadd.f32 %v7682, 0.001
          %v7747 = vadd.f32 %v7683, 0.001
          %v7748 = vadd.f32 %v7684, 0.001
          %v7749 = vadd.f32 %v7685, 0.001
          %v7750 = vadd.f32 %v7686, 0.001
          %v7751 = vadd.f32 %v7687, 0.001
          %v7752 = vadd.f32 %v7688, 0.001
          %v7753 = vadd.f32 %v7689, 0.001
          %v7754 = vadd.f32 %v7690, 0.001
          %v7755 = vadd.f32 %v7691, 0.001
          %v7756 = vadd.f32 %v7692, 0.001
          %v7757 = vadd.f32 %v7693, 0.001
          %v7758 = vadd.f32 %v7694, 0.001
          %v7759 = vadd.f32 %v7695, 0.001
          %v7760 = vadd.f32 %v7696, 0.001
          %v7761 = vadd.f32 %v7697, 0.001
          %v7762 = vadd.f32 %v7698, 0.001
          %v7763 = vadd.f32 %v7699, 0.001
          %v7764 = vadd.f32 %v7700, 0.001
          %v7765 = vadd.f32 %v7701, 0.001
          %v7766 = vadd.f32 %v7702, 0.001
          %v7767 = vadd.f32 %v7703, 0.001
          %v7768 = vadd.f32 %v7704, 0.001
          %v7769 = vadd.f32 %v7705, 0.001
          %v7770 = vadd.f32 %v7706, 0.001
          %v7771 = vadd.f32 %v7707, 0.001
          %v7772 = vadd.f32 %v7708, 0.001
          %v7773 = vadd.f32 %v7709, 0.001
          %v7774 = vadd.f32 %v7710, 0.001
          %v7775 = vadd.f32 %v7711, 0.001
          %v7776 = vrsqrt.pop %v7712
          %v7777 = vrsqrt.pop %v7713
          %v7778 = vrsqrt.pop %v7714
          %v7779 = vrsqrt.pop %v7715
          %v7780 = vrsqrt.pop %v7716
          %v7781 = vrsqrt.pop %v7717
          %v7782 = vrsqrt.pop %v7718
          %v7783 = vrsqrt.pop %v7719
          %v7784 = vrsqrt.pop %v7720
          %v7785 = vrsqrt.pop %v7721
          %v7786 = vrsqrt.pop %v7722
          %v7787 = vrsqrt.pop %v7723
          %v7788 = vrsqrt.pop %v7724
          %v7789 = vrsqrt.pop %v7725
          %v7790 = vrsqrt.pop %v7726
          %v7791 = vrsqrt.pop %v7727
          %v7792 = vrsqrt.pop %v7728
          %v7793 = vrsqrt.pop %v7729
          %v7794 = vrsqrt.pop %v7730
          %v7795 = vrsqrt.pop %v7731
          %v7796 = vrsqrt.pop %v7732
          %v7797 = vrsqrt.pop %v7733
          %v7798 = vrsqrt.pop %v7734
          %v7799 = vrsqrt.pop %v7735
          %v7800 = vrsqrt.pop %v7736
          %v7801 = vrsqrt.pop %v7737
          %v7802 = vrsqrt.pop %v7738
          %v7803 = vrsqrt.pop %v7739
          %v7804 = vrsqrt.pop %v7740
          %v7805 = vrsqrt.pop %v7741
          %v7806 = vrsqrt.pop %v7742
          %v7807 = vrsqrt.pop %v7743
          %v7808 = vrsqrt.pop %v7744
          %v7809 = vrsqrt.pop %v7745
          %v7810 = vrsqrt.pop %v7746
          %v7811 = vrsqrt.pop %v7747
          %v7812 = vrsqrt.pop %v7748
          %v7813 = vrsqrt.pop %v7749
          %v7814 = vrsqrt.pop %v7750
          %v7815 = vrsqrt.pop %v7751
          %v7816 = vrsqrt.pop %v7752
          %v7817 = vrsqrt.pop %v7753
          %v7818 = vrsqrt.pop %v7754
          %v7819 = vrsqrt.pop %v7755
          %v7820 = vrsqrt.pop %v7756
          %v7821 = vrsqrt.pop %v7757
          %v7822 = vrsqrt.pop %v7758
          %v7823 = vrsqrt.pop %v7759
          %v7824 = vrsqrt.pop %v7760
          %v7825 = vrsqrt.pop %v7761
          %v7826 = vrsqrt.pop %v7762
          %v7827 = vrsqrt.pop %v7763
          %v7828 = vrsqrt.pop %v7764
          %v7829 = vrsqrt.pop %v7765
          %v7830 = vrsqrt.pop %v7766
          %v7831 = vrsqrt.pop %v7767
          %v7832 = vrsqrt.pop %v7768
          %v7833 = vrsqrt.pop %v7769
          %v7834 = vrsqrt.pop %v7770
          %v7835 = vrsqrt.pop %v7771
          %v7836 = vrsqrt.pop %v7772
          %v7837 = vrsqrt.pop %v7773
          %v7838 = vrsqrt.pop %v7774
          %v7839 = vrsqrt.pop %v7775
          %v7840 = vsub.f32 %v6944, %v7456
          %v7841 = vsub.f32 %v6945, %v7457
          %v7842 = vsub.f32 %v6946, %v7458
          %v7843 = vsub.f32 %v6947, %v7459
          %v7844 = vsub.f32 %v6948, %v7460
          %v7845 = vsub.f32 %v6949, %v7461
          %v7846 = vsub.f32 %v6950, %v7462
          %v7847 = vsub.f32 %v6951, %v7463
          %v7848 = vsub.f32 %v6952, %v7464
          %v7849 = vsub.f32 %v6953, %v7465
          %v7850 = vsub.f32 %v6954, %v7466
          %v7851 = vsub.f32 %v6955, %v7467
          %v7852 = vsub.f32 %v6956, %v7468
          %v7853 = vsub.f32 %v6957, %v7469
          %v7854 = vsub.f32 %v6958, %v7470
          %v7855 = vsub.f32 %v6959, %v7471
          %v7856 = vsub.f32 %v6960, %v7472
          %v7857 = vsub.f32 %v6961, %v7473
          %v7858 = vsub.f32 %v6962, %v7474
          %v7859 = vsub.f32 %v6963, %v7475
          %v7860 = vsub.f32 %v6964, %v7476
          %v7861 = vsub.f32 %v6965, %v7477
          %v7862 = vsub.f32 %v6966, %v7478
          %v7863 = vsub.f32 %v6967, %v7479
          %v7864 = vsub.f32 %v6968, %v7480
          %v7865 = vsub.f32 %v6969, %v7481
          %v7866 = vsub.f32 %v6970, %v7482
          %v7867 = vsub.f32 %v6971, %v7483
          %v7868 = vsub.f32 %v6972, %v7484
          %v7869 = vsub.f32 %v6973, %v7485
          %v7870 = vsub.f32 %v6974, %v7486
          %v7871 = vsub.f32 %v6975, %v7487
          %v7872 = vsub.f32 %v6976, %v7488
          %v7873 = vsub.f32 %v6977, %v7489
          %v7874 = vsub.f32 %v6978, %v7490
          %v7875 = vsub.f32 %v6979, %v7491
          %v7876 = vsub.f32 %v6980, %v7492
          %v7877 = vsub.f32 %v6981, %v7493
          %v7878 = vsub.f32 %v6982, %v7494
          %v7879 = vsub.f32 %v6983, %v7495
          %v7880 = vsub.f32 %v6984, %v7496
          %v7881 = vsub.f32 %v6985, %v7497
          %v7882 = vsub.f32 %v6986, %v7498
          %v7883 = vsub.f32 %v6987, %v7499
          %v7884 = vsub.f32 %v6988, %v7500
          %v7885 = vsub.f32 %v6989, %v7501
          %v7886 = vsub.f32 %v6990, %v7502
          %v7887 = vsub.f32 %v6991, %v7503
          %v7888 = vsub.f32 %v6992, %v7504
          %v7889 = vsub.f32 %v6993, %v7505
          %v7890 = vsub.f32 %v6994, %v7506
          %v7891 = vsub.f32 %v6995, %v7507
          %v7892 = vsub.f32 %v6996, %v7508
          %v7893 = vsub.f32 %v6997, %v7509
          %v7894 = vsub.f32 %v6998, %v7510
          %v7895 = vsub.f32 %v6999, %v7511
          %v7896 = vsub.f32 %v7000, %v7512
          %v7897 = vsub.f32 %v7001, %v7513
          %v7898 = vsub.f32 %v7002, %v7514
          %v7899 = vsub.f32 %v7003, %v7515
          %v7900 = vsub.f32 %v7004, %v7516
          %v7901 = vsub.f32 %v7005, %v7517
          %v7902 = vsub.f32 %v7006, %v7518
          %v7903 = vsub.f32 %v7007, %v7519
          %v7904 = vld [vmem:[%s5] sm:$0xff]
          %v7905 = vld [vmem:[%s5 + $0x8] sm:$0xff]
          %v7906 = vld [vmem:[%s5 + $0x10] sm:$0xff]
          %v7907 = vld [vmem:[%s5 + $0x18] sm:$0xff]
          %v7908 = vld [vmem:[%s5 + $0x20] sm:$0xff]
          %v7909 = vld [vmem:[%s5 + $0x28] sm:$0xff]
          %v7910 = vld [vmem:[%s5 + $0x30] sm:$0xff]
          %v7911 = vld [vmem:[%s5 + $0x38] sm:$0xff]
          %v7912 = vld [vmem:[%s5 + $0x40] sm:$0xff]
          %v7913 = vld [vmem:[%s5 + $0x48] sm:$0xff]
          %v7914 = vld [vmem:[%s5 + $0x50] sm:$0xff]
          %v7915 = vld [vmem:[%s5 + $0x58] sm:$0xff]
          %v7916 = vld [vmem:[%s5 + $0x60] sm:$0xff]
          %v7917 = vld [vmem:[%s5 + $0x68] sm:$0xff]
          %v7918 = vld [vmem:[%s5 + $0x70] sm:$0xff]
          %v7919 = vld [vmem:[%s5 + $0x78] sm:$0xff]
          %v7920 = vld [vmem:[%s5 + $0x80] sm:$0xff]
          %v7921 = vld [vmem:[%s5 + $0x88] sm:$0xff]
          %v7922 = vld [vmem:[%s5 + $0x90] sm:$0xff]
          %v7923 = vld [vmem:[%s5 + $0x98] sm:$0xff]
          %v7924 = vld [vmem:[%s5 + $0xa0] sm:$0xff]
          %v7925 = vld [vmem:[%s5 + $0xa8] sm:$0xff]
          %v7926 = vld [vmem:[%s5 + $0xb0] sm:$0xff]
          %v7927 = vld [vmem:[%s5 + $0xb8] sm:$0xff]
          %v7928 = vld [vmem:[%s5 + $0xc0] sm:$0xff]
          %v7929 = vld [vmem:[%s5 + $0xc8] sm:$0xff]
          %v7930 = vld [vmem:[%s5 + $0xd0] sm:$0xff]
          %v7931 = vld [vmem:[%s5 + $0xd8] sm:$0xff]
          %v7932 = vld [vmem:[%s5 + $0xe0] sm:$0xff]
          %v7933 = vld [vmem:[%s5 + $0xe8] sm:$0xff]
          %v7934 = vld [vmem:[%s5 + $0xf0] sm:$0xff]
          %v7935 = vld [vmem:[%s5 + $0xf8] sm:$0xff]
          %v7936 = vld [vmem:[%s5 + $0x100] sm:$0xff]
          %v7937 = vld [vmem:[%s5 + $0x108] sm:$0xff]
          %v7938 = vld [vmem:[%s5 + $0x110] sm:$0xff]
          %v7939 = vld [vmem:[%s5 + $0x118] sm:$0xff]
          %v7940 = vld [vmem:[%s5 + $0x120] sm:$0xff]
          %v7941 = vld [vmem:[%s5 + $0x128] sm:$0xff]
          %v7942 = vld [vmem:[%s5 + $0x130] sm:$0xff]
          %v7943 = vld [vmem:[%s5 + $0x138] sm:$0xff]
          %v7944 = vld [vmem:[%s5 + $0x140] sm:$0xff]
          %v7945 = vld [vmem:[%s5 + $0x148] sm:$0xff]
          %v7946 = vld [vmem:[%s5 + $0x150] sm:$0xff]
          %v7947 = vld [vmem:[%s5 + $0x158] sm:$0xff]
          %v7948 = vld [vmem:[%s5 + $0x160] sm:$0xff]
          %v7949 = vld [vmem:[%s5 + $0x168] sm:$0xff]
          %v7950 = vld [vmem:[%s5 + $0x170] sm:$0xff]
          %v7951 = vld [vmem:[%s5 + $0x178] sm:$0xff]
          %v7952 = vld [vmem:[%s5 + $0x180] sm:$0xff]
          %v7953 = vld [vmem:[%s5 + $0x188] sm:$0xff]
          %v7954 = vld [vmem:[%s5 + $0x190] sm:$0xff]
          %v7955 = vld [vmem:[%s5 + $0x198] sm:$0xff]
          %v7956 = vld [vmem:[%s5 + $0x1a0] sm:$0xff]
          %v7957 = vld [vmem:[%s5 + $0x1a8] sm:$0xff]
          %v7958 = vld [vmem:[%s5 + $0x1b0] sm:$0xff]
          %v7959 = vld [vmem:[%s5 + $0x1b8] sm:$0xff]
          %v7960 = vld [vmem:[%s5 + $0x1c0] sm:$0xff]
          %v7961 = vld [vmem:[%s5 + $0x1c8] sm:$0xff]
          %v7962 = vld [vmem:[%s5 + $0x1d0] sm:$0xff]
          %v7963 = vld [vmem:[%s5 + $0x1d8] sm:$0xff]
          %v7964 = vld [vmem:[%s5 + $0x1e0] sm:$0xff]
          %v7965 = vld [vmem:[%s5 + $0x1e8] sm:$0xff]
          %v7966 = vld [vmem:[%s5 + $0x1f0] sm:$0xff]
          %v7967 = vld [vmem:[%s5 + $0x1f8] sm:$0xff]
          %v7968 = vmul.f32 %v7776, %v7904
          %v7969 = vmul.f32 %v7777, %v7905
          %v7970 = vmul.f32 %v7778, %v7906
          %v7971 = vmul.f32 %v7779, %v7907
          %v7972 = vmul.f32 %v7780, %v7908
          %v7973 = vmul.f32 %v7781, %v7909
          %v7974 = vmul.f32 %v7782, %v7910
          %v7975 = vmul.f32 %v7783, %v7911
          %v7976 = vmul.f32 %v7784, %v7912
          %v7977 = vmul.f32 %v7785, %v7913
          %v7978 = vmul.f32 %v7786, %v7914
          %v7979 = vmul.f32 %v7787, %v7915
          %v7980 = vmul.f32 %v7788, %v7916
          %v7981 = vmul.f32 %v7789, %v7917
          %v7982 = vmul.f32 %v7790, %v7918
          %v7983 = vmul.f32 %v7791, %v7919
          %v7984 = vmul.f32 %v7792, %v7920
          %v7985 = vmul.f32 %v7793, %v7921
          %v7986 = vmul.f32 %v7794, %v7922
          %v7987 = vmul.f32 %v7795, %v7923
          %v7988 = vmul.f32 %v7796, %v7924
          %v7989 = vmul.f32 %v7797, %v7925
          %v7990 = vmul.f32 %v7798, %v7926
          %v7991 = vmul.f32 %v7799, %v7927
          %v7992 = vmul.f32 %v7800, %v7928
          %v7993 = vmul.f32 %v7801, %v7929
          %v7994 = vmul.f32 %v7802, %v7930
          %v7995 = vmul.f32 %v7803, %v7931
          %v7996 = vmul.f32 %v7804, %v7932
          %v7997 = vmul.f32 %v7805, %v7933
          %v7998 = vmul.f32 %v7806, %v7934
          %v7999 = vmul.f32 %v7807, %v7935
          %v8000 = vmul.f32 %v7808, %v7936
          %v8001 = vmul.f32 %v7809, %v7937
          %v8002 = vmul.f32 %v7810, %v7938
          %v8003 = vmul.f32 %v7811, %v7939
          %v8004 = vmul.f32 %v7812, %v7940
          %v8005 = vmul.f32 %v7813, %v7941
          %v8006 = vmul.f32 %v7814, %v7942
          %v8007 = vmul.f32 %v7815, %v7943
          %v8008 = vmul.f32 %v7816, %v7944
          %v8009 = vmul.f32 %v7817, %v7945
          %v8010 = vmul.f32 %v7818, %v7946
          %v8011 = vmul.f32 %v7819, %v7947
          %v8012 = vmul.f32 %v7820, %v7948
          %v8013 = vmul.f32 %v7821, %v7949
          %v8014 = vmul.f32 %v7822, %v7950
          %v8015 = vmul.f32 %v7823, %v7951
          %v8016 = vmul.f32 %v7824, %v7952
          %v8017 = vmul.f32 %v7825, %v7953
          %v8018 = vmul.f32 %v7826, %v7954
          %v8019 = vmul.f32 %v7827, %v7955
          %v8020 = vmul.f32 %v7828, %v7956
          %v8021 = vmul.f32 %v7829, %v7957
          %v8022 = vmul.f32 %v7830, %v7958
          %v8023 = vmul.f32 %v7831, %v7959
          %v8024 = vmul.f32 %v7832, %v7960
          %v8025 = vmul.f32 %v7833, %v7961
          %v8026 = vmul.f32 %v7834, %v7962
          %v8027 = vmul.f32 %v7835, %v7963
          %v8028 = vmul.f32 %v7836, %v7964
          %v8029 = vmul.f32 %v7837, %v7965
          %v8030 = vmul.f32 %v7838, %v7966
          %v8031 = vmul.f32 %v7839, %v7967
          %8033 = vset.pattern.permute.xlu0 0
          %8034 = vperm.xlu0 %8033, %v7968
          %v8035 = vpop.permute.xlu0 %8034
          %8038 = vset.pattern.permute.xlu0 0
          %8039 = vperm.xlu0 %8038, %v7969
          %v8040 = vpop.permute.xlu0 %8039
          %8043 = vset.pattern.permute.xlu0 0
          %8044 = vperm.xlu0 %8043, %v7970
          %v8045 = vpop.permute.xlu0 %8044
          %8048 = vset.pattern.permute.xlu0 0
          %8049 = vperm.xlu0 %8048, %v7971
          %v8050 = vpop.permute.xlu0 %8049
          %8053 = vset.pattern.permute.xlu0 0
          %8054 = vperm.xlu0 %8053, %v7972
          %v8055 = vpop.permute.xlu0 %8054
          %8058 = vset.pattern.permute.xlu0 0
          %8059 = vperm.xlu0 %8058, %v7973
          %v8060 = vpop.permute.xlu0 %8059
          %8063 = vset.pattern.permute.xlu0 0
          %8064 = vperm.xlu0 %8063, %v7974
          %v8065 = vpop.permute.xlu0 %8064
          %8068 = vset.pattern.permute.xlu0 0
          %8069 = vperm.xlu0 %8068, %v7975
          %v8070 = vpop.permute.xlu0 %8069
          %8073 = vset.pattern.permute.xlu0 0
          %8074 = vperm.xlu0 %8073, %v7976
          %v8075 = vpop.permute.xlu0 %8074
          %8078 = vset.pattern.permute.xlu0 0
          %8079 = vperm.xlu0 %8078, %v7977
          %v8080 = vpop.permute.xlu0 %8079
          %8083 = vset.pattern.permute.xlu0 0
          %8084 = vperm.xlu0 %8083, %v7978
          %v8085 = vpop.permute.xlu0 %8084
          %8088 = vset.pattern.permute.xlu0 0
          %8089 = vperm.xlu0 %8088, %v7979
          %v8090 = vpop.permute.xlu0 %8089
          %8093 = vset.pattern.permute.xlu0 0
          %8094 = vperm.xlu0 %8093, %v7980
          %v8095 = vpop.permute.xlu0 %8094
          %8098 = vset.pattern.permute.xlu0 0
          %8099 = vperm.xlu0 %8098, %v7981
          %v8100 = vpop.permute.xlu0 %8099
          %8103 = vset.pattern.permute.xlu0 0
          %8104 = vperm.xlu0 %8103, %v7982
          %v8105 = vpop.permute.xlu0 %8104
          %8108 = vset.pattern.permute.xlu0 0
          %8109 = vperm.xlu0 %8108, %v7983
          %v8110 = vpop.permute.xlu0 %8109
          %8113 = vset.pattern.permute.xlu0 0
          %8114 = vperm.xlu0 %8113, %v7984
          %v8115 = vpop.permute.xlu0 %8114
          %8118 = vset.pattern.permute.xlu0 0
          %8119 = vperm.xlu0 %8118, %v7985
          %v8120 = vpop.permute.xlu0 %8119
          %8123 = vset.pattern.permute.xlu0 0
          %8124 = vperm.xlu0 %8123, %v7986
          %v8125 = vpop.permute.xlu0 %8124
          %8128 = vset.pattern.permute.xlu0 0
          %8129 = vperm.xlu0 %8128, %v7987
          %v8130 = vpop.permute.xlu0 %8129
          %8133 = vset.pattern.permute.xlu0 0
          %8134 = vperm.xlu0 %8133, %v7988
          %v8135 = vpop.permute.xlu0 %8134
          %8138 = vset.pattern.permute.xlu0 0
          %8139 = vperm.xlu0 %8138, %v7989
          %v8140 = vpop.permute.xlu0 %8139
          %8143 = vset.pattern.permute.xlu0 0
          %8144 = vperm.xlu0 %8143, %v7990
          %v8145 = vpop.permute.xlu0 %8144
          %8148 = vset.pattern.permute.xlu0 0
          %8149 = vperm.xlu0 %8148, %v7991
          %v8150 = vpop.permute.xlu0 %8149
          %8153 = vset.pattern.permute.xlu0 0
          %8154 = vperm.xlu0 %8153, %v7992
          %v8155 = vpop.permute.xlu0 %8154
          %8158 = vset.pattern.permute.xlu0 0
          %8159 = vperm.xlu0 %8158, %v7993
          %v8160 = vpop.permute.xlu0 %8159
          %8163 = vset.pattern.permute.xlu0 0
          %8164 = vperm.xlu0 %8163, %v7994
          %v8165 = vpop.permute.xlu0 %8164
          %8168 = vset.pattern.permute.xlu0 0
          %8169 = vperm.xlu0 %8168, %v7995
          %v8170 = vpop.permute.xlu0 %8169
          %8173 = vset.pattern.permute.xlu0 0
          %8174 = vperm.xlu0 %8173, %v7996
          %v8175 = vpop.permute.xlu0 %8174
          %8178 = vset.pattern.permute.xlu0 0
          %8179 = vperm.xlu0 %8178, %v7997
          %v8180 = vpop.permute.xlu0 %8179
          %8183 = vset.pattern.permute.xlu0 0
          %8184 = vperm.xlu0 %8183, %v7998
          %v8185 = vpop.permute.xlu0 %8184
          %8188 = vset.pattern.permute.xlu0 0
          %8189 = vperm.xlu0 %8188, %v7999
          %v8190 = vpop.permute.xlu0 %8189
          %8193 = vset.pattern.permute.xlu0 0
          %8194 = vperm.xlu0 %8193, %v8000
          %v8195 = vpop.permute.xlu0 %8194
          %8198 = vset.pattern.permute.xlu0 0
          %8199 = vperm.xlu0 %8198, %v8001
          %v8200 = vpop.permute.xlu0 %8199
          %8203 = vset.pattern.permute.xlu0 0
          %8204 = vperm.xlu0 %8203, %v8002
          %v8205 = vpop.permute.xlu0 %8204
          %8208 = vset.pattern.permute.xlu0 0
          %8209 = vperm.xlu0 %8208, %v8003
          %v8210 = vpop.permute.xlu0 %8209
          %8213 = vset.pattern.permute.xlu0 0
          %8214 = vperm.xlu0 %8213, %v8004
          %v8215 = vpop.permute.xlu0 %8214
          %8218 = vset.pattern.permute.xlu0 0
          %8219 = vperm.xlu0 %8218, %v8005
          %v8220 = vpop.permute.xlu0 %8219
          %8223 = vset.pattern.permute.xlu0 0
          %8224 = vperm.xlu0 %8223, %v8006
          %v8225 = vpop.permute.xlu0 %8224
          %8228 = vset.pattern.permute.xlu0 0
          %8229 = vperm.xlu0 %8228, %v8007
          %v8230 = vpop.permute.xlu0 %8229
          %8233 = vset.pattern.permute.xlu0 0
          %8234 = vperm.xlu0 %8233, %v8008
          %v8235 = vpop.permute.xlu0 %8234
          %8238 = vset.pattern.permute.xlu0 0
          %8239 = vperm.xlu0 %8238, %v8009
          %v8240 = vpop.permute.xlu0 %8239
          %8243 = vset.pattern.permute.xlu0 0
          %8244 = vperm.xlu0 %8243, %v8010
          %v8245 = vpop.permute.xlu0 %8244
          %8248 = vset.pattern.permute.xlu0 0
          %8249 = vperm.xlu0 %8248, %v8011
          %v8250 = vpop.permute.xlu0 %8249
          %8253 = vset.pattern.permute.xlu0 0
          %8254 = vperm.xlu0 %8253, %v8012
          %v8255 = vpop.permute.xlu0 %8254
          %8258 = vset.pattern.permute.xlu0 0
          %8259 = vperm.xlu0 %8258, %v8013
          %v8260 = vpop.permute.xlu0 %8259
          %8263 = vset.pattern.permute.xlu0 0
          %8264 = vperm.xlu0 %8263, %v8014
          %v8265 = vpop.permute.xlu0 %8264
          %8268 = vset.pattern.permute.xlu0 0
          %8269 = vperm.xlu0 %8268, %v8015
          %v8270 = vpop.permute.xlu0 %8269
          %8273 = vset.pattern.permute.xlu0 0
          %8274 = vperm.xlu0 %8273, %v8016
          %v8275 = vpop.permute.xlu0 %8274
          %8278 = vset.pattern.permute.xlu0 0
          %8279 = vperm.xlu0 %8278, %v8017
          %v8280 = vpop.permute.xlu0 %8279
          %8283 = vset.pattern.permute.xlu0 0
          %8284 = vperm.xlu0 %8283, %v8018
          %v8285 = vpop.permute.xlu0 %8284
          %8288 = vset.pattern.permute.xlu0 0
          %8289 = vperm.xlu0 %8288, %v8019
          %v8290 = vpop.permute.xlu0 %8289
          %8293 = vset.pattern.permute.xlu0 0
          %8294 = vperm.xlu0 %8293, %v8020
          %v8295 = vpop.permute.xlu0 %8294
          %8298 = vset.pattern.permute.xlu0 0
          %8299 = vperm.xlu0 %8298, %v8021
          %v8300 = vpop.permute.xlu0 %8299
          %8303 = vset.pattern.permute.xlu0 0
          %8304 = vperm.xlu0 %8303, %v8022
          %v8305 = vpop.permute.xlu0 %8304
          %8308 = vset.pattern.permute.xlu0 0
          %8309 = vperm.xlu0 %8308, %v8023
          %v8310 = vpop.permute.xlu0 %8309
          %8313 = vset.pattern.permute.xlu0 0
          %8314 = vperm.xlu0 %8313, %v8024
          %v8315 = vpop.permute.xlu0 %8314
          %8318 = vset.pattern.permute.xlu0 0
          %8319 = vperm.xlu0 %8318, %v8025
          %v8320 = vpop.permute.xlu0 %8319
          %8323 = vset.pattern.permute.xlu0 0
          %8324 = vperm.xlu0 %8323, %v8026
          %v8325 = vpop.permute.xlu0 %8324
          %8328 = vset.pattern.permute.xlu0 0
          %8329 = vperm.xlu0 %8328, %v8027
          %v8330 = vpop.permute.xlu0 %8329
          %8333 = vset.pattern.permute.xlu0 0
          %8334 = vperm.xlu0 %8333, %v8028
          %v8335 = vpop.permute.xlu0 %8334
          %8338 = vset.pattern.permute.xlu0 0
          %8339 = vperm.xlu0 %8338, %v8029
          %v8340 = vpop.permute.xlu0 %8339
          %8343 = vset.pattern.permute.xlu0 0
          %8344 = vperm.xlu0 %8343, %v8030
          %v8345 = vpop.permute.xlu0 %8344
          %8348 = vset.pattern.permute.xlu0 0
          %8349 = vperm.xlu0 %8348, %v8031
          %v8350 = vpop.permute.xlu0 %8349
          %v8352 = vmul.f32 %v7840, %v8035
          %v8353 = vmul.f32 %v7841, %v8040
          %v8354 = vmul.f32 %v7842, %v8045
          %v8355 = vmul.f32 %v7843, %v8050
          %v8356 = vmul.f32 %v7844, %v8055
          %v8357 = vmul.f32 %v7845, %v8060
          %v8358 = vmul.f32 %v7846, %v8065
          %v8359 = vmul.f32 %v7847, %v8070
          %v8360 = vmul.f32 %v7848, %v8075
          %v8361 = vmul.f32 %v7849, %v8080
          %v8362 = vmul.f32 %v7850, %v8085
          %v8363 = vmul.f32 %v7851, %v8090
          %v8364 = vmul.f32 %v7852, %v8095
          %v8365 = vmul.f32 %v7853, %v8100
          %v8366 = vmul.f32 %v7854, %v8105
          %v8367 = vmul.f32 %v7855, %v8110
          %v8368 = vmul.f32 %v7856, %v8115
          %v8369 = vmul.f32 %v7857, %v8120
          %v8370 = vmul.f32 %v7858, %v8125
          %v8371 = vmul.f32 %v7859, %v8130
          %v8372 = vmul.f32 %v7860, %v8135
          %v8373 = vmul.f32 %v7861, %v8140
          %v8374 = vmul.f32 %v7862, %v8145
          %v8375 = vmul.f32 %v7863, %v8150
          %v8376 = vmul.f32 %v7864, %v8155
          %v8377 = vmul.f32 %v7865, %v8160
          %v8378 = vmul.f32 %v7866, %v8165
          %v8379 = vmul.f32 %v7867, %v8170
          %v8380 = vmul.f32 %v7868, %v8175
          %v8381 = vmul.f32 %v7869, %v8180
          %v8382 = vmul.f32 %v7870, %v8185
          %v8383 = vmul.f32 %v7871, %v8190
          %v8384 = vmul.f32 %v7872, %v8195
          %v8385 = vmul.f32 %v7873, %v8200
          %v8386 = vmul.f32 %v7874, %v8205
          %v8387 = vmul.f32 %v7875, %v8210
          %v8388 = vmul.f32 %v7876, %v8215
          %v8389 = vmul.f32 %v7877, %v8220
          %v8390 = vmul.f32 %v7878, %v8225
          %v8391 = vmul.f32 %v7879, %v8230
          %v8392 = vmul.f32 %v7880, %v8235
          %v8393 = vmul.f32 %v7881, %v8240
          %v8394 = vmul.f32 %v7882, %v8245
          %v8395 = vmul.f32 %v7883, %v8250
          %v8396 = vmul.f32 %v7884, %v8255
          %v8397 = vmul.f32 %v7885, %v8260
          %v8398 = vmul.f32 %v7886, %v8265
          %v8399 = vmul.f32 %v7887, %v8270
          %v8400 = vmul.f32 %v7888, %v8275
          %v8401 = vmul.f32 %v7889, %v8280
          %v8402 = vmul.f32 %v7890, %v8285
          %v8403 = vmul.f32 %v7891, %v8290
          %v8404 = vmul.f32 %v7892, %v8295
          %v8405 = vmul.f32 %v7893, %v8300
          %v8406 = vmul.f32 %v7894, %v8305
          %v8407 = vmul.f32 %v7895, %v8310
          %v8408 = vmul.f32 %v7896, %v8315
          %v8409 = vmul.f32 %v7897, %v8320
          %v8410 = vmul.f32 %v7898, %v8325
          %v8411 = vmul.f32 %v7899, %v8330
          %v8412 = vmul.f32 %v7900, %v8335
          %v8413 = vmul.f32 %v7901, %v8340
          %v8414 = vmul.f32 %v7902, %v8345
          %v8415 = vmul.f32 %v7903, %v8350
          %v8416 = vld [vmem:[%s6] sm:$0xff]
          %v8417 = vld [vmem:[%s6 + $0x8] sm:$0xff]
          %v8418 = vld [vmem:[%s6 + $0x10] sm:$0xff]
          %v8419 = vld [vmem:[%s6 + $0x18] sm:$0xff]
          %v8420 = vld [vmem:[%s6 + $0x20] sm:$0xff]
          %v8421 = vld [vmem:[%s6 + $0x28] sm:$0xff]
          %v8422 = vld [vmem:[%s6 + $0x30] sm:$0xff]
          %v8423 = vld [vmem:[%s6 + $0x38] sm:$0xff]
          %v8424 = vld [vmem:[%s6 + $0x40] sm:$0xff]
          %v8425 = vld [vmem:[%s6 + $0x48] sm:$0xff]
          %v8426 = vld [vmem:[%s6 + $0x50] sm:$0xff]
          %v8427 = vld [vmem:[%s6 + $0x58] sm:$0xff]
          %v8428 = vld [vmem:[%s6 + $0x60] sm:$0xff]
          %v8429 = vld [vmem:[%s6 + $0x68] sm:$0xff]
          %v8430 = vld [vmem:[%s6 + $0x70] sm:$0xff]
          %v8431 = vld [vmem:[%s6 + $0x78] sm:$0xff]
          %v8432 = vld [vmem:[%s6 + $0x80] sm:$0xff]
          %v8433 = vld [vmem:[%s6 + $0x88] sm:$0xff]
          %v8434 = vld [vmem:[%s6 + $0x90] sm:$0xff]
          %v8435 = vld [vmem:[%s6 + $0x98] sm:$0xff]
          %v8436 = vld [vmem:[%s6 + $0xa0] sm:$0xff]
          %v8437 = vld [vmem:[%s6 + $0xa8] sm:$0xff]
          %v8438 = vld [vmem:[%s6 + $0xb0] sm:$0xff]
          %v8439 = vld [vmem:[%s6 + $0xb8] sm:$0xff]
          %v8440 = vld [vmem:[%s6 + $0xc0] sm:$0xff]
          %v8441 = vld [vmem:[%s6 + $0xc8] sm:$0xff]
          %v8442 = vld [vmem:[%s6 + $0xd0] sm:$0xff]
          %v8443 = vld [vmem:[%s6 + $0xd8] sm:$0xff]
          %v8444 = vld [vmem:[%s6 + $0xe0] sm:$0xff]
          %v8445 = vld [vmem:[%s6 + $0xe8] sm:$0xff]
          %v8446 = vld [vmem:[%s6 + $0xf0] sm:$0xff]
          %v8447 = vld [vmem:[%s6 + $0xf8] sm:$0xff]
          %v8448 = vld [vmem:[%s6 + $0x100] sm:$0xff]
          %v8449 = vld [vmem:[%s6 + $0x108] sm:$0xff]
          %v8450 = vld [vmem:[%s6 + $0x110] sm:$0xff]
          %v8451 = vld [vmem:[%s6 + $0x118] sm:$0xff]
          %v8452 = vld [vmem:[%s6 + $0x120] sm:$0xff]
          %v8453 = vld [vmem:[%s6 + $0x128] sm:$0xff]
          %v8454 = vld [vmem:[%s6 + $0x130] sm:$0xff]
          %v8455 = vld [vmem:[%s6 + $0x138] sm:$0xff]
          %v8456 = vld [vmem:[%s6 + $0x140] sm:$0xff]
          %v8457 = vld [vmem:[%s6 + $0x148] sm:$0xff]
          %v8458 = vld [vmem:[%s6 + $0x150] sm:$0xff]
          %v8459 = vld [vmem:[%s6 + $0x158] sm:$0xff]
          %v8460 = vld [vmem:[%s6 + $0x160] sm:$0xff]
          %v8461 = vld [vmem:[%s6 + $0x168] sm:$0xff]
          %v8462 = vld [vmem:[%s6 + $0x170] sm:$0xff]
          %v8463 = vld [vmem:[%s6 + $0x178] sm:$0xff]
          %v8464 = vld [vmem:[%s6 + $0x180] sm:$0xff]
          %v8465 = vld [vmem:[%s6 + $0x188] sm:$0xff]
          %v8466 = vld [vmem:[%s6 + $0x190] sm:$0xff]
          %v8467 = vld [vmem:[%s6 + $0x198] sm:$0xff]
          %v8468 = vld [vmem:[%s6 + $0x1a0] sm:$0xff]
          %v8469 = vld [vmem:[%s6 + $0x1a8] sm:$0xff]
          %v8470 = vld [vmem:[%s6 + $0x1b0] sm:$0xff]
          %v8471 = vld [vmem:[%s6 + $0x1b8] sm:$0xff]
          %v8472 = vld [vmem:[%s6 + $0x1c0] sm:$0xff]
          %v8473 = vld [vmem:[%s6 + $0x1c8] sm:$0xff]
          %v8474 = vld [vmem:[%s6 + $0x1d0] sm:$0xff]
          %v8475 = vld [vmem:[%s6 + $0x1d8] sm:$0xff]
          %v8476 = vld [vmem:[%s6 + $0x1e0] sm:$0xff]
          %v8477 = vld [vmem:[%s6 + $0x1e8] sm:$0xff]
          %v8478 = vld [vmem:[%s6 + $0x1f0] sm:$0xff]
          %v8479 = vld [vmem:[%s6 + $0x1f8] sm:$0xff]
          %8481 = vset.pattern.permute.xlu0 0
          %8482 = vperm.xlu0 %8481, %v8416
          %v8483 = vpop.permute.xlu0 %8482
          %8486 = vset.pattern.permute.xlu0 0
          %8487 = vperm.xlu0 %8486, %v8417
          %v8488 = vpop.permute.xlu0 %8487
          %8491 = vset.pattern.permute.xlu0 0
          %8492 = vperm.xlu0 %8491, %v8418
          %v8493 = vpop.permute.xlu0 %8492
          %8496 = vset.pattern.permute.xlu0 0
          %8497 = vperm.xlu0 %8496, %v8419
          %v8498 = vpop.permute.xlu0 %8497
          %8501 = vset.pattern.permute.xlu0 0
          %8502 = vperm.xlu0 %8501, %v8420
          %v8503 = vpop.permute.xlu0 %8502
          %8506 = vset.pattern.permute.xlu0 0
          %8507 = vperm.xlu0 %8506, %v8421
          %v8508 = vpop.permute.xlu0 %8507
          %8511 = vset.pattern.permute.xlu0 0
          %8512 = vperm.xlu0 %8511, %v8422
          %v8513 = vpop.permute.xlu0 %8512
          %8516 = vset.pattern.permute.xlu0 0
          %8517 = vperm.xlu0 %8516, %v8423
          %v8518 = vpop.permute.xlu0 %8517
          %8521 = vset.pattern.permute.xlu0 0
          %8522 = vperm.xlu0 %8521, %v8424
          %v8523 = vpop.permute.xlu0 %8522
          %8526 = vset.pattern.permute.xlu0 0
          %8527 = vperm.xlu0 %8526, %v8425
          %v8528 = vpop.permute.xlu0 %8527
          %8531 = vset.pattern.permute.xlu0 0
          %8532 = vperm.xlu0 %8531, %v8426
          %v8533 = vpop.permute.xlu0 %8532
          %8536 = vset.pattern.permute.xlu0 0
          %8537 = vperm.xlu0 %8536, %v8427
          %v8538 = vpop.permute.xlu0 %8537
          %8541 = vset.pattern.permute.xlu0 0
          %8542 = vperm.xlu0 %8541, %v8428
          %v8543 = vpop.permute.xlu0 %8542
          %8546 = vset.pattern.permute.xlu0 0
          %8547 = vperm.xlu0 %8546, %v8429
          %v8548 = vpop.permute.xlu0 %8547
          %8551 = vset.pattern.permute.xlu0 0
          %8552 = vperm.xlu0 %8551, %v8430
          %v8553 = vpop.permute.xlu0 %8552
          %8556 = vset.pattern.permute.xlu0 0
          %8557 = vperm.xlu0 %8556, %v8431
          %v8558 = vpop.permute.xlu0 %8557
          %8561 = vset.pattern.permute.xlu0 0
          %8562 = vperm.xlu0 %8561, %v8432
          %v8563 = vpop.permute.xlu0 %8562
          %8566 = vset.pattern.permute.xlu0 0
          %8567 = vperm.xlu0 %8566, %v8433
          %v8568 = vpop.permute.xlu0 %8567
          %8571 = vset.pattern.permute.xlu0 0
          %8572 = vperm.xlu0 %8571, %v8434
          %v8573 = vpop.permute.xlu0 %8572
          %8576 = vset.pattern.permute.xlu0 0
          %8577 = vperm.xlu0 %8576, %v8435
          %v8578 = vpop.permute.xlu0 %8577
          %8581 = vset.pattern.permute.xlu0 0
          %8582 = vperm.xlu0 %8581, %v8436
          %v8583 = vpop.permute.xlu0 %8582
          %8586 = vset.pattern.permute.xlu0 0
          %8587 = vperm.xlu0 %8586, %v8437
          %v8588 = vpop.permute.xlu0 %8587
          %8591 = vset.pattern.permute.xlu0 0
          %8592 = vperm.xlu0 %8591, %v8438
          %v8593 = vpop.permute.xlu0 %8592
          %8596 = vset.pattern.permute.xlu0 0
          %8597 = vperm.xlu0 %8596, %v8439
          %v8598 = vpop.permute.xlu0 %8597
          %8601 = vset.pattern.permute.xlu0 0
          %8602 = vperm.xlu0 %8601, %v8440
          %v8603 = vpop.permute.xlu0 %8602
          %8606 = vset.pattern.permute.xlu0 0
          %8607 = vperm.xlu0 %8606, %v8441
          %v8608 = vpop.permute.xlu0 %8607
          %8611 = vset.pattern.permute.xlu0 0
          %8612 = vperm.xlu0 %8611, %v8442
          %v8613 = vpop.permute.xlu0 %8612
          %8616 = vset.pattern.permute.xlu0 0
          %8617 = vperm.xlu0 %8616, %v8443
          %v8618 = vpop.permute.xlu0 %8617
          %8621 = vset.pattern.permute.xlu0 0
          %8622 = vperm.xlu0 %8621, %v8444
          %v8623 = vpop.permute.xlu0 %8622
          %8626 = vset.pattern.permute.xlu0 0
          %8627 = vperm.xlu0 %8626, %v8445
          %v8628 = vpop.permute.xlu0 %8627
          %8631 = vset.pattern.permute.xlu0 0
          %8632 = vperm.xlu0 %8631, %v8446
          %v8633 = vpop.permute.xlu0 %8632
          %8636 = vset.pattern.permute.xlu0 0
          %8637 = vperm.xlu0 %8636, %v8447
          %v8638 = vpop.permute.xlu0 %8637
          %8641 = vset.pattern.permute.xlu0 0
          %8642 = vperm.xlu0 %8641, %v8448
          %v8643 = vpop.permute.xlu0 %8642
          %8646 = vset.pattern.permute.xlu0 0
          %8647 = vperm.xlu0 %8646, %v8449
          %v8648 = vpop.permute.xlu0 %8647
          %8651 = vset.pattern.permute.xlu0 0
          %8652 = vperm.xlu0 %8651, %v8450
          %v8653 = vpop.permute.xlu0 %8652
          %8656 = vset.pattern.permute.xlu0 0
          %8657 = vperm.xlu0 %8656, %v8451
          %v8658 = vpop.permute.xlu0 %8657
          %8661 = vset.pattern.permute.xlu0 0
          %8662 = vperm.xlu0 %8661, %v8452
          %v8663 = vpop.permute.xlu0 %8662
          %8666 = vset.pattern.permute.xlu0 0
          %8667 = vperm.xlu0 %8666, %v8453
          %v8668 = vpop.permute.xlu0 %8667
          %8671 = vset.pattern.permute.xlu0 0
          %8672 = vperm.xlu0 %8671, %v8454
          %v8673 = vpop.permute.xlu0 %8672
          %8676 = vset.pattern.permute.xlu0 0
          %8677 = vperm.xlu0 %8676, %v8455
          %v8678 = vpop.permute.xlu0 %8677
          %8681 = vset.pattern.permute.xlu0 0
          %8682 = vperm.xlu0 %8681, %v8456
          %v8683 = vpop.permute.xlu0 %8682
          %8686 = vset.pattern.permute.xlu0 0
          %8687 = vperm.xlu0 %8686, %v8457
          %v8688 = vpop.permute.xlu0 %8687
          %8691 = vset.pattern.permute.xlu0 0
          %8692 = vperm.xlu0 %8691, %v8458
          %v8693 = vpop.permute.xlu0 %8692
          %8696 = vset.pattern.permute.xlu0 0
          %8697 = vperm.xlu0 %8696, %v8459
          %v8698 = vpop.permute.xlu0 %8697
          %8701 = vset.pattern.permute.xlu0 0
          %8702 = vperm.xlu0 %8701, %v8460
          %v8703 = vpop.permute.xlu0 %8702
          %8706 = vset.pattern.permute.xlu0 0
          %8707 = vperm.xlu0 %8706, %v8461
          %v8708 = vpop.permute.xlu0 %8707
          %8711 = vset.pattern.permute.xlu0 0
          %8712 = vperm.xlu0 %8711, %v8462
          %v8713 = vpop.permute.xlu0 %8712
          %8716 = vset.pattern.permute.xlu0 0
          %8717 = vperm.xlu0 %8716, %v8463
          %v8718 = vpop.permute.xlu0 %8717
          %8721 = vset.pattern.permute.xlu0 0
          %8722 = vperm.xlu0 %8721, %v8464
          %v8723 = vpop.permute.xlu0 %8722
          %8726 = vset.pattern.permute.xlu0 0
          %8727 = vperm.xlu0 %8726, %v8465
          %v8728 = vpop.permute.xlu0 %8727
          %8731 = vset.pattern.permute.xlu0 0
          %8732 = vperm.xlu0 %8731, %v8466
          %v8733 = vpop.permute.xlu0 %8732
          %8736 = vset.pattern.permute.xlu0 0
          %8737 = vperm.xlu0 %8736, %v8467
          %v8738 = vpop.permute.xlu0 %8737
          %8741 = vset.pattern.permute.xlu0 0
          %8742 = vperm.xlu0 %8741, %v8468
          %v8743 = vpop.permute.xlu0 %8742
          %8746 = vset.pattern.permute.xlu0 0
          %8747 = vperm.xlu0 %8746, %v8469
          %v8748 = vpop.permute.xlu0 %8747
          %8751 = vset.pattern.permute.xlu0 0
          %8752 = vperm.xlu0 %8751, %v8470
          %v8753 = vpop.permute.xlu0 %8752
          %8756 = vset.pattern.permute.xlu0 0
          %8757 = vperm.xlu0 %8756, %v8471
          %v8758 = vpop.permute.xlu0 %8757
          %8761 = vset.pattern.permute.xlu0 0
          %8762 = vperm.xlu0 %8761, %v8472
          %v8763 = vpop.permute.xlu0 %8762
          %8766 = vset.pattern.permute.xlu0 0
          %8767 = vperm.xlu0 %8766, %v8473
          %v8768 = vpop.permute.xlu0 %8767
          %8771 = vset.pattern.permute.xlu0 0
          %8772 = vperm.xlu0 %8771, %v8474
          %v8773 = vpop.permute.xlu0 %8772
          %8776 = vset.pattern.permute.xlu0 0
          %8777 = vperm.xlu0 %8776, %v8475
          %v8778 = vpop.permute.xlu0 %8777
          %8781 = vset.pattern.permute.xlu0 0
          %8782 = vperm.xlu0 %8781, %v8476
          %v8783 = vpop.permute.xlu0 %8782
          %8786 = vset.pattern.permute.xlu0 0
          %8787 = vperm.xlu0 %8786, %v8477
          %v8788 = vpop.permute.xlu0 %8787
          %8791 = vset.pattern.permute.xlu0 0
          %8792 = vperm.xlu0 %8791, %v8478
          %v8793 = vpop.permute.xlu0 %8792
          %8796 = vset.pattern.permute.xlu0 0
          %8797 = vperm.xlu0 %8796, %v8479
          %v8798 = vpop.permute.xlu0 %8797
          %v8800 = vadd.f32 %v8352, %v8483
          %v8801 = vadd.f32 %v8353, %v8488
          %v8802 = vadd.f32 %v8354, %v8493
          %v8803 = vadd.f32 %v8355, %v8498
          %v8804 = vadd.f32 %v8356, %v8503
          %v8805 = vadd.f32 %v8357, %v8508
          %v8806 = vadd.f32 %v8358, %v8513
          %v8807 = vadd.f32 %v8359, %v8518
          %v8808 = vadd.f32 %v8360, %v8523
          %v8809 = vadd.f32 %v8361, %v8528
          %v8810 = vadd.f32 %v8362, %v8533
          %v8811 = vadd.f32 %v8363, %v8538
          %v8812 = vadd.f32 %v8364, %v8543
          %v8813 = vadd.f32 %v8365, %v8548
          %v8814 = vadd.f32 %v8366, %v8553
          %v8815 = vadd.f32 %v8367, %v8558
          %v8816 = vadd.f32 %v8368, %v8563
          %v8817 = vadd.f32 %v8369, %v8568
          %v8818 = vadd.f32 %v8370, %v8573
          %v8819 = vadd.f32 %v8371, %v8578
          %v8820 = vadd.f32 %v8372, %v8583
          %v8821 = vadd.f32 %v8373, %v8588
          %v8822 = vadd.f32 %v8374, %v8593
          %v8823 = vadd.f32 %v8375, %v8598
          %v8824 = vadd.f32 %v8376, %v8603
          %v8825 = vadd.f32 %v8377, %v8608
          %v8826 = vadd.f32 %v8378, %v8613
          %v8827 = vadd.f32 %v8379, %v8618
          %v8828 = vadd.f32 %v8380, %v8623
          %v8829 = vadd.f32 %v8381, %v8628
          %v8830 = vadd.f32 %v8382, %v8633
          %v8831 = vadd.f32 %v8383, %v8638
          %v8832 = vadd.f32 %v8384, %v8643
          %v8833 = vadd.f32 %v8385, %v8648
          %v8834 = vadd.f32 %v8386, %v8653
          %v8835 = vadd.f32 %v8387, %v8658
          %v8836 = vadd.f32 %v8388, %v8663
          %v8837 = vadd.f32 %v8389, %v8668
          %v8838 = vadd.f32 %v8390, %v8673
          %v8839 = vadd.f32 %v8391, %v8678
          %v8840 = vadd.f32 %v8392, %v8683
          %v8841 = vadd.f32 %v8393, %v8688
          %v8842 = vadd.f32 %v8394, %v8693
          %v8843 = vadd.f32 %v8395, %v8698
          %v8844 = vadd.f32 %v8396, %v8703
          %v8845 = vadd.f32 %v8397, %v8708
          %v8846 = vadd.f32 %v8398, %v8713
          %v8847 = vadd.f32 %v8399, %v8718
          %v8848 = vadd.f32 %v8400, %v8723
          %v8849 = vadd.f32 %v8401, %v8728
          %v8850 = vadd.f32 %v8402, %v8733
          %v8851 = vadd.f32 %v8403, %v8738
          %v8852 = vadd.f32 %v8404, %v8743
          %v8853 = vadd.f32 %v8405, %v8748
          %v8854 = vadd.f32 %v8406, %v8753
          %v8855 = vadd.f32 %v8407, %v8758
          %v8856 = vadd.f32 %v8408, %v8763
          %v8857 = vadd.f32 %v8409, %v8768
          %v8858 = vadd.f32 %v8410, %v8773
          %v8859 = vadd.f32 %v8411, %v8778
          %v8860 = vadd.f32 %v8412, %v8783
          %v8861 = vadd.f32 %v8413, %v8788
          %v8862 = vadd.f32 %v8414, %v8793
          %v8863 = vadd.f32 %v8415, %v8798
          %8864 = vst.msk [vmem:[%s7] sm:$0xff] %vm6875, %v8800
          %8865 = vst.msk [vmem:[%s7 + $0x8] sm:$0xff] %vm6875, %v8801
          %8866 = vst.msk [vmem:[%s7 + $0x10] sm:$0xff] %vm6875, %v8802
          %8867 = vst.msk [vmem:[%s7 + $0x18] sm:$0xff] %vm6875, %v8803
          %8868 = vst.msk [vmem:[%s7 + $0x20] sm:$0xff] %vm6875, %v8804
          %8869 = vst.msk [vmem:[%s7 + $0x28] sm:$0xff] %vm6875, %v8805
          %8870 = vst.msk [vmem:[%s7 + $0x30] sm:$0xff] %vm6875, %v8806
          %8871 = vst.msk [vmem:[%s7 + $0x38] sm:$0xff] %vm6875, %v8807
          %8872 = vst.msk [vmem:[%s7 + $0x40] sm:$0xff] %vm6875, %v8808
          %8873 = vst.msk [vmem:[%s7 + $0x48] sm:$0xff] %vm6875, %v8809
          %8874 = vst.msk [vmem:[%s7 + $0x50] sm:$0xff] %vm6875, %v8810
          %8875 = vst.msk [vmem:[%s7 + $0x58] sm:$0xff] %vm6875, %v8811
          %8876 = vst.msk [vmem:[%s7 + $0x60] sm:$0xff] %vm6875, %v8812
          %8877 = vst.msk [vmem:[%s7 + $0x68] sm:$0xff] %vm6875, %v8813
          %8878 = vst.msk [vmem:[%s7 + $0x70] sm:$0xff] %vm6875, %v8814
          %8879 = vst.msk [vmem:[%s7 + $0x78] sm:$0xff] %vm6875, %v8815
          %8880 = vst.msk [vmem:[%s7 + $0x80] sm:$0xff] %vm6875, %v8816
          %8881 = vst.msk [vmem:[%s7 + $0x88] sm:$0xff] %vm6875, %v8817
          %8882 = vst.msk [vmem:[%s7 + $0x90] sm:$0xff] %vm6875, %v8818
          %8883 = vst.msk [vmem:[%s7 + $0x98] sm:$0xff] %vm6875, %v8819
          %8884 = vst.msk [vmem:[%s7 + $0xa0] sm:$0xff] %vm6875, %v8820
          %8885 = vst.msk [vmem:[%s7 + $0xa8] sm:$0xff] %vm6875, %v8821
          %8886 = vst.msk [vmem:[%s7 + $0xb0] sm:$0xff] %vm6875, %v8822
          %8887 = vst.msk [vmem:[%s7 + $0xb8] sm:$0xff] %vm6875, %v8823
          %8888 = vst.msk [vmem:[%s7 + $0xc0] sm:$0xff] %vm6875, %v8824
          %8889 = vst.msk [vmem:[%s7 + $0xc8] sm:$0xff] %vm6875, %v8825
          %8890 = vst.msk [vmem:[%s7 + $0xd0] sm:$0xff] %vm6875, %v8826
          %8891 = vst.msk [vmem:[%s7 + $0xd8] sm:$0xff] %vm6875, %v8827
          %8892 = vst.msk [vmem:[%s7 + $0xe0] sm:$0xff] %vm6875, %v8828
          %8893 = vst.msk [vmem:[%s7 + $0xe8] sm:$0xff] %vm6875, %v8829
          %8894 = vst.msk [vmem:[%s7 + $0xf0] sm:$0xff] %vm6875, %v8830
          %8895 = vst.msk [vmem:[%s7 + $0xf8] sm:$0xff] %vm6875, %v8831
          %8896 = vst.msk [vmem:[%s7 + $0x100] sm:$0xff] %vm6875, %v8832
          %8897 = vst.msk [vmem:[%s7 + $0x108] sm:$0xff] %vm6875, %v8833
          %8898 = vst.msk [vmem:[%s7 + $0x110] sm:$0xff] %vm6875, %v8834
          %8899 = vst.msk [vmem:[%s7 + $0x118] sm:$0xff] %vm6875, %v8835
          %8900 = vst.msk [vmem:[%s7 + $0x120] sm:$0xff] %vm6875, %v8836
          %8901 = vst.msk [vmem:[%s7 + $0x128] sm:$0xff] %vm6875, %v8837
          %8902 = vst.msk [vmem:[%s7 + $0x130] sm:$0xff] %vm6875, %v8838
          %8903 = vst.msk [vmem:[%s7 + $0x138] sm:$0xff] %vm6875, %v8839
          %8904 = vst.msk [vmem:[%s7 + $0x140] sm:$0xff] %vm6875, %v8840
          %8905 = vst.msk [vmem:[%s7 + $0x148] sm:$0xff] %vm6875, %v8841
          %8906 = vst.msk [vmem:[%s7 + $0x150] sm:$0xff] %vm6875, %v8842
          %8907 = vst.msk [vmem:[%s7 + $0x158] sm:$0xff] %vm6875, %v8843
          %8908 = vst.msk [vmem:[%s7 + $0x160] sm:$0xff] %vm6875, %v8844
          %8909 = vst.msk [vmem:[%s7 + $0x168] sm:$0xff] %vm6875, %v8845
          %8910 = vst.msk [vmem:[%s7 + $0x170] sm:$0xff] %vm6875, %v8846
          %8911 = vst.msk [vmem:[%s7 + $0x178] sm:$0xff] %vm6875, %v8847
          %8912 = vst.msk [vmem:[%s7 + $0x180] sm:$0xff] %vm6875, %v8848
          %8913 = vst.msk [vmem:[%s7 + $0x188] sm:$0xff] %vm6875, %v8849
          %8914 = vst.msk [vmem:[%s7 + $0x190] sm:$0xff] %vm6875, %v8850
          %8915 = vst.msk [vmem:[%s7 + $0x198] sm:$0xff] %vm6875, %v8851
          %8916 = vst.msk [vmem:[%s7 + $0x1a0] sm:$0xff] %vm6875, %v8852
          %8917 = vst.msk [vmem:[%s7 + $0x1a8] sm:$0xff] %vm6875, %v8853
          %8918 = vst.msk [vmem:[%s7 + $0x1b0] sm:$0xff] %vm6875, %v8854
          %8919 = vst.msk [vmem:[%s7 + $0x1b8] sm:$0xff] %vm6875, %v8855
          %8920 = vst.msk [vmem:[%s7 + $0x1c0] sm:$0xff] %vm6875, %v8856
          %8921 = vst.msk [vmem:[%s7 + $0x1c8] sm:$0xff] %vm6875, %v8857
          %8922 = vst.msk [vmem:[%s7 + $0x1d0] sm:$0xff] %vm6875, %v8858
          %8923 = vst.msk [vmem:[%s7 + $0x1d8] sm:$0xff] %vm6875, %v8859
          %8924 = vst.msk [vmem:[%s7 + $0x1e0] sm:$0xff] %vm6875, %v8860
          %8925 = vst.msk [vmem:[%s7 + $0x1e8] sm:$0xff] %vm6875, %v8861
          %8926 = vst.msk [vmem:[%s7 + $0x1f0] sm:$0xff] %vm6875, %v8862
          %8927 = vst.msk [vmem:[%s7 + $0x1f8] sm:$0xff] %vm6875, %v8863
        $region83: #{tpu_custom_call.1} parent=66 // pred_fallthru
          _
        // Predicated region
        $region84: #{tpu_custom_call.1} parent=66 // pred_check
          %p8928 = pneg %p201
        $region85: #{tpu_custom_call.1} parent=66 // pred_check_branch
          %8930 = sbr.rel (%p8928) target = $region87
        $region86: #{tpu_custom_call.1} parent=66 // pred_region
          _
        $region87: #{tpu_custom_call.1} parent=66 // pred_fallthru
          _
        // Predicated region
        $region88: #{tpu_custom_call.1} parent=66 // pred_check
          %p8931 = pneg %p201
        $region89: #{tpu_custom_call.1} parent=66 // pred_check_branch
          %8933 = sbr.rel (%p8931) target = $region91
        $region90: #{tpu_custom_call.1} parent=66 // pred_region
          _
        $region91: #{tpu_custom_call.1} parent=66 // pred_fallthru
          _
      $region67: #{tpu_custom_call.1} parent=5 // pred_fallthru
        _
      %p8934 = scmp.le.s32.totalorder 2, %s16
      // Predicated region
      $region92: #{tpu_custom_call.1} parent=5 // pred_check
        %p8935 = pneg %p8934
      $region93: #{tpu_custom_call.1} parent=5 // pred_check_branch
        %8937 = sbr.rel (%p8935) target = $region95
      $region94: #{tpu_custom_call.1} parent=5 // pred_region
        %s8938 = ssub.s32 %s16, 2
      $region95: #{tpu_custom_call.1} parent=5 // pred_fallthru
        _
    $region6: #{tpu_custom_call.1} parent=1 // loop_footer
      %s20 = sadd.s32 1, %s16
    $region7: #{tpu_custom_call.1} parent=1 // loop_footer_branch
      %15 = sbr.rel target = $region3
    $region8: #{tpu_custom_call.1} parent=1 // loop_exit
      _
    %8939 = vsyncpa [#allocation3], 1
    %s8940 = scalar_lea.sflag [#allocation3], 1
    %8941 = vsyncpa %s8940, 1

</llo_original>
